<compile_context>
chip_gen: v6e
topology: v6e:2x2x1
jax: 0.10.0
libtpu: 0.0.40
codegen_flags: <defaults>
</compile_context>

<pallas_src>
import jax
import jax.numpy as jnp
from jax.experimental import pallas as pl
from jax.experimental.pallas import tpu as pltpu

EPS = 1e-5


def _basic_block_kernel(x_ref, w1_ref, g1_ref, b1_ref, w2_ref, g2_ref, b2_ref,
                        out_ref, pad_ref):
    # x_ref   : (N, H, W, C)        f32  unpadded input
    # w1_ref  : (9*C, C)            f32  conv1 weights, (kh,kw,Cin)-major rows
    # g1/b1   : (1, C)              f32  BN1 gamma / beta
    # w2_ref  : (9*C, C)            f32  conv2 weights
    # g2/b2   : (1, C)              f32  BN2 gamma / beta
    # out_ref : (N*H*W, C)          f32
    # pad_ref : (N, H+2, W+2, C)    VMEM scratch with zero halo (shared by both convs)
    N, H, W, C = x_ref.shape
    NHW = N * H * W
    inv_n = 1.0 / NHW

    # ---- zero only the 1-pixel halo, once (center is always overwritten) ----
    pad_ref[:, 0:1, :, :] = jnp.zeros((N, 1, W + 2, C), jnp.float32)
    pad_ref[:, H + 1:H + 2, :, :] = jnp.zeros((N, 1, W + 2, C), jnp.float32)
    pad_ref[:, :, 0:1, :] = jnp.zeros((N, H + 2, 1, C), jnp.float32)
    pad_ref[:, :, W + 1:W + 2, :] = jnp.zeros((N, H + 2, 1, C), jnp.float32)

    x = x_ref[...]                          # load once; reused for the residual
    pad_ref[:, 1:H + 1, 1:W + 1, :] = x     # in-kernel padding of the input

    def conv3x3(w_ref):
        # im2col: 9 shifted windows concatenated on the lane axis -> K = 9*C,
        # then a single MXU matmul instead of 9 tiny K=C matmuls.
        patches = jnp.concatenate(
            [pad_ref[:, kh:kh + H, kw:kw + W, :].reshape(NHW, C)
             for kh in range(3) for kw in range(3)],
            axis=-1)                                           # (NHW, 9*C)
        return jnp.dot(patches, w_ref[...],
                       preferred_element_type=jnp.float32)     # (NHW, C)

    def batchnorm(y, g_ref, b_ref):
        # single-pass batch stats: biased var = E[x^2] - E[x]^2
        s = jnp.sum(y, axis=0, keepdims=True)
        s2 = jnp.sum(y * y, axis=0, keepdims=True)
        mean = s * inv_n
        var = s2 * inv_n - mean * mean
        return (y - mean) * jax.lax.rsqrt(var + EPS) * g_ref[...] + b_ref[...]

    # ---------------- conv1 -> BN1 -> ReLU
    y1 = jnp.maximum(batchnorm(conv3x3(w1_ref), g1_ref, b1_ref), 0.0)

    # reuse the same scratch for conv2: overwrite center, halo is still zero
    pad_ref[:, 1:H + 1, 1:W + 1, :] = y1.reshape(N, H, W, C)

    # ---------------- conv2 -> BN2 (no ReLU)
    y2 = batchnorm(conv3x3(w2_ref), g2_ref, b2_ref)

    # ---------------- residual add with the original (already loaded) input
    out_ref[...] = (y2 + x.reshape(NHW, C)).astype(out_ref.dtype)


def basic_block_forward(x_nchw, params):
    """x_nchw: (N, C, H, W) float32. Returns (N, C, H, W) float32."""
    x = jnp.transpose(x_nchw, (0, 2, 3, 1)).astype(jnp.float32)   # NCHW -> NHWC
    N, H, W, Cin = x.shape
    Cout = params["w1"].shape[-1]
    assert Cin == Cout, "downsample=None requires in_channels == out_channels"

    # HWIO (3,3,Cin,Cout) -> (9*Cin, Cout); row order (kh,kw,ci) matches im2col.
    w1 = params["w1"].astype(jnp.float32).reshape(9 * Cin, Cout)
    w2 = params["w2"].astype(jnp.float32).reshape(9 * Cout, Cout)
    g1 = params["g1"].reshape(1, Cout).astype(jnp.float32)
    b1 = params["b1"].reshape(1, Cout).astype(jnp.float32)
    g2 = params["g2"].reshape(1, Cout).astype(jnp.float32)
    b2 = params["b2"].reshape(1, Cout).astype(jnp.float32)

    # Explicit VMEM budget from the real footprint (with headroom), instead of
    # relying on the default scoped limit.
    elems = (2 * N * H * W * Cin                 # x + out
             + N * (H + 2) * (W + 2) * Cin       # shared padded scratch
             + 2 * 9 * Cin * Cout                # weights
             + 2 * N * H * W * 9 * Cin)          # im2col patch temporaries
    vmem_limit = min(int(4 * elems * 1.5) + (4 << 20), 48 << 20)

    vmem = pl.BlockSpec(memory_space=pltpu.MemorySpace.VMEM)
    out2d = pl.pallas_call(
        _basic_block_kernel,
        out_shape=jax.ShapeDtypeStruct((N * H * W, Cout), jnp.float32),
        in_specs=[vmem] * 7,
        out_specs=vmem,
        scratch_shapes=[pltpu.VMEM((N, H + 2, W + 2, Cin), jnp.float32)],
        compiler_params=pltpu.CompilerParams(vmem_limit_bytes=vmem_limit),
    )(x, w1, g1, b1, w2, g2, b2)

    out = out2d.reshape(N, H, W, Cout)
    return jnp.transpose(out, (0, 3, 1, 2))      # NHWC -> NCHW


# ----------------------------- pure-JAX reference ----------------------------
def _conv3x3_ref(x_nhwc, w_hwio):
    return jax.lax.conv_general_dilated(
        x_nhwc, w_hwio, window_strides=(1, 1), padding=((1, 1), (1, 1)),
        dimension_numbers=("NHWC", "HWIO", "NHWC"))


def _bn_train_ref(y, g, b):
    mean = y.mean(axis=(0, 1, 2))
    var = y.var(axis=(0, 1, 2))   # biased (ddof=0), matches BN normalization
    return (y - mean) * jax.lax.rsqrt(var + EPS) * g + b


def basic_block_reference(x_nchw, params):
    x = jnp.transpose(x_nchw, (0, 2, 3, 1)).astype(jnp.float32)
    o = jax.nn.relu(_bn_train_ref(_conv3x3_ref(x, params["w1"]),
                                  params["g1"], params["b1"]))
    o = _bn_train_ref(_conv3x3_ref(o, params["w2"]), params["g2"], params["b2"])
    o = o + x
    return jnp.transpose(o, (0, 3, 1, 2))


if __name__ == "__main__":
    # Small, shape-consistent config: downsample=None => stride=1, Cin == Cout.
    N, C, H, W = 2, 16, 16, 16

    key = jax.random.PRNGKey(0)
    kx, kw1, kw2, kg1, kb1, kg2, kb2 = jax.random.split(key, 7)

    x = jax.random.normal(kx, (N, C, H, W), jnp.float32)
    params = {
        "w1": jax.random.normal(kw1, (3, 3, C, C), jnp.float32) * 0.1,  # HWIO
        "w2": jax.random.normal(kw2, (3, 3, C, C), jnp.float32) * 0.1,  # HWIO
        "g1": 1.0 + 0.1 * jax.random.normal(kg1, (C,), jnp.float32),
        "b1": 0.1 * jax.random.normal(kb1, (C,), jnp.float32),
        "g2": 1.0 + 0.1 * jax.random.normal(kg2, (C,), jnp.float32),
        "b2": 0.1 * jax.random.normal(kb2, (C,), jnp.float32),
    }

    out = jax.block_until_ready(basic_block_forward(x, params))
    ref = jax.block_until_ready(basic_block_reference(x, params))

    assert out.shape == (N, C, H, W), out.shape
    assert jnp.allclose(out, ref, atol=2e-3, rtol=2e-3), (
        float(jnp.max(jnp.abs(out - ref))))
    print("KERNEL_OK")
</pallas_src>

<mosaic_0001>
module attributes {stable_mosaic.version = 11 : i64} {
  func.func @_basic_block_kernel(%arg0: memref<2x16x16x16xf32, #tpu.memory_space<vmem>>, %arg1: memref<144x16xf32, #tpu.memory_space<vmem>>, %arg2: memref<1x16xf32, #tpu.memory_space<vmem>>, %arg3: memref<1x16xf32, #tpu.memory_space<vmem>>, %arg4: memref<144x16xf32, #tpu.memory_space<vmem>>, %arg5: memref<1x16xf32, #tpu.memory_space<vmem>>, %arg6: memref<1x16xf32, #tpu.memory_space<vmem>>, %arg7: memref<512x16xf32, #tpu.memory_space<vmem>>, %arg8: memref<2x18x18x16xf32, #tpu.memory_space<vmem>>) attributes {dimension_semantics = [], scalar_prefetch = 0 : i64, scratch_operands = 1 : i64, tpu.core_type = #tpu.core_type<tc>} {
    %cst = arith.constant 0.000000e+00 : f32
    %0 = vector.broadcast %cst : f32 to vector<2x1x18x16xf32>
    %c0 = arith.constant 0 : index
    %c0_0 = arith.constant 0 : index
    %c0_1 = arith.constant 0 : index
    %c0_2 = arith.constant 0 : index
    %1 = vector.load %arg8[%c0, %c0_0, %c0_1, %c0_2] : memref<2x18x18x16xf32, #tpu.memory_space<vmem>>, vector<2x1x18x16xf32>
    tpu.vector_store %arg8[%c0, %c0_0, %c0_1, %c0_2], %0 {strides = array<i32>} : memref<2x18x18x16xf32, #tpu.memory_space<vmem>>, vector<2x1x18x16xf32>,
    %cst_3 = arith.constant 0.000000e+00 : f32
    %2 = vector.broadcast %cst_3 : f32 to vector<2x1x18x16xf32>
    %c0_4 = arith.constant 0 : index
    %c17 = arith.constant 17 : index
    %c0_5 = arith.constant 0 : index
    %c0_6 = arith.constant 0 : index
    %3 = vector.load %arg8[%c0_4, %c17, %c0_5, %c0_6] : memref<2x18x18x16xf32, #tpu.memory_space<vmem>>, vector<2x1x18x16xf32>
    tpu.vector_store %arg8[%c0_4, %c17, %c0_5, %c0_6], %2 {strides = array<i32>} : memref<2x18x18x16xf32, #tpu.memory_space<vmem>>, vector<2x1x18x16xf32>,
    %cst_7 = arith.constant 0.000000e+00 : f32
    %4 = vector.broadcast %cst_7 : f32 to vector<2x18x1x16xf32>
    %c0_8 = arith.constant 0 : index
    %c0_9 = arith.constant 0 : index
    %c0_10 = arith.constant 0 : index
    %c0_11 = arith.constant 0 : index
    %5 = vector.load %arg8[%c0_8, %c0_9, %c0_10, %c0_11] : memref<2x18x18x16xf32, #tpu.memory_space<vmem>>, vector<2x18x1x16xf32>
    tpu.vector_store %arg8[%c0_8, %c0_9, %c0_10, %c0_11], %4 {strides = array<i32>} : memref<2x18x18x16xf32, #tpu.memory_space<vmem>>, vector<2x18x1x16xf32>,
    %cst_12 = arith.constant 0.000000e+00 : f32
    %6 = vector.broadcast %cst_12 : f32 to vector<2x18x1x16xf32>
    %c0_13 = arith.constant 0 : index
    %c0_14 = arith.constant 0 : index
    %c17_15 = arith.constant 17 : index
    %c0_16 = arith.constant 0 : index
    %7 = vector.load %arg8[%c0_13, %c0_14, %c17_15, %c0_16] : memref<2x18x18x16xf32, #tpu.memory_space<vmem>>, vector<2x18x1x16xf32>
    tpu.vector_store %arg8[%c0_13, %c0_14, %c17_15, %c0_16], %6 {strides = array<i32>} : memref<2x18x18x16xf32, #tpu.memory_space<vmem>>, vector<2x18x1x16xf32>,
    %c0_17 = arith.constant 0 : index
    %c0_18 = arith.constant 0 : index
    %c0_19 = arith.constant 0 : index
    %c0_20 = arith.constant 0 : index
    %8 = vector.load %arg0[%c0_17, %c0_18, %c0_19, %c0_20] : memref<2x16x16x16xf32, #tpu.memory_space<vmem>>, vector<2x16x16x16xf32>
    %c0_21 = arith.constant 0 : index
    %c1 = arith.constant 1 : index
    %c1_22 = arith.constant 1 : index
    %c0_23 = arith.constant 0 : index
    %9 = vector.load %arg8[%c0_21, %c1, %c1_22, %c0_23] : memref<2x18x18x16xf32, #tpu.memory_space<vmem>>, vector<2x16x16x16xf32>
    tpu.vector_store %arg8[%c0_21, %c1, %c1_22, %c0_23], %8 {strides = array<i32>} : memref<2x18x18x16xf32, #tpu.memory_space<vmem>>, vector<2x16x16x16xf32>,
    %c0_24 = arith.constant 0 : index
    %c0_25 = arith.constant 0 : index
    %c0_26 = arith.constant 0 : index
    %c0_27 = arith.constant 0 : index
    %10 = vector.load %arg8[%c0_24, %c0_25, %c0_26, %c0_27] : memref<2x18x18x16xf32, #tpu.memory_space<vmem>>, vector<2x16x16x16xf32>
    %11 = vector.shape_cast %10 : vector<2x16x16x16xf32> to vector<512x16xf32>
    %c0_28 = arith.constant 0 : index
    %c0_29 = arith.constant 0 : index
    %c1_30 = arith.constant 1 : index
    %c0_31 = arith.constant 0 : index
    %12 = vector.load %arg8[%c0_28, %c0_29, %c1_30, %c0_31] : memref<2x18x18x16xf32, #tpu.memory_space<vmem>>, vector<2x16x16x16xf32>
    %13 = vector.shape_cast %12 : vector<2x16x16x16xf32> to vector<512x16xf32>
    %c0_32 = arith.constant 0 : index
    %c0_33 = arith.constant 0 : index
    %c2 = arith.constant 2 : index
    %c0_34 = arith.constant 0 : index
    %14 = vector.load %arg8[%c0_32, %c0_33, %c2, %c0_34] : memref<2x18x18x16xf32, #tpu.memory_space<vmem>>, vector<2x16x16x16xf32>
    %15 = vector.shape_cast %14 : vector<2x16x16x16xf32> to vector<512x16xf32>
    %c0_35 = arith.constant 0 : index
    %c1_36 = arith.constant 1 : index
    %c0_37 = arith.constant 0 : index
    %c0_38 = arith.constant 0 : index
    %16 = vector.load %arg8[%c0_35, %c1_36, %c0_37, %c0_38] : memref<2x18x18x16xf32, #tpu.memory_space<vmem>>, vector<2x16x16x16xf32>
    %17 = vector.shape_cast %16 : vector<2x16x16x16xf32> to vector<512x16xf32>
    %c0_39 = arith.constant 0 : index
    %c1_40 = arith.constant 1 : index
    %c1_41 = arith.constant 1 : index
    %c0_42 = arith.constant 0 : index
    %18 = vector.load %arg8[%c0_39, %c1_40, %c1_41, %c0_42] : memref<2x18x18x16xf32, #tpu.memory_space<vmem>>, vector<2x16x16x16xf32>
    %19 = vector.shape_cast %18 : vector<2x16x16x16xf32> to vector<512x16xf32>
    %c0_43 = arith.constant 0 : index
    %c1_44 = arith.constant 1 : index
    %c2_45 = arith.constant 2 : index
    %c0_46 = arith.constant 0 : index
    %20 = vector.load %arg8[%c0_43, %c1_44, %c2_45, %c0_46] : memref<2x18x18x16xf32, #tpu.memory_space<vmem>>, vector<2x16x16x16xf32>
    %21 = vector.shape_cast %20 : vector<2x16x16x16xf32> to vector<512x16xf32>
    %c0_47 = arith.constant 0 : index
    %c2_48 = arith.constant 2 : index
    %c0_49 = arith.constant 0 : index
    %c0_50 = arith.constant 0 : index
    %22 = vector.load %arg8[%c0_47, %c2_48, %c0_49, %c0_50] : memref<2x18x18x16xf32, #tpu.memory_space<vmem>>, vector<2x16x16x16xf32>
    %23 = vector.shape_cast %22 : vector<2x16x16x16xf32> to vector<512x16xf32>
    %c0_51 = arith.constant 0 : index
    %c2_52 = arith.constant 2 : index
    %c1_53 = arith.constant 1 : index
    %c0_54 = arith.constant 0 : index
    %24 = vector.load %arg8[%c0_51, %c2_52, %c1_53, %c0_54] : memref<2x18x18x16xf32, #tpu.memory_space<vmem>>, vector<2x16x16x16xf32>
    %25 = vector.shape_cast %24 : vector<2x16x16x16xf32> to vector<512x16xf32>
    %c0_55 = arith.constant 0 : index
    %c2_56 = arith.constant 2 : index
    %c2_57 = arith.constant 2 : index
    %c0_58 = arith.constant 0 : index
    %26 = vector.load %arg8[%c0_55, %c2_56, %c2_57, %c0_58] : memref<2x18x18x16xf32, #tpu.memory_space<vmem>>, vector<2x16x16x16xf32>
    %27 = vector.shape_cast %26 : vector<2x16x16x16xf32> to vector<512x16xf32>
    %28 = tpu.concatenate %11, %13, %15, %17, %19, %21, %23, %25, %27 in 1 : vector<512x16xf32>, vector<512x16xf32>, vector<512x16xf32>, vector<512x16xf32>, vector<512x16xf32>, vector<512x16xf32>, vector<512x16xf32>, vector<512x16xf32>, vector<512x16xf32> -> vector<512x144xf32>
    %c0_59 = arith.constant 0 : index
    %c0_60 = arith.constant 0 : index
    %29 = vector.load %arg1[%c0_59, %c0_60] : memref<144x16xf32, #tpu.memory_space<vmem>>, vector<144x16xf32>
    %cst_61 = arith.constant dense<0.000000e+00> : vector<512x16xf32>
    %30 = tpu.matmul %28, %29, %cst_61 {dimension_numbers = #tpu.dot_dimension_numbers<[1], [0], [0], [1], [0, 0, 1, 1], [], []>} : vector<512x144xf32>, vector<144x16xf32>, vector<512x16xf32> -> vector<512x16xf32>
    %cst_62 = arith.constant dense<0.000000e+00> : vector<16xf32>
    %31 = vector.multi_reduction <add>, %30, %cst_62 [0] : vector<512x16xf32> to vector<16xf32>
    %32 = vector.shape_cast %31 : vector<16xf32> to vector<1x16xf32>
    %33 = arith.mulf %30, %30 : vector<512x16xf32>
    %cst_63 = arith.constant dense<0.000000e+00> : vector<16xf32>
    %34 = vector.multi_reduction <add>, %33, %cst_63 [0] : vector<512x16xf32> to vector<16xf32>
    %35 = vector.shape_cast %34 : vector<16xf32> to vector<1x16xf32>
    %cst_64 = arith.constant 0.001953125 : f32
    %36 = vector.broadcast %cst_64 : f32 to vector<1x16xf32>
    %37 = arith.mulf %32, %36 : vector<1x16xf32>
    %cst_65 = arith.constant 0.001953125 : f32
    %38 = vector.broadcast %cst_65 : f32 to vector<1x16xf32>
    %39 = arith.mulf %35, %38 : vector<1x16xf32>
    %40 = arith.mulf %37, %37 : vector<1x16xf32>
    %41 = arith.subf %39, %40 : vector<1x16xf32>
    %42 = vector.broadcast %37 : vector<1x16xf32> to vector<512x16xf32>
    %43 = arith.subf %30, %42 : vector<512x16xf32>
    %cst_66 = arith.constant 9.99999974E-6 : f32
    %44 = vector.broadcast %cst_66 : f32 to vector<1x16xf32>
    %45 = arith.addf %41, %44 : vector<1x16xf32>
    %46 = math.rsqrt %45 : vector<1x16xf32>
    %47 = vector.broadcast %46 : vector<1x16xf32> to vector<512x16xf32>
    %48 = arith.mulf %43, %47 : vector<512x16xf32>
    %c0_67 = arith.constant 0 : index
    %c0_68 = arith.constant 0 : index
    %49 = vector.load %arg2[%c0_67, %c0_68] : memref<1x16xf32, #tpu.memory_space<vmem>>, vector<1x16xf32>
    %50 = vector.broadcast %49 : vector<1x16xf32> to vector<512x16xf32>
    %51 = arith.mulf %48, %50 : vector<512x16xf32>
    %c0_69 = arith.constant 0 : index
    %c0_70 = arith.constant 0 : index
    %52 = vector.load %arg3[%c0_69, %c0_70] : memref<1x16xf32, #tpu.memory_space<vmem>>, vector<1x16xf32>
    %53 = vector.broadcast %52 : vector<1x16xf32> to vector<512x16xf32>
    %54 = arith.addf %51, %53 : vector<512x16xf32>
    %cst_71 = arith.constant 0.000000e+00 : f32
    %55 = vector.broadcast %cst_71 : f32 to vector<512x16xf32>
    %56 = arith.maximumf %54, %55 : vector<512x16xf32>
    %57 = vector.shape_cast %56 : vector<512x16xf32> to vector<2x16x16x16xf32>
    %c0_72 = arith.constant 0 : index
    %c1_73 = arith.constant 1 : index
    %c1_74 = arith.constant 1 : index
    %c0_75 = arith.constant 0 : index
    %58 = vector.load %arg8[%c0_72, %c1_73, %c1_74, %c0_75] : memref<2x18x18x16xf32, #tpu.memory_space<vmem>>, vector<2x16x16x16xf32>
    tpu.vector_store %arg8[%c0_72, %c1_73, %c1_74, %c0_75], %57 {strides = array<i32>} : memref<2x18x18x16xf32, #tpu.memory_space<vmem>>, vector<2x16x16x16xf32>,
    %c0_76 = arith.constant 0 : index
    %c0_77 = arith.constant 0 : index
    %c0_78 = arith.constant 0 : index
    %c0_79 = arith.constant 0 : index
    %59 = vector.load %arg8[%c0_76, %c0_77, %c0_78, %c0_79] : memref<2x18x18x16xf32, #tpu.memory_space<vmem>>, vector<2x16x16x16xf32>
    %60 = vector.shape_cast %59 : vector<2x16x16x16xf32> to vector<512x16xf32>
    %c0_80 = arith.constant 0 : index
    %c0_81 = arith.constant 0 : index
    %c1_82 = arith.constant 1 : index
    %c0_83 = arith.constant 0 : index
    %61 = vector.load %arg8[%c0_80, %c0_81, %c1_82, %c0_83] : memref<2x18x18x16xf32, #tpu.memory_space<vmem>>, vector<2x16x16x16xf32>
    %62 = vector.shape_cast %61 : vector<2x16x16x16xf32> to vector<512x16xf32>
    %c0_84 = arith.constant 0 : index
    %c0_85 = arith.constant 0 : index
    %c2_86 = arith.constant 2 : index
    %c0_87 = arith.constant 0 : index
    %63 = vector.load %arg8[%c0_84, %c0_85, %c2_86, %c0_87] : memref<2x18x18x16xf32, #tpu.memory_space<vmem>>, vector<2x16x16x16xf32>
    %64 = vector.shape_cast %63 : vector<2x16x16x16xf32> to vector<512x16xf32>
    %c0_88 = arith.constant 0 : index
    %c1_89 = arith.constant 1 : index
    %c0_90 = arith.constant 0 : index
    %c0_91 = arith.constant 0 : index
    %65 = vector.load %arg8[%c0_88, %c1_89, %c0_90, %c0_91] : memref<2x18x18x16xf32, #tpu.memory_space<vmem>>, vector<2x16x16x16xf32>
    %66 = vector.shape_cast %65 : vector<2x16x16x16xf32> to vector<512x16xf32>
    %c0_92 = arith.constant 0 : index
    %c1_93 = arith.constant 1 : index
    %c1_94 = arith.constant 1 : index
    %c0_95 = arith.constant 0 : index
    %67 = vector.load %arg8[%c0_92, %c1_93, %c1_94, %c0_95] : memref<2x18x18x16xf32, #tpu.memory_space<vmem>>, vector<2x16x16x16xf32>
    %68 = vector.shape_cast %67 : vector<2x16x16x16xf32> to vector<512x16xf32>
    %c0_96 = arith.constant 0 : index
    %c1_97 = arith.constant 1 : index
    %c2_98 = arith.constant 2 : index
    %c0_99 = arith.constant 0 : index
    %69 = vector.load %arg8[%c0_96, %c1_97, %c2_98, %c0_99] : memref<2x18x18x16xf32, #tpu.memory_space<vmem>>, vector<2x16x16x16xf32>
    %70 = vector.shape_cast %69 : vector<2x16x16x16xf32> to vector<512x16xf32>
    %c0_100 = arith.constant 0 : index
    %c2_101 = arith.constant 2 : index
    %c0_102 = arith.constant 0 : index
    %c0_103 = arith.constant 0 : index
    %71 = vector.load %arg8[%c0_100, %c2_101, %c0_102, %c0_103] : memref<2x18x18x16xf32, #tpu.memory_space<vmem>>, vector<2x16x16x16xf32>
    %72 = vector.shape_cast %71 : vector<2x16x16x16xf32> to vector<512x16xf32>
    %c0_104 = arith.constant 0 : index
    %c2_105 = arith.constant 2 : index
    %c1_106 = arith.constant 1 : index
    %c0_107 = arith.constant 0 : index
    %73 = vector.load %arg8[%c0_104, %c2_105, %c1_106, %c0_107] : memref<2x18x18x16xf32, #tpu.memory_space<vmem>>, vector<2x16x16x16xf32>
    %74 = vector.shape_cast %73 : vector<2x16x16x16xf32> to vector<512x16xf32>
    %c0_108 = arith.constant 0 : index
    %c2_109 = arith.constant 2 : index
    %c2_110 = arith.constant 2 : index
    %c0_111 = arith.constant 0 : index
    %75 = vector.load %arg8[%c0_108, %c2_109, %c2_110, %c0_111] : memref<2x18x18x16xf32, #tpu.memory_space<vmem>>, vector<2x16x16x16xf32>
    %76 = vector.shape_cast %75 : vector<2x16x16x16xf32> to vector<512x16xf32>
    %77 = tpu.concatenate %60, %62, %64, %66, %68, %70, %72, %74, %76 in 1 : vector<512x16xf32>, vector<512x16xf32>, vector<512x16xf32>, vector<512x16xf32>, vector<512x16xf32>, vector<512x16xf32>, vector<512x16xf32>, vector<512x16xf32>, vector<512x16xf32> -> vector<512x144xf32>
    %c0_112 = arith.constant 0 : index
    %c0_113 = arith.constant 0 : index
    %78 = vector.load %arg4[%c0_112, %c0_113] : memref<144x16xf32, #tpu.memory_space<vmem>>, vector<144x16xf32>
    %cst_114 = arith.constant dense<0.000000e+00> : vector<512x16xf32>
    %79 = tpu.matmul %77, %78, %cst_114 {dimension_numbers = #tpu.dot_dimension_numbers<[1], [0], [0], [1], [0, 0, 1, 1], [], []>} : vector<512x144xf32>, vector<144x16xf32>, vector<512x16xf32> -> vector<512x16xf32>
    %cst_115 = arith.constant dense<0.000000e+00> : vector<16xf32>
    %80 = vector.multi_reduction <add>, %79, %cst_115 [0] : vector<512x16xf32> to vector<16xf32>
    %81 = vector.shape_cast %80 : vector<16xf32> to vector<1x16xf32>
    %82 = arith.mulf %79, %79 : vector<512x16xf32>
    %cst_116 = arith.constant dense<0.000000e+00> : vector<16xf32>
    %83 = vector.multi_reduction <add>, %82, %cst_116 [0] : vector<512x16xf32> to vector<16xf32>
    %84 = vector.shape_cast %83 : vector<16xf32> to vector<1x16xf32>
    %cst_117 = arith.constant 0.001953125 : f32
    %85 = vector.broadcast %cst_117 : f32 to vector<1x16xf32>
    %86 = arith.mulf %81, %85 : vector<1x16xf32>
    %cst_118 = arith.constant 0.001953125 : f32
    %87 = vector.broadcast %cst_118 : f32 to vector<1x16xf32>
    %88 = arith.mulf %84, %87 : vector<1x16xf32>
    %89 = arith.mulf %86, %86 : vector<1x16xf32>
    %90 = arith.subf %88, %89 : vector<1x16xf32>
    %91 = vector.broadcast %86 : vector<1x16xf32> to vector<512x16xf32>
    %92 = arith.subf %79, %91 : vector<512x16xf32>
    %cst_119 = arith.constant 9.99999974E-6 : f32
    %93 = vector.broadcast %cst_119 : f32 to vector<1x16xf32>
    %94 = arith.addf %90, %93 : vector<1x16xf32>
    %95 = math.rsqrt %94 : vector<1x16xf32>
    %96 = vector.broadcast %95 : vector<1x16xf32> to vector<512x16xf32>
    %97 = arith.mulf %92, %96 : vector<512x16xf32>
    %c0_120 = arith.constant 0 : index
    %c0_121 = arith.constant 0 : index
    %98 = vector.load %arg5[%c0_120, %c0_121] : memref<1x16xf32, #tpu.memory_space<vmem>>, vector<1x16xf32>
    %99 = vector.broadcast %98 : vector<1x16xf32> to vector<512x16xf32>
    %100 = arith.mulf %97, %99 : vector<512x16xf32>
    %c0_122 = arith.constant 0 : index
    %c0_123 = arith.constant 0 : index
    %101 = vector.load %arg6[%c0_122, %c0_123] : memref<1x16xf32, #tpu.memory_space<vmem>>, vector<1x16xf32>
    %102 = vector.broadcast %101 : vector<1x16xf32> to vector<512x16xf32>
    %103 = arith.addf %100, %102 : vector<512x16xf32>
    %104 = vector.shape_cast %8 : vector<2x16x16x16xf32> to vector<512x16xf32>
    %105 = arith.addf %103, %104 : vector<512x16xf32>
    %c0_124 = arith.constant 0 : index
    %c0_125 = arith.constant 0 : index
    %106 = vector.load %arg7[%c0_124, %c0_125] : memref<512x16xf32, #tpu.memory_space<vmem>>, vector<512x16xf32>
    tpu.vector_store %arg7[%c0_124, %c0_125], %105 {strides = array<i32>} : memref<512x16xf32, #tpu.memory_space<vmem>>, vector<512x16xf32>,
    return
  }
}

</mosaic_0001>

<llo_original>
// kernel: tpu_custom_call.1
$region0: #{tpu_custom_call.1}
  #allocation0 [shape = 'u32[]', space=smem, size = 0x4, offset = 0x4, fixed_abs, tag = 'smem constant byte address 0x4 - core index']
  #allocation1 [shape = 'u32[144,128]{1,0:T(1,128)}', space=vmem, size = 0x12000, scoped, tag = 'internal scratch']
  #allocation2 [shape = 'f32[2,18,18,16]{3,2,1,0:T(8,128)}', space=vmem, size = 0x6c000, scoped, tag = 'scratch operand']
  %s0 = inlined_call_operand.hbm [shape: f32[2,16,16,16], index: 0, kind: input, shape index: {}]
  %s1 = inlined_call_operand.vmem [shape: f32[144,16], index: 1, kind: input, shape index: {}]
  %s2 = inlined_call_operand.vmem [shape: f32[1,16], index: 2, kind: input, shape index: {}]
  %s3 = inlined_call_operand.vmem [shape: f32[1,16], index: 3, kind: input, shape index: {}]
  %s4 = inlined_call_operand.vmem [shape: f32[144,16], index: 4, kind: input, shape index: {}]
  %s5 = inlined_call_operand.vmem [shape: f32[1,16], index: 5, kind: input, shape index: {}]
  %s6 = inlined_call_operand.vmem [shape: f32[1,16], index: 6, kind: input, shape index: {}]
  %s7 = inlined_call_operand.vmem [shape: f32[512,16], index: 7, kind: output, shape index: {}]
  %s8 = sld [smem:[#allocation0]]
  $region42: #{tpu_custom_call.1} parent=0
    _
  %s10 = ssub.s32 1, %s8
  %s11 = scalar_select 0, %s10, %s8
  $region1: #{tpu_custom_call.1} parent=0
    #allocation3 [shape = 'u8[262144]{0}', space=vmem, size = 0x40000, scoped, tag = 'input window, operand 0, single buffered']
    #allocation4 [shape = 's32[1]{0}', space=sflag, size = 0x4, scoped, tag = 'scoped memory for tpu_custom_call.1']
    %12 = vsyncpa [#allocation4], 0
    // Predicated region
    $region2: #{tpu_custom_call.1} parent=1 // pred_check
      _
    $region3: #{tpu_custom_call.1} parent=1 // pred_check_branch
      %14 = sbr.rel (0) target = $region5
    $region4: #{tpu_custom_call.1} parent=1 // pred_region
      %s16 = ssub.s32 8192, 8192
      %17 = vsyncadd [#allocation4], %s16
      %s18 = sshll.u32 [#allocation3], 4
      %s19 = int_to_ptr.vmem [resolvable:$true] %s18
      %24 = dma.hbm_to_vmem [thread:$0]  %s0, 8192, %s19, [#allocation4], 128, 128, 8
    $region5: #{tpu_custom_call.1} parent=1 // pred_fallthru
      _
    // Predicated region
    $region6: #{tpu_custom_call.1} parent=1 // pred_check
      _
    $region7: #{tpu_custom_call.1} parent=1 // pred_check_branch
      %26 = sbr.rel (0) target = $region9
    $region8: #{tpu_custom_call.1} parent=1 // pred_region
      _
    $region9: #{tpu_custom_call.1} parent=1 // pred_fallthru
      _
    // Predicated region
    $region10: #{tpu_custom_call.1} parent=1 // pred_check
      _
    $region11: #{tpu_custom_call.1} parent=1 // pred_check_branch
      %28 = sbr.rel (0) target = $region13
    $region12: #{tpu_custom_call.1} parent=1 // pred_region
      _
    $region13: #{tpu_custom_call.1} parent=1 // pred_fallthru
      _
    // Predicated region
    $region14: #{tpu_custom_call.1} parent=1 // pred_check
      _
    $region15: #{tpu_custom_call.1} parent=1 // pred_check_branch
      %30 = sbr.rel (0) target = $region17
    $region16: #{tpu_custom_call.1} parent=1 // pred_region
      _
    $region17: #{tpu_custom_call.1} parent=1 // pred_fallthru
      _
    // Predicated region
    $region18: #{tpu_custom_call.1} parent=1 // pred_check
      _
    $region19: #{tpu_custom_call.1} parent=1 // pred_check_branch
      %32 = sbr.rel (0) target = $region21
    $region20: #{tpu_custom_call.1} parent=1 // pred_region
      _
    $region21: #{tpu_custom_call.1} parent=1 // pred_fallthru
      _
    // Predicated region
    $region22: #{tpu_custom_call.1} parent=1 // pred_check
      _
    $region23: #{tpu_custom_call.1} parent=1 // pred_check_branch
      %34 = sbr.rel (0) target = $region25
    $region24: #{tpu_custom_call.1} parent=1 // pred_region
      _
    $region25: #{tpu_custom_call.1} parent=1 // pred_fallthru
      _
    // Predicated region
    $region26: #{tpu_custom_call.1} parent=1 // pred_check
      _
    $region27: #{tpu_custom_call.1} parent=1 // pred_check_branch
      %36 = sbr.rel (0) target = $region29
    $region28: #{tpu_custom_call.1} parent=1 // pred_region
      _
    $region29: #{tpu_custom_call.1} parent=1 // pred_fallthru
      _
    // Predicated region
    $region30: #{tpu_custom_call.1} parent=1 // pred_check
      _
    $region31: #{tpu_custom_call.1} parent=1 // pred_check_branch
      %38 = sbr.rel (0) target = $region33
    $region32: #{tpu_custom_call.1} parent=1 // pred_region
      %39 = dma.done [#allocation4], 8192
    $region33: #{tpu_custom_call.1} parent=1 // pred_fallthru
      _
    %vm40 = vcmask 130048
    %41 = vst.msk [vmem:[#allocation2] sm:$0xff] %vm40, 0.0
    %42 = vst.msk [vmem:[#allocation2 + $0x8] sm:$0xff] %vm40, 0.0
    %vm43 = vcmask 123904
    %44 = vst.msk [vmem:[#allocation2 + $0x10] sm:$0x3] %vm43, 0.0
    %45 = vst.msk [vmem:[#allocation2 + $0x1b0] sm:$0xff] %vm40, 0.0
    %46 = vst.msk [vmem:[#allocation2 + $0x1b8] sm:$0xff] %vm40, 0.0
    %47 = vst.msk [vmem:[#allocation2 + $0x1c0] sm:$0x3] %vm43, 0.0
    %s48 = scalar_lea.vmem [#allocation2], 408
    %49 = vst.msk [vmem:[%s48] sm:$0xff] %vm40, 0.0
    %50 = vst.msk [vmem:[%s48 + $0x8] sm:$0xff] %vm40, 0.0
    %51 = vst.msk [vmem:[%s48 + $0x10] sm:$0x3] %vm43, 0.0
    %52 = vst.msk [vmem:[%s48 + $0x1b0] sm:$0xff] %vm40, 0.0
    %53 = vst.msk [vmem:[%s48 + $0x1b8] sm:$0xff] %vm40, 0.0
    %54 = vst.msk [vmem:[%s48 + $0x1c0] sm:$0x3] %vm43, 0.0
    %vm55 = vcmask 122880
    %56 = vst.msk [vmem:[#allocation2] sm:$0x1] %vm55, 0.0
    %57 = vst.msk [vmem:[#allocation2 + $0x18] sm:$0x1] %vm55, 0.0
    %58 = vst.msk [vmem:[#allocation2 + $0x30] sm:$0x1] %vm55, 0.0
    %59 = vst.msk [vmem:[#allocation2 + $0x48] sm:$0x1] %vm55, 0.0
    %60 = vst.msk [vmem:[#allocation2 + $0x60] sm:$0x1] %vm55, 0.0
    %61 = vst.msk [vmem:[#allocation2 + $0x78] sm:$0x1] %vm55, 0.0
    %62 = vst.msk [vmem:[#allocation2 + $0x90] sm:$0x1] %vm55, 0.0
    %63 = vst.msk [vmem:[#allocation2 + $0xa8] sm:$0x1] %vm55, 0.0
    %64 = vst.msk [vmem:[#allocation2 + $0xc0] sm:$0x1] %vm55, 0.0
    %65 = vst.msk [vmem:[#allocation2 + $0xd8] sm:$0x1] %vm55, 0.0
    %66 = vst.msk [vmem:[#allocation2 + $0xf0] sm:$0x1] %vm55, 0.0
    %67 = vst.msk [vmem:[#allocation2 + $0x108] sm:$0x1] %vm55, 0.0
    %68 = vst.msk [vmem:[#allocation2 + $0x120] sm:$0x1] %vm55, 0.0
    %69 = vst.msk [vmem:[#allocation2 + $0x138] sm:$0x1] %vm55, 0.0
    %70 = vst.msk [vmem:[#allocation2 + $0x150] sm:$0x1] %vm55, 0.0
    %71 = vst.msk [vmem:[#allocation2 + $0x168] sm:$0x1] %vm55, 0.0
    %72 = vst.msk [vmem:[#allocation2 + $0x180] sm:$0x1] %vm55, 0.0
    %73 = vst.msk [vmem:[#allocation2 + $0x198] sm:$0x1] %vm55, 0.0
    %74 = vst.msk [vmem:[#allocation2 + $0x1b0] sm:$0x1] %vm55, 0.0
    %75 = vst.msk [vmem:[#allocation2 + $0x1c8] sm:$0x1] %vm55, 0.0
    %76 = vst.msk [vmem:[#allocation2 + $0x1e0] sm:$0x1] %vm55, 0.0
    %77 = vst.msk [vmem:[#allocation2 + $0x1f8] sm:$0x1] %vm55, 0.0
    %78 = vst.msk [vmem:[#allocation2 + $0x210] sm:$0x1] %vm55, 0.0
    %79 = vst.msk [vmem:[#allocation2 + $0x228] sm:$0x1] %vm55, 0.0
    %80 = vst.msk [vmem:[#allocation2 + $0x240] sm:$0x1] %vm55, 0.0
    %81 = vst.msk [vmem:[#allocation2 + $0x258] sm:$0x1] %vm55, 0.0
    %82 = vst.msk [vmem:[#allocation2 + $0x270] sm:$0x1] %vm55, 0.0
    %83 = vst.msk [vmem:[#allocation2 + $0x288] sm:$0x1] %vm55, 0.0
    %84 = vst.msk [vmem:[#allocation2 + $0x2a0] sm:$0x1] %vm55, 0.0
    %85 = vst.msk [vmem:[#allocation2 + $0x2b8] sm:$0x1] %vm55, 0.0
    %86 = vst.msk [vmem:[#allocation2 + $0x2d0] sm:$0x1] %vm55, 0.0
    %87 = vst.msk [vmem:[#allocation2 + $0x2e8] sm:$0x1] %vm55, 0.0
    %88 = vst.msk [vmem:[#allocation2 + $0x300] sm:$0x1] %vm55, 0.0
    %89 = vst.msk [vmem:[#allocation2 + $0x318] sm:$0x1] %vm55, 0.0
    %90 = vst.msk [vmem:[#allocation2 + $0x330] sm:$0x1] %vm55, 0.0
    %91 = vst.msk [vmem:[#allocation2 + $0x348] sm:$0x1] %vm55, 0.0
    %92 = vst.msk [vmem:[#allocation2 + $0x11] sm:$0x1] %vm55, 0.0
    %93 = vst.msk [vmem:[#allocation2 + $0x29] sm:$0x1] %vm55, 0.0
    %94 = vst.msk [vmem:[#allocation2 + $0x41] sm:$0x1] %vm55, 0.0
    %95 = vst.msk [vmem:[#allocation2 + $0x59] sm:$0x1] %vm55, 0.0
    %96 = vst.msk [vmem:[#allocation2 + $0x71] sm:$0x1] %vm55, 0.0
    %97 = vst.msk [vmem:[#allocation2 + $0x89] sm:$0x1] %vm55, 0.0
    %98 = vst.msk [vmem:[#allocation2 + $0xa1] sm:$0x1] %vm55, 0.0
    %99 = vst.msk [vmem:[#allocation2 + $0xb9] sm:$0x1] %vm55, 0.0
    %100 = vst.msk [vmem:[#allocation2 + $0xd1] sm:$0x1] %vm55, 0.0
    %101 = vst.msk [vmem:[#allocation2 + $0xe9] sm:$0x1] %vm55, 0.0
    %102 = vst.msk [vmem:[#allocation2 + $0x101] sm:$0x1] %vm55, 0.0
    %103 = vst.msk [vmem:[#allocation2 + $0x119] sm:$0x1] %vm55, 0.0
    %104 = vst.msk [vmem:[#allocation2 + $0x131] sm:$0x1] %vm55, 0.0
    %105 = vst.msk [vmem:[#allocation2 + $0x149] sm:$0x1] %vm55, 0.0
    %106 = vst.msk [vmem:[#allocation2 + $0x161] sm:$0x1] %vm55, 0.0
    %107 = vst.msk [vmem:[#allocation2 + $0x179] sm:$0x1] %vm55, 0.0
    %108 = vst.msk [vmem:[#allocation2 + $0x191] sm:$0x1] %vm55, 0.0
    %109 = vst.msk [vmem:[#allocation2 + $0x1a9] sm:$0x1] %vm55, 0.0
    %110 = vst.msk [vmem:[#allocation2 + $0x1c1] sm:$0x1] %vm55, 0.0
    %111 = vst.msk [vmem:[#allocation2 + $0x1d9] sm:$0x1] %vm55, 0.0
    %112 = vst.msk [vmem:[#allocation2 + $0x1f1] sm:$0x1] %vm55, 0.0
    %113 = vst.msk [vmem:[#allocation2 + $0x209] sm:$0x1] %vm55, 0.0
    %114 = vst.msk [vmem:[#allocation2 + $0x221] sm:$0x1] %vm55, 0.0
    %115 = vst.msk [vmem:[#allocation2 + $0x239] sm:$0x1] %vm55, 0.0
    %116 = vst.msk [vmem:[#allocation2 + $0x251] sm:$0x1] %vm55, 0.0
    %117 = vst.msk [vmem:[#allocation2 + $0x269] sm:$0x1] %vm55, 0.0
    %118 = vst.msk [vmem:[#allocation2 + $0x281] sm:$0x1] %vm55, 0.0
    %119 = vst.msk [vmem:[#allocation2 + $0x299] sm:$0x1] %vm55, 0.0
    %120 = vst.msk [vmem:[#allocation2 + $0x2b1] sm:$0x1] %vm55, 0.0
    %121 = vst.msk [vmem:[#allocation2 + $0x2c9] sm:$0x1] %vm55, 0.0
    %122 = vst.msk [vmem:[#allocation2 + $0x2e1] sm:$0x1] %vm55, 0.0
    %123 = vst.msk [vmem:[#allocation2 + $0x2f9] sm:$0x1] %vm55, 0.0
    %124 = vst.msk [vmem:[#allocation2 + $0x311] sm:$0x1] %vm55, 0.0
    %125 = vst.msk [vmem:[#allocation2 + $0x329] sm:$0x1] %vm55, 0.0
    %126 = vst.msk [vmem:[#allocation2 + $0x341] sm:$0x1] %vm55, 0.0
    %127 = vst.msk [vmem:[#allocation2 + $0x359] sm:$0x1] %vm55, 0.0
    %v128 = vld [vmem:[#allocation3] sm:$0xff]
    %v129 = vld [vmem:[#allocation3 + $0x8] sm:$0xff]
    %v130 = vld [vmem:[#allocation3 + $0x10] sm:$0xff]
    %v131 = vld [vmem:[#allocation3 + $0x18] sm:$0xff]
    %v132 = vld [vmem:[#allocation3 + $0x20] sm:$0xff]
    %v133 = vld [vmem:[#allocation3 + $0x28] sm:$0xff]
    %v134 = vld [vmem:[#allocation3 + $0x30] sm:$0xff]
    %v135 = vld [vmem:[#allocation3 + $0x38] sm:$0xff]
    %v136 = vld [vmem:[#allocation3 + $0x40] sm:$0xff]
    %v137 = vld [vmem:[#allocation3 + $0x48] sm:$0xff]
    %v138 = vld [vmem:[#allocation3 + $0x50] sm:$0xff]
    %v139 = vld [vmem:[#allocation3 + $0x58] sm:$0xff]
    %v140 = vld [vmem:[#allocation3 + $0x60] sm:$0xff]
    %v141 = vld [vmem:[#allocation3 + $0x68] sm:$0xff]
    %v142 = vld [vmem:[#allocation3 + $0x70] sm:$0xff]
    %v143 = vld [vmem:[#allocation3 + $0x78] sm:$0xff]
    %v144 = vld [vmem:[#allocation3 + $0x80] sm:$0xff]
    %v145 = vld [vmem:[#allocation3 + $0x88] sm:$0xff]
    %v146 = vld [vmem:[#allocation3 + $0x90] sm:$0xff]
    %v147 = vld [vmem:[#allocation3 + $0x98] sm:$0xff]
    %v148 = vld [vmem:[#allocation3 + $0xa0] sm:$0xff]
    %v149 = vld [vmem:[#allocation3 + $0xa8] sm:$0xff]
    %v150 = vld [vmem:[#allocation3 + $0xb0] sm:$0xff]
    %v151 = vld [vmem:[#allocation3 + $0xb8] sm:$0xff]
    %v152 = vld [vmem:[#allocation3 + $0xc0] sm:$0xff]
    %v153 = vld [vmem:[#allocation3 + $0xc8] sm:$0xff]
    %v154 = vld [vmem:[#allocation3 + $0xd0] sm:$0xff]
    %v155 = vld [vmem:[#allocation3 + $0xd8] sm:$0xff]
    %v156 = vld [vmem:[#allocation3 + $0xe0] sm:$0xff]
    %v157 = vld [vmem:[#allocation3 + $0xe8] sm:$0xff]
    %v158 = vld [vmem:[#allocation3 + $0xf0] sm:$0xff]
    %v159 = vld [vmem:[#allocation3 + $0xf8] sm:$0xff]
    %v160 = vld [vmem:[#allocation3 + $0x100] sm:$0xff]
    %v161 = vld [vmem:[#allocation3 + $0x108] sm:$0xff]
    %v162 = vld [vmem:[#allocation3 + $0x110] sm:$0xff]
    %v163 = vld [vmem:[#allocation3 + $0x118] sm:$0xff]
    %v164 = vld [vmem:[#allocation3 + $0x120] sm:$0xff]
    %v165 = vld [vmem:[#allocation3 + $0x128] sm:$0xff]
    %v166 = vld [vmem:[#allocation3 + $0x130] sm:$0xff]
    %v167 = vld [vmem:[#allocation3 + $0x138] sm:$0xff]
    %v168 = vld [vmem:[#allocation3 + $0x140] sm:$0xff]
    %v169 = vld [vmem:[#allocation3 + $0x148] sm:$0xff]
    %v170 = vld [vmem:[#allocation3 + $0x150] sm:$0xff]
    %v171 = vld [vmem:[#allocation3 + $0x158] sm:$0xff]
    %v172 = vld [vmem:[#allocation3 + $0x160] sm:$0xff]
    %v173 = vld [vmem:[#allocation3 + $0x168] sm:$0xff]
    %v174 = vld [vmem:[#allocation3 + $0x170] sm:$0xff]
    %v175 = vld [vmem:[#allocation3 + $0x178] sm:$0xff]
    %v176 = vld [vmem:[#allocation3 + $0x180] sm:$0xff]
    %v177 = vld [vmem:[#allocation3 + $0x188] sm:$0xff]
    %v178 = vld [vmem:[#allocation3 + $0x190] sm:$0xff]
    %v179 = vld [vmem:[#allocation3 + $0x198] sm:$0xff]
    %v180 = vld [vmem:[#allocation3 + $0x1a0] sm:$0xff]
    %v181 = vld [vmem:[#allocation3 + $0x1a8] sm:$0xff]
    %v182 = vld [vmem:[#allocation3 + $0x1b0] sm:$0xff]
    %v183 = vld [vmem:[#allocation3 + $0x1b8] sm:$0xff]
    %v184 = vld [vmem:[#allocation3 + $0x1c0] sm:$0xff]
    %v185 = vld [vmem:[#allocation3 + $0x1c8] sm:$0xff]
    %v186 = vld [vmem:[#allocation3 + $0x1d0] sm:$0xff]
    %v187 = vld [vmem:[#allocation3 + $0x1d8] sm:$0xff]
    %v188 = vld [vmem:[#allocation3 + $0x1e0] sm:$0xff]
    %v189 = vld [vmem:[#allocation3 + $0x1e8] sm:$0xff]
    %v190 = vld [vmem:[#allocation3 + $0x1f0] sm:$0xff]
    %v191 = vld [vmem:[#allocation3 + $0x1f8] sm:$0xff]
    %s192 = scalar_lea.vmem [#allocation2], 24
    %193 = vst.msk [vmem:[%s192 + $0x1] sm:$0xff] %vm40, %v128
    %194 = vst.msk [vmem:[%s192 + $0x9] sm:$0xff] %vm40, %v129
    %195 = vst.msk [vmem:[%s192 + $0x19] sm:$0xff] %vm40, %v130
    %196 = vst.msk [vmem:[%s192 + $0x21] sm:$0xff] %vm40, %v131
    %197 = vst.msk [vmem:[%s192 + $0x31] sm:$0xff] %vm40, %v132
    %198 = vst.msk [vmem:[%s192 + $0x39] sm:$0xff] %vm40, %v133
    %199 = vst.msk [vmem:[%s192 + $0x49] sm:$0xff] %vm40, %v134
    %200 = vst.msk [vmem:[%s192 + $0x51] sm:$0xff] %vm40, %v135
    %201 = vst.msk [vmem:[%s192 + $0x61] sm:$0xff] %vm40, %v136
    %202 = vst.msk [vmem:[%s192 + $0x69] sm:$0xff] %vm40, %v137
    %203 = vst.msk [vmem:[%s192 + $0x79] sm:$0xff] %vm40, %v138
    %204 = vst.msk [vmem:[%s192 + $0x81] sm:$0xff] %vm40, %v139
    %205 = vst.msk [vmem:[%s192 + $0x91] sm:$0xff] %vm40, %v140
    %206 = vst.msk [vmem:[%s192 + $0x99] sm:$0xff] %vm40, %v141
    %207 = vst.msk [vmem:[%s192 + $0xa9] sm:$0xff] %vm40, %v142
    %208 = vst.msk [vmem:[%s192 + $0xb1] sm:$0xff] %vm40, %v143
    %209 = vst.msk [vmem:[%s192 + $0xc1] sm:$0xff] %vm40, %v144
    %210 = vst.msk [vmem:[%s192 + $0xc9] sm:$0xff] %vm40, %v145
    %211 = vst.msk [vmem:[%s192 + $0xd9] sm:$0xff] %vm40, %v146
    %212 = vst.msk [vmem:[%s192 + $0xe1] sm:$0xff] %vm40, %v147
    %213 = vst.msk [vmem:[%s192 + $0xf1] sm:$0xff] %vm40, %v148
    %214 = vst.msk [vmem:[%s192 + $0xf9] sm:$0xff] %vm40, %v149
    %215 = vst.msk [vmem:[%s192 + $0x109] sm:$0xff] %vm40, %v150
    %216 = vst.msk [vmem:[%s192 + $0x111] sm:$0xff] %vm40, %v151
    %217 = vst.msk [vmem:[%s192 + $0x121] sm:$0xff] %vm40, %v152
    %218 = vst.msk [vmem:[%s192 + $0x129] sm:$0xff] %vm40, %v153
    %219 = vst.msk [vmem:[%s192 + $0x139] sm:$0xff] %vm40, %v154
    %220 = vst.msk [vmem:[%s192 + $0x141] sm:$0xff] %vm40, %v155
    %221 = vst.msk [vmem:[%s192 + $0x151] sm:$0xff] %vm40, %v156
    %222 = vst.msk [vmem:[%s192 + $0x159] sm:$0xff] %vm40, %v157
    %223 = vst.msk [vmem:[%s192 + $0x169] sm:$0xff] %vm40, %v158
    %224 = vst.msk [vmem:[%s192 + $0x171] sm:$0xff] %vm40, %v159
    %225 = vst.msk [vmem:[%s192 + $0x1b1] sm:$0xff] %vm40, %v160
    %226 = vst.msk [vmem:[%s192 + $0x1b9] sm:$0xff] %vm40, %v161
    %227 = vst.msk [vmem:[%s192 + $0x1c9] sm:$0xff] %vm40, %v162
    %228 = vst.msk [vmem:[%s192 + $0x1d1] sm:$0xff] %vm40, %v163
    %229 = vst.msk [vmem:[%s192 + $0x1e1] sm:$0xff] %vm40, %v164
    %230 = vst.msk [vmem:[%s192 + $0x1e9] sm:$0xff] %vm40, %v165
    %231 = vst.msk [vmem:[%s192 + $0x1f9] sm:$0xff] %vm40, %v166
    %232 = vst.msk [vmem:[%s192 + $0x201] sm:$0xff] %vm40, %v167
    %233 = vst.msk [vmem:[%s192 + $0x211] sm:$0xff] %vm40, %v168
    %234 = vst.msk [vmem:[%s192 + $0x219] sm:$0xff] %vm40, %v169
    %235 = vst.msk [vmem:[%s192 + $0x229] sm:$0xff] %vm40, %v170
    %236 = vst.msk [vmem:[%s192 + $0x231] sm:$0xff] %vm40, %v171
    %237 = vst.msk [vmem:[%s192 + $0x241] sm:$0xff] %vm40, %v172
    %238 = vst.msk [vmem:[%s192 + $0x249] sm:$0xff] %vm40, %v173
    %239 = vst.msk [vmem:[%s192 + $0x259] sm:$0xff] %vm40, %v174
    %240 = vst.msk [vmem:[%s192 + $0x261] sm:$0xff] %vm40, %v175
    %241 = vst.msk [vmem:[%s192 + $0x271] sm:$0xff] %vm40, %v176
    %242 = vst.msk [vmem:[%s192 + $0x279] sm:$0xff] %vm40, %v177
    %243 = vst.msk [vmem:[%s192 + $0x289] sm:$0xff] %vm40, %v178
    %244 = vst.msk [vmem:[%s192 + $0x291] sm:$0xff] %vm40, %v179
    %245 = vst.msk [vmem:[%s192 + $0x2a1] sm:$0xff] %vm40, %v180
    %246 = vst.msk [vmem:[%s192 + $0x2a9] sm:$0xff] %vm40, %v181
    %247 = vst.msk [vmem:[%s192 + $0x2b9] sm:$0xff] %vm40, %v182
    %248 = vst.msk [vmem:[%s192 + $0x2c1] sm:$0xff] %vm40, %v183
    %249 = vst.msk [vmem:[%s192 + $0x2d1] sm:$0xff] %vm40, %v184
    %250 = vst.msk [vmem:[%s192 + $0x2d9] sm:$0xff] %vm40, %v185
    %251 = vst.msk [vmem:[%s192 + $0x2e9] sm:$0xff] %vm40, %v186
    %252 = vst.msk [vmem:[%s192 + $0x2f1] sm:$0xff] %vm40, %v187
    %253 = vst.msk [vmem:[%s192 + $0x301] sm:$0xff] %vm40, %v188
    %254 = vst.msk [vmem:[%s192 + $0x309] sm:$0xff] %vm40, %v189
    %255 = vst.msk [vmem:[%s192 + $0x319] sm:$0xff] %vm40, %v190
    %256 = vst.msk [vmem:[%s192 + $0x321] sm:$0xff] %vm40, %v191
    %v257 = vld [vmem:[#allocation2] sm:$0xff]
    %v258 = vld [vmem:[#allocation2 + $0x8] sm:$0xff]
    %v259 = vld [vmem:[#allocation2 + $0x18] sm:$0xff]
    %v260 = vld [vmem:[#allocation2 + $0x20] sm:$0xff]
    %v261 = vld [vmem:[#allocation2 + $0x30] sm:$0xff]
    %v262 = vld [vmem:[#allocation2 + $0x38] sm:$0xff]
    %v263 = vld [vmem:[#allocation2 + $0x48] sm:$0xff]
    %v264 = vld [vmem:[#allocation2 + $0x50] sm:$0xff]
    %v265 = vld [vmem:[#allocation2 + $0x60] sm:$0xff]
    %v266 = vld [vmem:[#allocation2 + $0x68] sm:$0xff]
    %v267 = vld [vmem:[#allocation2 + $0x78] sm:$0xff]
    %v268 = vld [vmem:[#allocation2 + $0x80] sm:$0xff]
    %v269 = vld [vmem:[#allocation2 + $0x90] sm:$0xff]
    %v270 = vld [vmem:[#allocation2 + $0x98] sm:$0xff]
    %v271 = vld [vmem:[#allocation2 + $0xa8] sm:$0xff]
    %v272 = vld [vmem:[#allocation2 + $0xb0] sm:$0xff]
    %v273 = vld [vmem:[#allocation2 + $0xc0] sm:$0xff]
    %v274 = vld [vmem:[#allocation2 + $0xc8] sm:$0xff]
    %v275 = vld [vmem:[#allocation2 + $0xd8] sm:$0xff]
    %v276 = vld [vmem:[#allocation2 + $0xe0] sm:$0xff]
    %v277 = vld [vmem:[#allocation2 + $0xf0] sm:$0xff]
    %v278 = vld [vmem:[#allocation2 + $0xf8] sm:$0xff]
    %v279 = vld [vmem:[#allocation2 + $0x108] sm:$0xff]
    %v280 = vld [vmem:[#allocation2 + $0x110] sm:$0xff]
    %v281 = vld [vmem:[#allocation2 + $0x120] sm:$0xff]
    %v282 = vld [vmem:[#allocation2 + $0x128] sm:$0xff]
    %v283 = vld [vmem:[#allocation2 + $0x138] sm:$0xff]
    %v284 = vld [vmem:[#allocation2 + $0x140] sm:$0xff]
    %v285 = vld [vmem:[#allocation2 + $0x150] sm:$0xff]
    %v286 = vld [vmem:[#allocation2 + $0x158] sm:$0xff]
    %v287 = vld [vmem:[#allocation2 + $0x168] sm:$0xff]
    %v288 = vld [vmem:[#allocation2 + $0x170] sm:$0xff]
    %v289 = vld [vmem:[#allocation2 + $0x1b0] sm:$0xff]
    %v290 = vld [vmem:[#allocation2 + $0x1b8] sm:$0xff]
    %v291 = vld [vmem:[#allocation2 + $0x1c8] sm:$0xff]
    %v292 = vld [vmem:[#allocation2 + $0x1d0] sm:$0xff]
    %v293 = vld [vmem:[#allocation2 + $0x1e0] sm:$0xff]
    %v294 = vld [vmem:[#allocation2 + $0x1e8] sm:$0xff]
    %v295 = vld [vmem:[#allocation2 + $0x1f8] sm:$0xff]
    %v296 = vld [vmem:[#allocation2 + $0x200] sm:$0xff]
    %v297 = vld [vmem:[#allocation2 + $0x210] sm:$0xff]
    %v298 = vld [vmem:[#allocation2 + $0x218] sm:$0xff]
    %v299 = vld [vmem:[#allocation2 + $0x228] sm:$0xff]
    %v300 = vld [vmem:[#allocation2 + $0x230] sm:$0xff]
    %v301 = vld [vmem:[#allocation2 + $0x240] sm:$0xff]
    %v302 = vld [vmem:[#allocation2 + $0x248] sm:$0xff]
    %v303 = vld [vmem:[#allocation2 + $0x258] sm:$0xff]
    %v304 = vld [vmem:[#allocation2 + $0x260] sm:$0xff]
    %v305 = vld [vmem:[#allocation2 + $0x270] sm:$0xff]
    %v306 = vld [vmem:[#allocation2 + $0x278] sm:$0xff]
    %v307 = vld [vmem:[#allocation2 + $0x288] sm:$0xff]
    %v308 = vld [vmem:[#allocation2 + $0x290] sm:$0xff]
    %v309 = vld [vmem:[#allocation2 + $0x2a0] sm:$0xff]
    %v310 = vld [vmem:[#allocation2 + $0x2a8] sm:$0xff]
    %v311 = vld [vmem:[#allocation2 + $0x2b8] sm:$0xff]
    %v312 = vld [vmem:[#allocation2 + $0x2c0] sm:$0xff]
    %v313 = vld [vmem:[#allocation2 + $0x2d0] sm:$0xff]
    %v314 = vld [vmem:[#allocation2 + $0x2d8] sm:$0xff]
    %v315 = vld [vmem:[#allocation2 + $0x2e8] sm:$0xff]
    %v316 = vld [vmem:[#allocation2 + $0x2f0] sm:$0xff]
    %v317 = vld [vmem:[#allocation2 + $0x300] sm:$0xff]
    %v318 = vld [vmem:[#allocation2 + $0x308] sm:$0xff]
    %v319 = vld [vmem:[#allocation2 + $0x318] sm:$0xff]
    %v320 = vld [vmem:[#allocation2 + $0x320] sm:$0xff]
    %v321 = vld [vmem:[#allocation2 + $0x1] sm:$0xff]
    %v322 = vld [vmem:[#allocation2 + $0x9] sm:$0xff]
    %v323 = vld [vmem:[#allocation2 + $0x19] sm:$0xff]
    %v324 = vld [vmem:[#allocation2 + $0x21] sm:$0xff]
    %v325 = vld [vmem:[#allocation2 + $0x31] sm:$0xff]
    %v326 = vld [vmem:[#allocation2 + $0x39] sm:$0xff]
    %v327 = vld [vmem:[#allocation2 + $0x49] sm:$0xff]
    %v328 = vld [vmem:[#allocation2 + $0x51] sm:$0xff]
    %v329 = vld [vmem:[#allocation2 + $0x61] sm:$0xff]
    %v330 = vld [vmem:[#allocation2 + $0x69] sm:$0xff]
    %v331 = vld [vmem:[#allocation2 + $0x79] sm:$0xff]
    %v332 = vld [vmem:[#allocation2 + $0x81] sm:$0xff]
    %v333 = vld [vmem:[#allocation2 + $0x91] sm:$0xff]
    %v334 = vld [vmem:[#allocation2 + $0x99] sm:$0xff]
    %v335 = vld [vmem:[#allocation2 + $0xa9] sm:$0xff]
    %v336 = vld [vmem:[#allocation2 + $0xb1] sm:$0xff]
    %v337 = vld [vmem:[#allocation2 + $0xc1] sm:$0xff]
    %v338 = vld [vmem:[#allocation2 + $0xc9] sm:$0xff]
    %v339 = vld [vmem:[#allocation2 + $0xd9] sm:$0xff]
    %v340 = vld [vmem:[#allocation2 + $0xe1] sm:$0xff]
    %v341 = vld [vmem:[#allocation2 + $0xf1] sm:$0xff]
    %v342 = vld [vmem:[#allocation2 + $0xf9] sm:$0xff]
    %v343 = vld [vmem:[#allocation2 + $0x109] sm:$0xff]
    %v344 = vld [vmem:[#allocation2 + $0x111] sm:$0xff]
    %v345 = vld [vmem:[#allocation2 + $0x121] sm:$0xff]
    %v346 = vld [vmem:[#allocation2 + $0x129] sm:$0xff]
    %v347 = vld [vmem:[#allocation2 + $0x139] sm:$0xff]
    %v348 = vld [vmem:[#allocation2 + $0x141] sm:$0xff]
    %v349 = vld [vmem:[#allocation2 + $0x151] sm:$0xff]
    %v350 = vld [vmem:[#allocation2 + $0x159] sm:$0xff]
    %v351 = vld [vmem:[#allocation2 + $0x169] sm:$0xff]
    %v352 = vld [vmem:[#allocation2 + $0x171] sm:$0xff]
    %v353 = vld [vmem:[#allocation2 + $0x1b1] sm:$0xff]
    %v354 = vld [vmem:[#allocation2 + $0x1b9] sm:$0xff]
    %v355 = vld [vmem:[#allocation2 + $0x1c9] sm:$0xff]
    %v356 = vld [vmem:[#allocation2 + $0x1d1] sm:$0xff]
    %v357 = vld [vmem:[#allocation2 + $0x1e1] sm:$0xff]
    %v358 = vld [vmem:[#allocation2 + $0x1e9] sm:$0xff]
    %v359 = vld [vmem:[#allocation2 + $0x1f9] sm:$0xff]
    %v360 = vld [vmem:[#allocation2 + $0x201] sm:$0xff]
    %v361 = vld [vmem:[#allocation2 + $0x211] sm:$0xff]
    %v362 = vld [vmem:[#allocation2 + $0x219] sm:$0xff]
    %v363 = vld [vmem:[#allocation2 + $0x229] sm:$0xff]
    %v364 = vld [vmem:[#allocation2 + $0x231] sm:$0xff]
    %v365 = vld [vmem:[#allocation2 + $0x241] sm:$0xff]
    %v366 = vld [vmem:[#allocation2 + $0x249] sm:$0xff]
    %v367 = vld [vmem:[#allocation2 + $0x259] sm:$0xff]
    %v368 = vld [vmem:[#allocation2 + $0x261] sm:$0xff]
    %v369 = vld [vmem:[#allocation2 + $0x271] sm:$0xff]
    %v370 = vld [vmem:[#allocation2 + $0x279] sm:$0xff]
    %v371 = vld [vmem:[#allocation2 + $0x289] sm:$0xff]
    %v372 = vld [vmem:[#allocation2 + $0x291] sm:$0xff]
    %v373 = vld [vmem:[#allocation2 + $0x2a1] sm:$0xff]
    %v374 = vld [vmem:[#allocation2 + $0x2a9] sm:$0xff]
    %v375 = vld [vmem:[#allocation2 + $0x2b9] sm:$0xff]
    %v376 = vld [vmem:[#allocation2 + $0x2c1] sm:$0xff]
    %v377 = vld [vmem:[#allocation2 + $0x2d1] sm:$0xff]
    %v378 = vld [vmem:[#allocation2 + $0x2d9] sm:$0xff]
    %v379 = vld [vmem:[#allocation2 + $0x2e9] sm:$0xff]
    %v380 = vld [vmem:[#allocation2 + $0x2f1] sm:$0xff]
    %v381 = vld [vmem:[#allocation2 + $0x301] sm:$0xff]
    %v382 = vld [vmem:[#allocation2 + $0x309] sm:$0xff]
    %v383 = vld [vmem:[#allocation2 + $0x319] sm:$0xff]
    %v384 = vld [vmem:[#allocation2 + $0x321] sm:$0xff]
    %v385 = vld [vmem:[#allocation2 + $0x2] sm:$0xff]
    %v386 = vld [vmem:[#allocation2 + $0xa] sm:$0xff]
    %v387 = vld [vmem:[#allocation2 + $0x1a] sm:$0xff]
    %v388 = vld [vmem:[#allocation2 + $0x22] sm:$0xff]
    %v389 = vld [vmem:[#allocation2 + $0x32] sm:$0xff]
    %v390 = vld [vmem:[#allocation2 + $0x3a] sm:$0xff]
    %v391 = vld [vmem:[#allocation2 + $0x4a] sm:$0xff]
    %v392 = vld [vmem:[#allocation2 + $0x52] sm:$0xff]
    %v393 = vld [vmem:[#allocation2 + $0x62] sm:$0xff]
    %v394 = vld [vmem:[#allocation2 + $0x6a] sm:$0xff]
    %v395 = vld [vmem:[#allocation2 + $0x7a] sm:$0xff]
    %v396 = vld [vmem:[#allocation2 + $0x82] sm:$0xff]
    %v397 = vld [vmem:[#allocation2 + $0x92] sm:$0xff]
    %v398 = vld [vmem:[#allocation2 + $0x9a] sm:$0xff]
    %v399 = vld [vmem:[#allocation2 + $0xaa] sm:$0xff]
    %v400 = vld [vmem:[#allocation2 + $0xb2] sm:$0xff]
    %v401 = vld [vmem:[#allocation2 + $0xc2] sm:$0xff]
    %v402 = vld [vmem:[#allocation2 + $0xca] sm:$0xff]
    %v403 = vld [vmem:[#allocation2 + $0xda] sm:$0xff]
    %v404 = vld [vmem:[#allocation2 + $0xe2] sm:$0xff]
    %v405 = vld [vmem:[#allocation2 + $0xf2] sm:$0xff]
    %v406 = vld [vmem:[#allocation2 + $0xfa] sm:$0xff]
    %v407 = vld [vmem:[#allocation2 + $0x10a] sm:$0xff]
    %v408 = vld [vmem:[#allocation2 + $0x112] sm:$0xff]
    %v409 = vld [vmem:[#allocation2 + $0x122] sm:$0xff]
    %v410 = vld [vmem:[#allocation2 + $0x12a] sm:$0xff]
    %v411 = vld [vmem:[#allocation2 + $0x13a] sm:$0xff]
    %v412 = vld [vmem:[#allocation2 + $0x142] sm:$0xff]
    %v413 = vld [vmem:[#allocation2 + $0x152] sm:$0xff]
    %v414 = vld [vmem:[#allocation2 + $0x15a] sm:$0xff]
    %v415 = vld [vmem:[#allocation2 + $0x16a] sm:$0xff]
    %v416 = vld [vmem:[#allocation2 + $0x172] sm:$0xff]
    %v417 = vld [vmem:[#allocation2 + $0x1b2] sm:$0xff]
    %v418 = vld [vmem:[#allocation2 + $0x1ba] sm:$0xff]
    %v419 = vld [vmem:[#allocation2 + $0x1ca] sm:$0xff]
    %v420 = vld [vmem:[#allocation2 + $0x1d2] sm:$0xff]
    %v421 = vld [vmem:[#allocation2 + $0x1e2] sm:$0xff]
    %v422 = vld [vmem:[#allocation2 + $0x1ea] sm:$0xff]
    %v423 = vld [vmem:[#allocation2 + $0x1fa] sm:$0xff]
    %v424 = vld [vmem:[#allocation2 + $0x202] sm:$0xff]
    %v425 = vld [vmem:[#allocation2 + $0x212] sm:$0xff]
    %v426 = vld [vmem:[#allocation2 + $0x21a] sm:$0xff]
    %v427 = vld [vmem:[#allocation2 + $0x22a] sm:$0xff]
    %v428 = vld [vmem:[#allocation2 + $0x232] sm:$0xff]
    %v429 = vld [vmem:[#allocation2 + $0x242] sm:$0xff]
    %v430 = vld [vmem:[#allocation2 + $0x24a] sm:$0xff]
    %v431 = vld [vmem:[#allocation2 + $0x25a] sm:$0xff]
    %v432 = vld [vmem:[#allocation2 + $0x262] sm:$0xff]
    %v433 = vld [vmem:[#allocation2 + $0x272] sm:$0xff]
    %v434 = vld [vmem:[#allocation2 + $0x27a] sm:$0xff]
    %v435 = vld [vmem:[#allocation2 + $0x28a] sm:$0xff]
    %v436 = vld [vmem:[#allocation2 + $0x292] sm:$0xff]
    %v437 = vld [vmem:[#allocation2 + $0x2a2] sm:$0xff]
    %v438 = vld [vmem:[#allocation2 + $0x2aa] sm:$0xff]
    %v439 = vld [vmem:[#allocation2 + $0x2ba] sm:$0xff]
    %v440 = vld [vmem:[#allocation2 + $0x2c2] sm:$0xff]
    %v441 = vld [vmem:[#allocation2 + $0x2d2] sm:$0xff]
    %v442 = vld [vmem:[#allocation2 + $0x2da] sm:$0xff]
    %v443 = vld [vmem:[#allocation2 + $0x2ea] sm:$0xff]
    %v444 = vld [vmem:[#allocation2 + $0x2f2] sm:$0xff]
    %v445 = vld [vmem:[#allocation2 + $0x302] sm:$0xff]
    %v446 = vld [vmem:[#allocation2 + $0x30a] sm:$0xff]
    %v447 = vld [vmem:[#allocation2 + $0x31a] sm:$0xff]
    %v448 = vld [vmem:[#allocation2 + $0x322] sm:$0xff]
    %v449 = vld [vmem:[%s192] sm:$0xff]
    %v450 = vld [vmem:[%s192 + $0x8] sm:$0xff]
    %v451 = vld [vmem:[%s192 + $0x18] sm:$0xff]
    %v452 = vld [vmem:[%s192 + $0x20] sm:$0xff]
    %v453 = vld [vmem:[%s192 + $0x30] sm:$0xff]
    %v454 = vld [vmem:[%s192 + $0x38] sm:$0xff]
    %v455 = vld [vmem:[%s192 + $0x48] sm:$0xff]
    %v456 = vld [vmem:[%s192 + $0x50] sm:$0xff]
    %v457 = vld [vmem:[%s192 + $0x60] sm:$0xff]
    %v458 = vld [vmem:[%s192 + $0x68] sm:$0xff]
    %v459 = vld [vmem:[%s192 + $0x78] sm:$0xff]
    %v460 = vld [vmem:[%s192 + $0x80] sm:$0xff]
    %v461 = vld [vmem:[%s192 + $0x90] sm:$0xff]
    %v462 = vld [vmem:[%s192 + $0x98] sm:$0xff]
    %v463 = vld [vmem:[%s192 + $0xa8] sm:$0xff]
    %v464 = vld [vmem:[%s192 + $0xb0] sm:$0xff]
    %v465 = vld [vmem:[%s192 + $0xc0] sm:$0xff]
    %v466 = vld [vmem:[%s192 + $0xc8] sm:$0xff]
    %v467 = vld [vmem:[%s192 + $0xd8] sm:$0xff]
    %v468 = vld [vmem:[%s192 + $0xe0] sm:$0xff]
    %v469 = vld [vmem:[%s192 + $0xf0] sm:$0xff]
    %v470 = vld [vmem:[%s192 + $0xf8] sm:$0xff]
    %v471 = vld [vmem:[%s192 + $0x108] sm:$0xff]
    %v472 = vld [vmem:[%s192 + $0x110] sm:$0xff]
    %v473 = vld [vmem:[%s192 + $0x120] sm:$0xff]
    %v474 = vld [vmem:[%s192 + $0x128] sm:$0xff]
    %v475 = vld [vmem:[%s192 + $0x138] sm:$0xff]
    %v476 = vld [vmem:[%s192 + $0x140] sm:$0xff]
    %v477 = vld [vmem:[%s192 + $0x150] sm:$0xff]
    %v478 = vld [vmem:[%s192 + $0x158] sm:$0xff]
    %v479 = vld [vmem:[%s192 + $0x168] sm:$0xff]
    %v480 = vld [vmem:[%s192 + $0x170] sm:$0xff]
    %v481 = vld [vmem:[%s192 + $0x1b0] sm:$0xff]
    %v482 = vld [vmem:[%s192 + $0x1b8] sm:$0xff]
    %v483 = vld [vmem:[%s192 + $0x1c8] sm:$0xff]
    %v484 = vld [vmem:[%s192 + $0x1d0] sm:$0xff]
    %v485 = vld [vmem:[%s192 + $0x1e0] sm:$0xff]
    %v486 = vld [vmem:[%s192 + $0x1e8] sm:$0xff]
    %v487 = vld [vmem:[%s192 + $0x1f8] sm:$0xff]
    %v488 = vld [vmem:[%s192 + $0x200] sm:$0xff]
    %v489 = vld [vmem:[%s192 + $0x210] sm:$0xff]
    %v490 = vld [vmem:[%s192 + $0x218] sm:$0xff]
    %v491 = vld [vmem:[%s192 + $0x228] sm:$0xff]
    %v492 = vld [vmem:[%s192 + $0x230] sm:$0xff]
    %v493 = vld [vmem:[%s192 + $0x240] sm:$0xff]
    %v494 = vld [vmem:[%s192 + $0x248] sm:$0xff]
    %v495 = vld [vmem:[%s192 + $0x258] sm:$0xff]
    %v496 = vld [vmem:[%s192 + $0x260] sm:$0xff]
    %v497 = vld [vmem:[%s192 + $0x270] sm:$0xff]
    %v498 = vld [vmem:[%s192 + $0x278] sm:$0xff]
    %v499 = vld [vmem:[%s192 + $0x288] sm:$0xff]
    %v500 = vld [vmem:[%s192 + $0x290] sm:$0xff]
    %v501 = vld [vmem:[%s192 + $0x2a0] sm:$0xff]
    %v502 = vld [vmem:[%s192 + $0x2a8] sm:$0xff]
    %v503 = vld [vmem:[%s192 + $0x2b8] sm:$0xff]
    %v504 = vld [vmem:[%s192 + $0x2c0] sm:$0xff]
    %v505 = vld [vmem:[%s192 + $0x2d0] sm:$0xff]
    %v506 = vld [vmem:[%s192 + $0x2d8] sm:$0xff]
    %v507 = vld [vmem:[%s192 + $0x2e8] sm:$0xff]
    %v508 = vld [vmem:[%s192 + $0x2f0] sm:$0xff]
    %v509 = vld [vmem:[%s192 + $0x300] sm:$0xff]
    %v510 = vld [vmem:[%s192 + $0x308] sm:$0xff]
    %v511 = vld [vmem:[%s192 + $0x318] sm:$0xff]
    %v512 = vld [vmem:[%s192 + $0x320] sm:$0xff]
    %v513 = vld [vmem:[%s192 + $0x1] sm:$0xff]
    %v514 = vld [vmem:[%s192 + $0x9] sm:$0xff]
    %v515 = vld [vmem:[%s192 + $0x19] sm:$0xff]
    %v516 = vld [vmem:[%s192 + $0x21] sm:$0xff]
    %v517 = vld [vmem:[%s192 + $0x31] sm:$0xff]
    %v518 = vld [vmem:[%s192 + $0x39] sm:$0xff]
    %v519 = vld [vmem:[%s192 + $0x49] sm:$0xff]
    %v520 = vld [vmem:[%s192 + $0x51] sm:$0xff]
    %v521 = vld [vmem:[%s192 + $0x61] sm:$0xff]
    %v522 = vld [vmem:[%s192 + $0x69] sm:$0xff]
    %v523 = vld [vmem:[%s192 + $0x79] sm:$0xff]
    %v524 = vld [vmem:[%s192 + $0x81] sm:$0xff]
    %v525 = vld [vmem:[%s192 + $0x91] sm:$0xff]
    %v526 = vld [vmem:[%s192 + $0x99] sm:$0xff]
    %v527 = vld [vmem:[%s192 + $0xa9] sm:$0xff]
    %v528 = vld [vmem:[%s192 + $0xb1] sm:$0xff]
    %v529 = vld [vmem:[%s192 + $0xc1] sm:$0xff]
    %v530 = vld [vmem:[%s192 + $0xc9] sm:$0xff]
    %v531 = vld [vmem:[%s192 + $0xd9] sm:$0xff]
    %v532 = vld [vmem:[%s192 + $0xe1] sm:$0xff]
    %v533 = vld [vmem:[%s192 + $0xf1] sm:$0xff]
    %v534 = vld [vmem:[%s192 + $0xf9] sm:$0xff]
    %v535 = vld [vmem:[%s192 + $0x109] sm:$0xff]
    %v536 = vld [vmem:[%s192 + $0x111] sm:$0xff]
    %v537 = vld [vmem:[%s192 + $0x121] sm:$0xff]
    %v538 = vld [vmem:[%s192 + $0x129] sm:$0xff]
    %v539 = vld [vmem:[%s192 + $0x139] sm:$0xff]
    %v540 = vld [vmem:[%s192 + $0x141] sm:$0xff]
    %v541 = vld [vmem:[%s192 + $0x151] sm:$0xff]
    %v542 = vld [vmem:[%s192 + $0x159] sm:$0xff]
    %v543 = vld [vmem:[%s192 + $0x169] sm:$0xff]
    %v544 = vld [vmem:[%s192 + $0x171] sm:$0xff]
    %v545 = vld [vmem:[%s192 + $0x1b1] sm:$0xff]
    %v546 = vld [vmem:[%s192 + $0x1b9] sm:$0xff]
    %v547 = vld [vmem:[%s192 + $0x1c9] sm:$0xff]
    %v548 = vld [vmem:[%s192 + $0x1d1] sm:$0xff]
    %v549 = vld [vmem:[%s192 + $0x1e1] sm:$0xff]
    %v550 = vld [vmem:[%s192 + $0x1e9] sm:$0xff]
    %v551 = vld [vmem:[%s192 + $0x1f9] sm:$0xff]
    %v552 = vld [vmem:[%s192 + $0x201] sm:$0xff]
    %v553 = vld [vmem:[%s192 + $0x211] sm:$0xff]
    %v554 = vld [vmem:[%s192 + $0x219] sm:$0xff]
    %v555 = vld [vmem:[%s192 + $0x229] sm:$0xff]
    %v556 = vld [vmem:[%s192 + $0x231] sm:$0xff]
    %v557 = vld [vmem:[%s192 + $0x241] sm:$0xff]
    %v558 = vld [vmem:[%s192 + $0x249] sm:$0xff]
    %v559 = vld [vmem:[%s192 + $0x259] sm:$0xff]
    %v560 = vld [vmem:[%s192 + $0x261] sm:$0xff]
    %v561 = vld [vmem:[%s192 + $0x271] sm:$0xff]
    %v562 = vld [vmem:[%s192 + $0x279] sm:$0xff]
    %v563 = vld [vmem:[%s192 + $0x289] sm:$0xff]
    %v564 = vld [vmem:[%s192 + $0x291] sm:$0xff]
    %v565 = vld [vmem:[%s192 + $0x2a1] sm:$0xff]
    %v566 = vld [vmem:[%s192 + $0x2a9] sm:$0xff]
    %v567 = vld [vmem:[%s192 + $0x2b9] sm:$0xff]
    %v568 = vld [vmem:[%s192 + $0x2c1] sm:$0xff]
    %v569 = vld [vmem:[%s192 + $0x2d1] sm:$0xff]
    %v570 = vld [vmem:[%s192 + $0x2d9] sm:$0xff]
    %v571 = vld [vmem:[%s192 + $0x2e9] sm:$0xff]
    %v572 = vld [vmem:[%s192 + $0x2f1] sm:$0xff]
    %v573 = vld [vmem:[%s192 + $0x301] sm:$0xff]
    %v574 = vld [vmem:[%s192 + $0x309] sm:$0xff]
    %v575 = vld [vmem:[%s192 + $0x319] sm:$0xff]
    %v576 = vld [vmem:[%s192 + $0x321] sm:$0xff]
    %v577 = vld [vmem:[%s192 + $0x2] sm:$0xff]
    %v578 = vld [vmem:[%s192 + $0xa] sm:$0xff]
    %v579 = vld [vmem:[%s192 + $0x1a] sm:$0xff]
    %v580 = vld [vmem:[%s192 + $0x22] sm:$0xff]
    %v581 = vld [vmem:[%s192 + $0x32] sm:$0xff]
    %v582 = vld [vmem:[%s192 + $0x3a] sm:$0xff]
    %v583 = vld [vmem:[%s192 + $0x4a] sm:$0xff]
    %v584 = vld [vmem:[%s192 + $0x52] sm:$0xff]
    %v585 = vld [vmem:[%s192 + $0x62] sm:$0xff]
    %v586 = vld [vmem:[%s192 + $0x6a] sm:$0xff]
    %v587 = vld [vmem:[%s192 + $0x7a] sm:$0xff]
    %v588 = vld [vmem:[%s192 + $0x82] sm:$0xff]
    %v589 = vld [vmem:[%s192 + $0x92] sm:$0xff]
    %v590 = vld [vmem:[%s192 + $0x9a] sm:$0xff]
    %v591 = vld [vmem:[%s192 + $0xaa] sm:$0xff]
    %v592 = vld [vmem:[%s192 + $0xb2] sm:$0xff]
    %v593 = vld [vmem:[%s192 + $0xc2] sm:$0xff]
    %v594 = vld [vmem:[%s192 + $0xca] sm:$0xff]
    %v595 = vld [vmem:[%s192 + $0xda] sm:$0xff]
    %v596 = vld [vmem:[%s192 + $0xe2] sm:$0xff]
    %v597 = vld [vmem:[%s192 + $0xf2] sm:$0xff]
    %v598 = vld [vmem:[%s192 + $0xfa] sm:$0xff]
    %v599 = vld [vmem:[%s192 + $0x10a] sm:$0xff]
    %v600 = vld [vmem:[%s192 + $0x112] sm:$0xff]
    %v601 = vld [vmem:[%s192 + $0x122] sm:$0xff]
    %v602 = vld [vmem:[%s192 + $0x12a] sm:$0xff]
    %v603 = vld [vmem:[%s192 + $0x13a] sm:$0xff]
    %v604 = vld [vmem:[%s192 + $0x142] sm:$0xff]
    %v605 = vld [vmem:[%s192 + $0x152] sm:$0xff]
    %v606 = vld [vmem:[%s192 + $0x15a] sm:$0xff]
    %v607 = vld [vmem:[%s192 + $0x16a] sm:$0xff]
    %v608 = vld [vmem:[%s192 + $0x172] sm:$0xff]
    %v609 = vld [vmem:[%s192 + $0x1b2] sm:$0xff]
    %v610 = vld [vmem:[%s192 + $0x1ba] sm:$0xff]
    %v611 = vld [vmem:[%s192 + $0x1ca] sm:$0xff]
    %v612 = vld [vmem:[%s192 + $0x1d2] sm:$0xff]
    %v613 = vld [vmem:[%s192 + $0x1e2] sm:$0xff]
    %v614 = vld [vmem:[%s192 + $0x1ea] sm:$0xff]
    %v615 = vld [vmem:[%s192 + $0x1fa] sm:$0xff]
    %v616 = vld [vmem:[%s192 + $0x202] sm:$0xff]
    %v617 = vld [vmem:[%s192 + $0x212] sm:$0xff]
    %v618 = vld [vmem:[%s192 + $0x21a] sm:$0xff]
    %v619 = vld [vmem:[%s192 + $0x22a] sm:$0xff]
    %v620 = vld [vmem:[%s192 + $0x232] sm:$0xff]
    %v621 = vld [vmem:[%s192 + $0x242] sm:$0xff]
    %v622 = vld [vmem:[%s192 + $0x24a] sm:$0xff]
    %v623 = vld [vmem:[%s192 + $0x25a] sm:$0xff]
    %v624 = vld [vmem:[%s192 + $0x262] sm:$0xff]
    %v625 = vld [vmem:[%s192 + $0x272] sm:$0xff]
    %v626 = vld [vmem:[%s192 + $0x27a] sm:$0xff]
    %v627 = vld [vmem:[%s192 + $0x28a] sm:$0xff]
    %v628 = vld [vmem:[%s192 + $0x292] sm:$0xff]
    %v629 = vld [vmem:[%s192 + $0x2a2] sm:$0xff]
    %v630 = vld [vmem:[%s192 + $0x2aa] sm:$0xff]
    %v631 = vld [vmem:[%s192 + $0x2ba] sm:$0xff]
    %v632 = vld [vmem:[%s192 + $0x2c2] sm:$0xff]
    %v633 = vld [vmem:[%s192 + $0x2d2] sm:$0xff]
    %v634 = vld [vmem:[%s192 + $0x2da] sm:$0xff]
    %v635 = vld [vmem:[%s192 + $0x2ea] sm:$0xff]
    %v636 = vld [vmem:[%s192 + $0x2f2] sm:$0xff]
    %v637 = vld [vmem:[%s192 + $0x302] sm:$0xff]
    %v638 = vld [vmem:[%s192 + $0x30a] sm:$0xff]
    %v639 = vld [vmem:[%s192 + $0x31a] sm:$0xff]
    %v640 = vld [vmem:[%s192 + $0x322] sm:$0xff]
    %s641 = scalar_lea.vmem [#allocation2], 48
    %v642 = vld [vmem:[%s641] sm:$0xff]
    %v643 = vld [vmem:[%s641 + $0x8] sm:$0xff]
    %v644 = vld [vmem:[%s641 + $0x18] sm:$0xff]
    %v645 = vld [vmem:[%s641 + $0x20] sm:$0xff]
    %v646 = vld [vmem:[%s641 + $0x30] sm:$0xff]
    %v647 = vld [vmem:[%s641 + $0x38] sm:$0xff]
    %v648 = vld [vmem:[%s641 + $0x48] sm:$0xff]
    %v649 = vld [vmem:[%s641 + $0x50] sm:$0xff]
    %v650 = vld [vmem:[%s641 + $0x60] sm:$0xff]
    %v651 = vld [vmem:[%s641 + $0x68] sm:$0xff]
    %v652 = vld [vmem:[%s641 + $0x78] sm:$0xff]
    %v653 = vld [vmem:[%s641 + $0x80] sm:$0xff]
    %v654 = vld [vmem:[%s641 + $0x90] sm:$0xff]
    %v655 = vld [vmem:[%s641 + $0x98] sm:$0xff]
    %v656 = vld [vmem:[%s641 + $0xa8] sm:$0xff]
    %v657 = vld [vmem:[%s641 + $0xb0] sm:$0xff]
    %v658 = vld [vmem:[%s641 + $0xc0] sm:$0xff]
    %v659 = vld [vmem:[%s641 + $0xc8] sm:$0xff]
    %v660 = vld [vmem:[%s641 + $0xd8] sm:$0xff]
    %v661 = vld [vmem:[%s641 + $0xe0] sm:$0xff]
    %v662 = vld [vmem:[%s641 + $0xf0] sm:$0xff]
    %v663 = vld [vmem:[%s641 + $0xf8] sm:$0xff]
    %v664 = vld [vmem:[%s641 + $0x108] sm:$0xff]
    %v665 = vld [vmem:[%s641 + $0x110] sm:$0xff]
    %v666 = vld [vmem:[%s641 + $0x120] sm:$0xff]
    %v667 = vld [vmem:[%s641 + $0x128] sm:$0xff]
    %v668 = vld [vmem:[%s641 + $0x138] sm:$0xff]
    %v669 = vld [vmem:[%s641 + $0x140] sm:$0xff]
    %v670 = vld [vmem:[%s641 + $0x150] sm:$0xff]
    %v671 = vld [vmem:[%s641 + $0x158] sm:$0xff]
    %v672 = vld [vmem:[%s641 + $0x168] sm:$0xff]
    %v673 = vld [vmem:[%s641 + $0x170] sm:$0xff]
    %v674 = vld [vmem:[%s641 + $0x1b0] sm:$0xff]
    %v675 = vld [vmem:[%s641 + $0x1b8] sm:$0xff]
    %v676 = vld [vmem:[%s641 + $0x1c8] sm:$0xff]
    %v677 = vld [vmem:[%s641 + $0x1d0] sm:$0xff]
    %v678 = vld [vmem:[%s641 + $0x1e0] sm:$0xff]
    %v679 = vld [vmem:[%s641 + $0x1e8] sm:$0xff]
    %v680 = vld [vmem:[%s641 + $0x1f8] sm:$0xff]
    %v681 = vld [vmem:[%s641 + $0x200] sm:$0xff]
    %v682 = vld [vmem:[%s641 + $0x210] sm:$0xff]
    %v683 = vld [vmem:[%s641 + $0x218] sm:$0xff]
    %v684 = vld [vmem:[%s641 + $0x228] sm:$0xff]
    %v685 = vld [vmem:[%s641 + $0x230] sm:$0xff]
    %v686 = vld [vmem:[%s641 + $0x240] sm:$0xff]
    %v687 = vld [vmem:[%s641 + $0x248] sm:$0xff]
    %v688 = vld [vmem:[%s641 + $0x258] sm:$0xff]
    %v689 = vld [vmem:[%s641 + $0x260] sm:$0xff]
    %v690 = vld [vmem:[%s641 + $0x270] sm:$0xff]
    %v691 = vld [vmem:[%s641 + $0x278] sm:$0xff]
    %v692 = vld [vmem:[%s641 + $0x288] sm:$0xff]
    %v693 = vld [vmem:[%s641 + $0x290] sm:$0xff]
    %v694 = vld [vmem:[%s641 + $0x2a0] sm:$0xff]
    %v695 = vld [vmem:[%s641 + $0x2a8] sm:$0xff]
    %v696 = vld [vmem:[%s641 + $0x2b8] sm:$0xff]
    %v697 = vld [vmem:[%s641 + $0x2c0] sm:$0xff]
    %v698 = vld [vmem:[%s641 + $0x2d0] sm:$0xff]
    %v699 = vld [vmem:[%s641 + $0x2d8] sm:$0xff]
    %v700 = vld [vmem:[%s641 + $0x2e8] sm:$0xff]
    %v701 = vld [vmem:[%s641 + $0x2f0] sm:$0xff]
    %v702 = vld [vmem:[%s641 + $0x300] sm:$0xff]
    %v703 = vld [vmem:[%s641 + $0x308] sm:$0xff]
    %v704 = vld [vmem:[%s641 + $0x318] sm:$0xff]
    %v705 = vld [vmem:[%s641 + $0x320] sm:$0xff]
    %v706 = vld [vmem:[%s641 + $0x1] sm:$0xff]
    %v707 = vld [vmem:[%s641 + $0x9] sm:$0xff]
    %v708 = vld [vmem:[%s641 + $0x19] sm:$0xff]
    %v709 = vld [vmem:[%s641 + $0x21] sm:$0xff]
    %v710 = vld [vmem:[%s641 + $0x31] sm:$0xff]
    %v711 = vld [vmem:[%s641 + $0x39] sm:$0xff]
    %v712 = vld [vmem:[%s641 + $0x49] sm:$0xff]
    %v713 = vld [vmem:[%s641 + $0x51] sm:$0xff]
    %v714 = vld [vmem:[%s641 + $0x61] sm:$0xff]
    %v715 = vld [vmem:[%s641 + $0x69] sm:$0xff]
    %v716 = vld [vmem:[%s641 + $0x79] sm:$0xff]
    %v717 = vld [vmem:[%s641 + $0x81] sm:$0xff]
    %v718 = vld [vmem:[%s641 + $0x91] sm:$0xff]
    %v719 = vld [vmem:[%s641 + $0x99] sm:$0xff]
    %v720 = vld [vmem:[%s641 + $0xa9] sm:$0xff]
    %v721 = vld [vmem:[%s641 + $0xb1] sm:$0xff]
    %v722 = vld [vmem:[%s641 + $0xc1] sm:$0xff]
    %v723 = vld [vmem:[%s641 + $0xc9] sm:$0xff]
    %v724 = vld [vmem:[%s641 + $0xd9] sm:$0xff]
    %v725 = vld [vmem:[%s641 + $0xe1] sm:$0xff]
    %v726 = vld [vmem:[%s641 + $0xf1] sm:$0xff]
    %v727 = vld [vmem:[%s641 + $0xf9] sm:$0xff]
    %v728 = vld [vmem:[%s641 + $0x109] sm:$0xff]
    %v729 = vld [vmem:[%s641 + $0x111] sm:$0xff]
    %v730 = vld [vmem:[%s641 + $0x121] sm:$0xff]
    %v731 = vld [vmem:[%s641 + $0x129] sm:$0xff]
    %v732 = vld [vmem:[%s641 + $0x139] sm:$0xff]
    %v733 = vld [vmem:[%s641 + $0x141] sm:$0xff]
    %v734 = vld [vmem:[%s641 + $0x151] sm:$0xff]
    %v735 = vld [vmem:[%s641 + $0x159] sm:$0xff]
    %v736 = vld [vmem:[%s641 + $0x169] sm:$0xff]
    %v737 = vld [vmem:[%s641 + $0x171] sm:$0xff]
    %v738 = vld [vmem:[%s641 + $0x1b1] sm:$0xff]
    %v739 = vld [vmem:[%s641 + $0x1b9] sm:$0xff]
    %v740 = vld [vmem:[%s641 + $0x1c9] sm:$0xff]
    %v741 = vld [vmem:[%s641 + $0x1d1] sm:$0xff]
    %v742 = vld [vmem:[%s641 + $0x1e1] sm:$0xff]
    %v743 = vld [vmem:[%s641 + $0x1e9] sm:$0xff]
    %v744 = vld [vmem:[%s641 + $0x1f9] sm:$0xff]
    %v745 = vld [vmem:[%s641 + $0x201] sm:$0xff]
    %v746 = vld [vmem:[%s641 + $0x211] sm:$0xff]
    %v747 = vld [vmem:[%s641 + $0x219] sm:$0xff]
    %v748 = vld [vmem:[%s641 + $0x229] sm:$0xff]
    %v749 = vld [vmem:[%s641 + $0x231] sm:$0xff]
    %v750 = vld [vmem:[%s641 + $0x241] sm:$0xff]
    %v751 = vld [vmem:[%s641 + $0x249] sm:$0xff]
    %v752 = vld [vmem:[%s641 + $0x259] sm:$0xff]
    %v753 = vld [vmem:[%s641 + $0x261] sm:$0xff]
    %v754 = vld [vmem:[%s641 + $0x271] sm:$0xff]
    %v755 = vld [vmem:[%s641 + $0x279] sm:$0xff]
    %v756 = vld [vmem:[%s641 + $0x289] sm:$0xff]
    %v757 = vld [vmem:[%s641 + $0x291] sm:$0xff]
    %v758 = vld [vmem:[%s641 + $0x2a1] sm:$0xff]
    %v759 = vld [vmem:[%s641 + $0x2a9] sm:$0xff]
    %v760 = vld [vmem:[%s641 + $0x2b9] sm:$0xff]
    %v761 = vld [vmem:[%s641 + $0x2c1] sm:$0xff]
    %v762 = vld [vmem:[%s641 + $0x2d1] sm:$0xff]
    %v763 = vld [vmem:[%s641 + $0x2d9] sm:$0xff]
    %v764 = vld [vmem:[%s641 + $0x2e9] sm:$0xff]
    %v765 = vld [vmem:[%s641 + $0x2f1] sm:$0xff]
    %v766 = vld [vmem:[%s641 + $0x301] sm:$0xff]
    %v767 = vld [vmem:[%s641 + $0x309] sm:$0xff]
    %v768 = vld [vmem:[%s641 + $0x319] sm:$0xff]
    %v769 = vld [vmem:[%s641 + $0x321] sm:$0xff]
    %v770 = vld [vmem:[%s641 + $0x2] sm:$0xff]
    %v771 = vld [vmem:[%s641 + $0xa] sm:$0xff]
    %v772 = vld [vmem:[%s641 + $0x1a] sm:$0xff]
    %v773 = vld [vmem:[%s641 + $0x22] sm:$0xff]
    %v774 = vld [vmem:[%s641 + $0x32] sm:$0xff]
    %v775 = vld [vmem:[%s641 + $0x3a] sm:$0xff]
    %v776 = vld [vmem:[%s641 + $0x4a] sm:$0xff]
    %v777 = vld [vmem:[%s641 + $0x52] sm:$0xff]
    %v778 = vld [vmem:[%s641 + $0x62] sm:$0xff]
    %v779 = vld [vmem:[%s641 + $0x6a] sm:$0xff]
    %v780 = vld [vmem:[%s641 + $0x7a] sm:$0xff]
    %v781 = vld [vmem:[%s641 + $0x82] sm:$0xff]
    %v782 = vld [vmem:[%s641 + $0x92] sm:$0xff]
    %v783 = vld [vmem:[%s641 + $0x9a] sm:$0xff]
    %v784 = vld [vmem:[%s641 + $0xaa] sm:$0xff]
    %v785 = vld [vmem:[%s641 + $0xb2] sm:$0xff]
    %v786 = vld [vmem:[%s641 + $0xc2] sm:$0xff]
    %v787 = vld [vmem:[%s641 + $0xca] sm:$0xff]
    %v788 = vld [vmem:[%s641 + $0xda] sm:$0xff]
    %v789 = vld [vmem:[%s641 + $0xe2] sm:$0xff]
    %v790 = vld [vmem:[%s641 + $0xf2] sm:$0xff]
    %v791 = vld [vmem:[%s641 + $0xfa] sm:$0xff]
    %v792 = vld [vmem:[%s641 + $0x10a] sm:$0xff]
    %v793 = vld [vmem:[%s641 + $0x112] sm:$0xff]
    %v794 = vld [vmem:[%s641 + $0x122] sm:$0xff]
    %v795 = vld [vmem:[%s641 + $0x12a] sm:$0xff]
    %v796 = vld [vmem:[%s641 + $0x13a] sm:$0xff]
    %v797 = vld [vmem:[%s641 + $0x142] sm:$0xff]
    %v798 = vld [vmem:[%s641 + $0x152] sm:$0xff]
    %v799 = vld [vmem:[%s641 + $0x15a] sm:$0xff]
    %v800 = vld [vmem:[%s641 + $0x16a] sm:$0xff]
    %v801 = vld [vmem:[%s641 + $0x172] sm:$0xff]
    %v802 = vld [vmem:[%s641 + $0x1b2] sm:$0xff]
    %v803 = vld [vmem:[%s641 + $0x1ba] sm:$0xff]
    %v804 = vld [vmem:[%s641 + $0x1ca] sm:$0xff]
    %v805 = vld [vmem:[%s641 + $0x1d2] sm:$0xff]
    %v806 = vld [vmem:[%s641 + $0x1e2] sm:$0xff]
    %v807 = vld [vmem:[%s641 + $0x1ea] sm:$0xff]
    %v808 = vld [vmem:[%s641 + $0x1fa] sm:$0xff]
    %v809 = vld [vmem:[%s641 + $0x202] sm:$0xff]
    %v810 = vld [vmem:[%s641 + $0x212] sm:$0xff]
    %v811 = vld [vmem:[%s641 + $0x21a] sm:$0xff]
    %v812 = vld [vmem:[%s641 + $0x22a] sm:$0xff]
    %v813 = vld [vmem:[%s641 + $0x232] sm:$0xff]
    %v814 = vld [vmem:[%s641 + $0x242] sm:$0xff]
    %v815 = vld [vmem:[%s641 + $0x24a] sm:$0xff]
    %v816 = vld [vmem:[%s641 + $0x25a] sm:$0xff]
    %v817 = vld [vmem:[%s641 + $0x262] sm:$0xff]
    %v818 = vld [vmem:[%s641 + $0x272] sm:$0xff]
    %v819 = vld [vmem:[%s641 + $0x27a] sm:$0xff]
    %v820 = vld [vmem:[%s641 + $0x28a] sm:$0xff]
    %v821 = vld [vmem:[%s641 + $0x292] sm:$0xff]
    %v822 = vld [vmem:[%s641 + $0x2a2] sm:$0xff]
    %v823 = vld [vmem:[%s641 + $0x2aa] sm:$0xff]
    %v824 = vld [vmem:[%s641 + $0x2ba] sm:$0xff]
    %v825 = vld [vmem:[%s641 + $0x2c2] sm:$0xff]
    %v826 = vld [vmem:[%s641 + $0x2d2] sm:$0xff]
    %v827 = vld [vmem:[%s641 + $0x2da] sm:$0xff]
    %v828 = vld [vmem:[%s641 + $0x2ea] sm:$0xff]
    %v829 = vld [vmem:[%s641 + $0x2f2] sm:$0xff]
    %v830 = vld [vmem:[%s641 + $0x302] sm:$0xff]
    %v831 = vld [vmem:[%s641 + $0x30a] sm:$0xff]
    %v832 = vld [vmem:[%s641 + $0x31a] sm:$0xff]
    %v833 = vld [vmem:[%s641 + $0x322] sm:$0xff]
    %898 = vrot.lane.b32.xlu0 %v321, 16
    %v899 = vpop.permute.xlu0 %898
    %900 = vrot.lane.b32.xlu0 %v322, 16
    %v901 = vpop.permute.xlu0 %900
    %902 = vrot.lane.b32.xlu0 %v323, 16
    %v903 = vpop.permute.xlu0 %902
    %904 = vrot.lane.b32.xlu0 %v324, 16
    %v905 = vpop.permute.xlu0 %904
    %906 = vrot.lane.b32.xlu0 %v325, 16
    %v907 = vpop.permute.xlu0 %906
    %908 = vrot.lane.b32.xlu0 %v326, 16
    %v909 = vpop.permute.xlu0 %908
    %910 = vrot.lane.b32.xlu0 %v327, 16
    %v911 = vpop.permute.xlu0 %910
    %912 = vrot.lane.b32.xlu0 %v328, 16
    %v913 = vpop.permute.xlu0 %912
    %914 = vrot.lane.b32.xlu0 %v329, 16
    %v915 = vpop.permute.xlu0 %914
    %916 = vrot.lane.b32.xlu0 %v330, 16
    %v917 = vpop.permute.xlu0 %916
    %918 = vrot.lane.b32.xlu0 %v331, 16
    %v919 = vpop.permute.xlu0 %918
    %920 = vrot.lane.b32.xlu0 %v332, 16
    %v921 = vpop.permute.xlu0 %920
    %922 = vrot.lane.b32.xlu0 %v333, 16
    %v923 = vpop.permute.xlu0 %922
    %924 = vrot.lane.b32.xlu0 %v334, 16
    %v925 = vpop.permute.xlu0 %924
    %926 = vrot.lane.b32.xlu0 %v335, 16
    %v927 = vpop.permute.xlu0 %926
    %928 = vrot.lane.b32.xlu0 %v336, 16
    %v929 = vpop.permute.xlu0 %928
    %930 = vrot.lane.b32.xlu0 %v337, 16
    %v931 = vpop.permute.xlu0 %930
    %932 = vrot.lane.b32.xlu0 %v338, 16
    %v933 = vpop.permute.xlu0 %932
    %934 = vrot.lane.b32.xlu0 %v339, 16
    %v935 = vpop.permute.xlu0 %934
    %936 = vrot.lane.b32.xlu0 %v340, 16
    %v937 = vpop.permute.xlu0 %936
    %938 = vrot.lane.b32.xlu0 %v341, 16
    %v939 = vpop.permute.xlu0 %938
    %940 = vrot.lane.b32.xlu0 %v342, 16
    %v941 = vpop.permute.xlu0 %940
    %942 = vrot.lane.b32.xlu0 %v343, 16
    %v943 = vpop.permute.xlu0 %942
    %944 = vrot.lane.b32.xlu0 %v344, 16
    %v945 = vpop.permute.xlu0 %944
    %946 = vrot.lane.b32.xlu0 %v345, 16
    %v947 = vpop.permute.xlu0 %946
    %948 = vrot.lane.b32.xlu0 %v346, 16
    %v949 = vpop.permute.xlu0 %948
    %950 = vrot.lane.b32.xlu0 %v347, 16
    %v951 = vpop.permute.xlu0 %950
    %952 = vrot.lane.b32.xlu0 %v348, 16
    %v953 = vpop.permute.xlu0 %952
    %954 = vrot.lane.b32.xlu0 %v349, 16
    %v955 = vpop.permute.xlu0 %954
    %956 = vrot.lane.b32.xlu0 %v350, 16
    %v957 = vpop.permute.xlu0 %956
    %958 = vrot.lane.b32.xlu0 %v351, 16
    %v959 = vpop.permute.xlu0 %958
    %960 = vrot.lane.b32.xlu0 %v352, 16
    %v961 = vpop.permute.xlu0 %960
    %962 = vrot.lane.b32.xlu0 %v353, 16
    %v963 = vpop.permute.xlu0 %962
    %964 = vrot.lane.b32.xlu0 %v354, 16
    %v965 = vpop.permute.xlu0 %964
    %966 = vrot.lane.b32.xlu0 %v355, 16
    %v967 = vpop.permute.xlu0 %966
    %968 = vrot.lane.b32.xlu0 %v356, 16
    %v969 = vpop.permute.xlu0 %968
    %970 = vrot.lane.b32.xlu0 %v357, 16
    %v971 = vpop.permute.xlu0 %970
    %972 = vrot.lane.b32.xlu0 %v358, 16
    %v973 = vpop.permute.xlu0 %972
    %974 = vrot.lane.b32.xlu0 %v359, 16
    %v975 = vpop.permute.xlu0 %974
    %976 = vrot.lane.b32.xlu0 %v360, 16
    %v977 = vpop.permute.xlu0 %976
    %978 = vrot.lane.b32.xlu0 %v361, 16
    %v979 = vpop.permute.xlu0 %978
    %980 = vrot.lane.b32.xlu0 %v362, 16
    %v981 = vpop.permute.xlu0 %980
    %982 = vrot.lane.b32.xlu0 %v363, 16
    %v983 = vpop.permute.xlu0 %982
    %984 = vrot.lane.b32.xlu0 %v364, 16
    %v985 = vpop.permute.xlu0 %984
    %986 = vrot.lane.b32.xlu0 %v365, 16
    %v987 = vpop.permute.xlu0 %986
    %988 = vrot.lane.b32.xlu0 %v366, 16
    %v989 = vpop.permute.xlu0 %988
    %990 = vrot.lane.b32.xlu0 %v367, 16
    %v991 = vpop.permute.xlu0 %990
    %992 = vrot.lane.b32.xlu0 %v368, 16
    %v993 = vpop.permute.xlu0 %992
    %994 = vrot.lane.b32.xlu0 %v369, 16
    %v995 = vpop.permute.xlu0 %994
    %996 = vrot.lane.b32.xlu0 %v370, 16
    %v997 = vpop.permute.xlu0 %996
    %998 = vrot.lane.b32.xlu0 %v371, 16
    %v999 = vpop.permute.xlu0 %998
    %1000 = vrot.lane.b32.xlu0 %v372, 16
    %v1001 = vpop.permute.xlu0 %1000
    %1002 = vrot.lane.b32.xlu0 %v373, 16
    %v1003 = vpop.permute.xlu0 %1002
    %1004 = vrot.lane.b32.xlu0 %v374, 16
    %v1005 = vpop.permute.xlu0 %1004
    %1006 = vrot.lane.b32.xlu0 %v375, 16
    %v1007 = vpop.permute.xlu0 %1006
    %1008 = vrot.lane.b32.xlu0 %v376, 16
    %v1009 = vpop.permute.xlu0 %1008
    %1010 = vrot.lane.b32.xlu0 %v377, 16
    %v1011 = vpop.permute.xlu0 %1010
    %1012 = vrot.lane.b32.xlu0 %v378, 16
    %v1013 = vpop.permute.xlu0 %1012
    %1014 = vrot.lane.b32.xlu0 %v379, 16
    %v1015 = vpop.permute.xlu0 %1014
    %1016 = vrot.lane.b32.xlu0 %v380, 16
    %v1017 = vpop.permute.xlu0 %1016
    %1018 = vrot.lane.b32.xlu0 %v381, 16
    %v1019 = vpop.permute.xlu0 %1018
    %1020 = vrot.lane.b32.xlu0 %v382, 16
    %v1021 = vpop.permute.xlu0 %1020
    %1022 = vrot.lane.b32.xlu0 %v383, 16
    %v1023 = vpop.permute.xlu0 %1022
    %1024 = vrot.lane.b32.xlu0 %v384, 16
    %v1025 = vpop.permute.xlu0 %1024
    %1154 = vrot.lane.b32.xlu0 %v385, 32
    %v1155 = vpop.permute.xlu0 %1154
    %1156 = vrot.lane.b32.xlu0 %v386, 32
    %v1157 = vpop.permute.xlu0 %1156
    %1158 = vrot.lane.b32.xlu0 %v387, 32
    %v1159 = vpop.permute.xlu0 %1158
    %1160 = vrot.lane.b32.xlu0 %v388, 32
    %v1161 = vpop.permute.xlu0 %1160
    %1162 = vrot.lane.b32.xlu0 %v389, 32
    %v1163 = vpop.permute.xlu0 %1162
    %1164 = vrot.lane.b32.xlu0 %v390, 32
    %v1165 = vpop.permute.xlu0 %1164
    %1166 = vrot.lane.b32.xlu0 %v391, 32
    %v1167 = vpop.permute.xlu0 %1166
    %1168 = vrot.lane.b32.xlu0 %v392, 32
    %v1169 = vpop.permute.xlu0 %1168
    %1170 = vrot.lane.b32.xlu0 %v393, 32
    %v1171 = vpop.permute.xlu0 %1170
    %1172 = vrot.lane.b32.xlu0 %v394, 32
    %v1173 = vpop.permute.xlu0 %1172
    %1174 = vrot.lane.b32.xlu0 %v395, 32
    %v1175 = vpop.permute.xlu0 %1174
    %1176 = vrot.lane.b32.xlu0 %v396, 32
    %v1177 = vpop.permute.xlu0 %1176
    %1178 = vrot.lane.b32.xlu0 %v397, 32
    %v1179 = vpop.permute.xlu0 %1178
    %1180 = vrot.lane.b32.xlu0 %v398, 32
    %v1181 = vpop.permute.xlu0 %1180
    %1182 = vrot.lane.b32.xlu0 %v399, 32
    %v1183 = vpop.permute.xlu0 %1182
    %1184 = vrot.lane.b32.xlu0 %v400, 32
    %v1185 = vpop.permute.xlu0 %1184
    %1186 = vrot.lane.b32.xlu0 %v401, 32
    %v1187 = vpop.permute.xlu0 %1186
    %1188 = vrot.lane.b32.xlu0 %v402, 32
    %v1189 = vpop.permute.xlu0 %1188
    %1190 = vrot.lane.b32.xlu0 %v403, 32
    %v1191 = vpop.permute.xlu0 %1190
    %1192 = vrot.lane.b32.xlu0 %v404, 32
    %v1193 = vpop.permute.xlu0 %1192
    %1194 = vrot.lane.b32.xlu0 %v405, 32
    %v1195 = vpop.permute.xlu0 %1194
    %1196 = vrot.lane.b32.xlu0 %v406, 32
    %v1197 = vpop.permute.xlu0 %1196
    %1198 = vrot.lane.b32.xlu0 %v407, 32
    %v1199 = vpop.permute.xlu0 %1198
    %1200 = vrot.lane.b32.xlu0 %v408, 32
    %v1201 = vpop.permute.xlu0 %1200
    %1202 = vrot.lane.b32.xlu0 %v409, 32
    %v1203 = vpop.permute.xlu0 %1202
    %1204 = vrot.lane.b32.xlu0 %v410, 32
    %v1205 = vpop.permute.xlu0 %1204
    %1206 = vrot.lane.b32.xlu0 %v411, 32
    %v1207 = vpop.permute.xlu0 %1206
    %1208 = vrot.lane.b32.xlu0 %v412, 32
    %v1209 = vpop.permute.xlu0 %1208
    %1210 = vrot.lane.b32.xlu0 %v413, 32
    %v1211 = vpop.permute.xlu0 %1210
    %1212 = vrot.lane.b32.xlu0 %v414, 32
    %v1213 = vpop.permute.xlu0 %1212
    %1214 = vrot.lane.b32.xlu0 %v415, 32
    %v1215 = vpop.permute.xlu0 %1214
    %1216 = vrot.lane.b32.xlu0 %v416, 32
    %v1217 = vpop.permute.xlu0 %1216
    %1218 = vrot.lane.b32.xlu0 %v417, 32
    %v1219 = vpop.permute.xlu0 %1218
    %1220 = vrot.lane.b32.xlu0 %v418, 32
    %v1221 = vpop.permute.xlu0 %1220
    %1222 = vrot.lane.b32.xlu0 %v419, 32
    %v1223 = vpop.permute.xlu0 %1222
    %1224 = vrot.lane.b32.xlu0 %v420, 32
    %v1225 = vpop.permute.xlu0 %1224
    %1226 = vrot.lane.b32.xlu0 %v421, 32
    %v1227 = vpop.permute.xlu0 %1226
    %1228 = vrot.lane.b32.xlu0 %v422, 32
    %v1229 = vpop.permute.xlu0 %1228
    %1230 = vrot.lane.b32.xlu0 %v423, 32
    %v1231 = vpop.permute.xlu0 %1230
    %1232 = vrot.lane.b32.xlu0 %v424, 32
    %v1233 = vpop.permute.xlu0 %1232
    %1234 = vrot.lane.b32.xlu0 %v425, 32
    %v1235 = vpop.permute.xlu0 %1234
    %1236 = vrot.lane.b32.xlu0 %v426, 32
    %v1237 = vpop.permute.xlu0 %1236
    %1238 = vrot.lane.b32.xlu0 %v427, 32
    %v1239 = vpop.permute.xlu0 %1238
    %1240 = vrot.lane.b32.xlu0 %v428, 32
    %v1241 = vpop.permute.xlu0 %1240
    %1242 = vrot.lane.b32.xlu0 %v429, 32
    %v1243 = vpop.permute.xlu0 %1242
    %1244 = vrot.lane.b32.xlu0 %v430, 32
    %v1245 = vpop.permute.xlu0 %1244
    %1246 = vrot.lane.b32.xlu0 %v431, 32
    %v1247 = vpop.permute.xlu0 %1246
    %1248 = vrot.lane.b32.xlu0 %v432, 32
    %v1249 = vpop.permute.xlu0 %1248
    %1250 = vrot.lane.b32.xlu0 %v433, 32
    %v1251 = vpop.permute.xlu0 %1250
    %1252 = vrot.lane.b32.xlu0 %v434, 32
    %v1253 = vpop.permute.xlu0 %1252
    %1254 = vrot.lane.b32.xlu0 %v435, 32
    %v1255 = vpop.permute.xlu0 %1254
    %1256 = vrot.lane.b32.xlu0 %v436, 32
    %v1257 = vpop.permute.xlu0 %1256
    %1258 = vrot.lane.b32.xlu0 %v437, 32
    %v1259 = vpop.permute.xlu0 %1258
    %1260 = vrot.lane.b32.xlu0 %v438, 32
    %v1261 = vpop.permute.xlu0 %1260
    %1262 = vrot.lane.b32.xlu0 %v439, 32
    %v1263 = vpop.permute.xlu0 %1262
    %1264 = vrot.lane.b32.xlu0 %v440, 32
    %v1265 = vpop.permute.xlu0 %1264
    %1266 = vrot.lane.b32.xlu0 %v441, 32
    %v1267 = vpop.permute.xlu0 %1266
    %1268 = vrot.lane.b32.xlu0 %v442, 32
    %v1269 = vpop.permute.xlu0 %1268
    %1270 = vrot.lane.b32.xlu0 %v443, 32
    %v1271 = vpop.permute.xlu0 %1270
    %1272 = vrot.lane.b32.xlu0 %v444, 32
    %v1273 = vpop.permute.xlu0 %1272
    %1274 = vrot.lane.b32.xlu0 %v445, 32
    %v1275 = vpop.permute.xlu0 %1274
    %1276 = vrot.lane.b32.xlu0 %v446, 32
    %v1277 = vpop.permute.xlu0 %1276
    %1278 = vrot.lane.b32.xlu0 %v447, 32
    %v1279 = vpop.permute.xlu0 %1278
    %1280 = vrot.lane.b32.xlu0 %v448, 32
    %v1281 = vpop.permute.xlu0 %1280
    %1410 = vrot.lane.b32.xlu0 %v449, 48
    %v1411 = vpop.permute.xlu0 %1410
    %1412 = vrot.lane.b32.xlu0 %v450, 48
    %v1413 = vpop.permute.xlu0 %1412
    %1414 = vrot.lane.b32.xlu0 %v451, 48
    %v1415 = vpop.permute.xlu0 %1414
    %1416 = vrot.lane.b32.xlu0 %v452, 48
    %v1417 = vpop.permute.xlu0 %1416
    %1418 = vrot.lane.b32.xlu0 %v453, 48
    %v1419 = vpop.permute.xlu0 %1418
    %1420 = vrot.lane.b32.xlu0 %v454, 48
    %v1421 = vpop.permute.xlu0 %1420
    %1422 = vrot.lane.b32.xlu0 %v455, 48
    %v1423 = vpop.permute.xlu0 %1422
    %1424 = vrot.lane.b32.xlu0 %v456, 48
    %v1425 = vpop.permute.xlu0 %1424
    %1426 = vrot.lane.b32.xlu0 %v457, 48
    %v1427 = vpop.permute.xlu0 %1426
    %1428 = vrot.lane.b32.xlu0 %v458, 48
    %v1429 = vpop.permute.xlu0 %1428
    %1430 = vrot.lane.b32.xlu0 %v459, 48
    %v1431 = vpop.permute.xlu0 %1430
    %1432 = vrot.lane.b32.xlu0 %v460, 48
    %v1433 = vpop.permute.xlu0 %1432
    %1434 = vrot.lane.b32.xlu0 %v461, 48
    %v1435 = vpop.permute.xlu0 %1434
    %1436 = vrot.lane.b32.xlu0 %v462, 48
    %v1437 = vpop.permute.xlu0 %1436
    %1438 = vrot.lane.b32.xlu0 %v463, 48
    %v1439 = vpop.permute.xlu0 %1438
    %1440 = vrot.lane.b32.xlu0 %v464, 48
    %v1441 = vpop.permute.xlu0 %1440
    %1442 = vrot.lane.b32.xlu0 %v465, 48
    %v1443 = vpop.permute.xlu0 %1442
    %1444 = vrot.lane.b32.xlu0 %v466, 48
    %v1445 = vpop.permute.xlu0 %1444
    %1446 = vrot.lane.b32.xlu0 %v467, 48
    %v1447 = vpop.permute.xlu0 %1446
    %1448 = vrot.lane.b32.xlu0 %v468, 48
    %v1449 = vpop.permute.xlu0 %1448
    %1450 = vrot.lane.b32.xlu0 %v469, 48
    %v1451 = vpop.permute.xlu0 %1450
    %1452 = vrot.lane.b32.xlu0 %v470, 48
    %v1453 = vpop.permute.xlu0 %1452
    %1454 = vrot.lane.b32.xlu0 %v471, 48
    %v1455 = vpop.permute.xlu0 %1454
    %1456 = vrot.lane.b32.xlu0 %v472, 48
    %v1457 = vpop.permute.xlu0 %1456
    %1458 = vrot.lane.b32.xlu0 %v473, 48
    %v1459 = vpop.permute.xlu0 %1458
    %1460 = vrot.lane.b32.xlu0 %v474, 48
    %v1461 = vpop.permute.xlu0 %1460
    %1462 = vrot.lane.b32.xlu0 %v475, 48
    %v1463 = vpop.permute.xlu0 %1462
    %1464 = vrot.lane.b32.xlu0 %v476, 48
    %v1465 = vpop.permute.xlu0 %1464
    %1466 = vrot.lane.b32.xlu0 %v477, 48
    %v1467 = vpop.permute.xlu0 %1466
    %1468 = vrot.lane.b32.xlu0 %v478, 48
    %v1469 = vpop.permute.xlu0 %1468
    %1470 = vrot.lane.b32.xlu0 %v479, 48
    %v1471 = vpop.permute.xlu0 %1470
    %1472 = vrot.lane.b32.xlu0 %v480, 48
    %v1473 = vpop.permute.xlu0 %1472
    %1474 = vrot.lane.b32.xlu0 %v481, 48
    %v1475 = vpop.permute.xlu0 %1474
    %1476 = vrot.lane.b32.xlu0 %v482, 48
    %v1477 = vpop.permute.xlu0 %1476
    %1478 = vrot.lane.b32.xlu0 %v483, 48
    %v1479 = vpop.permute.xlu0 %1478
    %1480 = vrot.lane.b32.xlu0 %v484, 48
    %v1481 = vpop.permute.xlu0 %1480
    %1482 = vrot.lane.b32.xlu0 %v485, 48
    %v1483 = vpop.permute.xlu0 %1482
    %1484 = vrot.lane.b32.xlu0 %v486, 48
    %v1485 = vpop.permute.xlu0 %1484
    %1486 = vrot.lane.b32.xlu0 %v487, 48
    %v1487 = vpop.permute.xlu0 %1486
    %1488 = vrot.lane.b32.xlu0 %v488, 48
    %v1489 = vpop.permute.xlu0 %1488
    %1490 = vrot.lane.b32.xlu0 %v489, 48
    %v1491 = vpop.permute.xlu0 %1490
    %1492 = vrot.lane.b32.xlu0 %v490, 48
    %v1493 = vpop.permute.xlu0 %1492
    %1494 = vrot.lane.b32.xlu0 %v491, 48
    %v1495 = vpop.permute.xlu0 %1494
    %1496 = vrot.lane.b32.xlu0 %v492, 48
    %v1497 = vpop.permute.xlu0 %1496
    %1498 = vrot.lane.b32.xlu0 %v493, 48
    %v1499 = vpop.permute.xlu0 %1498
    %1500 = vrot.lane.b32.xlu0 %v494, 48
    %v1501 = vpop.permute.xlu0 %1500
    %1502 = vrot.lane.b32.xlu0 %v495, 48
    %v1503 = vpop.permute.xlu0 %1502
    %1504 = vrot.lane.b32.xlu0 %v496, 48
    %v1505 = vpop.permute.xlu0 %1504
    %1506 = vrot.lane.b32.xlu0 %v497, 48
    %v1507 = vpop.permute.xlu0 %1506
    %1508 = vrot.lane.b32.xlu0 %v498, 48
    %v1509 = vpop.permute.xlu0 %1508
    %1510 = vrot.lane.b32.xlu0 %v499, 48
    %v1511 = vpop.permute.xlu0 %1510
    %1512 = vrot.lane.b32.xlu0 %v500, 48
    %v1513 = vpop.permute.xlu0 %1512
    %1514 = vrot.lane.b32.xlu0 %v501, 48
    %v1515 = vpop.permute.xlu0 %1514
    %1516 = vrot.lane.b32.xlu0 %v502, 48
    %v1517 = vpop.permute.xlu0 %1516
    %1518 = vrot.lane.b32.xlu0 %v503, 48
    %v1519 = vpop.permute.xlu0 %1518
    %1520 = vrot.lane.b32.xlu0 %v504, 48
    %v1521 = vpop.permute.xlu0 %1520
    %1522 = vrot.lane.b32.xlu0 %v505, 48
    %v1523 = vpop.permute.xlu0 %1522
    %1524 = vrot.lane.b32.xlu0 %v506, 48
    %v1525 = vpop.permute.xlu0 %1524
    %1526 = vrot.lane.b32.xlu0 %v507, 48
    %v1527 = vpop.permute.xlu0 %1526
    %1528 = vrot.lane.b32.xlu0 %v508, 48
    %v1529 = vpop.permute.xlu0 %1528
    %1530 = vrot.lane.b32.xlu0 %v509, 48
    %v1531 = vpop.permute.xlu0 %1530
    %1532 = vrot.lane.b32.xlu0 %v510, 48
    %v1533 = vpop.permute.xlu0 %1532
    %1534 = vrot.lane.b32.xlu0 %v511, 48
    %v1535 = vpop.permute.xlu0 %1534
    %1536 = vrot.lane.b32.xlu0 %v512, 48
    %v1537 = vpop.permute.xlu0 %1536
    %1666 = vrot.lane.b32.xlu0 %v513, 64
    %v1667 = vpop.permute.xlu0 %1666
    %1668 = vrot.lane.b32.xlu0 %v514, 64
    %v1669 = vpop.permute.xlu0 %1668
    %1670 = vrot.lane.b32.xlu0 %v515, 64
    %v1671 = vpop.permute.xlu0 %1670
    %1672 = vrot.lane.b32.xlu0 %v516, 64
    %v1673 = vpop.permute.xlu0 %1672
    %1674 = vrot.lane.b32.xlu0 %v517, 64
    %v1675 = vpop.permute.xlu0 %1674
    %1676 = vrot.lane.b32.xlu0 %v518, 64
    %v1677 = vpop.permute.xlu0 %1676
    %1678 = vrot.lane.b32.xlu0 %v519, 64
    %v1679 = vpop.permute.xlu0 %1678
    %1680 = vrot.lane.b32.xlu0 %v520, 64
    %v1681 = vpop.permute.xlu0 %1680
    %1682 = vrot.lane.b32.xlu0 %v521, 64
    %v1683 = vpop.permute.xlu0 %1682
    %1684 = vrot.lane.b32.xlu0 %v522, 64
    %v1685 = vpop.permute.xlu0 %1684
    %1686 = vrot.lane.b32.xlu0 %v523, 64
    %v1687 = vpop.permute.xlu0 %1686
    %1688 = vrot.lane.b32.xlu0 %v524, 64
    %v1689 = vpop.permute.xlu0 %1688
    %1690 = vrot.lane.b32.xlu0 %v525, 64
    %v1691 = vpop.permute.xlu0 %1690
    %1692 = vrot.lane.b32.xlu0 %v526, 64
    %v1693 = vpop.permute.xlu0 %1692
    %1694 = vrot.lane.b32.xlu0 %v527, 64
    %v1695 = vpop.permute.xlu0 %1694
    %1696 = vrot.lane.b32.xlu0 %v528, 64
    %v1697 = vpop.permute.xlu0 %1696
    %1698 = vrot.lane.b32.xlu0 %v529, 64
    %v1699 = vpop.permute.xlu0 %1698
    %1700 = vrot.lane.b32.xlu0 %v530, 64
    %v1701 = vpop.permute.xlu0 %1700
    %1702 = vrot.lane.b32.xlu0 %v531, 64
    %v1703 = vpop.permute.xlu0 %1702
    %1704 = vrot.lane.b32.xlu0 %v532, 64
    %v1705 = vpop.permute.xlu0 %1704
    %1706 = vrot.lane.b32.xlu0 %v533, 64
    %v1707 = vpop.permute.xlu0 %1706
    %1708 = vrot.lane.b32.xlu0 %v534, 64
    %v1709 = vpop.permute.xlu0 %1708
    %1710 = vrot.lane.b32.xlu0 %v535, 64
    %v1711 = vpop.permute.xlu0 %1710
    %1712 = vrot.lane.b32.xlu0 %v536, 64
    %v1713 = vpop.permute.xlu0 %1712
    %1714 = vrot.lane.b32.xlu0 %v537, 64
    %v1715 = vpop.permute.xlu0 %1714
    %1716 = vrot.lane.b32.xlu0 %v538, 64
    %v1717 = vpop.permute.xlu0 %1716
    %1718 = vrot.lane.b32.xlu0 %v539, 64
    %v1719 = vpop.permute.xlu0 %1718
    %1720 = vrot.lane.b32.xlu0 %v540, 64
    %v1721 = vpop.permute.xlu0 %1720
    %1722 = vrot.lane.b32.xlu0 %v541, 64
    %v1723 = vpop.permute.xlu0 %1722
    %1724 = vrot.lane.b32.xlu0 %v542, 64
    %v1725 = vpop.permute.xlu0 %1724
    %1726 = vrot.lane.b32.xlu0 %v543, 64
    %v1727 = vpop.permute.xlu0 %1726
    %1728 = vrot.lane.b32.xlu0 %v544, 64
    %v1729 = vpop.permute.xlu0 %1728
    %1730 = vrot.lane.b32.xlu0 %v545, 64
    %v1731 = vpop.permute.xlu0 %1730
    %1732 = vrot.lane.b32.xlu0 %v546, 64
    %v1733 = vpop.permute.xlu0 %1732
    %1734 = vrot.lane.b32.xlu0 %v547, 64
    %v1735 = vpop.permute.xlu0 %1734
    %1736 = vrot.lane.b32.xlu0 %v548, 64
    %v1737 = vpop.permute.xlu0 %1736
    %1738 = vrot.lane.b32.xlu0 %v549, 64
    %v1739 = vpop.permute.xlu0 %1738
    %1740 = vrot.lane.b32.xlu0 %v550, 64
    %v1741 = vpop.permute.xlu0 %1740
    %1742 = vrot.lane.b32.xlu0 %v551, 64
    %v1743 = vpop.permute.xlu0 %1742
    %1744 = vrot.lane.b32.xlu0 %v552, 64
    %v1745 = vpop.permute.xlu0 %1744
    %1746 = vrot.lane.b32.xlu0 %v553, 64
    %v1747 = vpop.permute.xlu0 %1746
    %1748 = vrot.lane.b32.xlu0 %v554, 64
    %v1749 = vpop.permute.xlu0 %1748
    %1750 = vrot.lane.b32.xlu0 %v555, 64
    %v1751 = vpop.permute.xlu0 %1750
    %1752 = vrot.lane.b32.xlu0 %v556, 64
    %v1753 = vpop.permute.xlu0 %1752
    %1754 = vrot.lane.b32.xlu0 %v557, 64
    %v1755 = vpop.permute.xlu0 %1754
    %1756 = vrot.lane.b32.xlu0 %v558, 64
    %v1757 = vpop.permute.xlu0 %1756
    %1758 = vrot.lane.b32.xlu0 %v559, 64
    %v1759 = vpop.permute.xlu0 %1758
    %1760 = vrot.lane.b32.xlu0 %v560, 64
    %v1761 = vpop.permute.xlu0 %1760
    %1762 = vrot.lane.b32.xlu0 %v561, 64
    %v1763 = vpop.permute.xlu0 %1762
    %1764 = vrot.lane.b32.xlu0 %v562, 64
    %v1765 = vpop.permute.xlu0 %1764
    %1766 = vrot.lane.b32.xlu0 %v563, 64
    %v1767 = vpop.permute.xlu0 %1766
    %1768 = vrot.lane.b32.xlu0 %v564, 64
    %v1769 = vpop.permute.xlu0 %1768
    %1770 = vrot.lane.b32.xlu0 %v565, 64
    %v1771 = vpop.permute.xlu0 %1770
    %1772 = vrot.lane.b32.xlu0 %v566, 64
    %v1773 = vpop.permute.xlu0 %1772
    %1774 = vrot.lane.b32.xlu0 %v567, 64
    %v1775 = vpop.permute.xlu0 %1774
    %1776 = vrot.lane.b32.xlu0 %v568, 64
    %v1777 = vpop.permute.xlu0 %1776
    %1778 = vrot.lane.b32.xlu0 %v569, 64
    %v1779 = vpop.permute.xlu0 %1778
    %1780 = vrot.lane.b32.xlu0 %v570, 64
    %v1781 = vpop.permute.xlu0 %1780
    %1782 = vrot.lane.b32.xlu0 %v571, 64
    %v1783 = vpop.permute.xlu0 %1782
    %1784 = vrot.lane.b32.xlu0 %v572, 64
    %v1785 = vpop.permute.xlu0 %1784
    %1786 = vrot.lane.b32.xlu0 %v573, 64
    %v1787 = vpop.permute.xlu0 %1786
    %1788 = vrot.lane.b32.xlu0 %v574, 64
    %v1789 = vpop.permute.xlu0 %1788
    %1790 = vrot.lane.b32.xlu0 %v575, 64
    %v1791 = vpop.permute.xlu0 %1790
    %1792 = vrot.lane.b32.xlu0 %v576, 64
    %v1793 = vpop.permute.xlu0 %1792
    %1922 = vrot.lane.b32.xlu0 %v577, 80
    %v1923 = vpop.permute.xlu0 %1922
    %1924 = vrot.lane.b32.xlu0 %v578, 80
    %v1925 = vpop.permute.xlu0 %1924
    %1926 = vrot.lane.b32.xlu0 %v579, 80
    %v1927 = vpop.permute.xlu0 %1926
    %1928 = vrot.lane.b32.xlu0 %v580, 80
    %v1929 = vpop.permute.xlu0 %1928
    %1930 = vrot.lane.b32.xlu0 %v581, 80
    %v1931 = vpop.permute.xlu0 %1930
    %1932 = vrot.lane.b32.xlu0 %v582, 80
    %v1933 = vpop.permute.xlu0 %1932
    %1934 = vrot.lane.b32.xlu0 %v583, 80
    %v1935 = vpop.permute.xlu0 %1934
    %1936 = vrot.lane.b32.xlu0 %v584, 80
    %v1937 = vpop.permute.xlu0 %1936
    %1938 = vrot.lane.b32.xlu0 %v585, 80
    %v1939 = vpop.permute.xlu0 %1938
    %1940 = vrot.lane.b32.xlu0 %v586, 80
    %v1941 = vpop.permute.xlu0 %1940
    %1942 = vrot.lane.b32.xlu0 %v587, 80
    %v1943 = vpop.permute.xlu0 %1942
    %1944 = vrot.lane.b32.xlu0 %v588, 80
    %v1945 = vpop.permute.xlu0 %1944
    %1946 = vrot.lane.b32.xlu0 %v589, 80
    %v1947 = vpop.permute.xlu0 %1946
    %1948 = vrot.lane.b32.xlu0 %v590, 80
    %v1949 = vpop.permute.xlu0 %1948
    %1950 = vrot.lane.b32.xlu0 %v591, 80
    %v1951 = vpop.permute.xlu0 %1950
    %1952 = vrot.lane.b32.xlu0 %v592, 80
    %v1953 = vpop.permute.xlu0 %1952
    %1954 = vrot.lane.b32.xlu0 %v593, 80
    %v1955 = vpop.permute.xlu0 %1954
    %1956 = vrot.lane.b32.xlu0 %v594, 80
    %v1957 = vpop.permute.xlu0 %1956
    %1958 = vrot.lane.b32.xlu0 %v595, 80
    %v1959 = vpop.permute.xlu0 %1958
    %1960 = vrot.lane.b32.xlu0 %v596, 80
    %v1961 = vpop.permute.xlu0 %1960
    %1962 = vrot.lane.b32.xlu0 %v597, 80
    %v1963 = vpop.permute.xlu0 %1962
    %1964 = vrot.lane.b32.xlu0 %v598, 80
    %v1965 = vpop.permute.xlu0 %1964
    %1966 = vrot.lane.b32.xlu0 %v599, 80
    %v1967 = vpop.permute.xlu0 %1966
    %1968 = vrot.lane.b32.xlu0 %v600, 80
    %v1969 = vpop.permute.xlu0 %1968
    %1970 = vrot.lane.b32.xlu0 %v601, 80
    %v1971 = vpop.permute.xlu0 %1970
    %1972 = vrot.lane.b32.xlu0 %v602, 80
    %v1973 = vpop.permute.xlu0 %1972
    %1974 = vrot.lane.b32.xlu0 %v603, 80
    %v1975 = vpop.permute.xlu0 %1974
    %1976 = vrot.lane.b32.xlu0 %v604, 80
    %v1977 = vpop.permute.xlu0 %1976
    %1978 = vrot.lane.b32.xlu0 %v605, 80
    %v1979 = vpop.permute.xlu0 %1978
    %1980 = vrot.lane.b32.xlu0 %v606, 80
    %v1981 = vpop.permute.xlu0 %1980
    %1982 = vrot.lane.b32.xlu0 %v607, 80
    %v1983 = vpop.permute.xlu0 %1982
    %1984 = vrot.lane.b32.xlu0 %v608, 80
    %v1985 = vpop.permute.xlu0 %1984
    %1986 = vrot.lane.b32.xlu0 %v609, 80
    %v1987 = vpop.permute.xlu0 %1986
    %1988 = vrot.lane.b32.xlu0 %v610, 80
    %v1989 = vpop.permute.xlu0 %1988
    %1990 = vrot.lane.b32.xlu0 %v611, 80
    %v1991 = vpop.permute.xlu0 %1990
    %1992 = vrot.lane.b32.xlu0 %v612, 80
    %v1993 = vpop.permute.xlu0 %1992
    %1994 = vrot.lane.b32.xlu0 %v613, 80
    %v1995 = vpop.permute.xlu0 %1994
    %1996 = vrot.lane.b32.xlu0 %v614, 80
    %v1997 = vpop.permute.xlu0 %1996
    %1998 = vrot.lane.b32.xlu0 %v615, 80
    %v1999 = vpop.permute.xlu0 %1998
    %2000 = vrot.lane.b32.xlu0 %v616, 80
    %v2001 = vpop.permute.xlu0 %2000
    %2002 = vrot.lane.b32.xlu0 %v617, 80
    %v2003 = vpop.permute.xlu0 %2002
    %2004 = vrot.lane.b32.xlu0 %v618, 80
    %v2005 = vpop.permute.xlu0 %2004
    %2006 = vrot.lane.b32.xlu0 %v619, 80
    %v2007 = vpop.permute.xlu0 %2006
    %2008 = vrot.lane.b32.xlu0 %v620, 80
    %v2009 = vpop.permute.xlu0 %2008
    %2010 = vrot.lane.b32.xlu0 %v621, 80
    %v2011 = vpop.permute.xlu0 %2010
    %2012 = vrot.lane.b32.xlu0 %v622, 80
    %v2013 = vpop.permute.xlu0 %2012
    %2014 = vrot.lane.b32.xlu0 %v623, 80
    %v2015 = vpop.permute.xlu0 %2014
    %2016 = vrot.lane.b32.xlu0 %v624, 80
    %v2017 = vpop.permute.xlu0 %2016
    %2018 = vrot.lane.b32.xlu0 %v625, 80
    %v2019 = vpop.permute.xlu0 %2018
    %2020 = vrot.lane.b32.xlu0 %v626, 80
    %v2021 = vpop.permute.xlu0 %2020
    %2022 = vrot.lane.b32.xlu0 %v627, 80
    %v2023 = vpop.permute.xlu0 %2022
    %2024 = vrot.lane.b32.xlu0 %v628, 80
    %v2025 = vpop.permute.xlu0 %2024
    %2026 = vrot.lane.b32.xlu0 %v629, 80
    %v2027 = vpop.permute.xlu0 %2026
    %2028 = vrot.lane.b32.xlu0 %v630, 80
    %v2029 = vpop.permute.xlu0 %2028
    %2030 = vrot.lane.b32.xlu0 %v631, 80
    %v2031 = vpop.permute.xlu0 %2030
    %2032 = vrot.lane.b32.xlu0 %v632, 80
    %v2033 = vpop.permute.xlu0 %2032
    %2034 = vrot.lane.b32.xlu0 %v633, 80
    %v2035 = vpop.permute.xlu0 %2034
    %2036 = vrot.lane.b32.xlu0 %v634, 80
    %v2037 = vpop.permute.xlu0 %2036
    %2038 = vrot.lane.b32.xlu0 %v635, 80
    %v2039 = vpop.permute.xlu0 %2038
    %2040 = vrot.lane.b32.xlu0 %v636, 80
    %v2041 = vpop.permute.xlu0 %2040
    %2042 = vrot.lane.b32.xlu0 %v637, 80
    %v2043 = vpop.permute.xlu0 %2042
    %2044 = vrot.lane.b32.xlu0 %v638, 80
    %v2045 = vpop.permute.xlu0 %2044
    %2046 = vrot.lane.b32.xlu0 %v639, 80
    %v2047 = vpop.permute.xlu0 %2046
    %2048 = vrot.lane.b32.xlu0 %v640, 80
    %v2049 = vpop.permute.xlu0 %2048
    %2178 = vrot.lane.b32.xlu0 %v642, 96
    %v2179 = vpop.permute.xlu0 %2178
    %2180 = vrot.lane.b32.xlu0 %v643, 96
    %v2181 = vpop.permute.xlu0 %2180
    %2182 = vrot.lane.b32.xlu0 %v644, 96
    %v2183 = vpop.permute.xlu0 %2182
    %2184 = vrot.lane.b32.xlu0 %v645, 96
    %v2185 = vpop.permute.xlu0 %2184
    %2186 = vrot.lane.b32.xlu0 %v646, 96
    %v2187 = vpop.permute.xlu0 %2186
    %2188 = vrot.lane.b32.xlu0 %v647, 96
    %v2189 = vpop.permute.xlu0 %2188
    %2190 = vrot.lane.b32.xlu0 %v648, 96
    %v2191 = vpop.permute.xlu0 %2190
    %2192 = vrot.lane.b32.xlu0 %v649, 96
    %v2193 = vpop.permute.xlu0 %2192
    %2194 = vrot.lane.b32.xlu0 %v650, 96
    %v2195 = vpop.permute.xlu0 %2194
    %2196 = vrot.lane.b32.xlu0 %v651, 96
    %v2197 = vpop.permute.xlu0 %2196
    %2198 = vrot.lane.b32.xlu0 %v652, 96
    %v2199 = vpop.permute.xlu0 %2198
    %2200 = vrot.lane.b32.xlu0 %v653, 96
    %v2201 = vpop.permute.xlu0 %2200
    %2202 = vrot.lane.b32.xlu0 %v654, 96
    %v2203 = vpop.permute.xlu0 %2202
    %2204 = vrot.lane.b32.xlu0 %v655, 96
    %v2205 = vpop.permute.xlu0 %2204
    %2206 = vrot.lane.b32.xlu0 %v656, 96
    %v2207 = vpop.permute.xlu0 %2206
    %2208 = vrot.lane.b32.xlu0 %v657, 96
    %v2209 = vpop.permute.xlu0 %2208
    %2210 = vrot.lane.b32.xlu0 %v658, 96
    %v2211 = vpop.permute.xlu0 %2210
    %2212 = vrot.lane.b32.xlu0 %v659, 96
    %v2213 = vpop.permute.xlu0 %2212
    %2214 = vrot.lane.b32.xlu0 %v660, 96
    %v2215 = vpop.permute.xlu0 %2214
    %2216 = vrot.lane.b32.xlu0 %v661, 96
    %v2217 = vpop.permute.xlu0 %2216
    %2218 = vrot.lane.b32.xlu0 %v662, 96
    %v2219 = vpop.permute.xlu0 %2218
    %2220 = vrot.lane.b32.xlu0 %v663, 96
    %v2221 = vpop.permute.xlu0 %2220
    %2222 = vrot.lane.b32.xlu0 %v664, 96
    %v2223 = vpop.permute.xlu0 %2222
    %2224 = vrot.lane.b32.xlu0 %v665, 96
    %v2225 = vpop.permute.xlu0 %2224
    %2226 = vrot.lane.b32.xlu0 %v666, 96
    %v2227 = vpop.permute.xlu0 %2226
    %2228 = vrot.lane.b32.xlu0 %v667, 96
    %v2229 = vpop.permute.xlu0 %2228
    %2230 = vrot.lane.b32.xlu0 %v668, 96
    %v2231 = vpop.permute.xlu0 %2230
    %2232 = vrot.lane.b32.xlu0 %v669, 96
    %v2233 = vpop.permute.xlu0 %2232
    %2234 = vrot.lane.b32.xlu0 %v670, 96
    %v2235 = vpop.permute.xlu0 %2234
    %2236 = vrot.lane.b32.xlu0 %v671, 96
    %v2237 = vpop.permute.xlu0 %2236
    %2238 = vrot.lane.b32.xlu0 %v672, 96
    %v2239 = vpop.permute.xlu0 %2238
    %2240 = vrot.lane.b32.xlu0 %v673, 96
    %v2241 = vpop.permute.xlu0 %2240
    %2242 = vrot.lane.b32.xlu0 %v674, 96
    %v2243 = vpop.permute.xlu0 %2242
    %2244 = vrot.lane.b32.xlu0 %v675, 96
    %v2245 = vpop.permute.xlu0 %2244
    %2246 = vrot.lane.b32.xlu0 %v676, 96
    %v2247 = vpop.permute.xlu0 %2246
    %2248 = vrot.lane.b32.xlu0 %v677, 96
    %v2249 = vpop.permute.xlu0 %2248
    %2250 = vrot.lane.b32.xlu0 %v678, 96
    %v2251 = vpop.permute.xlu0 %2250
    %2252 = vrot.lane.b32.xlu0 %v679, 96
    %v2253 = vpop.permute.xlu0 %2252
    %2254 = vrot.lane.b32.xlu0 %v680, 96
    %v2255 = vpop.permute.xlu0 %2254
    %2256 = vrot.lane.b32.xlu0 %v681, 96
    %v2257 = vpop.permute.xlu0 %2256
    %2258 = vrot.lane.b32.xlu0 %v682, 96
    %v2259 = vpop.permute.xlu0 %2258
    %2260 = vrot.lane.b32.xlu0 %v683, 96
    %v2261 = vpop.permute.xlu0 %2260
    %2262 = vrot.lane.b32.xlu0 %v684, 96
    %v2263 = vpop.permute.xlu0 %2262
    %2264 = vrot.lane.b32.xlu0 %v685, 96
    %v2265 = vpop.permute.xlu0 %2264
    %2266 = vrot.lane.b32.xlu0 %v686, 96
    %v2267 = vpop.permute.xlu0 %2266
    %2268 = vrot.lane.b32.xlu0 %v687, 96
    %v2269 = vpop.permute.xlu0 %2268
    %2270 = vrot.lane.b32.xlu0 %v688, 96
    %v2271 = vpop.permute.xlu0 %2270
    %2272 = vrot.lane.b32.xlu0 %v689, 96
    %v2273 = vpop.permute.xlu0 %2272
    %2274 = vrot.lane.b32.xlu0 %v690, 96
    %v2275 = vpop.permute.xlu0 %2274
    %2276 = vrot.lane.b32.xlu0 %v691, 96
    %v2277 = vpop.permute.xlu0 %2276
    %2278 = vrot.lane.b32.xlu0 %v692, 96
    %v2279 = vpop.permute.xlu0 %2278
    %2280 = vrot.lane.b32.xlu0 %v693, 96
    %v2281 = vpop.permute.xlu0 %2280
    %2282 = vrot.lane.b32.xlu0 %v694, 96
    %v2283 = vpop.permute.xlu0 %2282
    %2284 = vrot.lane.b32.xlu0 %v695, 96
    %v2285 = vpop.permute.xlu0 %2284
    %2286 = vrot.lane.b32.xlu0 %v696, 96
    %v2287 = vpop.permute.xlu0 %2286
    %2288 = vrot.lane.b32.xlu0 %v697, 96
    %v2289 = vpop.permute.xlu0 %2288
    %2290 = vrot.lane.b32.xlu0 %v698, 96
    %v2291 = vpop.permute.xlu0 %2290
    %2292 = vrot.lane.b32.xlu0 %v699, 96
    %v2293 = vpop.permute.xlu0 %2292
    %2294 = vrot.lane.b32.xlu0 %v700, 96
    %v2295 = vpop.permute.xlu0 %2294
    %2296 = vrot.lane.b32.xlu0 %v701, 96
    %v2297 = vpop.permute.xlu0 %2296
    %2298 = vrot.lane.b32.xlu0 %v702, 96
    %v2299 = vpop.permute.xlu0 %2298
    %2300 = vrot.lane.b32.xlu0 %v703, 96
    %v2301 = vpop.permute.xlu0 %2300
    %2302 = vrot.lane.b32.xlu0 %v704, 96
    %v2303 = vpop.permute.xlu0 %2302
    %2304 = vrot.lane.b32.xlu0 %v705, 96
    %v2305 = vpop.permute.xlu0 %2304
    %2434 = vrot.lane.b32.xlu0 %v706, 112
    %v2435 = vpop.permute.xlu0 %2434
    %2436 = vrot.lane.b32.xlu0 %v707, 112
    %v2437 = vpop.permute.xlu0 %2436
    %2438 = vrot.lane.b32.xlu0 %v708, 112
    %v2439 = vpop.permute.xlu0 %2438
    %2440 = vrot.lane.b32.xlu0 %v709, 112
    %v2441 = vpop.permute.xlu0 %2440
    %2442 = vrot.lane.b32.xlu0 %v710, 112
    %v2443 = vpop.permute.xlu0 %2442
    %2444 = vrot.lane.b32.xlu0 %v711, 112
    %v2445 = vpop.permute.xlu0 %2444
    %2446 = vrot.lane.b32.xlu0 %v712, 112
    %v2447 = vpop.permute.xlu0 %2446
    %2448 = vrot.lane.b32.xlu0 %v713, 112
    %v2449 = vpop.permute.xlu0 %2448
    %2450 = vrot.lane.b32.xlu0 %v714, 112
    %v2451 = vpop.permute.xlu0 %2450
    %2452 = vrot.lane.b32.xlu0 %v715, 112
    %v2453 = vpop.permute.xlu0 %2452
    %2454 = vrot.lane.b32.xlu0 %v716, 112
    %v2455 = vpop.permute.xlu0 %2454
    %2456 = vrot.lane.b32.xlu0 %v717, 112
    %v2457 = vpop.permute.xlu0 %2456
    %2458 = vrot.lane.b32.xlu0 %v718, 112
    %v2459 = vpop.permute.xlu0 %2458
    %2460 = vrot.lane.b32.xlu0 %v719, 112
    %v2461 = vpop.permute.xlu0 %2460
    %2462 = vrot.lane.b32.xlu0 %v720, 112
    %v2463 = vpop.permute.xlu0 %2462
    %2464 = vrot.lane.b32.xlu0 %v721, 112
    %v2465 = vpop.permute.xlu0 %2464
    %2466 = vrot.lane.b32.xlu0 %v722, 112
    %v2467 = vpop.permute.xlu0 %2466
    %2468 = vrot.lane.b32.xlu0 %v723, 112
    %v2469 = vpop.permute.xlu0 %2468
    %2470 = vrot.lane.b32.xlu0 %v724, 112
    %v2471 = vpop.permute.xlu0 %2470
    %2472 = vrot.lane.b32.xlu0 %v725, 112
    %v2473 = vpop.permute.xlu0 %2472
    %2474 = vrot.lane.b32.xlu0 %v726, 112
    %v2475 = vpop.permute.xlu0 %2474
    %2476 = vrot.lane.b32.xlu0 %v727, 112
    %v2477 = vpop.permute.xlu0 %2476
    %2478 = vrot.lane.b32.xlu0 %v728, 112
    %v2479 = vpop.permute.xlu0 %2478
    %2480 = vrot.lane.b32.xlu0 %v729, 112
    %v2481 = vpop.permute.xlu0 %2480
    %2482 = vrot.lane.b32.xlu0 %v730, 112
    %v2483 = vpop.permute.xlu0 %2482
    %2484 = vrot.lane.b32.xlu0 %v731, 112
    %v2485 = vpop.permute.xlu0 %2484
    %2486 = vrot.lane.b32.xlu0 %v732, 112
    %v2487 = vpop.permute.xlu0 %2486
    %2488 = vrot.lane.b32.xlu0 %v733, 112
    %v2489 = vpop.permute.xlu0 %2488
    %2490 = vrot.lane.b32.xlu0 %v734, 112
    %v2491 = vpop.permute.xlu0 %2490
    %2492 = vrot.lane.b32.xlu0 %v735, 112
    %v2493 = vpop.permute.xlu0 %2492
    %2494 = vrot.lane.b32.xlu0 %v736, 112
    %v2495 = vpop.permute.xlu0 %2494
    %2496 = vrot.lane.b32.xlu0 %v737, 112
    %v2497 = vpop.permute.xlu0 %2496
    %2498 = vrot.lane.b32.xlu0 %v738, 112
    %v2499 = vpop.permute.xlu0 %2498
    %2500 = vrot.lane.b32.xlu0 %v739, 112
    %v2501 = vpop.permute.xlu0 %2500
    %2502 = vrot.lane.b32.xlu0 %v740, 112
    %v2503 = vpop.permute.xlu0 %2502
    %2504 = vrot.lane.b32.xlu0 %v741, 112
    %v2505 = vpop.permute.xlu0 %2504
    %2506 = vrot.lane.b32.xlu0 %v742, 112
    %v2507 = vpop.permute.xlu0 %2506
    %2508 = vrot.lane.b32.xlu0 %v743, 112
    %v2509 = vpop.permute.xlu0 %2508
    %2510 = vrot.lane.b32.xlu0 %v744, 112
    %v2511 = vpop.permute.xlu0 %2510
    %2512 = vrot.lane.b32.xlu0 %v745, 112
    %v2513 = vpop.permute.xlu0 %2512
    %2514 = vrot.lane.b32.xlu0 %v746, 112
    %v2515 = vpop.permute.xlu0 %2514
    %2516 = vrot.lane.b32.xlu0 %v747, 112
    %v2517 = vpop.permute.xlu0 %2516
    %2518 = vrot.lane.b32.xlu0 %v748, 112
    %v2519 = vpop.permute.xlu0 %2518
    %2520 = vrot.lane.b32.xlu0 %v749, 112
    %v2521 = vpop.permute.xlu0 %2520
    %2522 = vrot.lane.b32.xlu0 %v750, 112
    %v2523 = vpop.permute.xlu0 %2522
    %2524 = vrot.lane.b32.xlu0 %v751, 112
    %v2525 = vpop.permute.xlu0 %2524
    %2526 = vrot.lane.b32.xlu0 %v752, 112
    %v2527 = vpop.permute.xlu0 %2526
    %2528 = vrot.lane.b32.xlu0 %v753, 112
    %v2529 = vpop.permute.xlu0 %2528
    %2530 = vrot.lane.b32.xlu0 %v754, 112
    %v2531 = vpop.permute.xlu0 %2530
    %2532 = vrot.lane.b32.xlu0 %v755, 112
    %v2533 = vpop.permute.xlu0 %2532
    %2534 = vrot.lane.b32.xlu0 %v756, 112
    %v2535 = vpop.permute.xlu0 %2534
    %2536 = vrot.lane.b32.xlu0 %v757, 112
    %v2537 = vpop.permute.xlu0 %2536
    %2538 = vrot.lane.b32.xlu0 %v758, 112
    %v2539 = vpop.permute.xlu0 %2538
    %2540 = vrot.lane.b32.xlu0 %v759, 112
    %v2541 = vpop.permute.xlu0 %2540
    %2542 = vrot.lane.b32.xlu0 %v760, 112
    %v2543 = vpop.permute.xlu0 %2542
    %2544 = vrot.lane.b32.xlu0 %v761, 112
    %v2545 = vpop.permute.xlu0 %2544
    %2546 = vrot.lane.b32.xlu0 %v762, 112
    %v2547 = vpop.permute.xlu0 %2546
    %2548 = vrot.lane.b32.xlu0 %v763, 112
    %v2549 = vpop.permute.xlu0 %2548
    %2550 = vrot.lane.b32.xlu0 %v764, 112
    %v2551 = vpop.permute.xlu0 %2550
    %2552 = vrot.lane.b32.xlu0 %v765, 112
    %v2553 = vpop.permute.xlu0 %2552
    %2554 = vrot.lane.b32.xlu0 %v766, 112
    %v2555 = vpop.permute.xlu0 %2554
    %2556 = vrot.lane.b32.xlu0 %v767, 112
    %v2557 = vpop.permute.xlu0 %2556
    %2558 = vrot.lane.b32.xlu0 %v768, 112
    %v2559 = vpop.permute.xlu0 %2558
    %2560 = vrot.lane.b32.xlu0 %v769, 112
    %v2561 = vpop.permute.xlu0 %2560
    %v2626 = vsel %vm40, %v257, %v899
    %v2627 = vsel %vm40, %v258, %v901
    %v2628 = vsel %vm40, %v259, %v903
    %v2629 = vsel %vm40, %v260, %v905
    %v2630 = vsel %vm40, %v261, %v907
    %v2631 = vsel %vm40, %v262, %v909
    %v2632 = vsel %vm40, %v263, %v911
    %v2633 = vsel %vm40, %v264, %v913
    %v2634 = vsel %vm40, %v265, %v915
    %v2635 = vsel %vm40, %v266, %v917
    %v2636 = vsel %vm40, %v267, %v919
    %v2637 = vsel %vm40, %v268, %v921
    %v2638 = vsel %vm40, %v269, %v923
    %v2639 = vsel %vm40, %v270, %v925
    %v2640 = vsel %vm40, %v271, %v927
    %v2641 = vsel %vm40, %v272, %v929
    %v2642 = vsel %vm40, %v273, %v931
    %v2643 = vsel %vm40, %v274, %v933
    %v2644 = vsel %vm40, %v275, %v935
    %v2645 = vsel %vm40, %v276, %v937
    %v2646 = vsel %vm40, %v277, %v939
    %v2647 = vsel %vm40, %v278, %v941
    %v2648 = vsel %vm40, %v279, %v943
    %v2649 = vsel %vm40, %v280, %v945
    %v2650 = vsel %vm40, %v281, %v947
    %v2651 = vsel %vm40, %v282, %v949
    %v2652 = vsel %vm40, %v283, %v951
    %v2653 = vsel %vm40, %v284, %v953
    %v2654 = vsel %vm40, %v285, %v955
    %v2655 = vsel %vm40, %v286, %v957
    %v2656 = vsel %vm40, %v287, %v959
    %v2657 = vsel %vm40, %v288, %v961
    %v2658 = vsel %vm40, %v289, %v963
    %v2659 = vsel %vm40, %v290, %v965
    %v2660 = vsel %vm40, %v291, %v967
    %v2661 = vsel %vm40, %v292, %v969
    %v2662 = vsel %vm40, %v293, %v971
    %v2663 = vsel %vm40, %v294, %v973
    %v2664 = vsel %vm40, %v295, %v975
    %v2665 = vsel %vm40, %v296, %v977
    %v2666 = vsel %vm40, %v297, %v979
    %v2667 = vsel %vm40, %v298, %v981
    %v2668 = vsel %vm40, %v299, %v983
    %v2669 = vsel %vm40, %v300, %v985
    %v2670 = vsel %vm40, %v301, %v987
    %v2671 = vsel %vm40, %v302, %v989
    %v2672 = vsel %vm40, %v303, %v991
    %v2673 = vsel %vm40, %v304, %v993
    %v2674 = vsel %vm40, %v305, %v995
    %v2675 = vsel %vm40, %v306, %v997
    %v2676 = vsel %vm40, %v307, %v999
    %v2677 = vsel %vm40, %v308, %v1001
    %v2678 = vsel %vm40, %v309, %v1003
    %v2679 = vsel %vm40, %v310, %v1005
    %v2680 = vsel %vm40, %v311, %v1007
    %v2681 = vsel %vm40, %v312, %v1009
    %v2682 = vsel %vm40, %v313, %v1011
    %v2683 = vsel %vm40, %v314, %v1013
    %v2684 = vsel %vm40, %v315, %v1015
    %v2685 = vsel %vm40, %v316, %v1017
    %v2686 = vsel %vm40, %v317, %v1019
    %v2687 = vsel %vm40, %v318, %v1021
    %v2688 = vsel %vm40, %v319, %v1023
    %v2689 = vsel %vm40, %v320, %v1025
    %vm2690 = vcmask 261120
    %v2691 = vsel %vm2690, %v2626, %v1155
    %v2692 = vsel %vm2690, %v2627, %v1157
    %v2693 = vsel %vm2690, %v2628, %v1159
    %v2694 = vsel %vm2690, %v2629, %v1161
    %v2695 = vsel %vm2690, %v2630, %v1163
    %v2696 = vsel %vm2690, %v2631, %v1165
    %v2697 = vsel %vm2690, %v2632, %v1167
    %v2698 = vsel %vm2690, %v2633, %v1169
    %v2699 = vsel %vm2690, %v2634, %v1171
    %v2700 = vsel %vm2690, %v2635, %v1173
    %v2701 = vsel %vm2690, %v2636, %v1175
    %v2702 = vsel %vm2690, %v2637, %v1177
    %v2703 = vsel %vm2690, %v2638, %v1179
    %v2704 = vsel %vm2690, %v2639, %v1181
    %v2705 = vsel %vm2690, %v2640, %v1183
    %v2706 = vsel %vm2690, %v2641, %v1185
    %v2707 = vsel %vm2690, %v2642, %v1187
    %v2708 = vsel %vm2690, %v2643, %v1189
    %v2709 = vsel %vm2690, %v2644, %v1191
    %v2710 = vsel %vm2690, %v2645, %v1193
    %v2711 = vsel %vm2690, %v2646, %v1195
    %v2712 = vsel %vm2690, %v2647, %v1197
    %v2713 = vsel %vm2690, %v2648, %v1199
    %v2714 = vsel %vm2690, %v2649, %v1201
    %v2715 = vsel %vm2690, %v2650, %v1203
    %v2716 = vsel %vm2690, %v2651, %v1205
    %v2717 = vsel %vm2690, %v2652, %v1207
    %v2718 = vsel %vm2690, %v2653, %v1209
    %v2719 = vsel %vm2690, %v2654, %v1211
    %v2720 = vsel %vm2690, %v2655, %v1213
    %v2721 = vsel %vm2690, %v2656, %v1215
    %v2722 = vsel %vm2690, %v2657, %v1217
    %v2723 = vsel %vm2690, %v2658, %v1219
    %v2724 = vsel %vm2690, %v2659, %v1221
    %v2725 = vsel %vm2690, %v2660, %v1223
    %v2726 = vsel %vm2690, %v2661, %v1225
    %v2727 = vsel %vm2690, %v2662, %v1227
    %v2728 = vsel %vm2690, %v2663, %v1229
    %v2729 = vsel %vm2690, %v2664, %v1231
    %v2730 = vsel %vm2690, %v2665, %v1233
    %v2731 = vsel %vm2690, %v2666, %v1235
    %v2732 = vsel %vm2690, %v2667, %v1237
    %v2733 = vsel %vm2690, %v2668, %v1239
    %v2734 = vsel %vm2690, %v2669, %v1241
    %v2735 = vsel %vm2690, %v2670, %v1243
    %v2736 = vsel %vm2690, %v2671, %v1245
    %v2737 = vsel %vm2690, %v2672, %v1247
    %v2738 = vsel %vm2690, %v2673, %v1249
    %v2739 = vsel %vm2690, %v2674, %v1251
    %v2740 = vsel %vm2690, %v2675, %v1253
    %v2741 = vsel %vm2690, %v2676, %v1255
    %v2742 = vsel %vm2690, %v2677, %v1257
    %v2743 = vsel %vm2690, %v2678, %v1259
    %v2744 = vsel %vm2690, %v2679, %v1261
    %v2745 = vsel %vm2690, %v2680, %v1263
    %v2746 = vsel %vm2690, %v2681, %v1265
    %v2747 = vsel %vm2690, %v2682, %v1267
    %v2748 = vsel %vm2690, %v2683, %v1269
    %v2749 = vsel %vm2690, %v2684, %v1271
    %v2750 = vsel %vm2690, %v2685, %v1273
    %v2751 = vsel %vm2690, %v2686, %v1275
    %v2752 = vsel %vm2690, %v2687, %v1277
    %v2753 = vsel %vm2690, %v2688, %v1279
    %v2754 = vsel %vm2690, %v2689, %v1281
    %vm2755 = vcmask 392192
    %v2756 = vsel %vm2755, %v2691, %v1411
    %v2757 = vsel %vm2755, %v2692, %v1413
    %v2758 = vsel %vm2755, %v2693, %v1415
    %v2759 = vsel %vm2755, %v2694, %v1417
    %v2760 = vsel %vm2755, %v2695, %v1419
    %v2761 = vsel %vm2755, %v2696, %v1421
    %v2762 = vsel %vm2755, %v2697, %v1423
    %v2763 = vsel %vm2755, %v2698, %v1425
    %v2764 = vsel %vm2755, %v2699, %v1427
    %v2765 = vsel %vm2755, %v2700, %v1429
    %v2766 = vsel %vm2755, %v2701, %v1431
    %v2767 = vsel %vm2755, %v2702, %v1433
    %v2768 = vsel %vm2755, %v2703, %v1435
    %v2769 = vsel %vm2755, %v2704, %v1437
    %v2770 = vsel %vm2755, %v2705, %v1439
    %v2771 = vsel %vm2755, %v2706, %v1441
    %v2772 = vsel %vm2755, %v2707, %v1443
    %v2773 = vsel %vm2755, %v2708, %v1445
    %v2774 = vsel %vm2755, %v2709, %v1447
    %v2775 = vsel %vm2755, %v2710, %v1449
    %v2776 = vsel %vm2755, %v2711, %v1451
    %v2777 = vsel %vm2755, %v2712, %v1453
    %v2778 = vsel %vm2755, %v2713, %v1455
    %v2779 = vsel %vm2755, %v2714, %v1457
    %v2780 = vsel %vm2755, %v2715, %v1459
    %v2781 = vsel %vm2755, %v2716, %v1461
    %v2782 = vsel %vm2755, %v2717, %v1463
    %v2783 = vsel %vm2755, %v2718, %v1465
    %v2784 = vsel %vm2755, %v2719, %v1467
    %v2785 = vsel %vm2755, %v2720, %v1469
    %v2786 = vsel %vm2755, %v2721, %v1471
    %v2787 = vsel %vm2755, %v2722, %v1473
    %v2788 = vsel %vm2755, %v2723, %v1475
    %v2789 = vsel %vm2755, %v2724, %v1477
    %v2790 = vsel %vm2755, %v2725, %v1479
    %v2791 = vsel %vm2755, %v2726, %v1481
    %v2792 = vsel %vm2755, %v2727, %v1483
    %v2793 = vsel %vm2755, %v2728, %v1485
    %v2794 = vsel %vm2755, %v2729, %v1487
    %v2795 = vsel %vm2755, %v2730, %v1489
    %v2796 = vsel %vm2755, %v2731, %v1491
    %v2797 = vsel %vm2755, %v2732, %v1493
    %v2798 = vsel %vm2755, %v2733, %v1495
    %v2799 = vsel %vm2755, %v2734, %v1497
    %v2800 = vsel %vm2755, %v2735, %v1499
    %v2801 = vsel %vm2755, %v2736, %v1501
    %v2802 = vsel %vm2755, %v2737, %v1503
    %v2803 = vsel %vm2755, %v2738, %v1505
    %v2804 = vsel %vm2755, %v2739, %v1507
    %v2805 = vsel %vm2755, %v2740, %v1509
    %v2806 = vsel %vm2755, %v2741, %v1511
    %v2807 = vsel %vm2755, %v2742, %v1513
    %v2808 = vsel %vm2755, %v2743, %v1515
    %v2809 = vsel %vm2755, %v2744, %v1517
    %v2810 = vsel %vm2755, %v2745, %v1519
    %v2811 = vsel %vm2755, %v2746, %v1521
    %v2812 = vsel %vm2755, %v2747, %v1523
    %v2813 = vsel %vm2755, %v2748, %v1525
    %v2814 = vsel %vm2755, %v2749, %v1527
    %v2815 = vsel %vm2755, %v2750, %v1529
    %v2816 = vsel %vm2755, %v2751, %v1531
    %v2817 = vsel %vm2755, %v2752, %v1533
    %v2818 = vsel %vm2755, %v2753, %v1535
    %v2819 = vsel %vm2755, %v2754, %v1537
    %vm2820 = vcmask 523264
    %v2821 = vsel %vm2820, %v2756, %v1667
    %v2822 = vsel %vm2820, %v2757, %v1669
    %v2823 = vsel %vm2820, %v2758, %v1671
    %v2824 = vsel %vm2820, %v2759, %v1673
    %v2825 = vsel %vm2820, %v2760, %v1675
    %v2826 = vsel %vm2820, %v2761, %v1677
    %v2827 = vsel %vm2820, %v2762, %v1679
    %v2828 = vsel %vm2820, %v2763, %v1681
    %v2829 = vsel %vm2820, %v2764, %v1683
    %v2830 = vsel %vm2820, %v2765, %v1685
    %v2831 = vsel %vm2820, %v2766, %v1687
    %v2832 = vsel %vm2820, %v2767, %v1689
    %v2833 = vsel %vm2820, %v2768, %v1691
    %v2834 = vsel %vm2820, %v2769, %v1693
    %v2835 = vsel %vm2820, %v2770, %v1695
    %v2836 = vsel %vm2820, %v2771, %v1697
    %v2837 = vsel %vm2820, %v2772, %v1699
    %v2838 = vsel %vm2820, %v2773, %v1701
    %v2839 = vsel %vm2820, %v2774, %v1703
    %v2840 = vsel %vm2820, %v2775, %v1705
    %v2841 = vsel %vm2820, %v2776, %v1707
    %v2842 = vsel %vm2820, %v2777, %v1709
    %v2843 = vsel %vm2820, %v2778, %v1711
    %v2844 = vsel %vm2820, %v2779, %v1713
    %v2845 = vsel %vm2820, %v2780, %v1715
    %v2846 = vsel %vm2820, %v2781, %v1717
    %v2847 = vsel %vm2820, %v2782, %v1719
    %v2848 = vsel %vm2820, %v2783, %v1721
    %v2849 = vsel %vm2820, %v2784, %v1723
    %v2850 = vsel %vm2820, %v2785, %v1725
    %v2851 = vsel %vm2820, %v2786, %v1727
    %v2852 = vsel %vm2820, %v2787, %v1729
    %v2853 = vsel %vm2820, %v2788, %v1731
    %v2854 = vsel %vm2820, %v2789, %v1733
    %v2855 = vsel %vm2820, %v2790, %v1735
    %v2856 = vsel %vm2820, %v2791, %v1737
    %v2857 = vsel %vm2820, %v2792, %v1739
    %v2858 = vsel %vm2820, %v2793, %v1741
    %v2859 = vsel %vm2820, %v2794, %v1743
    %v2860 = vsel %vm2820, %v2795, %v1745
    %v2861 = vsel %vm2820, %v2796, %v1747
    %v2862 = vsel %vm2820, %v2797, %v1749
    %v2863 = vsel %vm2820, %v2798, %v1751
    %v2864 = vsel %vm2820, %v2799, %v1753
    %v2865 = vsel %vm2820, %v2800, %v1755
    %v2866 = vsel %vm2820, %v2801, %v1757
    %v2867 = vsel %vm2820, %v2802, %v1759
    %v2868 = vsel %vm2820, %v2803, %v1761
    %v2869 = vsel %vm2820, %v2804, %v1763
    %v2870 = vsel %vm2820, %v2805, %v1765
    %v2871 = vsel %vm2820, %v2806, %v1767
    %v2872 = vsel %vm2820, %v2807, %v1769
    %v2873 = vsel %vm2820, %v2808, %v1771
    %v2874 = vsel %vm2820, %v2809, %v1773
    %v2875 = vsel %vm2820, %v2810, %v1775
    %v2876 = vsel %vm2820, %v2811, %v1777
    %v2877 = vsel %vm2820, %v2812, %v1779
    %v2878 = vsel %vm2820, %v2813, %v1781
    %v2879 = vsel %vm2820, %v2814, %v1783
    %v2880 = vsel %vm2820, %v2815, %v1785
    %v2881 = vsel %vm2820, %v2816, %v1787
    %v2882 = vsel %vm2820, %v2817, %v1789
    %v2883 = vsel %vm2820, %v2818, %v1791
    %v2884 = vsel %vm2820, %v2819, %v1793
    %vm2885 = vcmask 654336
    %v2886 = vsel %vm2885, %v2821, %v1923
    %v2887 = vsel %vm2885, %v2822, %v1925
    %v2888 = vsel %vm2885, %v2823, %v1927
    %v2889 = vsel %vm2885, %v2824, %v1929
    %v2890 = vsel %vm2885, %v2825, %v1931
    %v2891 = vsel %vm2885, %v2826, %v1933
    %v2892 = vsel %vm2885, %v2827, %v1935
    %v2893 = vsel %vm2885, %v2828, %v1937
    %v2894 = vsel %vm2885, %v2829, %v1939
    %v2895 = vsel %vm2885, %v2830, %v1941
    %v2896 = vsel %vm2885, %v2831, %v1943
    %v2897 = vsel %vm2885, %v2832, %v1945
    %v2898 = vsel %vm2885, %v2833, %v1947
    %v2899 = vsel %vm2885, %v2834, %v1949
    %v2900 = vsel %vm2885, %v2835, %v1951
    %v2901 = vsel %vm2885, %v2836, %v1953
    %v2902 = vsel %vm2885, %v2837, %v1955
    %v2903 = vsel %vm2885, %v2838, %v1957
    %v2904 = vsel %vm2885, %v2839, %v1959
    %v2905 = vsel %vm2885, %v2840, %v1961
    %v2906 = vsel %vm2885, %v2841, %v1963
    %v2907 = vsel %vm2885, %v2842, %v1965
    %v2908 = vsel %vm2885, %v2843, %v1967
    %v2909 = vsel %vm2885, %v2844, %v1969
    %v2910 = vsel %vm2885, %v2845, %v1971
    %v2911 = vsel %vm2885, %v2846, %v1973
    %v2912 = vsel %vm2885, %v2847, %v1975
    %v2913 = vsel %vm2885, %v2848, %v1977
    %v2914 = vsel %vm2885, %v2849, %v1979
    %v2915 = vsel %vm2885, %v2850, %v1981
    %v2916 = vsel %vm2885, %v2851, %v1983
    %v2917 = vsel %vm2885, %v2852, %v1985
    %v2918 = vsel %vm2885, %v2853, %v1987
    %v2919 = vsel %vm2885, %v2854, %v1989
    %v2920 = vsel %vm2885, %v2855, %v1991
    %v2921 = vsel %vm2885, %v2856, %v1993
    %v2922 = vsel %vm2885, %v2857, %v1995
    %v2923 = vsel %vm2885, %v2858, %v1997
    %v2924 = vsel %vm2885, %v2859, %v1999
    %v2925 = vsel %vm2885, %v2860, %v2001
    %v2926 = vsel %vm2885, %v2861, %v2003
    %v2927 = vsel %vm2885, %v2862, %v2005
    %v2928 = vsel %vm2885, %v2863, %v2007
    %v2929 = vsel %vm2885, %v2864, %v2009
    %v2930 = vsel %vm2885, %v2865, %v2011
    %v2931 = vsel %vm2885, %v2866, %v2013
    %v2932 = vsel %vm2885, %v2867, %v2015
    %v2933 = vsel %vm2885, %v2868, %v2017
    %v2934 = vsel %vm2885, %v2869, %v2019
    %v2935 = vsel %vm2885, %v2870, %v2021
    %v2936 = vsel %vm2885, %v2871, %v2023
    %v2937 = vsel %vm2885, %v2872, %v2025
    %v2938 = vsel %vm2885, %v2873, %v2027
    %v2939 = vsel %vm2885, %v2874, %v2029
    %v2940 = vsel %vm2885, %v2875, %v2031
    %v2941 = vsel %vm2885, %v2876, %v2033
    %v2942 = vsel %vm2885, %v2877, %v2035
    %v2943 = vsel %vm2885, %v2878, %v2037
    %v2944 = vsel %vm2885, %v2879, %v2039
    %v2945 = vsel %vm2885, %v2880, %v2041
    %v2946 = vsel %vm2885, %v2881, %v2043
    %v2947 = vsel %vm2885, %v2882, %v2045
    %v2948 = vsel %vm2885, %v2883, %v2047
    %v2949 = vsel %vm2885, %v2884, %v2049
    %vm2950 = vcmask 785408
    %v2951 = vsel %vm2950, %v2886, %v2179
    %v2952 = vsel %vm2950, %v2887, %v2181
    %v2953 = vsel %vm2950, %v2888, %v2183
    %v2954 = vsel %vm2950, %v2889, %v2185
    %v2955 = vsel %vm2950, %v2890, %v2187
    %v2956 = vsel %vm2950, %v2891, %v2189
    %v2957 = vsel %vm2950, %v2892, %v2191
    %v2958 = vsel %vm2950, %v2893, %v2193
    %v2959 = vsel %vm2950, %v2894, %v2195
    %v2960 = vsel %vm2950, %v2895, %v2197
    %v2961 = vsel %vm2950, %v2896, %v2199
    %v2962 = vsel %vm2950, %v2897, %v2201
    %v2963 = vsel %vm2950, %v2898, %v2203
    %v2964 = vsel %vm2950, %v2899, %v2205
    %v2965 = vsel %vm2950, %v2900, %v2207
    %v2966 = vsel %vm2950, %v2901, %v2209
    %v2967 = vsel %vm2950, %v2902, %v2211
    %v2968 = vsel %vm2950, %v2903, %v2213
    %v2969 = vsel %vm2950, %v2904, %v2215
    %v2970 = vsel %vm2950, %v2905, %v2217
    %v2971 = vsel %vm2950, %v2906, %v2219
    %v2972 = vsel %vm2950, %v2907, %v2221
    %v2973 = vsel %vm2950, %v2908, %v2223
    %v2974 = vsel %vm2950, %v2909, %v2225
    %v2975 = vsel %vm2950, %v2910, %v2227
    %v2976 = vsel %vm2950, %v2911, %v2229
    %v2977 = vsel %vm2950, %v2912, %v2231
    %v2978 = vsel %vm2950, %v2913, %v2233
    %v2979 = vsel %vm2950, %v2914, %v2235
    %v2980 = vsel %vm2950, %v2915, %v2237
    %v2981 = vsel %vm2950, %v2916, %v2239
    %v2982 = vsel %vm2950, %v2917, %v2241
    %v2983 = vsel %vm2950, %v2918, %v2243
    %v2984 = vsel %vm2950, %v2919, %v2245
    %v2985 = vsel %vm2950, %v2920, %v2247
    %v2986 = vsel %vm2950, %v2921, %v2249
    %v2987 = vsel %vm2950, %v2922, %v2251
    %v2988 = vsel %vm2950, %v2923, %v2253
    %v2989 = vsel %vm2950, %v2924, %v2255
    %v2990 = vsel %vm2950, %v2925, %v2257
    %v2991 = vsel %vm2950, %v2926, %v2259
    %v2992 = vsel %vm2950, %v2927, %v2261
    %v2993 = vsel %vm2950, %v2928, %v2263
    %v2994 = vsel %vm2950, %v2929, %v2265
    %v2995 = vsel %vm2950, %v2930, %v2267
    %v2996 = vsel %vm2950, %v2931, %v2269
    %v2997 = vsel %vm2950, %v2932, %v2271
    %v2998 = vsel %vm2950, %v2933, %v2273
    %v2999 = vsel %vm2950, %v2934, %v2275
    %v3000 = vsel %vm2950, %v2935, %v2277
    %v3001 = vsel %vm2950, %v2936, %v2279
    %v3002 = vsel %vm2950, %v2937, %v2281
    %v3003 = vsel %vm2950, %v2938, %v2283
    %v3004 = vsel %vm2950, %v2939, %v2285
    %v3005 = vsel %vm2950, %v2940, %v2287
    %v3006 = vsel %vm2950, %v2941, %v2289
    %v3007 = vsel %vm2950, %v2942, %v2291
    %v3008 = vsel %vm2950, %v2943, %v2293
    %v3009 = vsel %vm2950, %v2944, %v2295
    %v3010 = vsel %vm2950, %v2945, %v2297
    %v3011 = vsel %vm2950, %v2946, %v2299
    %v3012 = vsel %vm2950, %v2947, %v2301
    %v3013 = vsel %vm2950, %v2948, %v2303
    %v3014 = vsel %vm2950, %v2949, %v2305
    %vm3015 = vcmask 916480
    %v3016 = vsel %vm3015, %v2951, %v2435
    %v3017 = vsel %vm3015, %v2952, %v2437
    %v3018 = vsel %vm3015, %v2953, %v2439
    %v3019 = vsel %vm3015, %v2954, %v2441
    %v3020 = vsel %vm3015, %v2955, %v2443
    %v3021 = vsel %vm3015, %v2956, %v2445
    %v3022 = vsel %vm3015, %v2957, %v2447
    %v3023 = vsel %vm3015, %v2958, %v2449
    %v3024 = vsel %vm3015, %v2959, %v2451
    %v3025 = vsel %vm3015, %v2960, %v2453
    %v3026 = vsel %vm3015, %v2961, %v2455
    %v3027 = vsel %vm3015, %v2962, %v2457
    %v3028 = vsel %vm3015, %v2963, %v2459
    %v3029 = vsel %vm3015, %v2964, %v2461
    %v3030 = vsel %vm3015, %v2965, %v2463
    %v3031 = vsel %vm3015, %v2966, %v2465
    %v3032 = vsel %vm3015, %v2967, %v2467
    %v3033 = vsel %vm3015, %v2968, %v2469
    %v3034 = vsel %vm3015, %v2969, %v2471
    %v3035 = vsel %vm3015, %v2970, %v2473
    %v3036 = vsel %vm3015, %v2971, %v2475
    %v3037 = vsel %vm3015, %v2972, %v2477
    %v3038 = vsel %vm3015, %v2973, %v2479
    %v3039 = vsel %vm3015, %v2974, %v2481
    %v3040 = vsel %vm3015, %v2975, %v2483
    %v3041 = vsel %vm3015, %v2976, %v2485
    %v3042 = vsel %vm3015, %v2977, %v2487
    %v3043 = vsel %vm3015, %v2978, %v2489
    %v3044 = vsel %vm3015, %v2979, %v2491
    %v3045 = vsel %vm3015, %v2980, %v2493
    %v3046 = vsel %vm3015, %v2981, %v2495
    %v3047 = vsel %vm3015, %v2982, %v2497
    %v3048 = vsel %vm3015, %v2983, %v2499
    %v3049 = vsel %vm3015, %v2984, %v2501
    %v3050 = vsel %vm3015, %v2985, %v2503
    %v3051 = vsel %vm3015, %v2986, %v2505
    %v3052 = vsel %vm3015, %v2987, %v2507
    %v3053 = vsel %vm3015, %v2988, %v2509
    %v3054 = vsel %vm3015, %v2989, %v2511
    %v3055 = vsel %vm3015, %v2990, %v2513
    %v3056 = vsel %vm3015, %v2991, %v2515
    %v3057 = vsel %vm3015, %v2992, %v2517
    %v3058 = vsel %vm3015, %v2993, %v2519
    %v3059 = vsel %vm3015, %v2994, %v2521
    %v3060 = vsel %vm3015, %v2995, %v2523
    %v3061 = vsel %vm3015, %v2996, %v2525
    %v3062 = vsel %vm3015, %v2997, %v2527
    %v3063 = vsel %vm3015, %v2998, %v2529
    %v3064 = vsel %vm3015, %v2999, %v2531
    %v3065 = vsel %vm3015, %v3000, %v2533
    %v3066 = vsel %vm3015, %v3001, %v2535
    %v3067 = vsel %vm3015, %v3002, %v2537
    %v3068 = vsel %vm3015, %v3003, %v2539
    %v3069 = vsel %vm3015, %v3004, %v2541
    %v3070 = vsel %vm3015, %v3005, %v2543
    %v3071 = vsel %vm3015, %v3006, %v2545
    %v3072 = vsel %vm3015, %v3007, %v2547
    %v3073 = vsel %vm3015, %v3008, %v2549
    %v3074 = vsel %vm3015, %v3009, %v2551
    %v3075 = vsel %vm3015, %v3010, %v2553
    %v3076 = vsel %vm3015, %v3011, %v2555
    %v3077 = vsel %vm3015, %v3012, %v2557
    %v3078 = vsel %vm3015, %v3013, %v2559
    %v3079 = vsel %vm3015, %v3014, %v2561
    %v3080 = vld [vmem:[%s1] sm:$0xff]
    %v3081 = vld [vmem:[%s1 + $0x8] sm:$0xff]
    %v3082 = vld [vmem:[%s1 + $0x10] sm:$0xff]
    %v3083 = vld [vmem:[%s1 + $0x18] sm:$0xff]
    %v3084 = vld [vmem:[%s1 + $0x20] sm:$0xff]
    %v3085 = vld [vmem:[%s1 + $0x28] sm:$0xff]
    %v3086 = vld [vmem:[%s1 + $0x30] sm:$0xff]
    %v3087 = vld [vmem:[%s1 + $0x38] sm:$0xff]
    %v3088 = vld [vmem:[%s1 + $0x40] sm:$0xff]
    %v3089 = vld [vmem:[%s1 + $0x48] sm:$0xff]
    %v3090 = vld [vmem:[%s1 + $0x50] sm:$0xff]
    %v3091 = vld [vmem:[%s1 + $0x58] sm:$0xff]
    %v3092 = vld [vmem:[%s1 + $0x60] sm:$0xff]
    %v3093 = vld [vmem:[%s1 + $0x68] sm:$0xff]
    %v3094 = vld [vmem:[%s1 + $0x70] sm:$0xff]
    %v3095 = vld [vmem:[%s1 + $0x78] sm:$0xff]
    %v3096 = vld [vmem:[%s1 + $0x80] sm:$0xff]
    %v3097 = vld [vmem:[%s1 + $0x88] sm:$0xff]
    %v3099 = vsel %vm40, %v770, 0
    %v3102 = vsel %vm40, %v771, 0
    %v3105 = vsel %vm40, %v772, 0
    %v3108 = vsel %vm40, %v773, 0
    %v3111 = vsel %vm40, %v774, 0
    %v3114 = vsel %vm40, %v775, 0
    %v3117 = vsel %vm40, %v776, 0
    %v3120 = vsel %vm40, %v777, 0
    %v3123 = vsel %vm40, %v778, 0
    %v3126 = vsel %vm40, %v779, 0
    %v3129 = vsel %vm40, %v780, 0
    %v3132 = vsel %vm40, %v781, 0
    %v3135 = vsel %vm40, %v782, 0
    %v3138 = vsel %vm40, %v783, 0
    %v3141 = vsel %vm40, %v784, 0
    %v3144 = vsel %vm40, %v785, 0
    %v3147 = vsel %vm40, %v786, 0
    %v3150 = vsel %vm40, %v787, 0
    %v3153 = vsel %vm40, %v788, 0
    %v3156 = vsel %vm40, %v789, 0
    %v3159 = vsel %vm40, %v790, 0
    %v3162 = vsel %vm40, %v791, 0
    %v3165 = vsel %vm40, %v792, 0
    %v3168 = vsel %vm40, %v793, 0
    %v3171 = vsel %vm40, %v794, 0
    %v3174 = vsel %vm40, %v795, 0
    %v3177 = vsel %vm40, %v796, 0
    %v3180 = vsel %vm40, %v797, 0
    %v3183 = vsel %vm40, %v798, 0
    %v3186 = vsel %vm40, %v799, 0
    %v3189 = vsel %vm40, %v800, 0
    %v3192 = vsel %vm40, %v801, 0
    %v3195 = vsel %vm40, %v802, 0
    %v3198 = vsel %vm40, %v803, 0
    %v3201 = vsel %vm40, %v804, 0
    %v3204 = vsel %vm40, %v805, 0
    %v3207 = vsel %vm40, %v806, 0
    %v3210 = vsel %vm40, %v807, 0
    %v3213 = vsel %vm40, %v808, 0
    %v3216 = vsel %vm40, %v809, 0
    %v3219 = vsel %vm40, %v810, 0
    %v3222 = vsel %vm40, %v811, 0
    %v3225 = vsel %vm40, %v812, 0
    %v3228 = vsel %vm40, %v813, 0
    %v3231 = vsel %vm40, %v814, 0
    %v3234 = vsel %vm40, %v815, 0
    %v3237 = vsel %vm40, %v816, 0
    %v3240 = vsel %vm40, %v817, 0
    %v3243 = vsel %vm40, %v818, 0
    %v3246 = vsel %vm40, %v819, 0
    %v3249 = vsel %vm40, %v820, 0
    %v3252 = vsel %vm40, %v821, 0
    %v3255 = vsel %vm40, %v822, 0
    %v3258 = vsel %vm40, %v823, 0
    %v3261 = vsel %vm40, %v824, 0
    %v3264 = vsel %vm40, %v825, 0
    %v3267 = vsel %vm40, %v826, 0
    %v3270 = vsel %vm40, %v827, 0
    %v3273 = vsel %vm40, %v828, 0
    %v3276 = vsel %vm40, %v829, 0
    %v3279 = vsel %vm40, %v830, 0
    %v3282 = vsel %vm40, %v831, 0
    %v3285 = vsel %vm40, %v832, 0
    %v3288 = vsel %vm40, %v833, 0
    %3290 = vmatprep.subr.mxu0 0.0
    %3291 = vmatpush1.msra.mxu0 %v3095
    %3292 = vmatprep.subr.mxu0 0.0
    %3293 = vmatpush1.msra.mxu0 %v3094
    %3294 = vmatprep.subr.mxu0 0.0
    %3295 = vmatpush1.msra.mxu0 %v3093
    %3296 = vmatprep.subr.mxu0 0.0
    %3297 = vmatpush1.msra.mxu0 %v3092
    %3298 = vmatprep.subr.mxu0 0.0
    %3299 = vmatpush1.msra.mxu0 %v3091
    %3300 = vmatprep.subr.mxu0 0.0
    %3301 = vmatpush1.msra.mxu0 %v3090
    %3302 = vmatprep.subr.mxu0 0.0
    %3303 = vmatpush1.msra.mxu0 %v3089
    %3304 = vmatprep.subr.mxu0 0.0
    %3305 = vmatpush1.msra.mxu0 %v3088
    %3306 = vmatprep.subr.mxu0 0.0
    %3307 = vmatpush1.msra.mxu0 %v3087
    %3308 = vmatprep.subr.mxu0 0.0
    %3309 = vmatpush1.msra.mxu0 %v3086
    %3310 = vmatprep.subr.mxu0 0.0
    %3311 = vmatpush1.msra.mxu0 %v3085
    %3312 = vmatprep.subr.mxu0 0.0
    %3313 = vmatpush1.msra.mxu0 %v3084
    %3314 = vmatprep.subr.mxu0 0.0
    %3315 = vmatpush1.msra.mxu0 %v3083
    %3316 = vmatprep.subr.mxu0 0.0
    %3317 = vmatpush1.msra.mxu0 %v3082
    %3318 = vmatprep.subr.mxu0 0.0
    %3319 = vmatpush1.msra.mxu0 %v3081
    %3320 = vmatprep.subr.mxu0 0.0
    %3321 = vmatpush1.msra.mxu0 %v3080
    %3322 = vmatprep.subr.mxu0 0.0
    %3323 = vmatpush2.msra.mxu0 0.0
    %3324 = vmatprep.subr.mxu0 0.0
    %3325 = vmatpush2.msra.mxu0 0.0
    %3326 = vmatprep.subr.mxu0 0.0
    %3327 = vmatpush2.msra.mxu0 0.0
    %3328 = vmatprep.subr.mxu0 0.0
    %3329 = vmatpush2.msra.mxu0 0.0
    %3330 = vmatprep.subr.mxu0 0.0
    %3331 = vmatpush2.msra.mxu0 0.0
    %3332 = vmatprep.subr.mxu0 0.0
    %3333 = vmatpush2.msra.mxu0 0.0
    %3334 = vmatprep.subr.mxu0 0.0
    %3335 = vmatpush2.msra.mxu0 0.0
    %3336 = vmatprep.subr.mxu0 0.0
    %3337 = vmatpush2.msra.mxu0 0.0
    %3338 = vmatprep.subr.mxu0 0.0
    %3339 = vmatpush2.msra.mxu0 0.0
    %3340 = vmatprep.subr.mxu0 0.0
    %3341 = vmatpush2.msra.mxu0 0.0
    %3342 = vmatprep.subr.mxu0 0.0
    %3343 = vmatpush2.msra.mxu0 0.0
    %3344 = vmatprep.subr.mxu0 0.0
    %3345 = vmatpush2.msra.mxu0 0.0
    %3346 = vmatprep.subr.mxu0 0.0
    %3347 = vmatpush2.msra.mxu0 0.0
    %3348 = vmatprep.subr.mxu0 0.0
    %3349 = vmatpush2.msra.mxu0 0.0
    %3350 = vmatprep.subr.mxu0 0.0
    %3351 = vmatpush2.msra.mxu0 %v3097
    %3352 = vmatprep.subr.mxu0 0.0
    %3353 = vmatpush2.msra.mxu0 %v3096
    %3354 = vmatprep.mubr.f32.mxu0 %v3099
    %3355 = vmatmul.mubr.f32.gmra.mxu0 %v3016
    %v3356 = vpop.f32.mrf.mxu0
    %v3357 = vadd.f32 0.0, %v3356
    %v3358 = vpop.f32.mrf.mxu0
    %3359 = vmatprep.mubr.f32.mxu0 %v3102
    %3360 = vmatmul.mubr.f32.gmra.mxu0 %v3017
    %v3361 = vpop.f32.mrf.mxu0
    %v3362 = vadd.f32 0.0, %v3361
    %v3363 = vpop.f32.mrf.mxu0
    %3364 = vmatprep.mubr.f32.mxu0 %v3105
    %3365 = vmatmul.mubr.f32.gmra.mxu0 %v3018
    %v3366 = vpop.f32.mrf.mxu0
    %v3367 = vadd.f32 0.0, %v3366
    %v3368 = vpop.f32.mrf.mxu0
    %3369 = vmatprep.mubr.f32.mxu0 %v3108
    %3370 = vmatmul.mubr.f32.gmra.mxu0 %v3019
    %v3371 = vpop.f32.mrf.mxu0
    %v3372 = vadd.f32 0.0, %v3371
    %v3373 = vpop.f32.mrf.mxu0
    %3374 = vmatprep.mubr.f32.mxu0 %v3111
    %3375 = vmatmul.mubr.f32.gmra.mxu0 %v3020
    %v3376 = vpop.f32.mrf.mxu0
    %v3377 = vadd.f32 0.0, %v3376
    %v3378 = vpop.f32.mrf.mxu0
    %3379 = vmatprep.mubr.f32.mxu0 %v3114
    %3380 = vmatmul.mubr.f32.gmra.mxu0 %v3021
    %v3381 = vpop.f32.mrf.mxu0
    %v3382 = vadd.f32 0.0, %v3381
    %v3383 = vpop.f32.mrf.mxu0
    %3384 = vmatprep.mubr.f32.mxu0 %v3117
    %3385 = vmatmul.mubr.f32.gmra.mxu0 %v3022
    %v3386 = vpop.f32.mrf.mxu0
    %v3387 = vadd.f32 0.0, %v3386
    %v3388 = vpop.f32.mrf.mxu0
    %3389 = vmatprep.mubr.f32.mxu0 %v3120
    %3390 = vmatmul.mubr.f32.gmra.mxu0 %v3023
    %v3391 = vpop.f32.mrf.mxu0
    %v3392 = vadd.f32 0.0, %v3391
    %v3393 = vpop.f32.mrf.mxu0
    %3394 = vmatprep.mubr.f32.mxu0 %v3123
    %3395 = vmatmul.mubr.f32.gmra.mxu0 %v3024
    %v3396 = vpop.f32.mrf.mxu0
    %v3397 = vadd.f32 0.0, %v3396
    %v3398 = vpop.f32.mrf.mxu0
    %3399 = vmatprep.mubr.f32.mxu0 %v3126
    %3400 = vmatmul.mubr.f32.gmra.mxu0 %v3025
    %v3401 = vpop.f32.mrf.mxu0
    %v3402 = vadd.f32 0.0, %v3401
    %v3403 = vpop.f32.mrf.mxu0
    %3404 = vmatprep.mubr.f32.mxu0 %v3129
    %3405 = vmatmul.mubr.f32.gmra.mxu0 %v3026
    %v3406 = vpop.f32.mrf.mxu0
    %v3407 = vadd.f32 0.0, %v3406
    %v3408 = vpop.f32.mrf.mxu0
    %3409 = vmatprep.mubr.f32.mxu0 %v3132
    %3410 = vmatmul.mubr.f32.gmra.mxu0 %v3027
    %v3411 = vpop.f32.mrf.mxu0
    %v3412 = vadd.f32 0.0, %v3411
    %v3413 = vpop.f32.mrf.mxu0
    %3414 = vmatprep.mubr.f32.mxu0 %v3135
    %3415 = vmatmul.mubr.f32.gmra.mxu0 %v3028
    %v3416 = vpop.f32.mrf.mxu0
    %v3417 = vadd.f32 0.0, %v3416
    %v3418 = vpop.f32.mrf.mxu0
    %3419 = vmatprep.mubr.f32.mxu0 %v3138
    %3420 = vmatmul.mubr.f32.gmra.mxu0 %v3029
    %v3421 = vpop.f32.mrf.mxu0
    %v3422 = vadd.f32 0.0, %v3421
    %v3423 = vpop.f32.mrf.mxu0
    %3424 = vmatprep.mubr.f32.mxu0 %v3141
    %3425 = vmatmul.mubr.f32.gmra.mxu0 %v3030
    %v3426 = vpop.f32.mrf.mxu0
    %v3427 = vadd.f32 0.0, %v3426
    %v3428 = vpop.f32.mrf.mxu0
    %3429 = vmatprep.mubr.f32.mxu0 %v3144
    %3430 = vmatmul.mubr.f32.gmra.mxu0 %v3031
    %v3431 = vpop.f32.mrf.mxu0
    %v3432 = vadd.f32 0.0, %v3431
    %v3433 = vpop.f32.mrf.mxu0
    %3434 = vmatprep.mubr.f32.mxu0 %v3147
    %3435 = vmatmul.mubr.f32.gmra.mxu0 %v3032
    %v3436 = vpop.f32.mrf.mxu0
    %v3437 = vadd.f32 0.0, %v3436
    %v3438 = vpop.f32.mrf.mxu0
    %3439 = vmatprep.mubr.f32.mxu0 %v3150
    %3440 = vmatmul.mubr.f32.gmra.mxu0 %v3033
    %v3441 = vpop.f32.mrf.mxu0
    %v3442 = vadd.f32 0.0, %v3441
    %v3443 = vpop.f32.mrf.mxu0
    %3444 = vmatprep.mubr.f32.mxu0 %v3153
    %3445 = vmatmul.mubr.f32.gmra.mxu0 %v3034
    %v3446 = vpop.f32.mrf.mxu0
    %v3447 = vadd.f32 0.0, %v3446
    %v3448 = vpop.f32.mrf.mxu0
    %3449 = vmatprep.mubr.f32.mxu0 %v3156
    %3450 = vmatmul.mubr.f32.gmra.mxu0 %v3035
    %v3451 = vpop.f32.mrf.mxu0
    %v3452 = vadd.f32 0.0, %v3451
    %v3453 = vpop.f32.mrf.mxu0
    %3454 = vmatprep.mubr.f32.mxu0 %v3159
    %3455 = vmatmul.mubr.f32.gmra.mxu0 %v3036
    %v3456 = vpop.f32.mrf.mxu0
    %v3457 = vadd.f32 0.0, %v3456
    %v3458 = vpop.f32.mrf.mxu0
    %3459 = vmatprep.mubr.f32.mxu0 %v3162
    %3460 = vmatmul.mubr.f32.gmra.mxu0 %v3037
    %v3461 = vpop.f32.mrf.mxu0
    %v3462 = vadd.f32 0.0, %v3461
    %v3463 = vpop.f32.mrf.mxu0
    %3464 = vmatprep.mubr.f32.mxu0 %v3165
    %3465 = vmatmul.mubr.f32.gmra.mxu0 %v3038
    %v3466 = vpop.f32.mrf.mxu0
    %v3467 = vadd.f32 0.0, %v3466
    %v3468 = vpop.f32.mrf.mxu0
    %3469 = vmatprep.mubr.f32.mxu0 %v3168
    %3470 = vmatmul.mubr.f32.gmra.mxu0 %v3039
    %v3471 = vpop.f32.mrf.mxu0
    %v3472 = vadd.f32 0.0, %v3471
    %v3473 = vpop.f32.mrf.mxu0
    %3474 = vmatprep.mubr.f32.mxu0 %v3171
    %3475 = vmatmul.mubr.f32.gmra.mxu0 %v3040
    %v3476 = vpop.f32.mrf.mxu0
    %v3477 = vadd.f32 0.0, %v3476
    %v3478 = vpop.f32.mrf.mxu0
    %3479 = vmatprep.mubr.f32.mxu0 %v3174
    %3480 = vmatmul.mubr.f32.gmra.mxu0 %v3041
    %v3481 = vpop.f32.mrf.mxu0
    %v3482 = vadd.f32 0.0, %v3481
    %v3483 = vpop.f32.mrf.mxu0
    %3484 = vmatprep.mubr.f32.mxu0 %v3177
    %3485 = vmatmul.mubr.f32.gmra.mxu0 %v3042
    %v3486 = vpop.f32.mrf.mxu0
    %v3487 = vadd.f32 0.0, %v3486
    %v3488 = vpop.f32.mrf.mxu0
    %3489 = vmatprep.mubr.f32.mxu0 %v3180
    %3490 = vmatmul.mubr.f32.gmra.mxu0 %v3043
    %v3491 = vpop.f32.mrf.mxu0
    %v3492 = vadd.f32 0.0, %v3491
    %v3493 = vpop.f32.mrf.mxu0
    %3494 = vmatprep.mubr.f32.mxu0 %v3183
    %3495 = vmatmul.mubr.f32.gmra.mxu0 %v3044
    %v3496 = vpop.f32.mrf.mxu0
    %v3497 = vadd.f32 0.0, %v3496
    %v3498 = vpop.f32.mrf.mxu0
    %3499 = vmatprep.mubr.f32.mxu0 %v3186
    %3500 = vmatmul.mubr.f32.gmra.mxu0 %v3045
    %v3501 = vpop.f32.mrf.mxu0
    %v3502 = vadd.f32 0.0, %v3501
    %v3503 = vpop.f32.mrf.mxu0
    %3504 = vmatprep.mubr.f32.mxu0 %v3189
    %3505 = vmatmul.mubr.f32.gmra.mxu0 %v3046
    %v3506 = vpop.f32.mrf.mxu0
    %v3507 = vadd.f32 0.0, %v3506
    %v3508 = vpop.f32.mrf.mxu0
    %3509 = vmatprep.mubr.f32.mxu0 %v3192
    %3510 = vmatmul.mubr.f32.gmra.mxu0 %v3047
    %v3511 = vpop.f32.mrf.mxu0
    %v3512 = vadd.f32 0.0, %v3511
    %v3513 = vpop.f32.mrf.mxu0
    %3514 = vmatprep.mubr.f32.mxu0 %v3195
    %3515 = vmatmul.mubr.f32.gmra.mxu0 %v3048
    %v3516 = vpop.f32.mrf.mxu0
    %v3517 = vadd.f32 0.0, %v3516
    %v3518 = vpop.f32.mrf.mxu0
    %3519 = vmatprep.mubr.f32.mxu0 %v3198
    %3520 = vmatmul.mubr.f32.gmra.mxu0 %v3049
    %v3521 = vpop.f32.mrf.mxu0
    %v3522 = vadd.f32 0.0, %v3521
    %v3523 = vpop.f32.mrf.mxu0
    %3524 = vmatprep.mubr.f32.mxu0 %v3201
    %3525 = vmatmul.mubr.f32.gmra.mxu0 %v3050
    %v3526 = vpop.f32.mrf.mxu0
    %v3527 = vadd.f32 0.0, %v3526
    %v3528 = vpop.f32.mrf.mxu0
    %3529 = vmatprep.mubr.f32.mxu0 %v3204
    %3530 = vmatmul.mubr.f32.gmra.mxu0 %v3051
    %v3531 = vpop.f32.mrf.mxu0
    %v3532 = vadd.f32 0.0, %v3531
    %v3533 = vpop.f32.mrf.mxu0
    %3534 = vmatprep.mubr.f32.mxu0 %v3207
    %3535 = vmatmul.mubr.f32.gmra.mxu0 %v3052
    %v3536 = vpop.f32.mrf.mxu0
    %v3537 = vadd.f32 0.0, %v3536
    %v3538 = vpop.f32.mrf.mxu0
    %3539 = vmatprep.mubr.f32.mxu0 %v3210
    %3540 = vmatmul.mubr.f32.gmra.mxu0 %v3053
    %v3541 = vpop.f32.mrf.mxu0
    %v3542 = vadd.f32 0.0, %v3541
    %v3543 = vpop.f32.mrf.mxu0
    %3544 = vmatprep.mubr.f32.mxu0 %v3213
    %3545 = vmatmul.mubr.f32.gmra.mxu0 %v3054
    %v3546 = vpop.f32.mrf.mxu0
    %v3547 = vadd.f32 0.0, %v3546
    %v3548 = vpop.f32.mrf.mxu0
    %3549 = vmatprep.mubr.f32.mxu0 %v3216
    %3550 = vmatmul.mubr.f32.gmra.mxu0 %v3055
    %v3551 = vpop.f32.mrf.mxu0
    %v3552 = vadd.f32 0.0, %v3551
    %v3553 = vpop.f32.mrf.mxu0
    %3554 = vmatprep.mubr.f32.mxu0 %v3219
    %3555 = vmatmul.mubr.f32.gmra.mxu0 %v3056
    %v3556 = vpop.f32.mrf.mxu0
    %v3557 = vadd.f32 0.0, %v3556
    %v3558 = vpop.f32.mrf.mxu0
    %3559 = vmatprep.mubr.f32.mxu0 %v3222
    %3560 = vmatmul.mubr.f32.gmra.mxu0 %v3057
    %v3561 = vpop.f32.mrf.mxu0
    %v3562 = vadd.f32 0.0, %v3561
    %v3563 = vpop.f32.mrf.mxu0
    %3564 = vmatprep.mubr.f32.mxu0 %v3225
    %3565 = vmatmul.mubr.f32.gmra.mxu0 %v3058
    %v3566 = vpop.f32.mrf.mxu0
    %v3567 = vadd.f32 0.0, %v3566
    %v3568 = vpop.f32.mrf.mxu0
    %3569 = vmatprep.mubr.f32.mxu0 %v3228
    %3570 = vmatmul.mubr.f32.gmra.mxu0 %v3059
    %v3571 = vpop.f32.mrf.mxu0
    %v3572 = vadd.f32 0.0, %v3571
    %v3573 = vpop.f32.mrf.mxu0
    %3574 = vmatprep.mubr.f32.mxu0 %v3231
    %3575 = vmatmul.mubr.f32.gmra.mxu0 %v3060
    %v3576 = vpop.f32.mrf.mxu0
    %v3577 = vadd.f32 0.0, %v3576
    %v3578 = vpop.f32.mrf.mxu0
    %3579 = vmatprep.mubr.f32.mxu0 %v3234
    %3580 = vmatmul.mubr.f32.gmra.mxu0 %v3061
    %v3581 = vpop.f32.mrf.mxu0
    %v3582 = vadd.f32 0.0, %v3581
    %v3583 = vpop.f32.mrf.mxu0
    %3584 = vmatprep.mubr.f32.mxu0 %v3237
    %3585 = vmatmul.mubr.f32.gmra.mxu0 %v3062
    %v3586 = vpop.f32.mrf.mxu0
    %v3587 = vadd.f32 0.0, %v3586
    %v3588 = vpop.f32.mrf.mxu0
    %3589 = vmatprep.mubr.f32.mxu0 %v3240
    %3590 = vmatmul.mubr.f32.gmra.mxu0 %v3063
    %v3591 = vpop.f32.mrf.mxu0
    %v3592 = vadd.f32 0.0, %v3591
    %v3593 = vpop.f32.mrf.mxu0
    %3594 = vmatprep.mubr.f32.mxu0 %v3243
    %3595 = vmatmul.mubr.f32.gmra.mxu0 %v3064
    %v3596 = vpop.f32.mrf.mxu0
    %v3597 = vadd.f32 0.0, %v3596
    %v3598 = vpop.f32.mrf.mxu0
    %3599 = vmatprep.mubr.f32.mxu0 %v3246
    %3600 = vmatmul.mubr.f32.gmra.mxu0 %v3065
    %v3601 = vpop.f32.mrf.mxu0
    %v3602 = vadd.f32 0.0, %v3601
    %v3603 = vpop.f32.mrf.mxu0
    %3604 = vmatprep.mubr.f32.mxu0 %v3249
    %3605 = vmatmul.mubr.f32.gmra.mxu0 %v3066
    %v3606 = vpop.f32.mrf.mxu0
    %v3607 = vadd.f32 0.0, %v3606
    %v3608 = vpop.f32.mrf.mxu0
    %3609 = vmatprep.mubr.f32.mxu0 %v3252
    %3610 = vmatmul.mubr.f32.gmra.mxu0 %v3067
    %v3611 = vpop.f32.mrf.mxu0
    %v3612 = vadd.f32 0.0, %v3611
    %v3613 = vpop.f32.mrf.mxu0
    %3614 = vmatprep.mubr.f32.mxu0 %v3255
    %3615 = vmatmul.mubr.f32.gmra.mxu0 %v3068
    %v3616 = vpop.f32.mrf.mxu0
    %v3617 = vadd.f32 0.0, %v3616
    %v3618 = vpop.f32.mrf.mxu0
    %3619 = vmatprep.mubr.f32.mxu0 %v3258
    %3620 = vmatmul.mubr.f32.gmra.mxu0 %v3069
    %v3621 = vpop.f32.mrf.mxu0
    %v3622 = vadd.f32 0.0, %v3621
    %v3623 = vpop.f32.mrf.mxu0
    %3624 = vmatprep.mubr.f32.mxu0 %v3261
    %3625 = vmatmul.mubr.f32.gmra.mxu0 %v3070
    %v3626 = vpop.f32.mrf.mxu0
    %v3627 = vadd.f32 0.0, %v3626
    %v3628 = vpop.f32.mrf.mxu0
    %3629 = vmatprep.mubr.f32.mxu0 %v3264
    %3630 = vmatmul.mubr.f32.gmra.mxu0 %v3071
    %v3631 = vpop.f32.mrf.mxu0
    %v3632 = vadd.f32 0.0, %v3631
    %v3633 = vpop.f32.mrf.mxu0
    %3634 = vmatprep.mubr.f32.mxu0 %v3267
    %3635 = vmatmul.mubr.f32.gmra.mxu0 %v3072
    %v3636 = vpop.f32.mrf.mxu0
    %v3637 = vadd.f32 0.0, %v3636
    %v3638 = vpop.f32.mrf.mxu0
    %3639 = vmatprep.mubr.f32.mxu0 %v3270
    %3640 = vmatmul.mubr.f32.gmra.mxu0 %v3073
    %v3641 = vpop.f32.mrf.mxu0
    %v3642 = vadd.f32 0.0, %v3641
    %v3643 = vpop.f32.mrf.mxu0
    %3644 = vmatprep.mubr.f32.mxu0 %v3273
    %3645 = vmatmul.mubr.f32.gmra.mxu0 %v3074
    %v3646 = vpop.f32.mrf.mxu0
    %v3647 = vadd.f32 0.0, %v3646
    %v3648 = vpop.f32.mrf.mxu0
    %3649 = vmatprep.mubr.f32.mxu0 %v3276
    %3650 = vmatmul.mubr.f32.gmra.mxu0 %v3075
    %v3651 = vpop.f32.mrf.mxu0
    %v3652 = vadd.f32 0.0, %v3651
    %v3653 = vpop.f32.mrf.mxu0
    %3654 = vmatprep.mubr.f32.mxu0 %v3279
    %3655 = vmatmul.mubr.f32.gmra.mxu0 %v3076
    %v3656 = vpop.f32.mrf.mxu0
    %v3657 = vadd.f32 0.0, %v3656
    %v3658 = vpop.f32.mrf.mxu0
    %3659 = vmatprep.mubr.f32.mxu0 %v3282
    %3660 = vmatmul.mubr.f32.gmra.mxu0 %v3077
    %v3661 = vpop.f32.mrf.mxu0
    %v3662 = vadd.f32 0.0, %v3661
    %v3663 = vpop.f32.mrf.mxu0
    %3664 = vmatprep.mubr.f32.mxu0 %v3285
    %3665 = vmatmul.mubr.f32.gmra.mxu0 %v3078
    %v3666 = vpop.f32.mrf.mxu0
    %v3667 = vadd.f32 0.0, %v3666
    %v3668 = vpop.f32.mrf.mxu0
    %3669 = vmatprep.mubr.f32.mxu0 %v3288
    %3670 = vmatmul.mubr.f32.gmra.mxu0 %v3079
    %v3671 = vpop.f32.mrf.mxu0
    %v3672 = vadd.f32 0.0, %v3671
    %v3673 = vpop.f32.mrf.mxu0
    %3674 = vdwg.mxu0
    %v3675 = vsel %vm40, %v3357, 0.0
    %v3676 = vsel %vm40, %v3362, 0.0
    %v3677 = vadd.f32 %v3675, %v3676
    %v3678 = vsel %vm40, %v3367, 0.0
    %v3679 = vadd.f32 %v3677, %v3678
    %v3680 = vsel %vm40, %v3372, 0.0
    %v3681 = vadd.f32 %v3679, %v3680
    %v3682 = vsel %vm40, %v3377, 0.0
    %v3683 = vadd.f32 %v3681, %v3682
    %v3684 = vsel %vm40, %v3382, 0.0
    %v3685 = vadd.f32 %v3683, %v3684
    %v3686 = vsel %vm40, %v3387, 0.0
    %v3687 = vadd.f32 %v3685, %v3686
    %v3688 = vsel %vm40, %v3392, 0.0
    %v3689 = vadd.f32 %v3687, %v3688
    %v3690 = vsel %vm40, %v3397, 0.0
    %v3691 = vadd.f32 %v3689, %v3690
    %v3692 = vsel %vm40, %v3402, 0.0
    %v3693 = vadd.f32 %v3691, %v3692
    %v3694 = vsel %vm40, %v3407, 0.0
    %v3695 = vadd.f32 %v3693, %v3694
    %v3696 = vsel %vm40, %v3412, 0.0
    %v3697 = vadd.f32 %v3695, %v3696
    %v3698 = vsel %vm40, %v3417, 0.0
    %v3699 = vadd.f32 %v3697, %v3698
    %v3700 = vsel %vm40, %v3422, 0.0
    %v3701 = vadd.f32 %v3699, %v3700
    %v3702 = vsel %vm40, %v3427, 0.0
    %v3703 = vadd.f32 %v3701, %v3702
    %v3704 = vsel %vm40, %v3432, 0.0
    %v3705 = vadd.f32 %v3703, %v3704
    %v3706 = vsel %vm40, %v3437, 0.0
    %v3707 = vadd.f32 %v3705, %v3706
    %v3708 = vsel %vm40, %v3442, 0.0
    %v3709 = vadd.f32 %v3707, %v3708
    %v3710 = vsel %vm40, %v3447, 0.0
    %v3711 = vadd.f32 %v3709, %v3710
    %v3712 = vsel %vm40, %v3452, 0.0
    %v3713 = vadd.f32 %v3711, %v3712
    %v3714 = vsel %vm40, %v3457, 0.0
    %v3715 = vadd.f32 %v3713, %v3714
    %v3716 = vsel %vm40, %v3462, 0.0
    %v3717 = vadd.f32 %v3715, %v3716
    %v3718 = vsel %vm40, %v3467, 0.0
    %v3719 = vadd.f32 %v3717, %v3718
    %v3720 = vsel %vm40, %v3472, 0.0
    %v3721 = vadd.f32 %v3719, %v3720
    %v3722 = vsel %vm40, %v3477, 0.0
    %v3723 = vadd.f32 %v3721, %v3722
    %v3724 = vsel %vm40, %v3482, 0.0
    %v3725 = vadd.f32 %v3723, %v3724
    %v3726 = vsel %vm40, %v3487, 0.0
    %v3727 = vadd.f32 %v3725, %v3726
    %v3728 = vsel %vm40, %v3492, 0.0
    %v3729 = vadd.f32 %v3727, %v3728
    %v3730 = vsel %vm40, %v3497, 0.0
    %v3731 = vadd.f32 %v3729, %v3730
    %v3732 = vsel %vm40, %v3502, 0.0
    %v3733 = vadd.f32 %v3731, %v3732
    %v3734 = vsel %vm40, %v3507, 0.0
    %v3735 = vadd.f32 %v3733, %v3734
    %v3736 = vsel %vm40, %v3512, 0.0
    %v3737 = vadd.f32 %v3735, %v3736
    %v3738 = vsel %vm40, %v3517, 0.0
    %v3739 = vadd.f32 %v3737, %v3738
    %v3740 = vsel %vm40, %v3522, 0.0
    %v3741 = vadd.f32 %v3739, %v3740
    %v3742 = vsel %vm40, %v3527, 0.0
    %v3743 = vadd.f32 %v3741, %v3742
    %v3744 = vsel %vm40, %v3532, 0.0
    %v3745 = vadd.f32 %v3743, %v3744
    %v3746 = vsel %vm40, %v3537, 0.0
    %v3747 = vadd.f32 %v3745, %v3746
    %v3748 = vsel %vm40, %v3542, 0.0
    %v3749 = vadd.f32 %v3747, %v3748
    %v3750 = vsel %vm40, %v3547, 0.0
    %v3751 = vadd.f32 %v3749, %v3750
    %v3752 = vsel %vm40, %v3552, 0.0
    %v3753 = vadd.f32 %v3751, %v3752
    %v3754 = vsel %vm40, %v3557, 0.0
    %v3755 = vadd.f32 %v3753, %v3754
    %v3756 = vsel %vm40, %v3562, 0.0
    %v3757 = vadd.f32 %v3755, %v3756
    %v3758 = vsel %vm40, %v3567, 0.0
    %v3759 = vadd.f32 %v3757, %v3758
    %v3760 = vsel %vm40, %v3572, 0.0
    %v3761 = vadd.f32 %v3759, %v3760
    %v3762 = vsel %vm40, %v3577, 0.0
    %v3763 = vadd.f32 %v3761, %v3762
    %v3764 = vsel %vm40, %v3582, 0.0
    %v3765 = vadd.f32 %v3763, %v3764
    %v3766 = vsel %vm40, %v3587, 0.0
    %v3767 = vadd.f32 %v3765, %v3766
    %v3768 = vsel %vm40, %v3592, 0.0
    %v3769 = vadd.f32 %v3767, %v3768
    %v3770 = vsel %vm40, %v3597, 0.0
    %v3771 = vadd.f32 %v3769, %v3770
    %v3772 = vsel %vm40, %v3602, 0.0
    %v3773 = vadd.f32 %v3771, %v3772
    %v3774 = vsel %vm40, %v3607, 0.0
    %v3775 = vadd.f32 %v3773, %v3774
    %v3776 = vsel %vm40, %v3612, 0.0
    %v3777 = vadd.f32 %v3775, %v3776
    %v3778 = vsel %vm40, %v3617, 0.0
    %v3779 = vadd.f32 %v3777, %v3778
    %v3780 = vsel %vm40, %v3622, 0.0
    %v3781 = vadd.f32 %v3779, %v3780
    %v3782 = vsel %vm40, %v3627, 0.0
    %v3783 = vadd.f32 %v3781, %v3782
    %v3784 = vsel %vm40, %v3632, 0.0
    %v3785 = vadd.f32 %v3783, %v3784
    %v3786 = vsel %vm40, %v3637, 0.0
    %v3787 = vadd.f32 %v3785, %v3786
    %v3788 = vsel %vm40, %v3642, 0.0
    %v3789 = vadd.f32 %v3787, %v3788
    %v3790 = vsel %vm40, %v3647, 0.0
    %v3791 = vadd.f32 %v3789, %v3790
    %v3792 = vsel %vm40, %v3652, 0.0
    %v3793 = vadd.f32 %v3791, %v3792
    %v3794 = vsel %vm40, %v3657, 0.0
    %v3795 = vadd.f32 %v3793, %v3794
    %v3796 = vsel %vm40, %v3662, 0.0
    %v3797 = vadd.f32 %v3795, %v3796
    %v3798 = vsel %vm40, %v3667, 0.0
    %v3799 = vadd.f32 %v3797, %v3798
    %v3800 = vsel %vm40, %v3672, 0.0
    %v3801 = vadd.f32 %v3799, %v3800
    %v3802 = vrot.slane %v3801, 4
    %v3803 = vadd.f32 %v3801, %v3802
    %v3804 = vrot.slane %v3803, 2
    %v3805 = vadd.f32 %v3803, %v3804
    %v3806 = vrot.slane %v3805, 1
    %v3807 = vadd.f32 %v3805, %v3806
    %v3808 = vmul.f32 %v3357, %v3357
    %v3809 = vmul.f32 %v3362, %v3362
    %v3810 = vmul.f32 %v3367, %v3367
    %v3811 = vmul.f32 %v3372, %v3372
    %v3812 = vmul.f32 %v3377, %v3377
    %v3813 = vmul.f32 %v3382, %v3382
    %v3814 = vmul.f32 %v3387, %v3387
    %v3815 = vmul.f32 %v3392, %v3392
    %v3816 = vmul.f32 %v3397, %v3397
    %v3817 = vmul.f32 %v3402, %v3402
    %v3818 = vmul.f32 %v3407, %v3407
    %v3819 = vmul.f32 %v3412, %v3412
    %v3820 = vmul.f32 %v3417, %v3417
    %v3821 = vmul.f32 %v3422, %v3422
    %v3822 = vmul.f32 %v3427, %v3427
    %v3823 = vmul.f32 %v3432, %v3432
    %v3824 = vmul.f32 %v3437, %v3437
    %v3825 = vmul.f32 %v3442, %v3442
    %v3826 = vmul.f32 %v3447, %v3447
    %v3827 = vmul.f32 %v3452, %v3452
    %v3828 = vmul.f32 %v3457, %v3457
    %v3829 = vmul.f32 %v3462, %v3462
    %v3830 = vmul.f32 %v3467, %v3467
    %v3831 = vmul.f32 %v3472, %v3472
    %v3832 = vmul.f32 %v3477, %v3477
    %v3833 = vmul.f32 %v3482, %v3482
    %v3834 = vmul.f32 %v3487, %v3487
    %v3835 = vmul.f32 %v3492, %v3492
    %v3836 = vmul.f32 %v3497, %v3497
    %v3837 = vmul.f32 %v3502, %v3502
    %v3838 = vmul.f32 %v3507, %v3507
    %v3839 = vmul.f32 %v3512, %v3512
    %v3840 = vmul.f32 %v3517, %v3517
    %v3841 = vmul.f32 %v3522, %v3522
    %v3842 = vmul.f32 %v3527, %v3527
    %v3843 = vmul.f32 %v3532, %v3532
    %v3844 = vmul.f32 %v3537, %v3537
    %v3845 = vmul.f32 %v3542, %v3542
    %v3846 = vmul.f32 %v3547, %v3547
    %v3847 = vmul.f32 %v3552, %v3552
    %v3848 = vmul.f32 %v3557, %v3557
    %v3849 = vmul.f32 %v3562, %v3562
    %v3850 = vmul.f32 %v3567, %v3567
    %v3851 = vmul.f32 %v3572, %v3572
    %v3852 = vmul.f32 %v3577, %v3577
    %v3853 = vmul.f32 %v3582, %v3582
    %v3854 = vmul.f32 %v3587, %v3587
    %v3855 = vmul.f32 %v3592, %v3592
    %v3856 = vmul.f32 %v3597, %v3597
    %v3857 = vmul.f32 %v3602, %v3602
    %v3858 = vmul.f32 %v3607, %v3607
    %v3859 = vmul.f32 %v3612, %v3612
    %v3860 = vmul.f32 %v3617, %v3617
    %v3861 = vmul.f32 %v3622, %v3622
    %v3862 = vmul.f32 %v3627, %v3627
    %v3863 = vmul.f32 %v3632, %v3632
    %v3864 = vmul.f32 %v3637, %v3637
    %v3865 = vmul.f32 %v3642, %v3642
    %v3866 = vmul.f32 %v3647, %v3647
    %v3867 = vmul.f32 %v3652, %v3652
    %v3868 = vmul.f32 %v3657, %v3657
    %v3869 = vmul.f32 %v3662, %v3662
    %v3870 = vmul.f32 %v3667, %v3667
    %v3871 = vmul.f32 %v3672, %v3672
    %v3872 = vsel %vm40, %v3808, 0.0
    %v3873 = vsel %vm40, %v3809, 0.0
    %v3874 = vadd.f32 %v3872, %v3873
    %v3875 = vsel %vm40, %v3810, 0.0
    %v3876 = vadd.f32 %v3874, %v3875
    %v3877 = vsel %vm40, %v3811, 0.0
    %v3878 = vadd.f32 %v3876, %v3877
    %v3879 = vsel %vm40, %v3812, 0.0
    %v3880 = vadd.f32 %v3878, %v3879
    %v3881 = vsel %vm40, %v3813, 0.0
    %v3882 = vadd.f32 %v3880, %v3881
    %v3883 = vsel %vm40, %v3814, 0.0
    %v3884 = vadd.f32 %v3882, %v3883
    %v3885 = vsel %vm40, %v3815, 0.0
    %v3886 = vadd.f32 %v3884, %v3885
    %v3887 = vsel %vm40, %v3816, 0.0
    %v3888 = vadd.f32 %v3886, %v3887
    %v3889 = vsel %vm40, %v3817, 0.0
    %v3890 = vadd.f32 %v3888, %v3889
    %v3891 = vsel %vm40, %v3818, 0.0
    %v3892 = vadd.f32 %v3890, %v3891
    %v3893 = vsel %vm40, %v3819, 0.0
    %v3894 = vadd.f32 %v3892, %v3893
    %v3895 = vsel %vm40, %v3820, 0.0
    %v3896 = vadd.f32 %v3894, %v3895
    %v3897 = vsel %vm40, %v3821, 0.0
    %v3898 = vadd.f32 %v3896, %v3897
    %v3899 = vsel %vm40, %v3822, 0.0
    %v3900 = vadd.f32 %v3898, %v3899
    %v3901 = vsel %vm40, %v3823, 0.0
    %v3902 = vadd.f32 %v3900, %v3901
    %v3903 = vsel %vm40, %v3824, 0.0
    %v3904 = vadd.f32 %v3902, %v3903
    %v3905 = vsel %vm40, %v3825, 0.0
    %v3906 = vadd.f32 %v3904, %v3905
    %v3907 = vsel %vm40, %v3826, 0.0
    %v3908 = vadd.f32 %v3906, %v3907
    %v3909 = vsel %vm40, %v3827, 0.0
    %v3910 = vadd.f32 %v3908, %v3909
    %v3911 = vsel %vm40, %v3828, 0.0
    %v3912 = vadd.f32 %v3910, %v3911
    %v3913 = vsel %vm40, %v3829, 0.0
    %v3914 = vadd.f32 %v3912, %v3913
    %v3915 = vsel %vm40, %v3830, 0.0
    %v3916 = vadd.f32 %v3914, %v3915
    %v3917 = vsel %vm40, %v3831, 0.0
    %v3918 = vadd.f32 %v3916, %v3917
    %v3919 = vsel %vm40, %v3832, 0.0
    %v3920 = vadd.f32 %v3918, %v3919
    %v3921 = vsel %vm40, %v3833, 0.0
    %v3922 = vadd.f32 %v3920, %v3921
    %v3923 = vsel %vm40, %v3834, 0.0
    %v3924 = vadd.f32 %v3922, %v3923
    %v3925 = vsel %vm40, %v3835, 0.0
    %v3926 = vadd.f32 %v3924, %v3925
    %v3927 = vsel %vm40, %v3836, 0.0
    %v3928 = vadd.f32 %v3926, %v3927
    %v3929 = vsel %vm40, %v3837, 0.0
    %v3930 = vadd.f32 %v3928, %v3929
    %v3931 = vsel %vm40, %v3838, 0.0
    %v3932 = vadd.f32 %v3930, %v3931
    %v3933 = vsel %vm40, %v3839, 0.0
    %v3934 = vadd.f32 %v3932, %v3933
    %v3935 = vsel %vm40, %v3840, 0.0
    %v3936 = vadd.f32 %v3934, %v3935
    %v3937 = vsel %vm40, %v3841, 0.0
    %v3938 = vadd.f32 %v3936, %v3937
    %v3939 = vsel %vm40, %v3842, 0.0
    %v3940 = vadd.f32 %v3938, %v3939
    %v3941 = vsel %vm40, %v3843, 0.0
    %v3942 = vadd.f32 %v3940, %v3941
    %v3943 = vsel %vm40, %v3844, 0.0
    %v3944 = vadd.f32 %v3942, %v3943
    %v3945 = vsel %vm40, %v3845, 0.0
    %v3946 = vadd.f32 %v3944, %v3945
    %v3947 = vsel %vm40, %v3846, 0.0
    %v3948 = vadd.f32 %v3946, %v3947
    %v3949 = vsel %vm40, %v3847, 0.0
    %v3950 = vadd.f32 %v3948, %v3949
    %v3951 = vsel %vm40, %v3848, 0.0
    %v3952 = vadd.f32 %v3950, %v3951
    %v3953 = vsel %vm40, %v3849, 0.0
    %v3954 = vadd.f32 %v3952, %v3953
    %v3955 = vsel %vm40, %v3850, 0.0
    %v3956 = vadd.f32 %v3954, %v3955
    %v3957 = vsel %vm40, %v3851, 0.0
    %v3958 = vadd.f32 %v3956, %v3957
    %v3959 = vsel %vm40, %v3852, 0.0
    %v3960 = vadd.f32 %v3958, %v3959
    %v3961 = vsel %vm40, %v3853, 0.0
    %v3962 = vadd.f32 %v3960, %v3961
    %v3963 = vsel %vm40, %v3854, 0.0
    %v3964 = vadd.f32 %v3962, %v3963
    %v3965 = vsel %vm40, %v3855, 0.0
    %v3966 = vadd.f32 %v3964, %v3965
    %v3967 = vsel %vm40, %v3856, 0.0
    %v3968 = vadd.f32 %v3966, %v3967
    %v3969 = vsel %vm40, %v3857, 0.0
    %v3970 = vadd.f32 %v3968, %v3969
    %v3971 = vsel %vm40, %v3858, 0.0
    %v3972 = vadd.f32 %v3970, %v3971
    %v3973 = vsel %vm40, %v3859, 0.0
    %v3974 = vadd.f32 %v3972, %v3973
    %v3975 = vsel %vm40, %v3860, 0.0
    %v3976 = vadd.f32 %v3974, %v3975
    %v3977 = vsel %vm40, %v3861, 0.0
    %v3978 = vadd.f32 %v3976, %v3977
    %v3979 = vsel %vm40, %v3862, 0.0
    %v3980 = vadd.f32 %v3978, %v3979
    %v3981 = vsel %vm40, %v3863, 0.0
    %v3982 = vadd.f32 %v3980, %v3981
    %v3983 = vsel %vm40, %v3864, 0.0
    %v3984 = vadd.f32 %v3982, %v3983
    %v3985 = vsel %vm40, %v3865, 0.0
    %v3986 = vadd.f32 %v3984, %v3985
    %v3987 = vsel %vm40, %v3866, 0.0
    %v3988 = vadd.f32 %v3986, %v3987
    %v3989 = vsel %vm40, %v3867, 0.0
    %v3990 = vadd.f32 %v3988, %v3989
    %v3991 = vsel %vm40, %v3868, 0.0
    %v3992 = vadd.f32 %v3990, %v3991
    %v3993 = vsel %vm40, %v3869, 0.0
    %v3994 = vadd.f32 %v3992, %v3993
    %v3995 = vsel %vm40, %v3870, 0.0
    %v3996 = vadd.f32 %v3994, %v3995
    %v3997 = vsel %vm40, %v3871, 0.0
    %v3998 = vadd.f32 %v3996, %v3997
    %v3999 = vrot.slane %v3998, 4
    %v4000 = vadd.f32 %v3998, %v3999
    %v4001 = vrot.slane %v4000, 2
    %v4002 = vadd.f32 %v4000, %v4001
    %v4003 = vrot.slane %v4002, 1
    %v4004 = vadd.f32 %v4002, %v4003
    %v4005 = vmul.f32 %v3807, 0.001953125
    %v4006 = vmul.f32 %v4004, 0.001953125
    %v4007 = vmul.f32 %v4005, %v4005
    %v4008 = vsub.f32 %v4006, %v4007
    %v4009 = vsub.f32 %v3357, %v4005
    %v4010 = vsub.f32 %v3362, %v4005
    %v4011 = vsub.f32 %v3367, %v4005
    %v4012 = vsub.f32 %v3372, %v4005
    %v4013 = vsub.f32 %v3377, %v4005
    %v4014 = vsub.f32 %v3382, %v4005
    %v4015 = vsub.f32 %v3387, %v4005
    %v4016 = vsub.f32 %v3392, %v4005
    %v4017 = vsub.f32 %v3397, %v4005
    %v4018 = vsub.f32 %v3402, %v4005
    %v4019 = vsub.f32 %v3407, %v4005
    %v4020 = vsub.f32 %v3412, %v4005
    %v4021 = vsub.f32 %v3417, %v4005
    %v4022 = vsub.f32 %v3422, %v4005
    %v4023 = vsub.f32 %v3427, %v4005
    %v4024 = vsub.f32 %v3432, %v4005
    %v4025 = vsub.f32 %v3437, %v4005
    %v4026 = vsub.f32 %v3442, %v4005
    %v4027 = vsub.f32 %v3447, %v4005
    %v4028 = vsub.f32 %v3452, %v4005
    %v4029 = vsub.f32 %v3457, %v4005
    %v4030 = vsub.f32 %v3462, %v4005
    %v4031 = vsub.f32 %v3467, %v4005
    %v4032 = vsub.f32 %v3472, %v4005
    %v4033 = vsub.f32 %v3477, %v4005
    %v4034 = vsub.f32 %v3482, %v4005
    %v4035 = vsub.f32 %v3487, %v4005
    %v4036 = vsub.f32 %v3492, %v4005
    %v4037 = vsub.f32 %v3497, %v4005
    %v4038 = vsub.f32 %v3502, %v4005
    %v4039 = vsub.f32 %v3507, %v4005
    %v4040 = vsub.f32 %v3512, %v4005
    %v4041 = vsub.f32 %v3517, %v4005
    %v4042 = vsub.f32 %v3522, %v4005
    %v4043 = vsub.f32 %v3527, %v4005
    %v4044 = vsub.f32 %v3532, %v4005
    %v4045 = vsub.f32 %v3537, %v4005
    %v4046 = vsub.f32 %v3542, %v4005
    %v4047 = vsub.f32 %v3547, %v4005
    %v4048 = vsub.f32 %v3552, %v4005
    %v4049 = vsub.f32 %v3557, %v4005
    %v4050 = vsub.f32 %v3562, %v4005
    %v4051 = vsub.f32 %v3567, %v4005
    %v4052 = vsub.f32 %v3572, %v4005
    %v4053 = vsub.f32 %v3577, %v4005
    %v4054 = vsub.f32 %v3582, %v4005
    %v4055 = vsub.f32 %v3587, %v4005
    %v4056 = vsub.f32 %v3592, %v4005
    %v4057 = vsub.f32 %v3597, %v4005
    %v4058 = vsub.f32 %v3602, %v4005
    %v4059 = vsub.f32 %v3607, %v4005
    %v4060 = vsub.f32 %v3612, %v4005
    %v4061 = vsub.f32 %v3617, %v4005
    %v4062 = vsub.f32 %v3622, %v4005
    %v4063 = vsub.f32 %v3627, %v4005
    %v4064 = vsub.f32 %v3632, %v4005
    %v4065 = vsub.f32 %v3637, %v4005
    %v4066 = vsub.f32 %v3642, %v4005
    %v4067 = vsub.f32 %v3647, %v4005
    %v4068 = vsub.f32 %v3652, %v4005
    %v4069 = vsub.f32 %v3657, %v4005
    %v4070 = vsub.f32 %v3662, %v4005
    %v4071 = vsub.f32 %v3667, %v4005
    %v4072 = vsub.f32 %v3672, %v4005
    %v4073 = vadd.f32 %v4008, 1e-05
    %v4074 = vrsqrt.pop %v4073
    %v4075 = vmul.f32 %v4009, %v4074
    %v4076 = vmul.f32 %v4010, %v4074
    %v4077 = vmul.f32 %v4011, %v4074
    %v4078 = vmul.f32 %v4012, %v4074
    %v4079 = vmul.f32 %v4013, %v4074
    %v4080 = vmul.f32 %v4014, %v4074
    %v4081 = vmul.f32 %v4015, %v4074
    %v4082 = vmul.f32 %v4016, %v4074
    %v4083 = vmul.f32 %v4017, %v4074
    %v4084 = vmul.f32 %v4018, %v4074
    %v4085 = vmul.f32 %v4019, %v4074
    %v4086 = vmul.f32 %v4020, %v4074
    %v4087 = vmul.f32 %v4021, %v4074
    %v4088 = vmul.f32 %v4022, %v4074
    %v4089 = vmul.f32 %v4023, %v4074
    %v4090 = vmul.f32 %v4024, %v4074
    %v4091 = vmul.f32 %v4025, %v4074
    %v4092 = vmul.f32 %v4026, %v4074
    %v4093 = vmul.f32 %v4027, %v4074
    %v4094 = vmul.f32 %v4028, %v4074
    %v4095 = vmul.f32 %v4029, %v4074
    %v4096 = vmul.f32 %v4030, %v4074
    %v4097 = vmul.f32 %v4031, %v4074
    %v4098 = vmul.f32 %v4032, %v4074
    %v4099 = vmul.f32 %v4033, %v4074
    %v4100 = vmul.f32 %v4034, %v4074
    %v4101 = vmul.f32 %v4035, %v4074
    %v4102 = vmul.f32 %v4036, %v4074
    %v4103 = vmul.f32 %v4037, %v4074
    %v4104 = vmul.f32 %v4038, %v4074
    %v4105 = vmul.f32 %v4039, %v4074
    %v4106 = vmul.f32 %v4040, %v4074
    %v4107 = vmul.f32 %v4041, %v4074
    %v4108 = vmul.f32 %v4042, %v4074
    %v4109 = vmul.f32 %v4043, %v4074
    %v4110 = vmul.f32 %v4044, %v4074
    %v4111 = vmul.f32 %v4045, %v4074
    %v4112 = vmul.f32 %v4046, %v4074
    %v4113 = vmul.f32 %v4047, %v4074
    %v4114 = vmul.f32 %v4048, %v4074
    %v4115 = vmul.f32 %v4049, %v4074
    %v4116 = vmul.f32 %v4050, %v4074
    %v4117 = vmul.f32 %v4051, %v4074
    %v4118 = vmul.f32 %v4052, %v4074
    %v4119 = vmul.f32 %v4053, %v4074
    %v4120 = vmul.f32 %v4054, %v4074
    %v4121 = vmul.f32 %v4055, %v4074
    %v4122 = vmul.f32 %v4056, %v4074
    %v4123 = vmul.f32 %v4057, %v4074
    %v4124 = vmul.f32 %v4058, %v4074
    %v4125 = vmul.f32 %v4059, %v4074
    %v4126 = vmul.f32 %v4060, %v4074
    %v4127 = vmul.f32 %v4061, %v4074
    %v4128 = vmul.f32 %v4062, %v4074
    %v4129 = vmul.f32 %v4063, %v4074
    %v4130 = vmul.f32 %v4064, %v4074
    %v4131 = vmul.f32 %v4065, %v4074
    %v4132 = vmul.f32 %v4066, %v4074
    %v4133 = vmul.f32 %v4067, %v4074
    %v4134 = vmul.f32 %v4068, %v4074
    %v4135 = vmul.f32 %v4069, %v4074
    %v4136 = vmul.f32 %v4070, %v4074
    %v4137 = vmul.f32 %v4071, %v4074
    %v4138 = vmul.f32 %v4072, %v4074
    %v4139 = vld [vmem:[%s2] sm:$0x1]
    %v4141 = vlaneseq
    %v4142 = vshrl.u32 %v4141, 7
    %v4143 = vsub.s32 0, %v4142
    %v4144 = vrot.slane %v4139, %v4143
    %v4146 = vmul.f32 %v4075, %v4144
    %v4147 = vmul.f32 %v4076, %v4144
    %v4148 = vmul.f32 %v4077, %v4144
    %v4149 = vmul.f32 %v4078, %v4144
    %v4150 = vmul.f32 %v4079, %v4144
    %v4151 = vmul.f32 %v4080, %v4144
    %v4152 = vmul.f32 %v4081, %v4144
    %v4153 = vmul.f32 %v4082, %v4144
    %v4154 = vmul.f32 %v4083, %v4144
    %v4155 = vmul.f32 %v4084, %v4144
    %v4156 = vmul.f32 %v4085, %v4144
    %v4157 = vmul.f32 %v4086, %v4144
    %v4158 = vmul.f32 %v4087, %v4144
    %v4159 = vmul.f32 %v4088, %v4144
    %v4160 = vmul.f32 %v4089, %v4144
    %v4161 = vmul.f32 %v4090, %v4144
    %v4162 = vmul.f32 %v4091, %v4144
    %v4163 = vmul.f32 %v4092, %v4144
    %v4164 = vmul.f32 %v4093, %v4144
    %v4165 = vmul.f32 %v4094, %v4144
    %v4166 = vmul.f32 %v4095, %v4144
    %v4167 = vmul.f32 %v4096, %v4144
    %v4168 = vmul.f32 %v4097, %v4144
    %v4169 = vmul.f32 %v4098, %v4144
    %v4170 = vmul.f32 %v4099, %v4144
    %v4171 = vmul.f32 %v4100, %v4144
    %v4172 = vmul.f32 %v4101, %v4144
    %v4173 = vmul.f32 %v4102, %v4144
    %v4174 = vmul.f32 %v4103, %v4144
    %v4175 = vmul.f32 %v4104, %v4144
    %v4176 = vmul.f32 %v4105, %v4144
    %v4177 = vmul.f32 %v4106, %v4144
    %v4178 = vmul.f32 %v4107, %v4144
    %v4179 = vmul.f32 %v4108, %v4144
    %v4180 = vmul.f32 %v4109, %v4144
    %v4181 = vmul.f32 %v4110, %v4144
    %v4182 = vmul.f32 %v4111, %v4144
    %v4183 = vmul.f32 %v4112, %v4144
    %v4184 = vmul.f32 %v4113, %v4144
    %v4185 = vmul.f32 %v4114, %v4144
    %v4186 = vmul.f32 %v4115, %v4144
    %v4187 = vmul.f32 %v4116, %v4144
    %v4188 = vmul.f32 %v4117, %v4144
    %v4189 = vmul.f32 %v4118, %v4144
    %v4190 = vmul.f32 %v4119, %v4144
    %v4191 = vmul.f32 %v4120, %v4144
    %v4192 = vmul.f32 %v4121, %v4144
    %v4193 = vmul.f32 %v4122, %v4144
    %v4194 = vmul.f32 %v4123, %v4144
    %v4195 = vmul.f32 %v4124, %v4144
    %v4196 = vmul.f32 %v4125, %v4144
    %v4197 = vmul.f32 %v4126, %v4144
    %v4198 = vmul.f32 %v4127, %v4144
    %v4199 = vmul.f32 %v4128, %v4144
    %v4200 = vmul.f32 %v4129, %v4144
    %v4201 = vmul.f32 %v4130, %v4144
    %v4202 = vmul.f32 %v4131, %v4144
    %v4203 = vmul.f32 %v4132, %v4144
    %v4204 = vmul.f32 %v4133, %v4144
    %v4205 = vmul.f32 %v4134, %v4144
    %v4206 = vmul.f32 %v4135, %v4144
    %v4207 = vmul.f32 %v4136, %v4144
    %v4208 = vmul.f32 %v4137, %v4144
    %v4209 = vmul.f32 %v4138, %v4144
    %v4210 = vld [vmem:[%s3] sm:$0x1]
    %v4212 = vlaneseq
    %v4213 = vshrl.u32 %v4212, 7
    %v4214 = vsub.s32 0, %v4213
    %v4215 = vrot.slane %v4210, %v4214
    %v4217 = vadd.f32 %v4146, %v4215
    %v4218 = vadd.f32 %v4147, %v4215
    %v4219 = vadd.f32 %v4148, %v4215
    %v4220 = vadd.f32 %v4149, %v4215
    %v4221 = vadd.f32 %v4150, %v4215
    %v4222 = vadd.f32 %v4151, %v4215
    %v4223 = vadd.f32 %v4152, %v4215
    %v4224 = vadd.f32 %v4153, %v4215
    %v4225 = vadd.f32 %v4154, %v4215
    %v4226 = vadd.f32 %v4155, %v4215
    %v4227 = vadd.f32 %v4156, %v4215
    %v4228 = vadd.f32 %v4157, %v4215
    %v4229 = vadd.f32 %v4158, %v4215
    %v4230 = vadd.f32 %v4159, %v4215
    %v4231 = vadd.f32 %v4160, %v4215
    %v4232 = vadd.f32 %v4161, %v4215
    %v4233 = vadd.f32 %v4162, %v4215
    %v4234 = vadd.f32 %v4163, %v4215
    %v4235 = vadd.f32 %v4164, %v4215
    %v4236 = vadd.f32 %v4165, %v4215
    %v4237 = vadd.f32 %v4166, %v4215
    %v4238 = vadd.f32 %v4167, %v4215
    %v4239 = vadd.f32 %v4168, %v4215
    %v4240 = vadd.f32 %v4169, %v4215
    %v4241 = vadd.f32 %v4170, %v4215
    %v4242 = vadd.f32 %v4171, %v4215
    %v4243 = vadd.f32 %v4172, %v4215
    %v4244 = vadd.f32 %v4173, %v4215
    %v4245 = vadd.f32 %v4174, %v4215
    %v4246 = vadd.f32 %v4175, %v4215
    %v4247 = vadd.f32 %v4176, %v4215
    %v4248 = vadd.f32 %v4177, %v4215
    %v4249 = vadd.f32 %v4178, %v4215
    %v4250 = vadd.f32 %v4179, %v4215
    %v4251 = vadd.f32 %v4180, %v4215
    %v4252 = vadd.f32 %v4181, %v4215
    %v4253 = vadd.f32 %v4182, %v4215
    %v4254 = vadd.f32 %v4183, %v4215
    %v4255 = vadd.f32 %v4184, %v4215
    %v4256 = vadd.f32 %v4185, %v4215
    %v4257 = vadd.f32 %v4186, %v4215
    %v4258 = vadd.f32 %v4187, %v4215
    %v4259 = vadd.f32 %v4188, %v4215
    %v4260 = vadd.f32 %v4189, %v4215
    %v4261 = vadd.f32 %v4190, %v4215
    %v4262 = vadd.f32 %v4191, %v4215
    %v4263 = vadd.f32 %v4192, %v4215
    %v4264 = vadd.f32 %v4193, %v4215
    %v4265 = vadd.f32 %v4194, %v4215
    %v4266 = vadd.f32 %v4195, %v4215
    %v4267 = vadd.f32 %v4196, %v4215
    %v4268 = vadd.f32 %v4197, %v4215
    %v4269 = vadd.f32 %v4198, %v4215
    %v4270 = vadd.f32 %v4199, %v4215
    %v4271 = vadd.f32 %v4200, %v4215
    %v4272 = vadd.f32 %v4201, %v4215
    %v4273 = vadd.f32 %v4202, %v4215
    %v4274 = vadd.f32 %v4203, %v4215
    %v4275 = vadd.f32 %v4204, %v4215
    %v4276 = vadd.f32 %v4205, %v4215
    %v4277 = vadd.f32 %v4206, %v4215
    %v4278 = vadd.f32 %v4207, %v4215
    %v4279 = vadd.f32 %v4208, %v4215
    %v4280 = vadd.f32 %v4209, %v4215
    %v4281 = vmax.f32 %v4217, 0.0
    %v4282 = vmax.f32 %v4218, 0.0
    %v4283 = vmax.f32 %v4219, 0.0
    %v4284 = vmax.f32 %v4220, 0.0
    %v4285 = vmax.f32 %v4221, 0.0
    %v4286 = vmax.f32 %v4222, 0.0
    %v4287 = vmax.f32 %v4223, 0.0
    %v4288 = vmax.f32 %v4224, 0.0
    %v4289 = vmax.f32 %v4225, 0.0
    %v4290 = vmax.f32 %v4226, 0.0
    %v4291 = vmax.f32 %v4227, 0.0
    %v4292 = vmax.f32 %v4228, 0.0
    %v4293 = vmax.f32 %v4229, 0.0
    %v4294 = vmax.f32 %v4230, 0.0
    %v4295 = vmax.f32 %v4231, 0.0
    %v4296 = vmax.f32 %v4232, 0.0
    %v4297 = vmax.f32 %v4233, 0.0
    %v4298 = vmax.f32 %v4234, 0.0
    %v4299 = vmax.f32 %v4235, 0.0
    %v4300 = vmax.f32 %v4236, 0.0
    %v4301 = vmax.f32 %v4237, 0.0
    %v4302 = vmax.f32 %v4238, 0.0
    %v4303 = vmax.f32 %v4239, 0.0
    %v4304 = vmax.f32 %v4240, 0.0
    %v4305 = vmax.f32 %v4241, 0.0
    %v4306 = vmax.f32 %v4242, 0.0
    %v4307 = vmax.f32 %v4243, 0.0
    %v4308 = vmax.f32 %v4244, 0.0
    %v4309 = vmax.f32 %v4245, 0.0
    %v4310 = vmax.f32 %v4246, 0.0
    %v4311 = vmax.f32 %v4247, 0.0
    %v4312 = vmax.f32 %v4248, 0.0
    %v4313 = vmax.f32 %v4249, 0.0
    %v4314 = vmax.f32 %v4250, 0.0
    %v4315 = vmax.f32 %v4251, 0.0
    %v4316 = vmax.f32 %v4252, 0.0
    %v4317 = vmax.f32 %v4253, 0.0
    %v4318 = vmax.f32 %v4254, 0.0
    %v4319 = vmax.f32 %v4255, 0.0
    %v4320 = vmax.f32 %v4256, 0.0
    %v4321 = vmax.f32 %v4257, 0.0
    %v4322 = vmax.f32 %v4258, 0.0
    %v4323 = vmax.f32 %v4259, 0.0
    %v4324 = vmax.f32 %v4260, 0.0
    %v4325 = vmax.f32 %v4261, 0.0
    %v4326 = vmax.f32 %v4262, 0.0
    %v4327 = vmax.f32 %v4263, 0.0
    %v4328 = vmax.f32 %v4264, 0.0
    %v4329 = vmax.f32 %v4265, 0.0
    %v4330 = vmax.f32 %v4266, 0.0
    %v4331 = vmax.f32 %v4267, 0.0
    %v4332 = vmax.f32 %v4268, 0.0
    %v4333 = vmax.f32 %v4269, 0.0
    %v4334 = vmax.f32 %v4270, 0.0
    %v4335 = vmax.f32 %v4271, 0.0
    %v4336 = vmax.f32 %v4272, 0.0
    %v4337 = vmax.f32 %v4273, 0.0
    %v4338 = vmax.f32 %v4274, 0.0
    %v4339 = vmax.f32 %v4275, 0.0
    %v4340 = vmax.f32 %v4276, 0.0
    %v4341 = vmax.f32 %v4277, 0.0
    %v4342 = vmax.f32 %v4278, 0.0
    %v4343 = vmax.f32 %v4279, 0.0
    %v4344 = vmax.f32 %v4280, 0.0
    %4345 = vst.msk [vmem:[%s192 + $0x1] sm:$0xff] %vm40, %v4281
    %4346 = vst.msk [vmem:[%s192 + $0x9] sm:$0xff] %vm40, %v4282
    %4347 = vst.msk [vmem:[%s192 + $0x19] sm:$0xff] %vm40, %v4283
    %4348 = vst.msk [vmem:[%s192 + $0x21] sm:$0xff] %vm40, %v4284
    %4349 = vst.msk [vmem:[%s192 + $0x31] sm:$0xff] %vm40, %v4285
    %4350 = vst.msk [vmem:[%s192 + $0x39] sm:$0xff] %vm40, %v4286
    %4351 = vst.msk [vmem:[%s192 + $0x49] sm:$0xff] %vm40, %v4287
    %4352 = vst.msk [vmem:[%s192 + $0x51] sm:$0xff] %vm40, %v4288
    %4353 = vst.msk [vmem:[%s192 + $0x61] sm:$0xff] %vm40, %v4289
    %4354 = vst.msk [vmem:[%s192 + $0x69] sm:$0xff] %vm40, %v4290
    %4355 = vst.msk [vmem:[%s192 + $0x79] sm:$0xff] %vm40, %v4291
    %4356 = vst.msk [vmem:[%s192 + $0x81] sm:$0xff] %vm40, %v4292
    %4357 = vst.msk [vmem:[%s192 + $0x91] sm:$0xff] %vm40, %v4293
    %4358 = vst.msk [vmem:[%s192 + $0x99] sm:$0xff] %vm40, %v4294
    %4359 = vst.msk [vmem:[%s192 + $0xa9] sm:$0xff] %vm40, %v4295
    %4360 = vst.msk [vmem:[%s192 + $0xb1] sm:$0xff] %vm40, %v4296
    %4361 = vst.msk [vmem:[%s192 + $0xc1] sm:$0xff] %vm40, %v4297
    %4362 = vst.msk [vmem:[%s192 + $0xc9] sm:$0xff] %vm40, %v4298
    %4363 = vst.msk [vmem:[%s192 + $0xd9] sm:$0xff] %vm40, %v4299
    %4364 = vst.msk [vmem:[%s192 + $0xe1] sm:$0xff] %vm40, %v4300
    %4365 = vst.msk [vmem:[%s192 + $0xf1] sm:$0xff] %vm40, %v4301
    %4366 = vst.msk [vmem:[%s192 + $0xf9] sm:$0xff] %vm40, %v4302
    %4367 = vst.msk [vmem:[%s192 + $0x109] sm:$0xff] %vm40, %v4303
    %4368 = vst.msk [vmem:[%s192 + $0x111] sm:$0xff] %vm40, %v4304
    %4369 = vst.msk [vmem:[%s192 + $0x121] sm:$0xff] %vm40, %v4305
    %4370 = vst.msk [vmem:[%s192 + $0x129] sm:$0xff] %vm40, %v4306
    %4371 = vst.msk [vmem:[%s192 + $0x139] sm:$0xff] %vm40, %v4307
    %4372 = vst.msk [vmem:[%s192 + $0x141] sm:$0xff] %vm40, %v4308
    %4373 = vst.msk [vmem:[%s192 + $0x151] sm:$0xff] %vm40, %v4309
    %4374 = vst.msk [vmem:[%s192 + $0x159] sm:$0xff] %vm40, %v4310
    %4375 = vst.msk [vmem:[%s192 + $0x169] sm:$0xff] %vm40, %v4311
    %4376 = vst.msk [vmem:[%s192 + $0x171] sm:$0xff] %vm40, %v4312
    %4377 = vst.msk [vmem:[%s192 + $0x1b1] sm:$0xff] %vm40, %v4313
    %4378 = vst.msk [vmem:[%s192 + $0x1b9] sm:$0xff] %vm40, %v4314
    %4379 = vst.msk [vmem:[%s192 + $0x1c9] sm:$0xff] %vm40, %v4315
    %4380 = vst.msk [vmem:[%s192 + $0x1d1] sm:$0xff] %vm40, %v4316
    %4381 = vst.msk [vmem:[%s192 + $0x1e1] sm:$0xff] %vm40, %v4317
    %4382 = vst.msk [vmem:[%s192 + $0x1e9] sm:$0xff] %vm40, %v4318
    %4383 = vst.msk [vmem:[%s192 + $0x1f9] sm:$0xff] %vm40, %v4319
    %4384 = vst.msk [vmem:[%s192 + $0x201] sm:$0xff] %vm40, %v4320
    %4385 = vst.msk [vmem:[%s192 + $0x211] sm:$0xff] %vm40, %v4321
    %4386 = vst.msk [vmem:[%s192 + $0x219] sm:$0xff] %vm40, %v4322
    %4387 = vst.msk [vmem:[%s192 + $0x229] sm:$0xff] %vm40, %v4323
    %4388 = vst.msk [vmem:[%s192 + $0x231] sm:$0xff] %vm40, %v4324
    %4389 = vst.msk [vmem:[%s192 + $0x241] sm:$0xff] %vm40, %v4325
    %4390 = vst.msk [vmem:[%s192 + $0x249] sm:$0xff] %vm40, %v4326
    %4391 = vst.msk [vmem:[%s192 + $0x259] sm:$0xff] %vm40, %v4327
    %4392 = vst.msk [vmem:[%s192 + $0x261] sm:$0xff] %vm40, %v4328
    %4393 = vst.msk [vmem:[%s192 + $0x271] sm:$0xff] %vm40, %v4329
    %4394 = vst.msk [vmem:[%s192 + $0x279] sm:$0xff] %vm40, %v4330
    %4395 = vst.msk [vmem:[%s192 + $0x289] sm:$0xff] %vm40, %v4331
    %4396 = vst.msk [vmem:[%s192 + $0x291] sm:$0xff] %vm40, %v4332
    %4397 = vst.msk [vmem:[%s192 + $0x2a1] sm:$0xff] %vm40, %v4333
    %4398 = vst.msk [vmem:[%s192 + $0x2a9] sm:$0xff] %vm40, %v4334
    %4399 = vst.msk [vmem:[%s192 + $0x2b9] sm:$0xff] %vm40, %v4335
    %4400 = vst.msk [vmem:[%s192 + $0x2c1] sm:$0xff] %vm40, %v4336
    %4401 = vst.msk [vmem:[%s192 + $0x2d1] sm:$0xff] %vm40, %v4337
    %4402 = vst.msk [vmem:[%s192 + $0x2d9] sm:$0xff] %vm40, %v4338
    %4403 = vst.msk [vmem:[%s192 + $0x2e9] sm:$0xff] %vm40, %v4339
    %4404 = vst.msk [vmem:[%s192 + $0x2f1] sm:$0xff] %vm40, %v4340
    %4405 = vst.msk [vmem:[%s192 + $0x301] sm:$0xff] %vm40, %v4341
    %4406 = vst.msk [vmem:[%s192 + $0x309] sm:$0xff] %vm40, %v4342
    %4407 = vst.msk [vmem:[%s192 + $0x319] sm:$0xff] %vm40, %v4343
    %4408 = vst.msk [vmem:[%s192 + $0x321] sm:$0xff] %vm40, %v4344
    %v4409 = vld [vmem:[#allocation2] sm:$0xff]
    %v4410 = vld [vmem:[#allocation2 + $0x8] sm:$0xff]
    %v4411 = vld [vmem:[#allocation2 + $0x18] sm:$0xff]
    %v4412 = vld [vmem:[#allocation2 + $0x20] sm:$0xff]
    %v4413 = vld [vmem:[#allocation2 + $0x30] sm:$0xff]
    %v4414 = vld [vmem:[#allocation2 + $0x38] sm:$0xff]
    %v4415 = vld [vmem:[#allocation2 + $0x48] sm:$0xff]
    %v4416 = vld [vmem:[#allocation2 + $0x50] sm:$0xff]
    %v4417 = vld [vmem:[#allocation2 + $0x60] sm:$0xff]
    %v4418 = vld [vmem:[#allocation2 + $0x68] sm:$0xff]
    %v4419 = vld [vmem:[#allocation2 + $0x78] sm:$0xff]
    %v4420 = vld [vmem:[#allocation2 + $0x80] sm:$0xff]
    %v4421 = vld [vmem:[#allocation2 + $0x90] sm:$0xff]
    %v4422 = vld [vmem:[#allocation2 + $0x98] sm:$0xff]
    %v4423 = vld [vmem:[#allocation2 + $0xa8] sm:$0xff]
    %v4424 = vld [vmem:[#allocation2 + $0xb0] sm:$0xff]
    %v4425 = vld [vmem:[#allocation2 + $0xc0] sm:$0xff]
    %v4426 = vld [vmem:[#allocation2 + $0xc8] sm:$0xff]
    %v4427 = vld [vmem:[#allocation2 + $0xd8] sm:$0xff]
    %v4428 = vld [vmem:[#allocation2 + $0xe0] sm:$0xff]
    %v4429 = vld [vmem:[#allocation2 + $0xf0] sm:$0xff]
    %v4430 = vld [vmem:[#allocation2 + $0xf8] sm:$0xff]
    %v4431 = vld [vmem:[#allocation2 + $0x108] sm:$0xff]
    %v4432 = vld [vmem:[#allocation2 + $0x110] sm:$0xff]
    %v4433 = vld [vmem:[#allocation2 + $0x120] sm:$0xff]
    %v4434 = vld [vmem:[#allocation2 + $0x128] sm:$0xff]
    %v4435 = vld [vmem:[#allocation2 + $0x138] sm:$0xff]
    %v4436 = vld [vmem:[#allocation2 + $0x140] sm:$0xff]
    %v4437 = vld [vmem:[#allocation2 + $0x150] sm:$0xff]
    %v4438 = vld [vmem:[#allocation2 + $0x158] sm:$0xff]
    %v4439 = vld [vmem:[#allocation2 + $0x168] sm:$0xff]
    %v4440 = vld [vmem:[#allocation2 + $0x170] sm:$0xff]
    %v4441 = vld [vmem:[#allocation2 + $0x1b0] sm:$0xff]
    %v4442 = vld [vmem:[#allocation2 + $0x1b8] sm:$0xff]
    %v4443 = vld [vmem:[#allocation2 + $0x1c8] sm:$0xff]
    %v4444 = vld [vmem:[#allocation2 + $0x1d0] sm:$0xff]
    %v4445 = vld [vmem:[#allocation2 + $0x1e0] sm:$0xff]
    %v4446 = vld [vmem:[#allocation2 + $0x1e8] sm:$0xff]
    %v4447 = vld [vmem:[#allocation2 + $0x1f8] sm:$0xff]
    %v4448 = vld [vmem:[#allocation2 + $0x200] sm:$0xff]
    %v4449 = vld [vmem:[#allocation2 + $0x210] sm:$0xff]
    %v4450 = vld [vmem:[#allocation2 + $0x218] sm:$0xff]
    %v4451 = vld [vmem:[#allocation2 + $0x228] sm:$0xff]
    %v4452 = vld [vmem:[#allocation2 + $0x230] sm:$0xff]
    %v4453 = vld [vmem:[#allocation2 + $0x240] sm:$0xff]
    %v4454 = vld [vmem:[#allocation2 + $0x248] sm:$0xff]
    %v4455 = vld [vmem:[#allocation2 + $0x258] sm:$0xff]
    %v4456 = vld [vmem:[#allocation2 + $0x260] sm:$0xff]
    %v4457 = vld [vmem:[#allocation2 + $0x270] sm:$0xff]
    %v4458 = vld [vmem:[#allocation2 + $0x278] sm:$0xff]
    %v4459 = vld [vmem:[#allocation2 + $0x288] sm:$0xff]
    %v4460 = vld [vmem:[#allocation2 + $0x290] sm:$0xff]
    %v4461 = vld [vmem:[#allocation2 + $0x2a0] sm:$0xff]
    %v4462 = vld [vmem:[#allocation2 + $0x2a8] sm:$0xff]
    %v4463 = vld [vmem:[#allocation2 + $0x2b8] sm:$0xff]
    %v4464 = vld [vmem:[#allocation2 + $0x2c0] sm:$0xff]
    %v4465 = vld [vmem:[#allocation2 + $0x2d0] sm:$0xff]
    %v4466 = vld [vmem:[#allocation2 + $0x2d8] sm:$0xff]
    %v4467 = vld [vmem:[#allocation2 + $0x2e8] sm:$0xff]
    %v4468 = vld [vmem:[#allocation2 + $0x2f0] sm:$0xff]
    %v4469 = vld [vmem:[#allocation2 + $0x300] sm:$0xff]
    %v4470 = vld [vmem:[#allocation2 + $0x308] sm:$0xff]
    %v4471 = vld [vmem:[#allocation2 + $0x318] sm:$0xff]
    %v4472 = vld [vmem:[#allocation2 + $0x320] sm:$0xff]
    %v4473 = vld [vmem:[#allocation2 + $0x1] sm:$0xff]
    %v4474 = vld [vmem:[#allocation2 + $0x9] sm:$0xff]
    %v4475 = vld [vmem:[#allocation2 + $0x19] sm:$0xff]
    %v4476 = vld [vmem:[#allocation2 + $0x21] sm:$0xff]
    %v4477 = vld [vmem:[#allocation2 + $0x31] sm:$0xff]
    %v4478 = vld [vmem:[#allocation2 + $0x39] sm:$0xff]
    %v4479 = vld [vmem:[#allocation2 + $0x49] sm:$0xff]
    %v4480 = vld [vmem:[#allocation2 + $0x51] sm:$0xff]
    %v4481 = vld [vmem:[#allocation2 + $0x61] sm:$0xff]
    %v4482 = vld [vmem:[#allocation2 + $0x69] sm:$0xff]
    %v4483 = vld [vmem:[#allocation2 + $0x79] sm:$0xff]
    %v4484 = vld [vmem:[#allocation2 + $0x81] sm:$0xff]
    %v4485 = vld [vmem:[#allocation2 + $0x91] sm:$0xff]
    %v4486 = vld [vmem:[#allocation2 + $0x99] sm:$0xff]
    %v4487 = vld [vmem:[#allocation2 + $0xa9] sm:$0xff]
    %v4488 = vld [vmem:[#allocation2 + $0xb1] sm:$0xff]
    %v4489 = vld [vmem:[#allocation2 + $0xc1] sm:$0xff]
    %v4490 = vld [vmem:[#allocation2 + $0xc9] sm:$0xff]
    %v4491 = vld [vmem:[#allocation2 + $0xd9] sm:$0xff]
    %v4492 = vld [vmem:[#allocation2 + $0xe1] sm:$0xff]
    %v4493 = vld [vmem:[#allocation2 + $0xf1] sm:$0xff]
    %v4494 = vld [vmem:[#allocation2 + $0xf9] sm:$0xff]
    %v4495 = vld [vmem:[#allocation2 + $0x109] sm:$0xff]
    %v4496 = vld [vmem:[#allocation2 + $0x111] sm:$0xff]
    %v4497 = vld [vmem:[#allocation2 + $0x121] sm:$0xff]
    %v4498 = vld [vmem:[#allocation2 + $0x129] sm:$0xff]
    %v4499 = vld [vmem:[#allocation2 + $0x139] sm:$0xff]
    %v4500 = vld [vmem:[#allocation2 + $0x141] sm:$0xff]
    %v4501 = vld [vmem:[#allocation2 + $0x151] sm:$0xff]
    %v4502 = vld [vmem:[#allocation2 + $0x159] sm:$0xff]
    %v4503 = vld [vmem:[#allocation2 + $0x169] sm:$0xff]
    %v4504 = vld [vmem:[#allocation2 + $0x171] sm:$0xff]
    %v4505 = vld [vmem:[#allocation2 + $0x1b1] sm:$0xff]
    %v4506 = vld [vmem:[#allocation2 + $0x1b9] sm:$0xff]
    %v4507 = vld [vmem:[#allocation2 + $0x1c9] sm:$0xff]
    %v4508 = vld [vmem:[#allocation2 + $0x1d1] sm:$0xff]
    %v4509 = vld [vmem:[#allocation2 + $0x1e1] sm:$0xff]
    %v4510 = vld [vmem:[#allocation2 + $0x1e9] sm:$0xff]
    %v4511 = vld [vmem:[#allocation2 + $0x1f9] sm:$0xff]
    %v4512 = vld [vmem:[#allocation2 + $0x201] sm:$0xff]
    %v4513 = vld [vmem:[#allocation2 + $0x211] sm:$0xff]
    %v4514 = vld [vmem:[#allocation2 + $0x219] sm:$0xff]
    %v4515 = vld [vmem:[#allocation2 + $0x229] sm:$0xff]
    %v4516 = vld [vmem:[#allocation2 + $0x231] sm:$0xff]
    %v4517 = vld [vmem:[#allocation2 + $0x241] sm:$0xff]
    %v4518 = vld [vmem:[#allocation2 + $0x249] sm:$0xff]
    %v4519 = vld [vmem:[#allocation2 + $0x259] sm:$0xff]
    %v4520 = vld [vmem:[#allocation2 + $0x261] sm:$0xff]
    %v4521 = vld [vmem:[#allocation2 + $0x271] sm:$0xff]
    %v4522 = vld [vmem:[#allocation2 + $0x279] sm:$0xff]
    %v4523 = vld [vmem:[#allocation2 + $0x289] sm:$0xff]
    %v4524 = vld [vmem:[#allocation2 + $0x291] sm:$0xff]
    %v4525 = vld [vmem:[#allocation2 + $0x2a1] sm:$0xff]
    %v4526 = vld [vmem:[#allocation2 + $0x2a9] sm:$0xff]
    %v4527 = vld [vmem:[#allocation2 + $0x2b9] sm:$0xff]
    %v4528 = vld [vmem:[#allocation2 + $0x2c1] sm:$0xff]
    %v4529 = vld [vmem:[#allocation2 + $0x2d1] sm:$0xff]
    %v4530 = vld [vmem:[#allocation2 + $0x2d9] sm:$0xff]
    %v4531 = vld [vmem:[#allocation2 + $0x2e9] sm:$0xff]
    %v4532 = vld [vmem:[#allocation2 + $0x2f1] sm:$0xff]
    %v4533 = vld [vmem:[#allocation2 + $0x301] sm:$0xff]
    %v4534 = vld [vmem:[#allocation2 + $0x309] sm:$0xff]
    %v4535 = vld [vmem:[#allocation2 + $0x319] sm:$0xff]
    %v4536 = vld [vmem:[#allocation2 + $0x321] sm:$0xff]
    %v4537 = vld [vmem:[#allocation2 + $0x2] sm:$0xff]
    %v4538 = vld [vmem:[#allocation2 + $0xa] sm:$0xff]
    %v4539 = vld [vmem:[#allocation2 + $0x1a] sm:$0xff]
    %v4540 = vld [vmem:[#allocation2 + $0x22] sm:$0xff]
    %v4541 = vld [vmem:[#allocation2 + $0x32] sm:$0xff]
    %v4542 = vld [vmem:[#allocation2 + $0x3a] sm:$0xff]
    %v4543 = vld [vmem:[#allocation2 + $0x4a] sm:$0xff]
    %v4544 = vld [vmem:[#allocation2 + $0x52] sm:$0xff]
    %v4545 = vld [vmem:[#allocation2 + $0x62] sm:$0xff]
    %v4546 = vld [vmem:[#allocation2 + $0x6a] sm:$0xff]
    %v4547 = vld [vmem:[#allocation2 + $0x7a] sm:$0xff]
    %v4548 = vld [vmem:[#allocation2 + $0x82] sm:$0xff]
    %v4549 = vld [vmem:[#allocation2 + $0x92] sm:$0xff]
    %v4550 = vld [vmem:[#allocation2 + $0x9a] sm:$0xff]
    %v4551 = vld [vmem:[#allocation2 + $0xaa] sm:$0xff]
    %v4552 = vld [vmem:[#allocation2 + $0xb2] sm:$0xff]
    %v4553 = vld [vmem:[#allocation2 + $0xc2] sm:$0xff]
    %v4554 = vld [vmem:[#allocation2 + $0xca] sm:$0xff]
    %v4555 = vld [vmem:[#allocation2 + $0xda] sm:$0xff]
    %v4556 = vld [vmem:[#allocation2 + $0xe2] sm:$0xff]
    %v4557 = vld [vmem:[#allocation2 + $0xf2] sm:$0xff]
    %v4558 = vld [vmem:[#allocation2 + $0xfa] sm:$0xff]
    %v4559 = vld [vmem:[#allocation2 + $0x10a] sm:$0xff]
    %v4560 = vld [vmem:[#allocation2 + $0x112] sm:$0xff]
    %v4561 = vld [vmem:[#allocation2 + $0x122] sm:$0xff]
    %v4562 = vld [vmem:[#allocation2 + $0x12a] sm:$0xff]
    %v4563 = vld [vmem:[#allocation2 + $0x13a] sm:$0xff]
    %v4564 = vld [vmem:[#allocation2 + $0x142] sm:$0xff]
    %v4565 = vld [vmem:[#allocation2 + $0x152] sm:$0xff]
    %v4566 = vld [vmem:[#allocation2 + $0x15a] sm:$0xff]
    %v4567 = vld [vmem:[#allocation2 + $0x16a] sm:$0xff]
    %v4568 = vld [vmem:[#allocation2 + $0x172] sm:$0xff]
    %v4569 = vld [vmem:[#allocation2 + $0x1b2] sm:$0xff]
    %v4570 = vld [vmem:[#allocation2 + $0x1ba] sm:$0xff]
    %v4571 = vld [vmem:[#allocation2 + $0x1ca] sm:$0xff]
    %v4572 = vld [vmem:[#allocation2 + $0x1d2] sm:$0xff]
    %v4573 = vld [vmem:[#allocation2 + $0x1e2] sm:$0xff]
    %v4574 = vld [vmem:[#allocation2 + $0x1ea] sm:$0xff]
    %v4575 = vld [vmem:[#allocation2 + $0x1fa] sm:$0xff]
    %v4576 = vld [vmem:[#allocation2 + $0x202] sm:$0xff]
    %v4577 = vld [vmem:[#allocation2 + $0x212] sm:$0xff]
    %v4578 = vld [vmem:[#allocation2 + $0x21a] sm:$0xff]
    %v4579 = vld [vmem:[#allocation2 + $0x22a] sm:$0xff]
    %v4580 = vld [vmem:[#allocation2 + $0x232] sm:$0xff]
    %v4581 = vld [vmem:[#allocation2 + $0x242] sm:$0xff]
    %v4582 = vld [vmem:[#allocation2 + $0x24a] sm:$0xff]
    %v4583 = vld [vmem:[#allocation2 + $0x25a] sm:$0xff]
    %v4584 = vld [vmem:[#allocation2 + $0x262] sm:$0xff]
    %v4585 = vld [vmem:[#allocation2 + $0x272] sm:$0xff]
    %v4586 = vld [vmem:[#allocation2 + $0x27a] sm:$0xff]
    %v4587 = vld [vmem:[#allocation2 + $0x28a] sm:$0xff]
    %v4588 = vld [vmem:[#allocation2 + $0x292] sm:$0xff]
    %v4589 = vld [vmem:[#allocation2 + $0x2a2] sm:$0xff]
    %v4590 = vld [vmem:[#allocation2 + $0x2aa] sm:$0xff]
    %v4591 = vld [vmem:[#allocation2 + $0x2ba] sm:$0xff]
    %v4592 = vld [vmem:[#allocation2 + $0x2c2] sm:$0xff]
    %v4593 = vld [vmem:[#allocation2 + $0x2d2] sm:$0xff]
    %v4594 = vld [vmem:[#allocation2 + $0x2da] sm:$0xff]
    %v4595 = vld [vmem:[#allocation2 + $0x2ea] sm:$0xff]
    %v4596 = vld [vmem:[#allocation2 + $0x2f2] sm:$0xff]
    %v4597 = vld [vmem:[#allocation2 + $0x302] sm:$0xff]
    %v4598 = vld [vmem:[#allocation2 + $0x30a] sm:$0xff]
    %v4599 = vld [vmem:[#allocation2 + $0x31a] sm:$0xff]
    %v4600 = vld [vmem:[#allocation2 + $0x322] sm:$0xff]
    %v4601 = vld [vmem:[%s192] sm:$0xff]
    %v4602 = vld [vmem:[%s192 + $0x8] sm:$0xff]
    %v4603 = vld [vmem:[%s192 + $0x18] sm:$0xff]
    %v4604 = vld [vmem:[%s192 + $0x20] sm:$0xff]
    %v4605 = vld [vmem:[%s192 + $0x30] sm:$0xff]
    %v4606 = vld [vmem:[%s192 + $0x38] sm:$0xff]
    %v4607 = vld [vmem:[%s192 + $0x48] sm:$0xff]
    %v4608 = vld [vmem:[%s192 + $0x50] sm:$0xff]
    %v4609 = vld [vmem:[%s192 + $0x60] sm:$0xff]
    %v4610 = vld [vmem:[%s192 + $0x68] sm:$0xff]
    %v4611 = vld [vmem:[%s192 + $0x78] sm:$0xff]
    %v4612 = vld [vmem:[%s192 + $0x80] sm:$0xff]
    %v4613 = vld [vmem:[%s192 + $0x90] sm:$0xff]
    %v4614 = vld [vmem:[%s192 + $0x98] sm:$0xff]
    %v4615 = vld [vmem:[%s192 + $0xa8] sm:$0xff]
    %v4616 = vld [vmem:[%s192 + $0xb0] sm:$0xff]
    %v4617 = vld [vmem:[%s192 + $0xc0] sm:$0xff]
    %v4618 = vld [vmem:[%s192 + $0xc8] sm:$0xff]
    %v4619 = vld [vmem:[%s192 + $0xd8] sm:$0xff]
    %v4620 = vld [vmem:[%s192 + $0xe0] sm:$0xff]
    %v4621 = vld [vmem:[%s192 + $0xf0] sm:$0xff]
    %v4622 = vld [vmem:[%s192 + $0xf8] sm:$0xff]
    %v4623 = vld [vmem:[%s192 + $0x108] sm:$0xff]
    %v4624 = vld [vmem:[%s192 + $0x110] sm:$0xff]
    %v4625 = vld [vmem:[%s192 + $0x120] sm:$0xff]
    %v4626 = vld [vmem:[%s192 + $0x128] sm:$0xff]
    %v4627 = vld [vmem:[%s192 + $0x138] sm:$0xff]
    %v4628 = vld [vmem:[%s192 + $0x140] sm:$0xff]
    %v4629 = vld [vmem:[%s192 + $0x150] sm:$0xff]
    %v4630 = vld [vmem:[%s192 + $0x158] sm:$0xff]
    %v4631 = vld [vmem:[%s192 + $0x168] sm:$0xff]
    %v4632 = vld [vmem:[%s192 + $0x170] sm:$0xff]
    %v4633 = vld [vmem:[%s192 + $0x1b0] sm:$0xff]
    %v4634 = vld [vmem:[%s192 + $0x1b8] sm:$0xff]
    %v4635 = vld [vmem:[%s192 + $0x1c8] sm:$0xff]
    %v4636 = vld [vmem:[%s192 + $0x1d0] sm:$0xff]
    %v4637 = vld [vmem:[%s192 + $0x1e0] sm:$0xff]
    %v4638 = vld [vmem:[%s192 + $0x1e8] sm:$0xff]
    %v4639 = vld [vmem:[%s192 + $0x1f8] sm:$0xff]
    %v4640 = vld [vmem:[%s192 + $0x200] sm:$0xff]
    %v4641 = vld [vmem:[%s192 + $0x210] sm:$0xff]
    %v4642 = vld [vmem:[%s192 + $0x218] sm:$0xff]
    %v4643 = vld [vmem:[%s192 + $0x228] sm:$0xff]
    %v4644 = vld [vmem:[%s192 + $0x230] sm:$0xff]
    %v4645 = vld [vmem:[%s192 + $0x240] sm:$0xff]
    %v4646 = vld [vmem:[%s192 + $0x248] sm:$0xff]
    %v4647 = vld [vmem:[%s192 + $0x258] sm:$0xff]
    %v4648 = vld [vmem:[%s192 + $0x260] sm:$0xff]
    %v4649 = vld [vmem:[%s192 + $0x270] sm:$0xff]
    %v4650 = vld [vmem:[%s192 + $0x278] sm:$0xff]
    %v4651 = vld [vmem:[%s192 + $0x288] sm:$0xff]
    %v4652 = vld [vmem:[%s192 + $0x290] sm:$0xff]
    %v4653 = vld [vmem:[%s192 + $0x2a0] sm:$0xff]
    %v4654 = vld [vmem:[%s192 + $0x2a8] sm:$0xff]
    %v4655 = vld [vmem:[%s192 + $0x2b8] sm:$0xff]
    %v4656 = vld [vmem:[%s192 + $0x2c0] sm:$0xff]
    %v4657 = vld [vmem:[%s192 + $0x2d0] sm:$0xff]
    %v4658 = vld [vmem:[%s192 + $0x2d8] sm:$0xff]
    %v4659 = vld [vmem:[%s192 + $0x2e8] sm:$0xff]
    %v4660 = vld [vmem:[%s192 + $0x2f0] sm:$0xff]
    %v4661 = vld [vmem:[%s192 + $0x300] sm:$0xff]
    %v4662 = vld [vmem:[%s192 + $0x308] sm:$0xff]
    %v4663 = vld [vmem:[%s192 + $0x318] sm:$0xff]
    %v4664 = vld [vmem:[%s192 + $0x320] sm:$0xff]
    %v4665 = vld [vmem:[%s192 + $0x1] sm:$0xff]
    %v4666 = vld [vmem:[%s192 + $0x9] sm:$0xff]
    %v4667 = vld [vmem:[%s192 + $0x19] sm:$0xff]
    %v4668 = vld [vmem:[%s192 + $0x21] sm:$0xff]
    %v4669 = vld [vmem:[%s192 + $0x31] sm:$0xff]
    %v4670 = vld [vmem:[%s192 + $0x39] sm:$0xff]
    %v4671 = vld [vmem:[%s192 + $0x49] sm:$0xff]
    %v4672 = vld [vmem:[%s192 + $0x51] sm:$0xff]
    %v4673 = vld [vmem:[%s192 + $0x61] sm:$0xff]
    %v4674 = vld [vmem:[%s192 + $0x69] sm:$0xff]
    %v4675 = vld [vmem:[%s192 + $0x79] sm:$0xff]
    %v4676 = vld [vmem:[%s192 + $0x81] sm:$0xff]
    %v4677 = vld [vmem:[%s192 + $0x91] sm:$0xff]
    %v4678 = vld [vmem:[%s192 + $0x99] sm:$0xff]
    %v4679 = vld [vmem:[%s192 + $0xa9] sm:$0xff]
    %v4680 = vld [vmem:[%s192 + $0xb1] sm:$0xff]
    %v4681 = vld [vmem:[%s192 + $0xc1] sm:$0xff]
    %v4682 = vld [vmem:[%s192 + $0xc9] sm:$0xff]
    %v4683 = vld [vmem:[%s192 + $0xd9] sm:$0xff]
    %v4684 = vld [vmem:[%s192 + $0xe1] sm:$0xff]
    %v4685 = vld [vmem:[%s192 + $0xf1] sm:$0xff]
    %v4686 = vld [vmem:[%s192 + $0xf9] sm:$0xff]
    %v4687 = vld [vmem:[%s192 + $0x109] sm:$0xff]
    %v4688 = vld [vmem:[%s192 + $0x111] sm:$0xff]
    %v4689 = vld [vmem:[%s192 + $0x121] sm:$0xff]
    %v4690 = vld [vmem:[%s192 + $0x129] sm:$0xff]
    %v4691 = vld [vmem:[%s192 + $0x139] sm:$0xff]
    %v4692 = vld [vmem:[%s192 + $0x141] sm:$0xff]
    %v4693 = vld [vmem:[%s192 + $0x151] sm:$0xff]
    %v4694 = vld [vmem:[%s192 + $0x159] sm:$0xff]
    %v4695 = vld [vmem:[%s192 + $0x169] sm:$0xff]
    %v4696 = vld [vmem:[%s192 + $0x171] sm:$0xff]
    %v4697 = vld [vmem:[%s192 + $0x1b1] sm:$0xff]
    %v4698 = vld [vmem:[%s192 + $0x1b9] sm:$0xff]
    %v4699 = vld [vmem:[%s192 + $0x1c9] sm:$0xff]
    %v4700 = vld [vmem:[%s192 + $0x1d1] sm:$0xff]
    %v4701 = vld [vmem:[%s192 + $0x1e1] sm:$0xff]
    %v4702 = vld [vmem:[%s192 + $0x1e9] sm:$0xff]
    %v4703 = vld [vmem:[%s192 + $0x1f9] sm:$0xff]
    %v4704 = vld [vmem:[%s192 + $0x201] sm:$0xff]
    %v4705 = vld [vmem:[%s192 + $0x211] sm:$0xff]
    %v4706 = vld [vmem:[%s192 + $0x219] sm:$0xff]
    %v4707 = vld [vmem:[%s192 + $0x229] sm:$0xff]
    %v4708 = vld [vmem:[%s192 + $0x231] sm:$0xff]
    %v4709 = vld [vmem:[%s192 + $0x241] sm:$0xff]
    %v4710 = vld [vmem:[%s192 + $0x249] sm:$0xff]
    %v4711 = vld [vmem:[%s192 + $0x259] sm:$0xff]
    %v4712 = vld [vmem:[%s192 + $0x261] sm:$0xff]
    %v4713 = vld [vmem:[%s192 + $0x271] sm:$0xff]
    %v4714 = vld [vmem:[%s192 + $0x279] sm:$0xff]
    %v4715 = vld [vmem:[%s192 + $0x289] sm:$0xff]
    %v4716 = vld [vmem:[%s192 + $0x291] sm:$0xff]
    %v4717 = vld [vmem:[%s192 + $0x2a1] sm:$0xff]
    %v4718 = vld [vmem:[%s192 + $0x2a9] sm:$0xff]
    %v4719 = vld [vmem:[%s192 + $0x2b9] sm:$0xff]
    %v4720 = vld [vmem:[%s192 + $0x2c1] sm:$0xff]
    %v4721 = vld [vmem:[%s192 + $0x2d1] sm:$0xff]
    %v4722 = vld [vmem:[%s192 + $0x2d9] sm:$0xff]
    %v4723 = vld [vmem:[%s192 + $0x2e9] sm:$0xff]
    %v4724 = vld [vmem:[%s192 + $0x2f1] sm:$0xff]
    %v4725 = vld [vmem:[%s192 + $0x301] sm:$0xff]
    %v4726 = vld [vmem:[%s192 + $0x309] sm:$0xff]
    %v4727 = vld [vmem:[%s192 + $0x319] sm:$0xff]
    %v4728 = vld [vmem:[%s192 + $0x321] sm:$0xff]
    %v4729 = vld [vmem:[%s192 + $0x2] sm:$0xff]
    %v4730 = vld [vmem:[%s192 + $0xa] sm:$0xff]
    %v4731 = vld [vmem:[%s192 + $0x1a] sm:$0xff]
    %v4732 = vld [vmem:[%s192 + $0x22] sm:$0xff]
    %v4733 = vld [vmem:[%s192 + $0x32] sm:$0xff]
    %v4734 = vld [vmem:[%s192 + $0x3a] sm:$0xff]
    %v4735 = vld [vmem:[%s192 + $0x4a] sm:$0xff]
    %v4736 = vld [vmem:[%s192 + $0x52] sm:$0xff]
    %v4737 = vld [vmem:[%s192 + $0x62] sm:$0xff]
    %v4738 = vld [vmem:[%s192 + $0x6a] sm:$0xff]
    %v4739 = vld [vmem:[%s192 + $0x7a] sm:$0xff]
    %v4740 = vld [vmem:[%s192 + $0x82] sm:$0xff]
    %v4741 = vld [vmem:[%s192 + $0x92] sm:$0xff]
    %v4742 = vld [vmem:[%s192 + $0x9a] sm:$0xff]
    %v4743 = vld [vmem:[%s192 + $0xaa] sm:$0xff]
    %v4744 = vld [vmem:[%s192 + $0xb2] sm:$0xff]
    %v4745 = vld [vmem:[%s192 + $0xc2] sm:$0xff]
    %v4746 = vld [vmem:[%s192 + $0xca] sm:$0xff]
    %v4747 = vld [vmem:[%s192 + $0xda] sm:$0xff]
    %v4748 = vld [vmem:[%s192 + $0xe2] sm:$0xff]
    %v4749 = vld [vmem:[%s192 + $0xf2] sm:$0xff]
    %v4750 = vld [vmem:[%s192 + $0xfa] sm:$0xff]
    %v4751 = vld [vmem:[%s192 + $0x10a] sm:$0xff]
    %v4752 = vld [vmem:[%s192 + $0x112] sm:$0xff]
    %v4753 = vld [vmem:[%s192 + $0x122] sm:$0xff]
    %v4754 = vld [vmem:[%s192 + $0x12a] sm:$0xff]
    %v4755 = vld [vmem:[%s192 + $0x13a] sm:$0xff]
    %v4756 = vld [vmem:[%s192 + $0x142] sm:$0xff]
    %v4757 = vld [vmem:[%s192 + $0x152] sm:$0xff]
    %v4758 = vld [vmem:[%s192 + $0x15a] sm:$0xff]
    %v4759 = vld [vmem:[%s192 + $0x16a] sm:$0xff]
    %v4760 = vld [vmem:[%s192 + $0x172] sm:$0xff]
    %v4761 = vld [vmem:[%s192 + $0x1b2] sm:$0xff]
    %v4762 = vld [vmem:[%s192 + $0x1ba] sm:$0xff]
    %v4763 = vld [vmem:[%s192 + $0x1ca] sm:$0xff]
    %v4764 = vld [vmem:[%s192 + $0x1d2] sm:$0xff]
    %v4765 = vld [vmem:[%s192 + $0x1e2] sm:$0xff]
    %v4766 = vld [vmem:[%s192 + $0x1ea] sm:$0xff]
    %v4767 = vld [vmem:[%s192 + $0x1fa] sm:$0xff]
    %v4768 = vld [vmem:[%s192 + $0x202] sm:$0xff]
    %v4769 = vld [vmem:[%s192 + $0x212] sm:$0xff]
    %v4770 = vld [vmem:[%s192 + $0x21a] sm:$0xff]
    %v4771 = vld [vmem:[%s192 + $0x22a] sm:$0xff]
    %v4772 = vld [vmem:[%s192 + $0x232] sm:$0xff]
    %v4773 = vld [vmem:[%s192 + $0x242] sm:$0xff]
    %v4774 = vld [vmem:[%s192 + $0x24a] sm:$0xff]
    %v4775 = vld [vmem:[%s192 + $0x25a] sm:$0xff]
    %v4776 = vld [vmem:[%s192 + $0x262] sm:$0xff]
    %v4777 = vld [vmem:[%s192 + $0x272] sm:$0xff]
    %v4778 = vld [vmem:[%s192 + $0x27a] sm:$0xff]
    %v4779 = vld [vmem:[%s192 + $0x28a] sm:$0xff]
    %v4780 = vld [vmem:[%s192 + $0x292] sm:$0xff]
    %v4781 = vld [vmem:[%s192 + $0x2a2] sm:$0xff]
    %v4782 = vld [vmem:[%s192 + $0x2aa] sm:$0xff]
    %v4783 = vld [vmem:[%s192 + $0x2ba] sm:$0xff]
    %v4784 = vld [vmem:[%s192 + $0x2c2] sm:$0xff]
    %v4785 = vld [vmem:[%s192 + $0x2d2] sm:$0xff]
    %v4786 = vld [vmem:[%s192 + $0x2da] sm:$0xff]
    %v4787 = vld [vmem:[%s192 + $0x2ea] sm:$0xff]
    %v4788 = vld [vmem:[%s192 + $0x2f2] sm:$0xff]
    %v4789 = vld [vmem:[%s192 + $0x302] sm:$0xff]
    %v4790 = vld [vmem:[%s192 + $0x30a] sm:$0xff]
    %v4791 = vld [vmem:[%s192 + $0x31a] sm:$0xff]
    %v4792 = vld [vmem:[%s192 + $0x322] sm:$0xff]
    %v4793 = vld [vmem:[%s641] sm:$0xff]
    %v4794 = vld [vmem:[%s641 + $0x8] sm:$0xff]
    %v4795 = vld [vmem:[%s641 + $0x18] sm:$0xff]
    %v4796 = vld [vmem:[%s641 + $0x20] sm:$0xff]
    %v4797 = vld [vmem:[%s641 + $0x30] sm:$0xff]
    %v4798 = vld [vmem:[%s641 + $0x38] sm:$0xff]
    %v4799 = vld [vmem:[%s641 + $0x48] sm:$0xff]
    %v4800 = vld [vmem:[%s641 + $0x50] sm:$0xff]
    %v4801 = vld [vmem:[%s641 + $0x60] sm:$0xff]
    %v4802 = vld [vmem:[%s641 + $0x68] sm:$0xff]
    %v4803 = vld [vmem:[%s641 + $0x78] sm:$0xff]
    %v4804 = vld [vmem:[%s641 + $0x80] sm:$0xff]
    %v4805 = vld [vmem:[%s641 + $0x90] sm:$0xff]
    %v4806 = vld [vmem:[%s641 + $0x98] sm:$0xff]
    %v4807 = vld [vmem:[%s641 + $0xa8] sm:$0xff]
    %v4808 = vld [vmem:[%s641 + $0xb0] sm:$0xff]
    %v4809 = vld [vmem:[%s641 + $0xc0] sm:$0xff]
    %v4810 = vld [vmem:[%s641 + $0xc8] sm:$0xff]
    %v4811 = vld [vmem:[%s641 + $0xd8] sm:$0xff]
    %v4812 = vld [vmem:[%s641 + $0xe0] sm:$0xff]
    %v4813 = vld [vmem:[%s641 + $0xf0] sm:$0xff]
    %v4814 = vld [vmem:[%s641 + $0xf8] sm:$0xff]
    %v4815 = vld [vmem:[%s641 + $0x108] sm:$0xff]
    %v4816 = vld [vmem:[%s641 + $0x110] sm:$0xff]
    %v4817 = vld [vmem:[%s641 + $0x120] sm:$0xff]
    %v4818 = vld [vmem:[%s641 + $0x128] sm:$0xff]
    %v4819 = vld [vmem:[%s641 + $0x138] sm:$0xff]
    %v4820 = vld [vmem:[%s641 + $0x140] sm:$0xff]
    %v4821 = vld [vmem:[%s641 + $0x150] sm:$0xff]
    %v4822 = vld [vmem:[%s641 + $0x158] sm:$0xff]
    %v4823 = vld [vmem:[%s641 + $0x168] sm:$0xff]
    %v4824 = vld [vmem:[%s641 + $0x170] sm:$0xff]
    %v4825 = vld [vmem:[%s641 + $0x1b0] sm:$0xff]
    %v4826 = vld [vmem:[%s641 + $0x1b8] sm:$0xff]
    %v4827 = vld [vmem:[%s641 + $0x1c8] sm:$0xff]
    %v4828 = vld [vmem:[%s641 + $0x1d0] sm:$0xff]
    %v4829 = vld [vmem:[%s641 + $0x1e0] sm:$0xff]
    %v4830 = vld [vmem:[%s641 + $0x1e8] sm:$0xff]
    %v4831 = vld [vmem:[%s641 + $0x1f8] sm:$0xff]
    %v4832 = vld [vmem:[%s641 + $0x200] sm:$0xff]
    %v4833 = vld [vmem:[%s641 + $0x210] sm:$0xff]
    %v4834 = vld [vmem:[%s641 + $0x218] sm:$0xff]
    %v4835 = vld [vmem:[%s641 + $0x228] sm:$0xff]
    %v4836 = vld [vmem:[%s641 + $0x230] sm:$0xff]
    %v4837 = vld [vmem:[%s641 + $0x240] sm:$0xff]
    %v4838 = vld [vmem:[%s641 + $0x248] sm:$0xff]
    %v4839 = vld [vmem:[%s641 + $0x258] sm:$0xff]
    %v4840 = vld [vmem:[%s641 + $0x260] sm:$0xff]
    %v4841 = vld [vmem:[%s641 + $0x270] sm:$0xff]
    %v4842 = vld [vmem:[%s641 + $0x278] sm:$0xff]
    %v4843 = vld [vmem:[%s641 + $0x288] sm:$0xff]
    %v4844 = vld [vmem:[%s641 + $0x290] sm:$0xff]
    %v4845 = vld [vmem:[%s641 + $0x2a0] sm:$0xff]
    %v4846 = vld [vmem:[%s641 + $0x2a8] sm:$0xff]
    %v4847 = vld [vmem:[%s641 + $0x2b8] sm:$0xff]
    %v4848 = vld [vmem:[%s641 + $0x2c0] sm:$0xff]
    %v4849 = vld [vmem:[%s641 + $0x2d0] sm:$0xff]
    %v4850 = vld [vmem:[%s641 + $0x2d8] sm:$0xff]
    %v4851 = vld [vmem:[%s641 + $0x2e8] sm:$0xff]
    %v4852 = vld [vmem:[%s641 + $0x2f0] sm:$0xff]
    %v4853 = vld [vmem:[%s641 + $0x300] sm:$0xff]
    %v4854 = vld [vmem:[%s641 + $0x308] sm:$0xff]
    %v4855 = vld [vmem:[%s641 + $0x318] sm:$0xff]
    %v4856 = vld [vmem:[%s641 + $0x320] sm:$0xff]
    %v4857 = vld [vmem:[%s641 + $0x1] sm:$0xff]
    %v4858 = vld [vmem:[%s641 + $0x9] sm:$0xff]
    %v4859 = vld [vmem:[%s641 + $0x19] sm:$0xff]
    %v4860 = vld [vmem:[%s641 + $0x21] sm:$0xff]
    %v4861 = vld [vmem:[%s641 + $0x31] sm:$0xff]
    %v4862 = vld [vmem:[%s641 + $0x39] sm:$0xff]
    %v4863 = vld [vmem:[%s641 + $0x49] sm:$0xff]
    %v4864 = vld [vmem:[%s641 + $0x51] sm:$0xff]
    %v4865 = vld [vmem:[%s641 + $0x61] sm:$0xff]
    %v4866 = vld [vmem:[%s641 + $0x69] sm:$0xff]
    %v4867 = vld [vmem:[%s641 + $0x79] sm:$0xff]
    %v4868 = vld [vmem:[%s641 + $0x81] sm:$0xff]
    %v4869 = vld [vmem:[%s641 + $0x91] sm:$0xff]
    %v4870 = vld [vmem:[%s641 + $0x99] sm:$0xff]
    %v4871 = vld [vmem:[%s641 + $0xa9] sm:$0xff]
    %v4872 = vld [vmem:[%s641 + $0xb1] sm:$0xff]
    %v4873 = vld [vmem:[%s641 + $0xc1] sm:$0xff]
    %v4874 = vld [vmem:[%s641 + $0xc9] sm:$0xff]
    %v4875 = vld [vmem:[%s641 + $0xd9] sm:$0xff]
    %v4876 = vld [vmem:[%s641 + $0xe1] sm:$0xff]
    %v4877 = vld [vmem:[%s641 + $0xf1] sm:$0xff]
    %v4878 = vld [vmem:[%s641 + $0xf9] sm:$0xff]
    %v4879 = vld [vmem:[%s641 + $0x109] sm:$0xff]
    %v4880 = vld [vmem:[%s641 + $0x111] sm:$0xff]
    %v4881 = vld [vmem:[%s641 + $0x121] sm:$0xff]
    %v4882 = vld [vmem:[%s641 + $0x129] sm:$0xff]
    %v4883 = vld [vmem:[%s641 + $0x139] sm:$0xff]
    %v4884 = vld [vmem:[%s641 + $0x141] sm:$0xff]
    %v4885 = vld [vmem:[%s641 + $0x151] sm:$0xff]
    %v4886 = vld [vmem:[%s641 + $0x159] sm:$0xff]
    %v4887 = vld [vmem:[%s641 + $0x169] sm:$0xff]
    %v4888 = vld [vmem:[%s641 + $0x171] sm:$0xff]
    %v4889 = vld [vmem:[%s641 + $0x1b1] sm:$0xff]
    %v4890 = vld [vmem:[%s641 + $0x1b9] sm:$0xff]
    %v4891 = vld [vmem:[%s641 + $0x1c9] sm:$0xff]
    %v4892 = vld [vmem:[%s641 + $0x1d1] sm:$0xff]
    %v4893 = vld [vmem:[%s641 + $0x1e1] sm:$0xff]
    %v4894 = vld [vmem:[%s641 + $0x1e9] sm:$0xff]
    %v4895 = vld [vmem:[%s641 + $0x1f9] sm:$0xff]
    %v4896 = vld [vmem:[%s641 + $0x201] sm:$0xff]
    %v4897 = vld [vmem:[%s641 + $0x211] sm:$0xff]
    %v4898 = vld [vmem:[%s641 + $0x219] sm:$0xff]
    %v4899 = vld [vmem:[%s641 + $0x229] sm:$0xff]
    %v4900 = vld [vmem:[%s641 + $0x231] sm:$0xff]
    %v4901 = vld [vmem:[%s641 + $0x241] sm:$0xff]
    %v4902 = vld [vmem:[%s641 + $0x249] sm:$0xff]
    %v4903 = vld [vmem:[%s641 + $0x259] sm:$0xff]
    %v4904 = vld [vmem:[%s641 + $0x261] sm:$0xff]
    %v4905 = vld [vmem:[%s641 + $0x271] sm:$0xff]
    %v4906 = vld [vmem:[%s641 + $0x279] sm:$0xff]
    %v4907 = vld [vmem:[%s641 + $0x289] sm:$0xff]
    %v4908 = vld [vmem:[%s641 + $0x291] sm:$0xff]
    %v4909 = vld [vmem:[%s641 + $0x2a1] sm:$0xff]
    %v4910 = vld [vmem:[%s641 + $0x2a9] sm:$0xff]
    %v4911 = vld [vmem:[%s641 + $0x2b9] sm:$0xff]
    %v4912 = vld [vmem:[%s641 + $0x2c1] sm:$0xff]
    %v4913 = vld [vmem:[%s641 + $0x2d1] sm:$0xff]
    %v4914 = vld [vmem:[%s641 + $0x2d9] sm:$0xff]
    %v4915 = vld [vmem:[%s641 + $0x2e9] sm:$0xff]
    %v4916 = vld [vmem:[%s641 + $0x2f1] sm:$0xff]
    %v4917 = vld [vmem:[%s641 + $0x301] sm:$0xff]
    %v4918 = vld [vmem:[%s641 + $0x309] sm:$0xff]
    %v4919 = vld [vmem:[%s641 + $0x319] sm:$0xff]
    %v4920 = vld [vmem:[%s641 + $0x321] sm:$0xff]
    %v4921 = vld [vmem:[%s641 + $0x2] sm:$0xff]
    %v4922 = vld [vmem:[%s641 + $0xa] sm:$0xff]
    %v4923 = vld [vmem:[%s641 + $0x1a] sm:$0xff]
    %v4924 = vld [vmem:[%s641 + $0x22] sm:$0xff]
    %v4925 = vld [vmem:[%s641 + $0x32] sm:$0xff]
    %v4926 = vld [vmem:[%s641 + $0x3a] sm:$0xff]
    %v4927 = vld [vmem:[%s641 + $0x4a] sm:$0xff]
    %v4928 = vld [vmem:[%s641 + $0x52] sm:$0xff]
    %v4929 = vld [vmem:[%s641 + $0x62] sm:$0xff]
    %v4930 = vld [vmem:[%s641 + $0x6a] sm:$0xff]
    %v4931 = vld [vmem:[%s641 + $0x7a] sm:$0xff]
    %v4932 = vld [vmem:[%s641 + $0x82] sm:$0xff]
    %v4933 = vld [vmem:[%s641 + $0x92] sm:$0xff]
    %v4934 = vld [vmem:[%s641 + $0x9a] sm:$0xff]
    %v4935 = vld [vmem:[%s641 + $0xaa] sm:$0xff]
    %v4936 = vld [vmem:[%s641 + $0xb2] sm:$0xff]
    %v4937 = vld [vmem:[%s641 + $0xc2] sm:$0xff]
    %v4938 = vld [vmem:[%s641 + $0xca] sm:$0xff]
    %v4939 = vld [vmem:[%s641 + $0xda] sm:$0xff]
    %v4940 = vld [vmem:[%s641 + $0xe2] sm:$0xff]
    %v4941 = vld [vmem:[%s641 + $0xf2] sm:$0xff]
    %v4942 = vld [vmem:[%s641 + $0xfa] sm:$0xff]
    %v4943 = vld [vmem:[%s641 + $0x10a] sm:$0xff]
    %v4944 = vld [vmem:[%s641 + $0x112] sm:$0xff]
    %v4945 = vld [vmem:[%s641 + $0x122] sm:$0xff]
    %v4946 = vld [vmem:[%s641 + $0x12a] sm:$0xff]
    %v4947 = vld [vmem:[%s641 + $0x13a] sm:$0xff]
    %v4948 = vld [vmem:[%s641 + $0x142] sm:$0xff]
    %v4949 = vld [vmem:[%s641 + $0x152] sm:$0xff]
    %v4950 = vld [vmem:[%s641 + $0x15a] sm:$0xff]
    %v4951 = vld [vmem:[%s641 + $0x16a] sm:$0xff]
    %v4952 = vld [vmem:[%s641 + $0x172] sm:$0xff]
    %v4953 = vld [vmem:[%s641 + $0x1b2] sm:$0xff]
    %v4954 = vld [vmem:[%s641 + $0x1ba] sm:$0xff]
    %v4955 = vld [vmem:[%s641 + $0x1ca] sm:$0xff]
    %v4956 = vld [vmem:[%s641 + $0x1d2] sm:$0xff]
    %v4957 = vld [vmem:[%s641 + $0x1e2] sm:$0xff]
    %v4958 = vld [vmem:[%s641 + $0x1ea] sm:$0xff]
    %v4959 = vld [vmem:[%s641 + $0x1fa] sm:$0xff]
    %v4960 = vld [vmem:[%s641 + $0x202] sm:$0xff]
    %v4961 = vld [vmem:[%s641 + $0x212] sm:$0xff]
    %v4962 = vld [vmem:[%s641 + $0x21a] sm:$0xff]
    %v4963 = vld [vmem:[%s641 + $0x22a] sm:$0xff]
    %v4964 = vld [vmem:[%s641 + $0x232] sm:$0xff]
    %v4965 = vld [vmem:[%s641 + $0x242] sm:$0xff]
    %v4966 = vld [vmem:[%s641 + $0x24a] sm:$0xff]
    %v4967 = vld [vmem:[%s641 + $0x25a] sm:$0xff]
    %v4968 = vld [vmem:[%s641 + $0x262] sm:$0xff]
    %v4969 = vld [vmem:[%s641 + $0x272] sm:$0xff]
    %v4970 = vld [vmem:[%s641 + $0x27a] sm:$0xff]
    %v4971 = vld [vmem:[%s641 + $0x28a] sm:$0xff]
    %v4972 = vld [vmem:[%s641 + $0x292] sm:$0xff]
    %v4973 = vld [vmem:[%s641 + $0x2a2] sm:$0xff]
    %v4974 = vld [vmem:[%s641 + $0x2aa] sm:$0xff]
    %v4975 = vld [vmem:[%s641 + $0x2ba] sm:$0xff]
    %v4976 = vld [vmem:[%s641 + $0x2c2] sm:$0xff]
    %v4977 = vld [vmem:[%s641 + $0x2d2] sm:$0xff]
    %v4978 = vld [vmem:[%s641 + $0x2da] sm:$0xff]
    %v4979 = vld [vmem:[%s641 + $0x2ea] sm:$0xff]
    %v4980 = vld [vmem:[%s641 + $0x2f2] sm:$0xff]
    %v4981 = vld [vmem:[%s641 + $0x302] sm:$0xff]
    %v4982 = vld [vmem:[%s641 + $0x30a] sm:$0xff]
    %v4983 = vld [vmem:[%s641 + $0x31a] sm:$0xff]
    %v4984 = vld [vmem:[%s641 + $0x322] sm:$0xff]
    %5049 = vrot.lane.b32.xlu0 %v4473, 16
    %v5050 = vpop.permute.xlu0 %5049
    %5051 = vrot.lane.b32.xlu0 %v4474, 16
    %v5052 = vpop.permute.xlu0 %5051
    %5053 = vrot.lane.b32.xlu0 %v4475, 16
    %v5054 = vpop.permute.xlu0 %5053
    %5055 = vrot.lane.b32.xlu0 %v4476, 16
    %v5056 = vpop.permute.xlu0 %5055
    %5057 = vrot.lane.b32.xlu0 %v4477, 16
    %v5058 = vpop.permute.xlu0 %5057
    %5059 = vrot.lane.b32.xlu0 %v4478, 16
    %v5060 = vpop.permute.xlu0 %5059
    %5061 = vrot.lane.b32.xlu0 %v4479, 16
    %v5062 = vpop.permute.xlu0 %5061
    %5063 = vrot.lane.b32.xlu0 %v4480, 16
    %v5064 = vpop.permute.xlu0 %5063
    %5065 = vrot.lane.b32.xlu0 %v4481, 16
    %v5066 = vpop.permute.xlu0 %5065
    %5067 = vrot.lane.b32.xlu0 %v4482, 16
    %v5068 = vpop.permute.xlu0 %5067
    %5069 = vrot.lane.b32.xlu0 %v4483, 16
    %v5070 = vpop.permute.xlu0 %5069
    %5071 = vrot.lane.b32.xlu0 %v4484, 16
    %v5072 = vpop.permute.xlu0 %5071
    %5073 = vrot.lane.b32.xlu0 %v4485, 16
    %v5074 = vpop.permute.xlu0 %5073
    %5075 = vrot.lane.b32.xlu0 %v4486, 16
    %v5076 = vpop.permute.xlu0 %5075
    %5077 = vrot.lane.b32.xlu0 %v4487, 16
    %v5078 = vpop.permute.xlu0 %5077
    %5079 = vrot.lane.b32.xlu0 %v4488, 16
    %v5080 = vpop.permute.xlu0 %5079
    %5081 = vrot.lane.b32.xlu0 %v4489, 16
    %v5082 = vpop.permute.xlu0 %5081
    %5083 = vrot.lane.b32.xlu0 %v4490, 16
    %v5084 = vpop.permute.xlu0 %5083
    %5085 = vrot.lane.b32.xlu0 %v4491, 16
    %v5086 = vpop.permute.xlu0 %5085
    %5087 = vrot.lane.b32.xlu0 %v4492, 16
    %v5088 = vpop.permute.xlu0 %5087
    %5089 = vrot.lane.b32.xlu0 %v4493, 16
    %v5090 = vpop.permute.xlu0 %5089
    %5091 = vrot.lane.b32.xlu0 %v4494, 16
    %v5092 = vpop.permute.xlu0 %5091
    %5093 = vrot.lane.b32.xlu0 %v4495, 16
    %v5094 = vpop.permute.xlu0 %5093
    %5095 = vrot.lane.b32.xlu0 %v4496, 16
    %v5096 = vpop.permute.xlu0 %5095
    %5097 = vrot.lane.b32.xlu0 %v4497, 16
    %v5098 = vpop.permute.xlu0 %5097
    %5099 = vrot.lane.b32.xlu0 %v4498, 16
    %v5100 = vpop.permute.xlu0 %5099
    %5101 = vrot.lane.b32.xlu0 %v4499, 16
    %v5102 = vpop.permute.xlu0 %5101
    %5103 = vrot.lane.b32.xlu0 %v4500, 16
    %v5104 = vpop.permute.xlu0 %5103
    %5105 = vrot.lane.b32.xlu0 %v4501, 16
    %v5106 = vpop.permute.xlu0 %5105
    %5107 = vrot.lane.b32.xlu0 %v4502, 16
    %v5108 = vpop.permute.xlu0 %5107
    %5109 = vrot.lane.b32.xlu0 %v4503, 16
    %v5110 = vpop.permute.xlu0 %5109
    %5111 = vrot.lane.b32.xlu0 %v4504, 16
    %v5112 = vpop.permute.xlu0 %5111
    %5113 = vrot.lane.b32.xlu0 %v4505, 16
    %v5114 = vpop.permute.xlu0 %5113
    %5115 = vrot.lane.b32.xlu0 %v4506, 16
    %v5116 = vpop.permute.xlu0 %5115
    %5117 = vrot.lane.b32.xlu0 %v4507, 16
    %v5118 = vpop.permute.xlu0 %5117
    %5119 = vrot.lane.b32.xlu0 %v4508, 16
    %v5120 = vpop.permute.xlu0 %5119
    %5121 = vrot.lane.b32.xlu0 %v4509, 16
    %v5122 = vpop.permute.xlu0 %5121
    %5123 = vrot.lane.b32.xlu0 %v4510, 16
    %v5124 = vpop.permute.xlu0 %5123
    %5125 = vrot.lane.b32.xlu0 %v4511, 16
    %v5126 = vpop.permute.xlu0 %5125
    %5127 = vrot.lane.b32.xlu0 %v4512, 16
    %v5128 = vpop.permute.xlu0 %5127
    %5129 = vrot.lane.b32.xlu0 %v4513, 16
    %v5130 = vpop.permute.xlu0 %5129
    %5131 = vrot.lane.b32.xlu0 %v4514, 16
    %v5132 = vpop.permute.xlu0 %5131
    %5133 = vrot.lane.b32.xlu0 %v4515, 16
    %v5134 = vpop.permute.xlu0 %5133
    %5135 = vrot.lane.b32.xlu0 %v4516, 16
    %v5136 = vpop.permute.xlu0 %5135
    %5137 = vrot.lane.b32.xlu0 %v4517, 16
    %v5138 = vpop.permute.xlu0 %5137
    %5139 = vrot.lane.b32.xlu0 %v4518, 16
    %v5140 = vpop.permute.xlu0 %5139
    %5141 = vrot.lane.b32.xlu0 %v4519, 16
    %v5142 = vpop.permute.xlu0 %5141
    %5143 = vrot.lane.b32.xlu0 %v4520, 16
    %v5144 = vpop.permute.xlu0 %5143
    %5145 = vrot.lane.b32.xlu0 %v4521, 16
    %v5146 = vpop.permute.xlu0 %5145
    %5147 = vrot.lane.b32.xlu0 %v4522, 16
    %v5148 = vpop.permute.xlu0 %5147
    %5149 = vrot.lane.b32.xlu0 %v4523, 16
    %v5150 = vpop.permute.xlu0 %5149
    %5151 = vrot.lane.b32.xlu0 %v4524, 16
    %v5152 = vpop.permute.xlu0 %5151
    %5153 = vrot.lane.b32.xlu0 %v4525, 16
    %v5154 = vpop.permute.xlu0 %5153
    %5155 = vrot.lane.b32.xlu0 %v4526, 16
    %v5156 = vpop.permute.xlu0 %5155
    %5157 = vrot.lane.b32.xlu0 %v4527, 16
    %v5158 = vpop.permute.xlu0 %5157
    %5159 = vrot.lane.b32.xlu0 %v4528, 16
    %v5160 = vpop.permute.xlu0 %5159
    %5161 = vrot.lane.b32.xlu0 %v4529, 16
    %v5162 = vpop.permute.xlu0 %5161
    %5163 = vrot.lane.b32.xlu0 %v4530, 16
    %v5164 = vpop.permute.xlu0 %5163
    %5165 = vrot.lane.b32.xlu0 %v4531, 16
    %v5166 = vpop.permute.xlu0 %5165
    %5167 = vrot.lane.b32.xlu0 %v4532, 16
    %v5168 = vpop.permute.xlu0 %5167
    %5169 = vrot.lane.b32.xlu0 %v4533, 16
    %v5170 = vpop.permute.xlu0 %5169
    %5171 = vrot.lane.b32.xlu0 %v4534, 16
    %v5172 = vpop.permute.xlu0 %5171
    %5173 = vrot.lane.b32.xlu0 %v4535, 16
    %v5174 = vpop.permute.xlu0 %5173
    %5175 = vrot.lane.b32.xlu0 %v4536, 16
    %v5176 = vpop.permute.xlu0 %5175
    %5305 = vrot.lane.b32.xlu0 %v4537, 32
    %v5306 = vpop.permute.xlu0 %5305
    %5307 = vrot.lane.b32.xlu0 %v4538, 32
    %v5308 = vpop.permute.xlu0 %5307
    %5309 = vrot.lane.b32.xlu0 %v4539, 32
    %v5310 = vpop.permute.xlu0 %5309
    %5311 = vrot.lane.b32.xlu0 %v4540, 32
    %v5312 = vpop.permute.xlu0 %5311
    %5313 = vrot.lane.b32.xlu0 %v4541, 32
    %v5314 = vpop.permute.xlu0 %5313
    %5315 = vrot.lane.b32.xlu0 %v4542, 32
    %v5316 = vpop.permute.xlu0 %5315
    %5317 = vrot.lane.b32.xlu0 %v4543, 32
    %v5318 = vpop.permute.xlu0 %5317
    %5319 = vrot.lane.b32.xlu0 %v4544, 32
    %v5320 = vpop.permute.xlu0 %5319
    %5321 = vrot.lane.b32.xlu0 %v4545, 32
    %v5322 = vpop.permute.xlu0 %5321
    %5323 = vrot.lane.b32.xlu0 %v4546, 32
    %v5324 = vpop.permute.xlu0 %5323
    %5325 = vrot.lane.b32.xlu0 %v4547, 32
    %v5326 = vpop.permute.xlu0 %5325
    %5327 = vrot.lane.b32.xlu0 %v4548, 32
    %v5328 = vpop.permute.xlu0 %5327
    %5329 = vrot.lane.b32.xlu0 %v4549, 32
    %v5330 = vpop.permute.xlu0 %5329
    %5331 = vrot.lane.b32.xlu0 %v4550, 32
    %v5332 = vpop.permute.xlu0 %5331
    %5333 = vrot.lane.b32.xlu0 %v4551, 32
    %v5334 = vpop.permute.xlu0 %5333
    %5335 = vrot.lane.b32.xlu0 %v4552, 32
    %v5336 = vpop.permute.xlu0 %5335
    %5337 = vrot.lane.b32.xlu0 %v4553, 32
    %v5338 = vpop.permute.xlu0 %5337
    %5339 = vrot.lane.b32.xlu0 %v4554, 32
    %v5340 = vpop.permute.xlu0 %5339
    %5341 = vrot.lane.b32.xlu0 %v4555, 32
    %v5342 = vpop.permute.xlu0 %5341
    %5343 = vrot.lane.b32.xlu0 %v4556, 32
    %v5344 = vpop.permute.xlu0 %5343
    %5345 = vrot.lane.b32.xlu0 %v4557, 32
    %v5346 = vpop.permute.xlu0 %5345
    %5347 = vrot.lane.b32.xlu0 %v4558, 32
    %v5348 = vpop.permute.xlu0 %5347
    %5349 = vrot.lane.b32.xlu0 %v4559, 32
    %v5350 = vpop.permute.xlu0 %5349
    %5351 = vrot.lane.b32.xlu0 %v4560, 32
    %v5352 = vpop.permute.xlu0 %5351
    %5353 = vrot.lane.b32.xlu0 %v4561, 32
    %v5354 = vpop.permute.xlu0 %5353
    %5355 = vrot.lane.b32.xlu0 %v4562, 32
    %v5356 = vpop.permute.xlu0 %5355
    %5357 = vrot.lane.b32.xlu0 %v4563, 32
    %v5358 = vpop.permute.xlu0 %5357
    %5359 = vrot.lane.b32.xlu0 %v4564, 32
    %v5360 = vpop.permute.xlu0 %5359
    %5361 = vrot.lane.b32.xlu0 %v4565, 32
    %v5362 = vpop.permute.xlu0 %5361
    %5363 = vrot.lane.b32.xlu0 %v4566, 32
    %v5364 = vpop.permute.xlu0 %5363
    %5365 = vrot.lane.b32.xlu0 %v4567, 32
    %v5366 = vpop.permute.xlu0 %5365
    %5367 = vrot.lane.b32.xlu0 %v4568, 32
    %v5368 = vpop.permute.xlu0 %5367
    %5369 = vrot.lane.b32.xlu0 %v4569, 32
    %v5370 = vpop.permute.xlu0 %5369
    %5371 = vrot.lane.b32.xlu0 %v4570, 32
    %v5372 = vpop.permute.xlu0 %5371
    %5373 = vrot.lane.b32.xlu0 %v4571, 32
    %v5374 = vpop.permute.xlu0 %5373
    %5375 = vrot.lane.b32.xlu0 %v4572, 32
    %v5376 = vpop.permute.xlu0 %5375
    %5377 = vrot.lane.b32.xlu0 %v4573, 32
    %v5378 = vpop.permute.xlu0 %5377
    %5379 = vrot.lane.b32.xlu0 %v4574, 32
    %v5380 = vpop.permute.xlu0 %5379
    %5381 = vrot.lane.b32.xlu0 %v4575, 32
    %v5382 = vpop.permute.xlu0 %5381
    %5383 = vrot.lane.b32.xlu0 %v4576, 32
    %v5384 = vpop.permute.xlu0 %5383
    %5385 = vrot.lane.b32.xlu0 %v4577, 32
    %v5386 = vpop.permute.xlu0 %5385
    %5387 = vrot.lane.b32.xlu0 %v4578, 32
    %v5388 = vpop.permute.xlu0 %5387
    %5389 = vrot.lane.b32.xlu0 %v4579, 32
    %v5390 = vpop.permute.xlu0 %5389
    %5391 = vrot.lane.b32.xlu0 %v4580, 32
    %v5392 = vpop.permute.xlu0 %5391
    %5393 = vrot.lane.b32.xlu0 %v4581, 32
    %v5394 = vpop.permute.xlu0 %5393
    %5395 = vrot.lane.b32.xlu0 %v4582, 32
    %v5396 = vpop.permute.xlu0 %5395
    %5397 = vrot.lane.b32.xlu0 %v4583, 32
    %v5398 = vpop.permute.xlu0 %5397
    %5399 = vrot.lane.b32.xlu0 %v4584, 32
    %v5400 = vpop.permute.xlu0 %5399
    %5401 = vrot.lane.b32.xlu0 %v4585, 32
    %v5402 = vpop.permute.xlu0 %5401
    %5403 = vrot.lane.b32.xlu0 %v4586, 32
    %v5404 = vpop.permute.xlu0 %5403
    %5405 = vrot.lane.b32.xlu0 %v4587, 32
    %v5406 = vpop.permute.xlu0 %5405
    %5407 = vrot.lane.b32.xlu0 %v4588, 32
    %v5408 = vpop.permute.xlu0 %5407
    %5409 = vrot.lane.b32.xlu0 %v4589, 32
    %v5410 = vpop.permute.xlu0 %5409
    %5411 = vrot.lane.b32.xlu0 %v4590, 32
    %v5412 = vpop.permute.xlu0 %5411
    %5413 = vrot.lane.b32.xlu0 %v4591, 32
    %v5414 = vpop.permute.xlu0 %5413
    %5415 = vrot.lane.b32.xlu0 %v4592, 32
    %v5416 = vpop.permute.xlu0 %5415
    %5417 = vrot.lane.b32.xlu0 %v4593, 32
    %v5418 = vpop.permute.xlu0 %5417
    %5419 = vrot.lane.b32.xlu0 %v4594, 32
    %v5420 = vpop.permute.xlu0 %5419
    %5421 = vrot.lane.b32.xlu0 %v4595, 32
    %v5422 = vpop.permute.xlu0 %5421
    %5423 = vrot.lane.b32.xlu0 %v4596, 32
    %v5424 = vpop.permute.xlu0 %5423
    %5425 = vrot.lane.b32.xlu0 %v4597, 32
    %v5426 = vpop.permute.xlu0 %5425
    %5427 = vrot.lane.b32.xlu0 %v4598, 32
    %v5428 = vpop.permute.xlu0 %5427
    %5429 = vrot.lane.b32.xlu0 %v4599, 32
    %v5430 = vpop.permute.xlu0 %5429
    %5431 = vrot.lane.b32.xlu0 %v4600, 32
    %v5432 = vpop.permute.xlu0 %5431
    %5561 = vrot.lane.b32.xlu0 %v4601, 48
    %v5562 = vpop.permute.xlu0 %5561
    %5563 = vrot.lane.b32.xlu0 %v4602, 48
    %v5564 = vpop.permute.xlu0 %5563
    %5565 = vrot.lane.b32.xlu0 %v4603, 48
    %v5566 = vpop.permute.xlu0 %5565
    %5567 = vrot.lane.b32.xlu0 %v4604, 48
    %v5568 = vpop.permute.xlu0 %5567
    %5569 = vrot.lane.b32.xlu0 %v4605, 48
    %v5570 = vpop.permute.xlu0 %5569
    %5571 = vrot.lane.b32.xlu0 %v4606, 48
    %v5572 = vpop.permute.xlu0 %5571
    %5573 = vrot.lane.b32.xlu0 %v4607, 48
    %v5574 = vpop.permute.xlu0 %5573
    %5575 = vrot.lane.b32.xlu0 %v4608, 48
    %v5576 = vpop.permute.xlu0 %5575
    %5577 = vrot.lane.b32.xlu0 %v4609, 48
    %v5578 = vpop.permute.xlu0 %5577
    %5579 = vrot.lane.b32.xlu0 %v4610, 48
    %v5580 = vpop.permute.xlu0 %5579
    %5581 = vrot.lane.b32.xlu0 %v4611, 48
    %v5582 = vpop.permute.xlu0 %5581
    %5583 = vrot.lane.b32.xlu0 %v4612, 48
    %v5584 = vpop.permute.xlu0 %5583
    %5585 = vrot.lane.b32.xlu0 %v4613, 48
    %v5586 = vpop.permute.xlu0 %5585
    %5587 = vrot.lane.b32.xlu0 %v4614, 48
    %v5588 = vpop.permute.xlu0 %5587
    %5589 = vrot.lane.b32.xlu0 %v4615, 48
    %v5590 = vpop.permute.xlu0 %5589
    %5591 = vrot.lane.b32.xlu0 %v4616, 48
    %v5592 = vpop.permute.xlu0 %5591
    %5593 = vrot.lane.b32.xlu0 %v4617, 48
    %v5594 = vpop.permute.xlu0 %5593
    %5595 = vrot.lane.b32.xlu0 %v4618, 48
    %v5596 = vpop.permute.xlu0 %5595
    %5597 = vrot.lane.b32.xlu0 %v4619, 48
    %v5598 = vpop.permute.xlu0 %5597
    %5599 = vrot.lane.b32.xlu0 %v4620, 48
    %v5600 = vpop.permute.xlu0 %5599
    %5601 = vrot.lane.b32.xlu0 %v4621, 48
    %v5602 = vpop.permute.xlu0 %5601
    %5603 = vrot.lane.b32.xlu0 %v4622, 48
    %v5604 = vpop.permute.xlu0 %5603
    %5605 = vrot.lane.b32.xlu0 %v4623, 48
    %v5606 = vpop.permute.xlu0 %5605
    %5607 = vrot.lane.b32.xlu0 %v4624, 48
    %v5608 = vpop.permute.xlu0 %5607
    %5609 = vrot.lane.b32.xlu0 %v4625, 48
    %v5610 = vpop.permute.xlu0 %5609
    %5611 = vrot.lane.b32.xlu0 %v4626, 48
    %v5612 = vpop.permute.xlu0 %5611
    %5613 = vrot.lane.b32.xlu0 %v4627, 48
    %v5614 = vpop.permute.xlu0 %5613
    %5615 = vrot.lane.b32.xlu0 %v4628, 48
    %v5616 = vpop.permute.xlu0 %5615
    %5617 = vrot.lane.b32.xlu0 %v4629, 48
    %v5618 = vpop.permute.xlu0 %5617
    %5619 = vrot.lane.b32.xlu0 %v4630, 48
    %v5620 = vpop.permute.xlu0 %5619
    %5621 = vrot.lane.b32.xlu0 %v4631, 48
    %v5622 = vpop.permute.xlu0 %5621
    %5623 = vrot.lane.b32.xlu0 %v4632, 48
    %v5624 = vpop.permute.xlu0 %5623
    %5625 = vrot.lane.b32.xlu0 %v4633, 48
    %v5626 = vpop.permute.xlu0 %5625
    %5627 = vrot.lane.b32.xlu0 %v4634, 48
    %v5628 = vpop.permute.xlu0 %5627
    %5629 = vrot.lane.b32.xlu0 %v4635, 48
    %v5630 = vpop.permute.xlu0 %5629
    %5631 = vrot.lane.b32.xlu0 %v4636, 48
    %v5632 = vpop.permute.xlu0 %5631
    %5633 = vrot.lane.b32.xlu0 %v4637, 48
    %v5634 = vpop.permute.xlu0 %5633
    %5635 = vrot.lane.b32.xlu0 %v4638, 48
    %v5636 = vpop.permute.xlu0 %5635
    %5637 = vrot.lane.b32.xlu0 %v4639, 48
    %v5638 = vpop.permute.xlu0 %5637
    %5639 = vrot.lane.b32.xlu0 %v4640, 48
    %v5640 = vpop.permute.xlu0 %5639
    %5641 = vrot.lane.b32.xlu0 %v4641, 48
    %v5642 = vpop.permute.xlu0 %5641
    %5643 = vrot.lane.b32.xlu0 %v4642, 48
    %v5644 = vpop.permute.xlu0 %5643
    %5645 = vrot.lane.b32.xlu0 %v4643, 48
    %v5646 = vpop.permute.xlu0 %5645
    %5647 = vrot.lane.b32.xlu0 %v4644, 48
    %v5648 = vpop.permute.xlu0 %5647
    %5649 = vrot.lane.b32.xlu0 %v4645, 48
    %v5650 = vpop.permute.xlu0 %5649
    %5651 = vrot.lane.b32.xlu0 %v4646, 48
    %v5652 = vpop.permute.xlu0 %5651
    %5653 = vrot.lane.b32.xlu0 %v4647, 48
    %v5654 = vpop.permute.xlu0 %5653
    %5655 = vrot.lane.b32.xlu0 %v4648, 48
    %v5656 = vpop.permute.xlu0 %5655
    %5657 = vrot.lane.b32.xlu0 %v4649, 48
    %v5658 = vpop.permute.xlu0 %5657
    %5659 = vrot.lane.b32.xlu0 %v4650, 48
    %v5660 = vpop.permute.xlu0 %5659
    %5661 = vrot.lane.b32.xlu0 %v4651, 48
    %v5662 = vpop.permute.xlu0 %5661
    %5663 = vrot.lane.b32.xlu0 %v4652, 48
    %v5664 = vpop.permute.xlu0 %5663
    %5665 = vrot.lane.b32.xlu0 %v4653, 48
    %v5666 = vpop.permute.xlu0 %5665
    %5667 = vrot.lane.b32.xlu0 %v4654, 48
    %v5668 = vpop.permute.xlu0 %5667
    %5669 = vrot.lane.b32.xlu0 %v4655, 48
    %v5670 = vpop.permute.xlu0 %5669
    %5671 = vrot.lane.b32.xlu0 %v4656, 48
    %v5672 = vpop.permute.xlu0 %5671
    %5673 = vrot.lane.b32.xlu0 %v4657, 48
    %v5674 = vpop.permute.xlu0 %5673
    %5675 = vrot.lane.b32.xlu0 %v4658, 48
    %v5676 = vpop.permute.xlu0 %5675
    %5677 = vrot.lane.b32.xlu0 %v4659, 48
    %v5678 = vpop.permute.xlu0 %5677
    %5679 = vrot.lane.b32.xlu0 %v4660, 48
    %v5680 = vpop.permute.xlu0 %5679
    %5681 = vrot.lane.b32.xlu0 %v4661, 48
    %v5682 = vpop.permute.xlu0 %5681
    %5683 = vrot.lane.b32.xlu0 %v4662, 48
    %v5684 = vpop.permute.xlu0 %5683
    %5685 = vrot.lane.b32.xlu0 %v4663, 48
    %v5686 = vpop.permute.xlu0 %5685
    %5687 = vrot.lane.b32.xlu0 %v4664, 48
    %v5688 = vpop.permute.xlu0 %5687
    %5817 = vrot.lane.b32.xlu0 %v4665, 64
    %v5818 = vpop.permute.xlu0 %5817
    %5819 = vrot.lane.b32.xlu0 %v4666, 64
    %v5820 = vpop.permute.xlu0 %5819
    %5821 = vrot.lane.b32.xlu0 %v4667, 64
    %v5822 = vpop.permute.xlu0 %5821
    %5823 = vrot.lane.b32.xlu0 %v4668, 64
    %v5824 = vpop.permute.xlu0 %5823
    %5825 = vrot.lane.b32.xlu0 %v4669, 64
    %v5826 = vpop.permute.xlu0 %5825
    %5827 = vrot.lane.b32.xlu0 %v4670, 64
    %v5828 = vpop.permute.xlu0 %5827
    %5829 = vrot.lane.b32.xlu0 %v4671, 64
    %v5830 = vpop.permute.xlu0 %5829
    %5831 = vrot.lane.b32.xlu0 %v4672, 64
    %v5832 = vpop.permute.xlu0 %5831
    %5833 = vrot.lane.b32.xlu0 %v4673, 64
    %v5834 = vpop.permute.xlu0 %5833
    %5835 = vrot.lane.b32.xlu0 %v4674, 64
    %v5836 = vpop.permute.xlu0 %5835
    %5837 = vrot.lane.b32.xlu0 %v4675, 64
    %v5838 = vpop.permute.xlu0 %5837
    %5839 = vrot.lane.b32.xlu0 %v4676, 64
    %v5840 = vpop.permute.xlu0 %5839
    %5841 = vrot.lane.b32.xlu0 %v4677, 64
    %v5842 = vpop.permute.xlu0 %5841
    %5843 = vrot.lane.b32.xlu0 %v4678, 64
    %v5844 = vpop.permute.xlu0 %5843
    %5845 = vrot.lane.b32.xlu0 %v4679, 64
    %v5846 = vpop.permute.xlu0 %5845
    %5847 = vrot.lane.b32.xlu0 %v4680, 64
    %v5848 = vpop.permute.xlu0 %5847
    %5849 = vrot.lane.b32.xlu0 %v4681, 64
    %v5850 = vpop.permute.xlu0 %5849
    %5851 = vrot.lane.b32.xlu0 %v4682, 64
    %v5852 = vpop.permute.xlu0 %5851
    %5853 = vrot.lane.b32.xlu0 %v4683, 64
    %v5854 = vpop.permute.xlu0 %5853
    %5855 = vrot.lane.b32.xlu0 %v4684, 64
    %v5856 = vpop.permute.xlu0 %5855
    %5857 = vrot.lane.b32.xlu0 %v4685, 64
    %v5858 = vpop.permute.xlu0 %5857
    %5859 = vrot.lane.b32.xlu0 %v4686, 64
    %v5860 = vpop.permute.xlu0 %5859
    %5861 = vrot.lane.b32.xlu0 %v4687, 64
    %v5862 = vpop.permute.xlu0 %5861
    %5863 = vrot.lane.b32.xlu0 %v4688, 64
    %v5864 = vpop.permute.xlu0 %5863
    %5865 = vrot.lane.b32.xlu0 %v4689, 64
    %v5866 = vpop.permute.xlu0 %5865
    %5867 = vrot.lane.b32.xlu0 %v4690, 64
    %v5868 = vpop.permute.xlu0 %5867
    %5869 = vrot.lane.b32.xlu0 %v4691, 64
    %v5870 = vpop.permute.xlu0 %5869
    %5871 = vrot.lane.b32.xlu0 %v4692, 64
    %v5872 = vpop.permute.xlu0 %5871
    %5873 = vrot.lane.b32.xlu0 %v4693, 64
    %v5874 = vpop.permute.xlu0 %5873
    %5875 = vrot.lane.b32.xlu0 %v4694, 64
    %v5876 = vpop.permute.xlu0 %5875
    %5877 = vrot.lane.b32.xlu0 %v4695, 64
    %v5878 = vpop.permute.xlu0 %5877
    %5879 = vrot.lane.b32.xlu0 %v4696, 64
    %v5880 = vpop.permute.xlu0 %5879
    %5881 = vrot.lane.b32.xlu0 %v4697, 64
    %v5882 = vpop.permute.xlu0 %5881
    %5883 = vrot.lane.b32.xlu0 %v4698, 64
    %v5884 = vpop.permute.xlu0 %5883
    %5885 = vrot.lane.b32.xlu0 %v4699, 64
    %v5886 = vpop.permute.xlu0 %5885
    %5887 = vrot.lane.b32.xlu0 %v4700, 64
    %v5888 = vpop.permute.xlu0 %5887
    %5889 = vrot.lane.b32.xlu0 %v4701, 64
    %v5890 = vpop.permute.xlu0 %5889
    %5891 = vrot.lane.b32.xlu0 %v4702, 64
    %v5892 = vpop.permute.xlu0 %5891
    %5893 = vrot.lane.b32.xlu0 %v4703, 64
    %v5894 = vpop.permute.xlu0 %5893
    %5895 = vrot.lane.b32.xlu0 %v4704, 64
    %v5896 = vpop.permute.xlu0 %5895
    %5897 = vrot.lane.b32.xlu0 %v4705, 64
    %v5898 = vpop.permute.xlu0 %5897
    %5899 = vrot.lane.b32.xlu0 %v4706, 64
    %v5900 = vpop.permute.xlu0 %5899
    %5901 = vrot.lane.b32.xlu0 %v4707, 64
    %v5902 = vpop.permute.xlu0 %5901
    %5903 = vrot.lane.b32.xlu0 %v4708, 64
    %v5904 = vpop.permute.xlu0 %5903
    %5905 = vrot.lane.b32.xlu0 %v4709, 64
    %v5906 = vpop.permute.xlu0 %5905
    %5907 = vrot.lane.b32.xlu0 %v4710, 64
    %v5908 = vpop.permute.xlu0 %5907
    %5909 = vrot.lane.b32.xlu0 %v4711, 64
    %v5910 = vpop.permute.xlu0 %5909
    %5911 = vrot.lane.b32.xlu0 %v4712, 64
    %v5912 = vpop.permute.xlu0 %5911
    %5913 = vrot.lane.b32.xlu0 %v4713, 64
    %v5914 = vpop.permute.xlu0 %5913
    %5915 = vrot.lane.b32.xlu0 %v4714, 64
    %v5916 = vpop.permute.xlu0 %5915
    %5917 = vrot.lane.b32.xlu0 %v4715, 64
    %v5918 = vpop.permute.xlu0 %5917
    %5919 = vrot.lane.b32.xlu0 %v4716, 64
    %v5920 = vpop.permute.xlu0 %5919
    %5921 = vrot.lane.b32.xlu0 %v4717, 64
    %v5922 = vpop.permute.xlu0 %5921
    %5923 = vrot.lane.b32.xlu0 %v4718, 64
    %v5924 = vpop.permute.xlu0 %5923
    %5925 = vrot.lane.b32.xlu0 %v4719, 64
    %v5926 = vpop.permute.xlu0 %5925
    %5927 = vrot.lane.b32.xlu0 %v4720, 64
    %v5928 = vpop.permute.xlu0 %5927
    %5929 = vrot.lane.b32.xlu0 %v4721, 64
    %v5930 = vpop.permute.xlu0 %5929
    %5931 = vrot.lane.b32.xlu0 %v4722, 64
    %v5932 = vpop.permute.xlu0 %5931
    %5933 = vrot.lane.b32.xlu0 %v4723, 64
    %v5934 = vpop.permute.xlu0 %5933
    %5935 = vrot.lane.b32.xlu0 %v4724, 64
    %v5936 = vpop.permute.xlu0 %5935
    %5937 = vrot.lane.b32.xlu0 %v4725, 64
    %v5938 = vpop.permute.xlu0 %5937
    %5939 = vrot.lane.b32.xlu0 %v4726, 64
    %v5940 = vpop.permute.xlu0 %5939
    %5941 = vrot.lane.b32.xlu0 %v4727, 64
    %v5942 = vpop.permute.xlu0 %5941
    %5943 = vrot.lane.b32.xlu0 %v4728, 64
    %v5944 = vpop.permute.xlu0 %5943
    %6073 = vrot.lane.b32.xlu0 %v4729, 80
    %v6074 = vpop.permute.xlu0 %6073
    %6075 = vrot.lane.b32.xlu0 %v4730, 80
    %v6076 = vpop.permute.xlu0 %6075
    %6077 = vrot.lane.b32.xlu0 %v4731, 80
    %v6078 = vpop.permute.xlu0 %6077
    %6079 = vrot.lane.b32.xlu0 %v4732, 80
    %v6080 = vpop.permute.xlu0 %6079
    %6081 = vrot.lane.b32.xlu0 %v4733, 80
    %v6082 = vpop.permute.xlu0 %6081
    %6083 = vrot.lane.b32.xlu0 %v4734, 80
    %v6084 = vpop.permute.xlu0 %6083
    %6085 = vrot.lane.b32.xlu0 %v4735, 80
    %v6086 = vpop.permute.xlu0 %6085
    %6087 = vrot.lane.b32.xlu0 %v4736, 80
    %v6088 = vpop.permute.xlu0 %6087
    %6089 = vrot.lane.b32.xlu0 %v4737, 80
    %v6090 = vpop.permute.xlu0 %6089
    %6091 = vrot.lane.b32.xlu0 %v4738, 80
    %v6092 = vpop.permute.xlu0 %6091
    %6093 = vrot.lane.b32.xlu0 %v4739, 80
    %v6094 = vpop.permute.xlu0 %6093
    %6095 = vrot.lane.b32.xlu0 %v4740, 80
    %v6096 = vpop.permute.xlu0 %6095
    %6097 = vrot.lane.b32.xlu0 %v4741, 80
    %v6098 = vpop.permute.xlu0 %6097
    %6099 = vrot.lane.b32.xlu0 %v4742, 80
    %v6100 = vpop.permute.xlu0 %6099
    %6101 = vrot.lane.b32.xlu0 %v4743, 80
    %v6102 = vpop.permute.xlu0 %6101
    %6103 = vrot.lane.b32.xlu0 %v4744, 80
    %v6104 = vpop.permute.xlu0 %6103
    %6105 = vrot.lane.b32.xlu0 %v4745, 80
    %v6106 = vpop.permute.xlu0 %6105
    %6107 = vrot.lane.b32.xlu0 %v4746, 80
    %v6108 = vpop.permute.xlu0 %6107
    %6109 = vrot.lane.b32.xlu0 %v4747, 80
    %v6110 = vpop.permute.xlu0 %6109
    %6111 = vrot.lane.b32.xlu0 %v4748, 80
    %v6112 = vpop.permute.xlu0 %6111
    %6113 = vrot.lane.b32.xlu0 %v4749, 80
    %v6114 = vpop.permute.xlu0 %6113
    %6115 = vrot.lane.b32.xlu0 %v4750, 80
    %v6116 = vpop.permute.xlu0 %6115
    %6117 = vrot.lane.b32.xlu0 %v4751, 80
    %v6118 = vpop.permute.xlu0 %6117
    %6119 = vrot.lane.b32.xlu0 %v4752, 80
    %v6120 = vpop.permute.xlu0 %6119
    %6121 = vrot.lane.b32.xlu0 %v4753, 80
    %v6122 = vpop.permute.xlu0 %6121
    %6123 = vrot.lane.b32.xlu0 %v4754, 80
    %v6124 = vpop.permute.xlu0 %6123
    %6125 = vrot.lane.b32.xlu0 %v4755, 80
    %v6126 = vpop.permute.xlu0 %6125
    %6127 = vrot.lane.b32.xlu0 %v4756, 80
    %v6128 = vpop.permute.xlu0 %6127
    %6129 = vrot.lane.b32.xlu0 %v4757, 80
    %v6130 = vpop.permute.xlu0 %6129
    %6131 = vrot.lane.b32.xlu0 %v4758, 80
    %v6132 = vpop.permute.xlu0 %6131
    %6133 = vrot.lane.b32.xlu0 %v4759, 80
    %v6134 = vpop.permute.xlu0 %6133
    %6135 = vrot.lane.b32.xlu0 %v4760, 80
    %v6136 = vpop.permute.xlu0 %6135
    %6137 = vrot.lane.b32.xlu0 %v4761, 80
    %v6138 = vpop.permute.xlu0 %6137
    %6139 = vrot.lane.b32.xlu0 %v4762, 80
    %v6140 = vpop.permute.xlu0 %6139
    %6141 = vrot.lane.b32.xlu0 %v4763, 80
    %v6142 = vpop.permute.xlu0 %6141
    %6143 = vrot.lane.b32.xlu0 %v4764, 80
    %v6144 = vpop.permute.xlu0 %6143
    %6145 = vrot.lane.b32.xlu0 %v4765, 80
    %v6146 = vpop.permute.xlu0 %6145
    %6147 = vrot.lane.b32.xlu0 %v4766, 80
    %v6148 = vpop.permute.xlu0 %6147
    %6149 = vrot.lane.b32.xlu0 %v4767, 80
    %v6150 = vpop.permute.xlu0 %6149
    %6151 = vrot.lane.b32.xlu0 %v4768, 80
    %v6152 = vpop.permute.xlu0 %6151
    %6153 = vrot.lane.b32.xlu0 %v4769, 80
    %v6154 = vpop.permute.xlu0 %6153
    %6155 = vrot.lane.b32.xlu0 %v4770, 80
    %v6156 = vpop.permute.xlu0 %6155
    %6157 = vrot.lane.b32.xlu0 %v4771, 80
    %v6158 = vpop.permute.xlu0 %6157
    %6159 = vrot.lane.b32.xlu0 %v4772, 80
    %v6160 = vpop.permute.xlu0 %6159
    %6161 = vrot.lane.b32.xlu0 %v4773, 80
    %v6162 = vpop.permute.xlu0 %6161
    %6163 = vrot.lane.b32.xlu0 %v4774, 80
    %v6164 = vpop.permute.xlu0 %6163
    %6165 = vrot.lane.b32.xlu0 %v4775, 80
    %v6166 = vpop.permute.xlu0 %6165
    %6167 = vrot.lane.b32.xlu0 %v4776, 80
    %v6168 = vpop.permute.xlu0 %6167
    %6169 = vrot.lane.b32.xlu0 %v4777, 80
    %v6170 = vpop.permute.xlu0 %6169
    %6171 = vrot.lane.b32.xlu0 %v4778, 80
    %v6172 = vpop.permute.xlu0 %6171
    %6173 = vrot.lane.b32.xlu0 %v4779, 80
    %v6174 = vpop.permute.xlu0 %6173
    %6175 = vrot.lane.b32.xlu0 %v4780, 80
    %v6176 = vpop.permute.xlu0 %6175
    %6177 = vrot.lane.b32.xlu0 %v4781, 80
    %v6178 = vpop.permute.xlu0 %6177
    %6179 = vrot.lane.b32.xlu0 %v4782, 80
    %v6180 = vpop.permute.xlu0 %6179
    %6181 = vrot.lane.b32.xlu0 %v4783, 80
    %v6182 = vpop.permute.xlu0 %6181
    %6183 = vrot.lane.b32.xlu0 %v4784, 80
    %v6184 = vpop.permute.xlu0 %6183
    %6185 = vrot.lane.b32.xlu0 %v4785, 80
    %v6186 = vpop.permute.xlu0 %6185
    %6187 = vrot.lane.b32.xlu0 %v4786, 80
    %v6188 = vpop.permute.xlu0 %6187
    %6189 = vrot.lane.b32.xlu0 %v4787, 80
    %v6190 = vpop.permute.xlu0 %6189
    %6191 = vrot.lane.b32.xlu0 %v4788, 80
    %v6192 = vpop.permute.xlu0 %6191
    %6193 = vrot.lane.b32.xlu0 %v4789, 80
    %v6194 = vpop.permute.xlu0 %6193
    %6195 = vrot.lane.b32.xlu0 %v4790, 80
    %v6196 = vpop.permute.xlu0 %6195
    %6197 = vrot.lane.b32.xlu0 %v4791, 80
    %v6198 = vpop.permute.xlu0 %6197
    %6199 = vrot.lane.b32.xlu0 %v4792, 80
    %v6200 = vpop.permute.xlu0 %6199
    %6329 = vrot.lane.b32.xlu0 %v4793, 96
    %v6330 = vpop.permute.xlu0 %6329
    %6331 = vrot.lane.b32.xlu0 %v4794, 96
    %v6332 = vpop.permute.xlu0 %6331
    %6333 = vrot.lane.b32.xlu0 %v4795, 96
    %v6334 = vpop.permute.xlu0 %6333
    %6335 = vrot.lane.b32.xlu0 %v4796, 96
    %v6336 = vpop.permute.xlu0 %6335
    %6337 = vrot.lane.b32.xlu0 %v4797, 96
    %v6338 = vpop.permute.xlu0 %6337
    %6339 = vrot.lane.b32.xlu0 %v4798, 96
    %v6340 = vpop.permute.xlu0 %6339
    %6341 = vrot.lane.b32.xlu0 %v4799, 96
    %v6342 = vpop.permute.xlu0 %6341
    %6343 = vrot.lane.b32.xlu0 %v4800, 96
    %v6344 = vpop.permute.xlu0 %6343
    %6345 = vrot.lane.b32.xlu0 %v4801, 96
    %v6346 = vpop.permute.xlu0 %6345
    %6347 = vrot.lane.b32.xlu0 %v4802, 96
    %v6348 = vpop.permute.xlu0 %6347
    %6349 = vrot.lane.b32.xlu0 %v4803, 96
    %v6350 = vpop.permute.xlu0 %6349
    %6351 = vrot.lane.b32.xlu0 %v4804, 96
    %v6352 = vpop.permute.xlu0 %6351
    %6353 = vrot.lane.b32.xlu0 %v4805, 96
    %v6354 = vpop.permute.xlu0 %6353
    %6355 = vrot.lane.b32.xlu0 %v4806, 96
    %v6356 = vpop.permute.xlu0 %6355
    %6357 = vrot.lane.b32.xlu0 %v4807, 96
    %v6358 = vpop.permute.xlu0 %6357
    %6359 = vrot.lane.b32.xlu0 %v4808, 96
    %v6360 = vpop.permute.xlu0 %6359
    %6361 = vrot.lane.b32.xlu0 %v4809, 96
    %v6362 = vpop.permute.xlu0 %6361
    %6363 = vrot.lane.b32.xlu0 %v4810, 96
    %v6364 = vpop.permute.xlu0 %6363
    %6365 = vrot.lane.b32.xlu0 %v4811, 96
    %v6366 = vpop.permute.xlu0 %6365
    %6367 = vrot.lane.b32.xlu0 %v4812, 96
    %v6368 = vpop.permute.xlu0 %6367
    %6369 = vrot.lane.b32.xlu0 %v4813, 96
    %v6370 = vpop.permute.xlu0 %6369
    %6371 = vrot.lane.b32.xlu0 %v4814, 96
    %v6372 = vpop.permute.xlu0 %6371
    %6373 = vrot.lane.b32.xlu0 %v4815, 96
    %v6374 = vpop.permute.xlu0 %6373
    %6375 = vrot.lane.b32.xlu0 %v4816, 96
    %v6376 = vpop.permute.xlu0 %6375
    %6377 = vrot.lane.b32.xlu0 %v4817, 96
    %v6378 = vpop.permute.xlu0 %6377
    %6379 = vrot.lane.b32.xlu0 %v4818, 96
    %v6380 = vpop.permute.xlu0 %6379
    %6381 = vrot.lane.b32.xlu0 %v4819, 96
    %v6382 = vpop.permute.xlu0 %6381
    %6383 = vrot.lane.b32.xlu0 %v4820, 96
    %v6384 = vpop.permute.xlu0 %6383
    %6385 = vrot.lane.b32.xlu0 %v4821, 96
    %v6386 = vpop.permute.xlu0 %6385
    %6387 = vrot.lane.b32.xlu0 %v4822, 96
    %v6388 = vpop.permute.xlu0 %6387
    %6389 = vrot.lane.b32.xlu0 %v4823, 96
    %v6390 = vpop.permute.xlu0 %6389
    %6391 = vrot.lane.b32.xlu0 %v4824, 96
    %v6392 = vpop.permute.xlu0 %6391
    %6393 = vrot.lane.b32.xlu0 %v4825, 96
    %v6394 = vpop.permute.xlu0 %6393
    %6395 = vrot.lane.b32.xlu0 %v4826, 96
    %v6396 = vpop.permute.xlu0 %6395
    %6397 = vrot.lane.b32.xlu0 %v4827, 96
    %v6398 = vpop.permute.xlu0 %6397
    %6399 = vrot.lane.b32.xlu0 %v4828, 96
    %v6400 = vpop.permute.xlu0 %6399
    %6401 = vrot.lane.b32.xlu0 %v4829, 96
    %v6402 = vpop.permute.xlu0 %6401
    %6403 = vrot.lane.b32.xlu0 %v4830, 96
    %v6404 = vpop.permute.xlu0 %6403
    %6405 = vrot.lane.b32.xlu0 %v4831, 96
    %v6406 = vpop.permute.xlu0 %6405
    %6407 = vrot.lane.b32.xlu0 %v4832, 96
    %v6408 = vpop.permute.xlu0 %6407
    %6409 = vrot.lane.b32.xlu0 %v4833, 96
    %v6410 = vpop.permute.xlu0 %6409
    %6411 = vrot.lane.b32.xlu0 %v4834, 96
    %v6412 = vpop.permute.xlu0 %6411
    %6413 = vrot.lane.b32.xlu0 %v4835, 96
    %v6414 = vpop.permute.xlu0 %6413
    %6415 = vrot.lane.b32.xlu0 %v4836, 96
    %v6416 = vpop.permute.xlu0 %6415
    %6417 = vrot.lane.b32.xlu0 %v4837, 96
    %v6418 = vpop.permute.xlu0 %6417
    %6419 = vrot.lane.b32.xlu0 %v4838, 96
    %v6420 = vpop.permute.xlu0 %6419
    %6421 = vrot.lane.b32.xlu0 %v4839, 96
    %v6422 = vpop.permute.xlu0 %6421
    %6423 = vrot.lane.b32.xlu0 %v4840, 96
    %v6424 = vpop.permute.xlu0 %6423
    %6425 = vrot.lane.b32.xlu0 %v4841, 96
    %v6426 = vpop.permute.xlu0 %6425
    %6427 = vrot.lane.b32.xlu0 %v4842, 96
    %v6428 = vpop.permute.xlu0 %6427
    %6429 = vrot.lane.b32.xlu0 %v4843, 96
    %v6430 = vpop.permute.xlu0 %6429
    %6431 = vrot.lane.b32.xlu0 %v4844, 96
    %v6432 = vpop.permute.xlu0 %6431
    %6433 = vrot.lane.b32.xlu0 %v4845, 96
    %v6434 = vpop.permute.xlu0 %6433
    %6435 = vrot.lane.b32.xlu0 %v4846, 96
    %v6436 = vpop.permute.xlu0 %6435
    %6437 = vrot.lane.b32.xlu0 %v4847, 96
    %v6438 = vpop.permute.xlu0 %6437
    %6439 = vrot.lane.b32.xlu0 %v4848, 96
    %v6440 = vpop.permute.xlu0 %6439
    %6441 = vrot.lane.b32.xlu0 %v4849, 96
    %v6442 = vpop.permute.xlu0 %6441
    %6443 = vrot.lane.b32.xlu0 %v4850, 96
    %v6444 = vpop.permute.xlu0 %6443
    %6445 = vrot.lane.b32.xlu0 %v4851, 96
    %v6446 = vpop.permute.xlu0 %6445
    %6447 = vrot.lane.b32.xlu0 %v4852, 96
    %v6448 = vpop.permute.xlu0 %6447
    %6449 = vrot.lane.b32.xlu0 %v4853, 96
    %v6450 = vpop.permute.xlu0 %6449
    %6451 = vrot.lane.b32.xlu0 %v4854, 96
    %v6452 = vpop.permute.xlu0 %6451
    %6453 = vrot.lane.b32.xlu0 %v4855, 96
    %v6454 = vpop.permute.xlu0 %6453
    %6455 = vrot.lane.b32.xlu0 %v4856, 96
    %v6456 = vpop.permute.xlu0 %6455
    %6585 = vrot.lane.b32.xlu0 %v4857, 112
    %v6586 = vpop.permute.xlu0 %6585
    %6587 = vrot.lane.b32.xlu0 %v4858, 112
    %v6588 = vpop.permute.xlu0 %6587
    %6589 = vrot.lane.b32.xlu0 %v4859, 112
    %v6590 = vpop.permute.xlu0 %6589
    %6591 = vrot.lane.b32.xlu0 %v4860, 112
    %v6592 = vpop.permute.xlu0 %6591
    %6593 = vrot.lane.b32.xlu0 %v4861, 112
    %v6594 = vpop.permute.xlu0 %6593
    %6595 = vrot.lane.b32.xlu0 %v4862, 112
    %v6596 = vpop.permute.xlu0 %6595
    %6597 = vrot.lane.b32.xlu0 %v4863, 112
    %v6598 = vpop.permute.xlu0 %6597
    %6599 = vrot.lane.b32.xlu0 %v4864, 112
    %v6600 = vpop.permute.xlu0 %6599
    %6601 = vrot.lane.b32.xlu0 %v4865, 112
    %v6602 = vpop.permute.xlu0 %6601
    %6603 = vrot.lane.b32.xlu0 %v4866, 112
    %v6604 = vpop.permute.xlu0 %6603
    %6605 = vrot.lane.b32.xlu0 %v4867, 112
    %v6606 = vpop.permute.xlu0 %6605
    %6607 = vrot.lane.b32.xlu0 %v4868, 112
    %v6608 = vpop.permute.xlu0 %6607
    %6609 = vrot.lane.b32.xlu0 %v4869, 112
    %v6610 = vpop.permute.xlu0 %6609
    %6611 = vrot.lane.b32.xlu0 %v4870, 112
    %v6612 = vpop.permute.xlu0 %6611
    %6613 = vrot.lane.b32.xlu0 %v4871, 112
    %v6614 = vpop.permute.xlu0 %6613
    %6615 = vrot.lane.b32.xlu0 %v4872, 112
    %v6616 = vpop.permute.xlu0 %6615
    %6617 = vrot.lane.b32.xlu0 %v4873, 112
    %v6618 = vpop.permute.xlu0 %6617
    %6619 = vrot.lane.b32.xlu0 %v4874, 112
    %v6620 = vpop.permute.xlu0 %6619
    %6621 = vrot.lane.b32.xlu0 %v4875, 112
    %v6622 = vpop.permute.xlu0 %6621
    %6623 = vrot.lane.b32.xlu0 %v4876, 112
    %v6624 = vpop.permute.xlu0 %6623
    %6625 = vrot.lane.b32.xlu0 %v4877, 112
    %v6626 = vpop.permute.xlu0 %6625
    %6627 = vrot.lane.b32.xlu0 %v4878, 112
    %v6628 = vpop.permute.xlu0 %6627
    %6629 = vrot.lane.b32.xlu0 %v4879, 112
    %v6630 = vpop.permute.xlu0 %6629
    %6631 = vrot.lane.b32.xlu0 %v4880, 112
    %v6632 = vpop.permute.xlu0 %6631
    %6633 = vrot.lane.b32.xlu0 %v4881, 112
    %v6634 = vpop.permute.xlu0 %6633
    %6635 = vrot.lane.b32.xlu0 %v4882, 112
    %v6636 = vpop.permute.xlu0 %6635
    %6637 = vrot.lane.b32.xlu0 %v4883, 112
    %v6638 = vpop.permute.xlu0 %6637
    %6639 = vrot.lane.b32.xlu0 %v4884, 112
    %v6640 = vpop.permute.xlu0 %6639
    %6641 = vrot.lane.b32.xlu0 %v4885, 112
    %v6642 = vpop.permute.xlu0 %6641
    %6643 = vrot.lane.b32.xlu0 %v4886, 112
    %v6644 = vpop.permute.xlu0 %6643
    %6645 = vrot.lane.b32.xlu0 %v4887, 112
    %v6646 = vpop.permute.xlu0 %6645
    %6647 = vrot.lane.b32.xlu0 %v4888, 112
    %v6648 = vpop.permute.xlu0 %6647
    %6649 = vrot.lane.b32.xlu0 %v4889, 112
    %v6650 = vpop.permute.xlu0 %6649
    %6651 = vrot.lane.b32.xlu0 %v4890, 112
    %v6652 = vpop.permute.xlu0 %6651
    %6653 = vrot.lane.b32.xlu0 %v4891, 112
    %v6654 = vpop.permute.xlu0 %6653
    %6655 = vrot.lane.b32.xlu0 %v4892, 112
    %v6656 = vpop.permute.xlu0 %6655
    %6657 = vrot.lane.b32.xlu0 %v4893, 112
    %v6658 = vpop.permute.xlu0 %6657
    %6659 = vrot.lane.b32.xlu0 %v4894, 112
    %v6660 = vpop.permute.xlu0 %6659
    %6661 = vrot.lane.b32.xlu0 %v4895, 112
    %v6662 = vpop.permute.xlu0 %6661
    %6663 = vrot.lane.b32.xlu0 %v4896, 112
    %v6664 = vpop.permute.xlu0 %6663
    %6665 = vrot.lane.b32.xlu0 %v4897, 112
    %v6666 = vpop.permute.xlu0 %6665
    %6667 = vrot.lane.b32.xlu0 %v4898, 112
    %v6668 = vpop.permute.xlu0 %6667
    %6669 = vrot.lane.b32.xlu0 %v4899, 112
    %v6670 = vpop.permute.xlu0 %6669
    %6671 = vrot.lane.b32.xlu0 %v4900, 112
    %v6672 = vpop.permute.xlu0 %6671
    %6673 = vrot.lane.b32.xlu0 %v4901, 112
    %v6674 = vpop.permute.xlu0 %6673
    %6675 = vrot.lane.b32.xlu0 %v4902, 112
    %v6676 = vpop.permute.xlu0 %6675
    %6677 = vrot.lane.b32.xlu0 %v4903, 112
    %v6678 = vpop.permute.xlu0 %6677
    %6679 = vrot.lane.b32.xlu0 %v4904, 112
    %v6680 = vpop.permute.xlu0 %6679
    %6681 = vrot.lane.b32.xlu0 %v4905, 112
    %v6682 = vpop.permute.xlu0 %6681
    %6683 = vrot.lane.b32.xlu0 %v4906, 112
    %v6684 = vpop.permute.xlu0 %6683
    %6685 = vrot.lane.b32.xlu0 %v4907, 112
    %v6686 = vpop.permute.xlu0 %6685
    %6687 = vrot.lane.b32.xlu0 %v4908, 112
    %v6688 = vpop.permute.xlu0 %6687
    %6689 = vrot.lane.b32.xlu0 %v4909, 112
    %v6690 = vpop.permute.xlu0 %6689
    %6691 = vrot.lane.b32.xlu0 %v4910, 112
    %v6692 = vpop.permute.xlu0 %6691
    %6693 = vrot.lane.b32.xlu0 %v4911, 112
    %v6694 = vpop.permute.xlu0 %6693
    %6695 = vrot.lane.b32.xlu0 %v4912, 112
    %v6696 = vpop.permute.xlu0 %6695
    %6697 = vrot.lane.b32.xlu0 %v4913, 112
    %v6698 = vpop.permute.xlu0 %6697
    %6699 = vrot.lane.b32.xlu0 %v4914, 112
    %v6700 = vpop.permute.xlu0 %6699
    %6701 = vrot.lane.b32.xlu0 %v4915, 112
    %v6702 = vpop.permute.xlu0 %6701
    %6703 = vrot.lane.b32.xlu0 %v4916, 112
    %v6704 = vpop.permute.xlu0 %6703
    %6705 = vrot.lane.b32.xlu0 %v4917, 112
    %v6706 = vpop.permute.xlu0 %6705
    %6707 = vrot.lane.b32.xlu0 %v4918, 112
    %v6708 = vpop.permute.xlu0 %6707
    %6709 = vrot.lane.b32.xlu0 %v4919, 112
    %v6710 = vpop.permute.xlu0 %6709
    %6711 = vrot.lane.b32.xlu0 %v4920, 112
    %v6712 = vpop.permute.xlu0 %6711
    %v6777 = vsel %vm40, %v4409, %v5050
    %v6778 = vsel %vm40, %v4410, %v5052
    %v6779 = vsel %vm40, %v4411, %v5054
    %v6780 = vsel %vm40, %v4412, %v5056
    %v6781 = vsel %vm40, %v4413, %v5058
    %v6782 = vsel %vm40, %v4414, %v5060
    %v6783 = vsel %vm40, %v4415, %v5062
    %v6784 = vsel %vm40, %v4416, %v5064
    %v6785 = vsel %vm40, %v4417, %v5066
    %v6786 = vsel %vm40, %v4418, %v5068
    %v6787 = vsel %vm40, %v4419, %v5070
    %v6788 = vsel %vm40, %v4420, %v5072
    %v6789 = vsel %vm40, %v4421, %v5074
    %v6790 = vsel %vm40, %v4422, %v5076
    %v6791 = vsel %vm40, %v4423, %v5078
    %v6792 = vsel %vm40, %v4424, %v5080
    %v6793 = vsel %vm40, %v4425, %v5082
    %v6794 = vsel %vm40, %v4426, %v5084
    %v6795 = vsel %vm40, %v4427, %v5086
    %v6796 = vsel %vm40, %v4428, %v5088
    %v6797 = vsel %vm40, %v4429, %v5090
    %v6798 = vsel %vm40, %v4430, %v5092
    %v6799 = vsel %vm40, %v4431, %v5094
    %v6800 = vsel %vm40, %v4432, %v5096
    %v6801 = vsel %vm40, %v4433, %v5098
    %v6802 = vsel %vm40, %v4434, %v5100
    %v6803 = vsel %vm40, %v4435, %v5102
    %v6804 = vsel %vm40, %v4436, %v5104
    %v6805 = vsel %vm40, %v4437, %v5106
    %v6806 = vsel %vm40, %v4438, %v5108
    %v6807 = vsel %vm40, %v4439, %v5110
    %v6808 = vsel %vm40, %v4440, %v5112
    %v6809 = vsel %vm40, %v4441, %v5114
    %v6810 = vsel %vm40, %v4442, %v5116
    %v6811 = vsel %vm40, %v4443, %v5118
    %v6812 = vsel %vm40, %v4444, %v5120
    %v6813 = vsel %vm40, %v4445, %v5122
    %v6814 = vsel %vm40, %v4446, %v5124
    %v6815 = vsel %vm40, %v4447, %v5126
    %v6816 = vsel %vm40, %v4448, %v5128
    %v6817 = vsel %vm40, %v4449, %v5130
    %v6818 = vsel %vm40, %v4450, %v5132
    %v6819 = vsel %vm40, %v4451, %v5134
    %v6820 = vsel %vm40, %v4452, %v5136
    %v6821 = vsel %vm40, %v4453, %v5138
    %v6822 = vsel %vm40, %v4454, %v5140
    %v6823 = vsel %vm40, %v4455, %v5142
    %v6824 = vsel %vm40, %v4456, %v5144
    %v6825 = vsel %vm40, %v4457, %v5146
    %v6826 = vsel %vm40, %v4458, %v5148
    %v6827 = vsel %vm40, %v4459, %v5150
    %v6828 = vsel %vm40, %v4460, %v5152
    %v6829 = vsel %vm40, %v4461, %v5154
    %v6830 = vsel %vm40, %v4462, %v5156
    %v6831 = vsel %vm40, %v4463, %v5158
    %v6832 = vsel %vm40, %v4464, %v5160
    %v6833 = vsel %vm40, %v4465, %v5162
    %v6834 = vsel %vm40, %v4466, %v5164
    %v6835 = vsel %vm40, %v4467, %v5166
    %v6836 = vsel %vm40, %v4468, %v5168
    %v6837 = vsel %vm40, %v4469, %v5170
    %v6838 = vsel %vm40, %v4470, %v5172
    %v6839 = vsel %vm40, %v4471, %v5174
    %v6840 = vsel %vm40, %v4472, %v5176
    %v6841 = vsel %vm2690, %v6777, %v5306
    %v6842 = vsel %vm2690, %v6778, %v5308
    %v6843 = vsel %vm2690, %v6779, %v5310
    %v6844 = vsel %vm2690, %v6780, %v5312
    %v6845 = vsel %vm2690, %v6781, %v5314
    %v6846 = vsel %vm2690, %v6782, %v5316
    %v6847 = vsel %vm2690, %v6783, %v5318
    %v6848 = vsel %vm2690, %v6784, %v5320
    %v6849 = vsel %vm2690, %v6785, %v5322
    %v6850 = vsel %vm2690, %v6786, %v5324
    %v6851 = vsel %vm2690, %v6787, %v5326
    %v6852 = vsel %vm2690, %v6788, %v5328
    %v6853 = vsel %vm2690, %v6789, %v5330
    %v6854 = vsel %vm2690, %v6790, %v5332
    %v6855 = vsel %vm2690, %v6791, %v5334
    %v6856 = vsel %vm2690, %v6792, %v5336
    %v6857 = vsel %vm2690, %v6793, %v5338
    %v6858 = vsel %vm2690, %v6794, %v5340
    %v6859 = vsel %vm2690, %v6795, %v5342
    %v6860 = vsel %vm2690, %v6796, %v5344
    %v6861 = vsel %vm2690, %v6797, %v5346
    %v6862 = vsel %vm2690, %v6798, %v5348
    %v6863 = vsel %vm2690, %v6799, %v5350
    %v6864 = vsel %vm2690, %v6800, %v5352
    %v6865 = vsel %vm2690, %v6801, %v5354
    %v6866 = vsel %vm2690, %v6802, %v5356
    %v6867 = vsel %vm2690, %v6803, %v5358
    %v6868 = vsel %vm2690, %v6804, %v5360
    %v6869 = vsel %vm2690, %v6805, %v5362
    %v6870 = vsel %vm2690, %v6806, %v5364
    %v6871 = vsel %vm2690, %v6807, %v5366
    %v6872 = vsel %vm2690, %v6808, %v5368
    %v6873 = vsel %vm2690, %v6809, %v5370
    %v6874 = vsel %vm2690, %v6810, %v5372
    %v6875 = vsel %vm2690, %v6811, %v5374
    %v6876 = vsel %vm2690, %v6812, %v5376
    %v6877 = vsel %vm2690, %v6813, %v5378
    %v6878 = vsel %vm2690, %v6814, %v5380
    %v6879 = vsel %vm2690, %v6815, %v5382
    %v6880 = vsel %vm2690, %v6816, %v5384
    %v6881 = vsel %vm2690, %v6817, %v5386
    %v6882 = vsel %vm2690, %v6818, %v5388
    %v6883 = vsel %vm2690, %v6819, %v5390
    %v6884 = vsel %vm2690, %v6820, %v5392
    %v6885 = vsel %vm2690, %v6821, %v5394
    %v6886 = vsel %vm2690, %v6822, %v5396
    %v6887 = vsel %vm2690, %v6823, %v5398
    %v6888 = vsel %vm2690, %v6824, %v5400
    %v6889 = vsel %vm2690, %v6825, %v5402
    %v6890 = vsel %vm2690, %v6826, %v5404
    %v6891 = vsel %vm2690, %v6827, %v5406
    %v6892 = vsel %vm2690, %v6828, %v5408
    %v6893 = vsel %vm2690, %v6829, %v5410
    %v6894 = vsel %vm2690, %v6830, %v5412
    %v6895 = vsel %vm2690, %v6831, %v5414
    %v6896 = vsel %vm2690, %v6832, %v5416
    %v6897 = vsel %vm2690, %v6833, %v5418
    %v6898 = vsel %vm2690, %v6834, %v5420
    %v6899 = vsel %vm2690, %v6835, %v5422
    %v6900 = vsel %vm2690, %v6836, %v5424
    %v6901 = vsel %vm2690, %v6837, %v5426
    %v6902 = vsel %vm2690, %v6838, %v5428
    %v6903 = vsel %vm2690, %v6839, %v5430
    %v6904 = vsel %vm2690, %v6840, %v5432
    %v6905 = vsel %vm2755, %v6841, %v5562
    %v6906 = vsel %vm2755, %v6842, %v5564
    %v6907 = vsel %vm2755, %v6843, %v5566
    %v6908 = vsel %vm2755, %v6844, %v5568
    %v6909 = vsel %vm2755, %v6845, %v5570
    %v6910 = vsel %vm2755, %v6846, %v5572
    %v6911 = vsel %vm2755, %v6847, %v5574
    %v6912 = vsel %vm2755, %v6848, %v5576
    %v6913 = vsel %vm2755, %v6849, %v5578
    %v6914 = vsel %vm2755, %v6850, %v5580
    %v6915 = vsel %vm2755, %v6851, %v5582
    %v6916 = vsel %vm2755, %v6852, %v5584
    %v6917 = vsel %vm2755, %v6853, %v5586
    %v6918 = vsel %vm2755, %v6854, %v5588
    %v6919 = vsel %vm2755, %v6855, %v5590
    %v6920 = vsel %vm2755, %v6856, %v5592
    %v6921 = vsel %vm2755, %v6857, %v5594
    %v6922 = vsel %vm2755, %v6858, %v5596
    %v6923 = vsel %vm2755, %v6859, %v5598
    %v6924 = vsel %vm2755, %v6860, %v5600
    %v6925 = vsel %vm2755, %v6861, %v5602
    %v6926 = vsel %vm2755, %v6862, %v5604
    %v6927 = vsel %vm2755, %v6863, %v5606
    %v6928 = vsel %vm2755, %v6864, %v5608
    %v6929 = vsel %vm2755, %v6865, %v5610
    %v6930 = vsel %vm2755, %v6866, %v5612
    %v6931 = vsel %vm2755, %v6867, %v5614
    %v6932 = vsel %vm2755, %v6868, %v5616
    %v6933 = vsel %vm2755, %v6869, %v5618
    %v6934 = vsel %vm2755, %v6870, %v5620
    %v6935 = vsel %vm2755, %v6871, %v5622
    %v6936 = vsel %vm2755, %v6872, %v5624
    %v6937 = vsel %vm2755, %v6873, %v5626
    %v6938 = vsel %vm2755, %v6874, %v5628
    %v6939 = vsel %vm2755, %v6875, %v5630
    %v6940 = vsel %vm2755, %v6876, %v5632
    %v6941 = vsel %vm2755, %v6877, %v5634
    %v6942 = vsel %vm2755, %v6878, %v5636
    %v6943 = vsel %vm2755, %v6879, %v5638
    %v6944 = vsel %vm2755, %v6880, %v5640
    %v6945 = vsel %vm2755, %v6881, %v5642
    %v6946 = vsel %vm2755, %v6882, %v5644
    %v6947 = vsel %vm2755, %v6883, %v5646
    %v6948 = vsel %vm2755, %v6884, %v5648
    %v6949 = vsel %vm2755, %v6885, %v5650
    %v6950 = vsel %vm2755, %v6886, %v5652
    %v6951 = vsel %vm2755, %v6887, %v5654
    %v6952 = vsel %vm2755, %v6888, %v5656
    %v6953 = vsel %vm2755, %v6889, %v5658
    %v6954 = vsel %vm2755, %v6890, %v5660
    %v6955 = vsel %vm2755, %v6891, %v5662
    %v6956 = vsel %vm2755, %v6892, %v5664
    %v6957 = vsel %vm2755, %v6893, %v5666
    %v6958 = vsel %vm2755, %v6894, %v5668
    %v6959 = vsel %vm2755, %v6895, %v5670
    %v6960 = vsel %vm2755, %v6896, %v5672
    %v6961 = vsel %vm2755, %v6897, %v5674
    %v6962 = vsel %vm2755, %v6898, %v5676
    %v6963 = vsel %vm2755, %v6899, %v5678
    %v6964 = vsel %vm2755, %v6900, %v5680
    %v6965 = vsel %vm2755, %v6901, %v5682
    %v6966 = vsel %vm2755, %v6902, %v5684
    %v6967 = vsel %vm2755, %v6903, %v5686
    %v6968 = vsel %vm2755, %v6904, %v5688
    %v6969 = vsel %vm2820, %v6905, %v5818
    %v6970 = vsel %vm2820, %v6906, %v5820
    %v6971 = vsel %vm2820, %v6907, %v5822
    %v6972 = vsel %vm2820, %v6908, %v5824
    %v6973 = vsel %vm2820, %v6909, %v5826
    %v6974 = vsel %vm2820, %v6910, %v5828
    %v6975 = vsel %vm2820, %v6911, %v5830
    %v6976 = vsel %vm2820, %v6912, %v5832
    %v6977 = vsel %vm2820, %v6913, %v5834
    %v6978 = vsel %vm2820, %v6914, %v5836
    %v6979 = vsel %vm2820, %v6915, %v5838
    %v6980 = vsel %vm2820, %v6916, %v5840
    %v6981 = vsel %vm2820, %v6917, %v5842
    %v6982 = vsel %vm2820, %v6918, %v5844
    %v6983 = vsel %vm2820, %v6919, %v5846
    %v6984 = vsel %vm2820, %v6920, %v5848
    %v6985 = vsel %vm2820, %v6921, %v5850
    %v6986 = vsel %vm2820, %v6922, %v5852
    %v6987 = vsel %vm2820, %v6923, %v5854
    %v6988 = vsel %vm2820, %v6924, %v5856
    %v6989 = vsel %vm2820, %v6925, %v5858
    %v6990 = vsel %vm2820, %v6926, %v5860
    %v6991 = vsel %vm2820, %v6927, %v5862
    %v6992 = vsel %vm2820, %v6928, %v5864
    %v6993 = vsel %vm2820, %v6929, %v5866
    %v6994 = vsel %vm2820, %v6930, %v5868
    %v6995 = vsel %vm2820, %v6931, %v5870
    %v6996 = vsel %vm2820, %v6932, %v5872
    %v6997 = vsel %vm2820, %v6933, %v5874
    %v6998 = vsel %vm2820, %v6934, %v5876
    %v6999 = vsel %vm2820, %v6935, %v5878
    %v7000 = vsel %vm2820, %v6936, %v5880
    %v7001 = vsel %vm2820, %v6937, %v5882
    %v7002 = vsel %vm2820, %v6938, %v5884
    %v7003 = vsel %vm2820, %v6939, %v5886
    %v7004 = vsel %vm2820, %v6940, %v5888
    %v7005 = vsel %vm2820, %v6941, %v5890
    %v7006 = vsel %vm2820, %v6942, %v5892
    %v7007 = vsel %vm2820, %v6943, %v5894
    %v7008 = vsel %vm2820, %v6944, %v5896
    %v7009 = vsel %vm2820, %v6945, %v5898
    %v7010 = vsel %vm2820, %v6946, %v5900
    %v7011 = vsel %vm2820, %v6947, %v5902
    %v7012 = vsel %vm2820, %v6948, %v5904
    %v7013 = vsel %vm2820, %v6949, %v5906
    %v7014 = vsel %vm2820, %v6950, %v5908
    %v7015 = vsel %vm2820, %v6951, %v5910
    %v7016 = vsel %vm2820, %v6952, %v5912
    %v7017 = vsel %vm2820, %v6953, %v5914
    %v7018 = vsel %vm2820, %v6954, %v5916
    %v7019 = vsel %vm2820, %v6955, %v5918
    %v7020 = vsel %vm2820, %v6956, %v5920
    %v7021 = vsel %vm2820, %v6957, %v5922
    %v7022 = vsel %vm2820, %v6958, %v5924
    %v7023 = vsel %vm2820, %v6959, %v5926
    %v7024 = vsel %vm2820, %v6960, %v5928
    %v7025 = vsel %vm2820, %v6961, %v5930
    %v7026 = vsel %vm2820, %v6962, %v5932
    %v7027 = vsel %vm2820, %v6963, %v5934
    %v7028 = vsel %vm2820, %v6964, %v5936
    %v7029 = vsel %vm2820, %v6965, %v5938
    %v7030 = vsel %vm2820, %v6966, %v5940
    %v7031 = vsel %vm2820, %v6967, %v5942
    %v7032 = vsel %vm2820, %v6968, %v5944
    %v7033 = vsel %vm2885, %v6969, %v6074
    %v7034 = vsel %vm2885, %v6970, %v6076
    %v7035 = vsel %vm2885, %v6971, %v6078
    %v7036 = vsel %vm2885, %v6972, %v6080
    %v7037 = vsel %vm2885, %v6973, %v6082
    %v7038 = vsel %vm2885, %v6974, %v6084
    %v7039 = vsel %vm2885, %v6975, %v6086
    %v7040 = vsel %vm2885, %v6976, %v6088
    %v7041 = vsel %vm2885, %v6977, %v6090
    %v7042 = vsel %vm2885, %v6978, %v6092
    %v7043 = vsel %vm2885, %v6979, %v6094
    %v7044 = vsel %vm2885, %v6980, %v6096
    %v7045 = vsel %vm2885, %v6981, %v6098
    %v7046 = vsel %vm2885, %v6982, %v6100
    %v7047 = vsel %vm2885, %v6983, %v6102
    %v7048 = vsel %vm2885, %v6984, %v6104
    %v7049 = vsel %vm2885, %v6985, %v6106
    %v7050 = vsel %vm2885, %v6986, %v6108
    %v7051 = vsel %vm2885, %v6987, %v6110
    %v7052 = vsel %vm2885, %v6988, %v6112
    %v7053 = vsel %vm2885, %v6989, %v6114
    %v7054 = vsel %vm2885, %v6990, %v6116
    %v7055 = vsel %vm2885, %v6991, %v6118
    %v7056 = vsel %vm2885, %v6992, %v6120
    %v7057 = vsel %vm2885, %v6993, %v6122
    %v7058 = vsel %vm2885, %v6994, %v6124
    %v7059 = vsel %vm2885, %v6995, %v6126
    %v7060 = vsel %vm2885, %v6996, %v6128
    %v7061 = vsel %vm2885, %v6997, %v6130
    %v7062 = vsel %vm2885, %v6998, %v6132
    %v7063 = vsel %vm2885, %v6999, %v6134
    %v7064 = vsel %vm2885, %v7000, %v6136
    %v7065 = vsel %vm2885, %v7001, %v6138
    %v7066 = vsel %vm2885, %v7002, %v6140
    %v7067 = vsel %vm2885, %v7003, %v6142
    %v7068 = vsel %vm2885, %v7004, %v6144
    %v7069 = vsel %vm2885, %v7005, %v6146
    %v7070 = vsel %vm2885, %v7006, %v6148
    %v7071 = vsel %vm2885, %v7007, %v6150
    %v7072 = vsel %vm2885, %v7008, %v6152
    %v7073 = vsel %vm2885, %v7009, %v6154
    %v7074 = vsel %vm2885, %v7010, %v6156
    %v7075 = vsel %vm2885, %v7011, %v6158
    %v7076 = vsel %vm2885, %v7012, %v6160
    %v7077 = vsel %vm2885, %v7013, %v6162
    %v7078 = vsel %vm2885, %v7014, %v6164
    %v7079 = vsel %vm2885, %v7015, %v6166
    %v7080 = vsel %vm2885, %v7016, %v6168
    %v7081 = vsel %vm2885, %v7017, %v6170
    %v7082 = vsel %vm2885, %v7018, %v6172
    %v7083 = vsel %vm2885, %v7019, %v6174
    %v7084 = vsel %vm2885, %v7020, %v6176
    %v7085 = vsel %vm2885, %v7021, %v6178
    %v7086 = vsel %vm2885, %v7022, %v6180
    %v7087 = vsel %vm2885, %v7023, %v6182
    %v7088 = vsel %vm2885, %v7024, %v6184
    %v7089 = vsel %vm2885, %v7025, %v6186
    %v7090 = vsel %vm2885, %v7026, %v6188
    %v7091 = vsel %vm2885, %v7027, %v6190
    %v7092 = vsel %vm2885, %v7028, %v6192
    %v7093 = vsel %vm2885, %v7029, %v6194
    %v7094 = vsel %vm2885, %v7030, %v6196
    %v7095 = vsel %vm2885, %v7031, %v6198
    %v7096 = vsel %vm2885, %v7032, %v6200
    %v7097 = vsel %vm2950, %v7033, %v6330
    %v7098 = vsel %vm2950, %v7034, %v6332
    %v7099 = vsel %vm2950, %v7035, %v6334
    %v7100 = vsel %vm2950, %v7036, %v6336
    %v7101 = vsel %vm2950, %v7037, %v6338
    %v7102 = vsel %vm2950, %v7038, %v6340
    %v7103 = vsel %vm2950, %v7039, %v6342
    %v7104 = vsel %vm2950, %v7040, %v6344
    %v7105 = vsel %vm2950, %v7041, %v6346
    %v7106 = vsel %vm2950, %v7042, %v6348
    %v7107 = vsel %vm2950, %v7043, %v6350
    %v7108 = vsel %vm2950, %v7044, %v6352
    %v7109 = vsel %vm2950, %v7045, %v6354
    %v7110 = vsel %vm2950, %v7046, %v6356
    %v7111 = vsel %vm2950, %v7047, %v6358
    %v7112 = vsel %vm2950, %v7048, %v6360
    %v7113 = vsel %vm2950, %v7049, %v6362
    %v7114 = vsel %vm2950, %v7050, %v6364
    %v7115 = vsel %vm2950, %v7051, %v6366
    %v7116 = vsel %vm2950, %v7052, %v6368
    %v7117 = vsel %vm2950, %v7053, %v6370
    %v7118 = vsel %vm2950, %v7054, %v6372
    %v7119 = vsel %vm2950, %v7055, %v6374
    %v7120 = vsel %vm2950, %v7056, %v6376
    %v7121 = vsel %vm2950, %v7057, %v6378
    %v7122 = vsel %vm2950, %v7058, %v6380
    %v7123 = vsel %vm2950, %v7059, %v6382
    %v7124 = vsel %vm2950, %v7060, %v6384
    %v7125 = vsel %vm2950, %v7061, %v6386
    %v7126 = vsel %vm2950, %v7062, %v6388
    %v7127 = vsel %vm2950, %v7063, %v6390
    %v7128 = vsel %vm2950, %v7064, %v6392
    %v7129 = vsel %vm2950, %v7065, %v6394
    %v7130 = vsel %vm2950, %v7066, %v6396
    %v7131 = vsel %vm2950, %v7067, %v6398
    %v7132 = vsel %vm2950, %v7068, %v6400
    %v7133 = vsel %vm2950, %v7069, %v6402
    %v7134 = vsel %vm2950, %v7070, %v6404
    %v7135 = vsel %vm2950, %v7071, %v6406
    %v7136 = vsel %vm2950, %v7072, %v6408
    %v7137 = vsel %vm2950, %v7073, %v6410
    %v7138 = vsel %vm2950, %v7074, %v6412
    %v7139 = vsel %vm2950, %v7075, %v6414
    %v7140 = vsel %vm2950, %v7076, %v6416
    %v7141 = vsel %vm2950, %v7077, %v6418
    %v7142 = vsel %vm2950, %v7078, %v6420
    %v7143 = vsel %vm2950, %v7079, %v6422
    %v7144 = vsel %vm2950, %v7080, %v6424
    %v7145 = vsel %vm2950, %v7081, %v6426
    %v7146 = vsel %vm2950, %v7082, %v6428
    %v7147 = vsel %vm2950, %v7083, %v6430
    %v7148 = vsel %vm2950, %v7084, %v6432
    %v7149 = vsel %vm2950, %v7085, %v6434
    %v7150 = vsel %vm2950, %v7086, %v6436
    %v7151 = vsel %vm2950, %v7087, %v6438
    %v7152 = vsel %vm2950, %v7088, %v6440
    %v7153 = vsel %vm2950, %v7089, %v6442
    %v7154 = vsel %vm2950, %v7090, %v6444
    %v7155 = vsel %vm2950, %v7091, %v6446
    %v7156 = vsel %vm2950, %v7092, %v6448
    %v7157 = vsel %vm2950, %v7093, %v6450
    %v7158 = vsel %vm2950, %v7094, %v6452
    %v7159 = vsel %vm2950, %v7095, %v6454
    %v7160 = vsel %vm2950, %v7096, %v6456
    %v7161 = vsel %vm3015, %v7097, %v6586
    %v7162 = vsel %vm3015, %v7098, %v6588
    %v7163 = vsel %vm3015, %v7099, %v6590
    %v7164 = vsel %vm3015, %v7100, %v6592
    %v7165 = vsel %vm3015, %v7101, %v6594
    %v7166 = vsel %vm3015, %v7102, %v6596
    %v7167 = vsel %vm3015, %v7103, %v6598
    %v7168 = vsel %vm3015, %v7104, %v6600
    %v7169 = vsel %vm3015, %v7105, %v6602
    %v7170 = vsel %vm3015, %v7106, %v6604
    %v7171 = vsel %vm3015, %v7107, %v6606
    %v7172 = vsel %vm3015, %v7108, %v6608
    %v7173 = vsel %vm3015, %v7109, %v6610
    %v7174 = vsel %vm3015, %v7110, %v6612
    %v7175 = vsel %vm3015, %v7111, %v6614
    %v7176 = vsel %vm3015, %v7112, %v6616
    %v7177 = vsel %vm3015, %v7113, %v6618
    %v7178 = vsel %vm3015, %v7114, %v6620
    %v7179 = vsel %vm3015, %v7115, %v6622
    %v7180 = vsel %vm3015, %v7116, %v6624
    %v7181 = vsel %vm3015, %v7117, %v6626
    %v7182 = vsel %vm3015, %v7118, %v6628
    %v7183 = vsel %vm3015, %v7119, %v6630
    %v7184 = vsel %vm3015, %v7120, %v6632
    %v7185 = vsel %vm3015, %v7121, %v6634
    %v7186 = vsel %vm3015, %v7122, %v6636
    %v7187 = vsel %vm3015, %v7123, %v6638
    %v7188 = vsel %vm3015, %v7124, %v6640
    %v7189 = vsel %vm3015, %v7125, %v6642
    %v7190 = vsel %vm3015, %v7126, %v6644
    %v7191 = vsel %vm3015, %v7127, %v6646
    %v7192 = vsel %vm3015, %v7128, %v6648
    %v7193 = vsel %vm3015, %v7129, %v6650
    %v7194 = vsel %vm3015, %v7130, %v6652
    %v7195 = vsel %vm3015, %v7131, %v6654
    %v7196 = vsel %vm3015, %v7132, %v6656
    %v7197 = vsel %vm3015, %v7133, %v6658
    %v7198 = vsel %vm3015, %v7134, %v6660
    %v7199 = vsel %vm3015, %v7135, %v6662
    %v7200 = vsel %vm3015, %v7136, %v6664
    %v7201 = vsel %vm3015, %v7137, %v6666
    %v7202 = vsel %vm3015, %v7138, %v6668
    %v7203 = vsel %vm3015, %v7139, %v6670
    %v7204 = vsel %vm3015, %v7140, %v6672
    %v7205 = vsel %vm3015, %v7141, %v6674
    %v7206 = vsel %vm3015, %v7142, %v6676
    %v7207 = vsel %vm3015, %v7143, %v6678
    %v7208 = vsel %vm3015, %v7144, %v6680
    %v7209 = vsel %vm3015, %v7145, %v6682
    %v7210 = vsel %vm3015, %v7146, %v6684
    %v7211 = vsel %vm3015, %v7147, %v6686
    %v7212 = vsel %vm3015, %v7148, %v6688
    %v7213 = vsel %vm3015, %v7149, %v6690
    %v7214 = vsel %vm3015, %v7150, %v6692
    %v7215 = vsel %vm3015, %v7151, %v6694
    %v7216 = vsel %vm3015, %v7152, %v6696
    %v7217 = vsel %vm3015, %v7153, %v6698
    %v7218 = vsel %vm3015, %v7154, %v6700
    %v7219 = vsel %vm3015, %v7155, %v6702
    %v7220 = vsel %vm3015, %v7156, %v6704
    %v7221 = vsel %vm3015, %v7157, %v6706
    %v7222 = vsel %vm3015, %v7158, %v6708
    %v7223 = vsel %vm3015, %v7159, %v6710
    %v7224 = vsel %vm3015, %v7160, %v6712
    %v7225 = vld [vmem:[%s4] sm:$0xff]
    %v7226 = vld [vmem:[%s4 + $0x8] sm:$0xff]
    %v7227 = vld [vmem:[%s4 + $0x10] sm:$0xff]
    %v7228 = vld [vmem:[%s4 + $0x18] sm:$0xff]
    %v7229 = vld [vmem:[%s4 + $0x20] sm:$0xff]
    %v7230 = vld [vmem:[%s4 + $0x28] sm:$0xff]
    %v7231 = vld [vmem:[%s4 + $0x30] sm:$0xff]
    %v7232 = vld [vmem:[%s4 + $0x38] sm:$0xff]
    %v7233 = vld [vmem:[%s4 + $0x40] sm:$0xff]
    %v7234 = vld [vmem:[%s4 + $0x48] sm:$0xff]
    %v7235 = vld [vmem:[%s4 + $0x50] sm:$0xff]
    %v7236 = vld [vmem:[%s4 + $0x58] sm:$0xff]
    %v7237 = vld [vmem:[%s4 + $0x60] sm:$0xff]
    %v7238 = vld [vmem:[%s4 + $0x68] sm:$0xff]
    %v7239 = vld [vmem:[%s4 + $0x70] sm:$0xff]
    %v7240 = vld [vmem:[%s4 + $0x78] sm:$0xff]
    %v7241 = vld [vmem:[%s4 + $0x80] sm:$0xff]
    %v7242 = vld [vmem:[%s4 + $0x88] sm:$0xff]
    %v7244 = vsel %vm40, %v4921, 0
    %v7247 = vsel %vm40, %v4922, 0
    %v7250 = vsel %vm40, %v4923, 0
    %v7253 = vsel %vm40, %v4924, 0
    %v7256 = vsel %vm40, %v4925, 0
    %v7259 = vsel %vm40, %v4926, 0
    %v7262 = vsel %vm40, %v4927, 0
    %v7265 = vsel %vm40, %v4928, 0
    %v7268 = vsel %vm40, %v4929, 0
    %v7271 = vsel %vm40, %v4930, 0
    %v7274 = vsel %vm40, %v4931, 0
    %v7277 = vsel %vm40, %v4932, 0
    %v7280 = vsel %vm40, %v4933, 0
    %v7283 = vsel %vm40, %v4934, 0
    %v7286 = vsel %vm40, %v4935, 0
    %v7289 = vsel %vm40, %v4936, 0
    %v7292 = vsel %vm40, %v4937, 0
    %v7295 = vsel %vm40, %v4938, 0
    %v7298 = vsel %vm40, %v4939, 0
    %v7301 = vsel %vm40, %v4940, 0
    %v7304 = vsel %vm40, %v4941, 0
    %v7307 = vsel %vm40, %v4942, 0
    %v7310 = vsel %vm40, %v4943, 0
    %v7313 = vsel %vm40, %v4944, 0
    %v7316 = vsel %vm40, %v4945, 0
    %v7319 = vsel %vm40, %v4946, 0
    %v7322 = vsel %vm40, %v4947, 0
    %v7325 = vsel %vm40, %v4948, 0
    %v7328 = vsel %vm40, %v4949, 0
    %v7331 = vsel %vm40, %v4950, 0
    %v7334 = vsel %vm40, %v4951, 0
    %v7337 = vsel %vm40, %v4952, 0
    %v7340 = vsel %vm40, %v4953, 0
    %v7343 = vsel %vm40, %v4954, 0
    %v7346 = vsel %vm40, %v4955, 0
    %v7349 = vsel %vm40, %v4956, 0
    %v7352 = vsel %vm40, %v4957, 0
    %v7355 = vsel %vm40, %v4958, 0
    %v7358 = vsel %vm40, %v4959, 0
    %v7361 = vsel %vm40, %v4960, 0
    %v7364 = vsel %vm40, %v4961, 0
    %v7367 = vsel %vm40, %v4962, 0
    %v7370 = vsel %vm40, %v4963, 0
    %v7373 = vsel %vm40, %v4964, 0
    %v7376 = vsel %vm40, %v4965, 0
    %v7379 = vsel %vm40, %v4966, 0
    %v7382 = vsel %vm40, %v4967, 0
    %v7385 = vsel %vm40, %v4968, 0
    %v7388 = vsel %vm40, %v4969, 0
    %v7391 = vsel %vm40, %v4970, 0
    %v7394 = vsel %vm40, %v4971, 0
    %v7397 = vsel %vm40, %v4972, 0
    %v7400 = vsel %vm40, %v4973, 0
    %v7403 = vsel %vm40, %v4974, 0
    %v7406 = vsel %vm40, %v4975, 0
    %v7409 = vsel %vm40, %v4976, 0
    %v7412 = vsel %vm40, %v4977, 0
    %v7415 = vsel %vm40, %v4978, 0
    %v7418 = vsel %vm40, %v4979, 0
    %v7421 = vsel %vm40, %v4980, 0
    %v7424 = vsel %vm40, %v4981, 0
    %v7427 = vsel %vm40, %v4982, 0
    %v7430 = vsel %vm40, %v4983, 0
    %v7433 = vsel %vm40, %v4984, 0
    %7435 = vmatprep.subr.mxu0 0.0
    %7436 = vmatpush1.msra.mxu0 %v7240
    %7437 = vmatprep.subr.mxu0 0.0
    %7438 = vmatpush1.msra.mxu0 %v7239
    %7439 = vmatprep.subr.mxu0 0.0
    %7440 = vmatpush1.msra.mxu0 %v7238
    %7441 = vmatprep.subr.mxu0 0.0
    %7442 = vmatpush1.msra.mxu0 %v7237
    %7443 = vmatprep.subr.mxu0 0.0
    %7444 = vmatpush1.msra.mxu0 %v7236
    %7445 = vmatprep.subr.mxu0 0.0
    %7446 = vmatpush1.msra.mxu0 %v7235
    %7447 = vmatprep.subr.mxu0 0.0
    %7448 = vmatpush1.msra.mxu0 %v7234
    %7449 = vmatprep.subr.mxu0 0.0
    %7450 = vmatpush1.msra.mxu0 %v7233
    %7451 = vmatprep.subr.mxu0 0.0
    %7452 = vmatpush1.msra.mxu0 %v7232
    %7453 = vmatprep.subr.mxu0 0.0
    %7454 = vmatpush1.msra.mxu0 %v7231
    %7455 = vmatprep.subr.mxu0 0.0
    %7456 = vmatpush1.msra.mxu0 %v7230
    %7457 = vmatprep.subr.mxu0 0.0
    %7458 = vmatpush1.msra.mxu0 %v7229
    %7459 = vmatprep.subr.mxu0 0.0
    %7460 = vmatpush1.msra.mxu0 %v7228
    %7461 = vmatprep.subr.mxu0 0.0
    %7462 = vmatpush1.msra.mxu0 %v7227
    %7463 = vmatprep.subr.mxu0 0.0
    %7464 = vmatpush1.msra.mxu0 %v7226
    %7465 = vmatprep.subr.mxu0 0.0
    %7466 = vmatpush1.msra.mxu0 %v7225
    %7467 = vmatprep.subr.mxu0 0.0
    %7468 = vmatpush2.msra.mxu0 0.0
    %7469 = vmatprep.subr.mxu0 0.0
    %7470 = vmatpush2.msra.mxu0 0.0
    %7471 = vmatprep.subr.mxu0 0.0
    %7472 = vmatpush2.msra.mxu0 0.0
    %7473 = vmatprep.subr.mxu0 0.0
    %7474 = vmatpush2.msra.mxu0 0.0
    %7475 = vmatprep.subr.mxu0 0.0
    %7476 = vmatpush2.msra.mxu0 0.0
    %7477 = vmatprep.subr.mxu0 0.0
    %7478 = vmatpush2.msra.mxu0 0.0
    %7479 = vmatprep.subr.mxu0 0.0
    %7480 = vmatpush2.msra.mxu0 0.0
    %7481 = vmatprep.subr.mxu0 0.0
    %7482 = vmatpush2.msra.mxu0 0.0
    %7483 = vmatprep.subr.mxu0 0.0
    %7484 = vmatpush2.msra.mxu0 0.0
    %7485 = vmatprep.subr.mxu0 0.0
    %7486 = vmatpush2.msra.mxu0 0.0
    %7487 = vmatprep.subr.mxu0 0.0
    %7488 = vmatpush2.msra.mxu0 0.0
    %7489 = vmatprep.subr.mxu0 0.0
    %7490 = vmatpush2.msra.mxu0 0.0
    %7491 = vmatprep.subr.mxu0 0.0
    %7492 = vmatpush2.msra.mxu0 0.0
    %7493 = vmatprep.subr.mxu0 0.0
    %7494 = vmatpush2.msra.mxu0 0.0
    %7495 = vmatprep.subr.mxu0 0.0
    %7496 = vmatpush2.msra.mxu0 %v7242
    %7497 = vmatprep.subr.mxu0 0.0
    %7498 = vmatpush2.msra.mxu0 %v7241
    %7499 = vmatprep.mubr.f32.mxu0 %v7244
    %7500 = vmatmul.mubr.f32.gmra.mxu0 %v7161
    %v7501 = vpop.f32.mrf.mxu0
    %v7502 = vadd.f32 0.0, %v7501
    %v7503 = vpop.f32.mrf.mxu0
    %7504 = vmatprep.mubr.f32.mxu0 %v7247
    %7505 = vmatmul.mubr.f32.gmra.mxu0 %v7162
    %v7506 = vpop.f32.mrf.mxu0
    %v7507 = vadd.f32 0.0, %v7506
    %v7508 = vpop.f32.mrf.mxu0
    %7509 = vmatprep.mubr.f32.mxu0 %v7250
    %7510 = vmatmul.mubr.f32.gmra.mxu0 %v7163
    %v7511 = vpop.f32.mrf.mxu0
    %v7512 = vadd.f32 0.0, %v7511
    %v7513 = vpop.f32.mrf.mxu0
    %7514 = vmatprep.mubr.f32.mxu0 %v7253
    %7515 = vmatmul.mubr.f32.gmra.mxu0 %v7164
    %v7516 = vpop.f32.mrf.mxu0
    %v7517 = vadd.f32 0.0, %v7516
    %v7518 = vpop.f32.mrf.mxu0
    %7519 = vmatprep.mubr.f32.mxu0 %v7256
    %7520 = vmatmul.mubr.f32.gmra.mxu0 %v7165
    %v7521 = vpop.f32.mrf.mxu0
    %v7522 = vadd.f32 0.0, %v7521
    %v7523 = vpop.f32.mrf.mxu0
    %7524 = vmatprep.mubr.f32.mxu0 %v7259
    %7525 = vmatmul.mubr.f32.gmra.mxu0 %v7166
    %v7526 = vpop.f32.mrf.mxu0
    %v7527 = vadd.f32 0.0, %v7526
    %v7528 = vpop.f32.mrf.mxu0
    %7529 = vmatprep.mubr.f32.mxu0 %v7262
    %7530 = vmatmul.mubr.f32.gmra.mxu0 %v7167
    %v7531 = vpop.f32.mrf.mxu0
    %v7532 = vadd.f32 0.0, %v7531
    %v7533 = vpop.f32.mrf.mxu0
    %7534 = vmatprep.mubr.f32.mxu0 %v7265
    %7535 = vmatmul.mubr.f32.gmra.mxu0 %v7168
    %v7536 = vpop.f32.mrf.mxu0
    %v7537 = vadd.f32 0.0, %v7536
    %v7538 = vpop.f32.mrf.mxu0
    %7539 = vmatprep.mubr.f32.mxu0 %v7268
    %7540 = vmatmul.mubr.f32.gmra.mxu0 %v7169
    %v7541 = vpop.f32.mrf.mxu0
    %v7542 = vadd.f32 0.0, %v7541
    %v7543 = vpop.f32.mrf.mxu0
    %7544 = vmatprep.mubr.f32.mxu0 %v7271
    %7545 = vmatmul.mubr.f32.gmra.mxu0 %v7170
    %v7546 = vpop.f32.mrf.mxu0
    %v7547 = vadd.f32 0.0, %v7546
    %v7548 = vpop.f32.mrf.mxu0
    %7549 = vmatprep.mubr.f32.mxu0 %v7274
    %7550 = vmatmul.mubr.f32.gmra.mxu0 %v7171
    %v7551 = vpop.f32.mrf.mxu0
    %v7552 = vadd.f32 0.0, %v7551
    %v7553 = vpop.f32.mrf.mxu0
    %7554 = vmatprep.mubr.f32.mxu0 %v7277
    %7555 = vmatmul.mubr.f32.gmra.mxu0 %v7172
    %v7556 = vpop.f32.mrf.mxu0
    %v7557 = vadd.f32 0.0, %v7556
    %v7558 = vpop.f32.mrf.mxu0
    %7559 = vmatprep.mubr.f32.mxu0 %v7280
    %7560 = vmatmul.mubr.f32.gmra.mxu0 %v7173
    %v7561 = vpop.f32.mrf.mxu0
    %v7562 = vadd.f32 0.0, %v7561
    %v7563 = vpop.f32.mrf.mxu0
    %7564 = vmatprep.mubr.f32.mxu0 %v7283
    %7565 = vmatmul.mubr.f32.gmra.mxu0 %v7174
    %v7566 = vpop.f32.mrf.mxu0
    %v7567 = vadd.f32 0.0, %v7566
    %v7568 = vpop.f32.mrf.mxu0
    %7569 = vmatprep.mubr.f32.mxu0 %v7286
    %7570 = vmatmul.mubr.f32.gmra.mxu0 %v7175
    %v7571 = vpop.f32.mrf.mxu0
    %v7572 = vadd.f32 0.0, %v7571
    %v7573 = vpop.f32.mrf.mxu0
    %7574 = vmatprep.mubr.f32.mxu0 %v7289
    %7575 = vmatmul.mubr.f32.gmra.mxu0 %v7176
    %v7576 = vpop.f32.mrf.mxu0
    %v7577 = vadd.f32 0.0, %v7576
    %v7578 = vpop.f32.mrf.mxu0
    %7579 = vmatprep.mubr.f32.mxu0 %v7292
    %7580 = vmatmul.mubr.f32.gmra.mxu0 %v7177
    %v7581 = vpop.f32.mrf.mxu0
    %v7582 = vadd.f32 0.0, %v7581
    %v7583 = vpop.f32.mrf.mxu0
    %7584 = vmatprep.mubr.f32.mxu0 %v7295
    %7585 = vmatmul.mubr.f32.gmra.mxu0 %v7178
    %v7586 = vpop.f32.mrf.mxu0
    %v7587 = vadd.f32 0.0, %v7586
    %v7588 = vpop.f32.mrf.mxu0
    %7589 = vmatprep.mubr.f32.mxu0 %v7298
    %7590 = vmatmul.mubr.f32.gmra.mxu0 %v7179
    %v7591 = vpop.f32.mrf.mxu0
    %v7592 = vadd.f32 0.0, %v7591
    %v7593 = vpop.f32.mrf.mxu0
    %7594 = vmatprep.mubr.f32.mxu0 %v7301
    %7595 = vmatmul.mubr.f32.gmra.mxu0 %v7180
    %v7596 = vpop.f32.mrf.mxu0
    %v7597 = vadd.f32 0.0, %v7596
    %v7598 = vpop.f32.mrf.mxu0
    %7599 = vmatprep.mubr.f32.mxu0 %v7304
    %7600 = vmatmul.mubr.f32.gmra.mxu0 %v7181
    %v7601 = vpop.f32.mrf.mxu0
    %v7602 = vadd.f32 0.0, %v7601
    %v7603 = vpop.f32.mrf.mxu0
    %7604 = vmatprep.mubr.f32.mxu0 %v7307
    %7605 = vmatmul.mubr.f32.gmra.mxu0 %v7182
    %v7606 = vpop.f32.mrf.mxu0
    %v7607 = vadd.f32 0.0, %v7606
    %v7608 = vpop.f32.mrf.mxu0
    %7609 = vmatprep.mubr.f32.mxu0 %v7310
    %7610 = vmatmul.mubr.f32.gmra.mxu0 %v7183
    %v7611 = vpop.f32.mrf.mxu0
    %v7612 = vadd.f32 0.0, %v7611
    %v7613 = vpop.f32.mrf.mxu0
    %7614 = vmatprep.mubr.f32.mxu0 %v7313
    %7615 = vmatmul.mubr.f32.gmra.mxu0 %v7184
    %v7616 = vpop.f32.mrf.mxu0
    %v7617 = vadd.f32 0.0, %v7616
    %v7618 = vpop.f32.mrf.mxu0
    %7619 = vmatprep.mubr.f32.mxu0 %v7316
    %7620 = vmatmul.mubr.f32.gmra.mxu0 %v7185
    %v7621 = vpop.f32.mrf.mxu0
    %v7622 = vadd.f32 0.0, %v7621
    %v7623 = vpop.f32.mrf.mxu0
    %7624 = vmatprep.mubr.f32.mxu0 %v7319
    %7625 = vmatmul.mubr.f32.gmra.mxu0 %v7186
    %v7626 = vpop.f32.mrf.mxu0
    %v7627 = vadd.f32 0.0, %v7626
    %v7628 = vpop.f32.mrf.mxu0
    %7629 = vmatprep.mubr.f32.mxu0 %v7322
    %7630 = vmatmul.mubr.f32.gmra.mxu0 %v7187
    %v7631 = vpop.f32.mrf.mxu0
    %v7632 = vadd.f32 0.0, %v7631
    %v7633 = vpop.f32.mrf.mxu0
    %7634 = vmatprep.mubr.f32.mxu0 %v7325
    %7635 = vmatmul.mubr.f32.gmra.mxu0 %v7188
    %v7636 = vpop.f32.mrf.mxu0
    %v7637 = vadd.f32 0.0, %v7636
    %v7638 = vpop.f32.mrf.mxu0
    %7639 = vmatprep.mubr.f32.mxu0 %v7328
    %7640 = vmatmul.mubr.f32.gmra.mxu0 %v7189
    %v7641 = vpop.f32.mrf.mxu0
    %v7642 = vadd.f32 0.0, %v7641
    %v7643 = vpop.f32.mrf.mxu0
    %7644 = vmatprep.mubr.f32.mxu0 %v7331
    %7645 = vmatmul.mubr.f32.gmra.mxu0 %v7190
    %v7646 = vpop.f32.mrf.mxu0
    %v7647 = vadd.f32 0.0, %v7646
    %v7648 = vpop.f32.mrf.mxu0
    %7649 = vmatprep.mubr.f32.mxu0 %v7334
    %7650 = vmatmul.mubr.f32.gmra.mxu0 %v7191
    %v7651 = vpop.f32.mrf.mxu0
    %v7652 = vadd.f32 0.0, %v7651
    %v7653 = vpop.f32.mrf.mxu0
    %7654 = vmatprep.mubr.f32.mxu0 %v7337
    %7655 = vmatmul.mubr.f32.gmra.mxu0 %v7192
    %v7656 = vpop.f32.mrf.mxu0
    %v7657 = vadd.f32 0.0, %v7656
    %v7658 = vpop.f32.mrf.mxu0
    %7659 = vmatprep.mubr.f32.mxu0 %v7340
    %7660 = vmatmul.mubr.f32.gmra.mxu0 %v7193
    %v7661 = vpop.f32.mrf.mxu0
    %v7662 = vadd.f32 0.0, %v7661
    %v7663 = vpop.f32.mrf.mxu0
    %7664 = vmatprep.mubr.f32.mxu0 %v7343
    %7665 = vmatmul.mubr.f32.gmra.mxu0 %v7194
    %v7666 = vpop.f32.mrf.mxu0
    %v7667 = vadd.f32 0.0, %v7666
    %v7668 = vpop.f32.mrf.mxu0
    %7669 = vmatprep.mubr.f32.mxu0 %v7346
    %7670 = vmatmul.mubr.f32.gmra.mxu0 %v7195
    %v7671 = vpop.f32.mrf.mxu0
    %v7672 = vadd.f32 0.0, %v7671
    %v7673 = vpop.f32.mrf.mxu0
    %7674 = vmatprep.mubr.f32.mxu0 %v7349
    %7675 = vmatmul.mubr.f32.gmra.mxu0 %v7196
    %v7676 = vpop.f32.mrf.mxu0
    %v7677 = vadd.f32 0.0, %v7676
    %v7678 = vpop.f32.mrf.mxu0
    %7679 = vmatprep.mubr.f32.mxu0 %v7352
    %7680 = vmatmul.mubr.f32.gmra.mxu0 %v7197
    %v7681 = vpop.f32.mrf.mxu0
    %v7682 = vadd.f32 0.0, %v7681
    %v7683 = vpop.f32.mrf.mxu0
    %7684 = vmatprep.mubr.f32.mxu0 %v7355
    %7685 = vmatmul.mubr.f32.gmra.mxu0 %v7198
    %v7686 = vpop.f32.mrf.mxu0
    %v7687 = vadd.f32 0.0, %v7686
    %v7688 = vpop.f32.mrf.mxu0
    %7689 = vmatprep.mubr.f32.mxu0 %v7358
    %7690 = vmatmul.mubr.f32.gmra.mxu0 %v7199
    %v7691 = vpop.f32.mrf.mxu0
    %v7692 = vadd.f32 0.0, %v7691
    %v7693 = vpop.f32.mrf.mxu0
    %7694 = vmatprep.mubr.f32.mxu0 %v7361
    %7695 = vmatmul.mubr.f32.gmra.mxu0 %v7200
    %v7696 = vpop.f32.mrf.mxu0
    %v7697 = vadd.f32 0.0, %v7696
    %v7698 = vpop.f32.mrf.mxu0
    %7699 = vmatprep.mubr.f32.mxu0 %v7364
    %7700 = vmatmul.mubr.f32.gmra.mxu0 %v7201
    %v7701 = vpop.f32.mrf.mxu0
    %v7702 = vadd.f32 0.0, %v7701
    %v7703 = vpop.f32.mrf.mxu0
    %7704 = vmatprep.mubr.f32.mxu0 %v7367
    %7705 = vmatmul.mubr.f32.gmra.mxu0 %v7202
    %v7706 = vpop.f32.mrf.mxu0
    %v7707 = vadd.f32 0.0, %v7706
    %v7708 = vpop.f32.mrf.mxu0
    %7709 = vmatprep.mubr.f32.mxu0 %v7370
    %7710 = vmatmul.mubr.f32.gmra.mxu0 %v7203
    %v7711 = vpop.f32.mrf.mxu0
    %v7712 = vadd.f32 0.0, %v7711
    %v7713 = vpop.f32.mrf.mxu0
    %7714 = vmatprep.mubr.f32.mxu0 %v7373
    %7715 = vmatmul.mubr.f32.gmra.mxu0 %v7204
    %v7716 = vpop.f32.mrf.mxu0
    %v7717 = vadd.f32 0.0, %v7716
    %v7718 = vpop.f32.mrf.mxu0
    %7719 = vmatprep.mubr.f32.mxu0 %v7376
    %7720 = vmatmul.mubr.f32.gmra.mxu0 %v7205
    %v7721 = vpop.f32.mrf.mxu0
    %v7722 = vadd.f32 0.0, %v7721
    %v7723 = vpop.f32.mrf.mxu0
    %7724 = vmatprep.mubr.f32.mxu0 %v7379
    %7725 = vmatmul.mubr.f32.gmra.mxu0 %v7206
    %v7726 = vpop.f32.mrf.mxu0
    %v7727 = vadd.f32 0.0, %v7726
    %v7728 = vpop.f32.mrf.mxu0
    %7729 = vmatprep.mubr.f32.mxu0 %v7382
    %7730 = vmatmul.mubr.f32.gmra.mxu0 %v7207
    %v7731 = vpop.f32.mrf.mxu0
    %v7732 = vadd.f32 0.0, %v7731
    %v7733 = vpop.f32.mrf.mxu0
    %7734 = vmatprep.mubr.f32.mxu0 %v7385
    %7735 = vmatmul.mubr.f32.gmra.mxu0 %v7208
    %v7736 = vpop.f32.mrf.mxu0
    %v7737 = vadd.f32 0.0, %v7736
    %v7738 = vpop.f32.mrf.mxu0
    %7739 = vmatprep.mubr.f32.mxu0 %v7388
    %7740 = vmatmul.mubr.f32.gmra.mxu0 %v7209
    %v7741 = vpop.f32.mrf.mxu0
    %v7742 = vadd.f32 0.0, %v7741
    %v7743 = vpop.f32.mrf.mxu0
    %7744 = vmatprep.mubr.f32.mxu0 %v7391
    %7745 = vmatmul.mubr.f32.gmra.mxu0 %v7210
    %v7746 = vpop.f32.mrf.mxu0
    %v7747 = vadd.f32 0.0, %v7746
    %v7748 = vpop.f32.mrf.mxu0
    %7749 = vmatprep.mubr.f32.mxu0 %v7394
    %7750 = vmatmul.mubr.f32.gmra.mxu0 %v7211
    %v7751 = vpop.f32.mrf.mxu0
    %v7752 = vadd.f32 0.0, %v7751
    %v7753 = vpop.f32.mrf.mxu0
    %7754 = vmatprep.mubr.f32.mxu0 %v7397
    %7755 = vmatmul.mubr.f32.gmra.mxu0 %v7212
    %v7756 = vpop.f32.mrf.mxu0
    %v7757 = vadd.f32 0.0, %v7756
    %v7758 = vpop.f32.mrf.mxu0
    %7759 = vmatprep.mubr.f32.mxu0 %v7400
    %7760 = vmatmul.mubr.f32.gmra.mxu0 %v7213
    %v7761 = vpop.f32.mrf.mxu0
    %v7762 = vadd.f32 0.0, %v7761
    %v7763 = vpop.f32.mrf.mxu0
    %7764 = vmatprep.mubr.f32.mxu0 %v7403
    %7765 = vmatmul.mubr.f32.gmra.mxu0 %v7214
    %v7766 = vpop.f32.mrf.mxu0
    %v7767 = vadd.f32 0.0, %v7766
    %v7768 = vpop.f32.mrf.mxu0
    %7769 = vmatprep.mubr.f32.mxu0 %v7406
    %7770 = vmatmul.mubr.f32.gmra.mxu0 %v7215
    %v7771 = vpop.f32.mrf.mxu0
    %v7772 = vadd.f32 0.0, %v7771
    %v7773 = vpop.f32.mrf.mxu0
    %7774 = vmatprep.mubr.f32.mxu0 %v7409
    %7775 = vmatmul.mubr.f32.gmra.mxu0 %v7216
    %v7776 = vpop.f32.mrf.mxu0
    %v7777 = vadd.f32 0.0, %v7776
    %v7778 = vpop.f32.mrf.mxu0
    %7779 = vmatprep.mubr.f32.mxu0 %v7412
    %7780 = vmatmul.mubr.f32.gmra.mxu0 %v7217
    %v7781 = vpop.f32.mrf.mxu0
    %v7782 = vadd.f32 0.0, %v7781
    %v7783 = vpop.f32.mrf.mxu0
    %7784 = vmatprep.mubr.f32.mxu0 %v7415
    %7785 = vmatmul.mubr.f32.gmra.mxu0 %v7218
    %v7786 = vpop.f32.mrf.mxu0
    %v7787 = vadd.f32 0.0, %v7786
    %v7788 = vpop.f32.mrf.mxu0
    %7789 = vmatprep.mubr.f32.mxu0 %v7418
    %7790 = vmatmul.mubr.f32.gmra.mxu0 %v7219
    %v7791 = vpop.f32.mrf.mxu0
    %v7792 = vadd.f32 0.0, %v7791
    %v7793 = vpop.f32.mrf.mxu0
    %7794 = vmatprep.mubr.f32.mxu0 %v7421
    %7795 = vmatmul.mubr.f32.gmra.mxu0 %v7220
    %v7796 = vpop.f32.mrf.mxu0
    %v7797 = vadd.f32 0.0, %v7796
    %v7798 = vpop.f32.mrf.mxu0
    %7799 = vmatprep.mubr.f32.mxu0 %v7424
    %7800 = vmatmul.mubr.f32.gmra.mxu0 %v7221
    %v7801 = vpop.f32.mrf.mxu0
    %v7802 = vadd.f32 0.0, %v7801
    %v7803 = vpop.f32.mrf.mxu0
    %7804 = vmatprep.mubr.f32.mxu0 %v7427
    %7805 = vmatmul.mubr.f32.gmra.mxu0 %v7222
    %v7806 = vpop.f32.mrf.mxu0
    %v7807 = vadd.f32 0.0, %v7806
    %v7808 = vpop.f32.mrf.mxu0
    %7809 = vmatprep.mubr.f32.mxu0 %v7430
    %7810 = vmatmul.mubr.f32.gmra.mxu0 %v7223
    %v7811 = vpop.f32.mrf.mxu0
    %v7812 = vadd.f32 0.0, %v7811
    %v7813 = vpop.f32.mrf.mxu0
    %7814 = vmatprep.mubr.f32.mxu0 %v7433
    %7815 = vmatmul.mubr.f32.gmra.mxu0 %v7224
    %v7816 = vpop.f32.mrf.mxu0
    %v7817 = vadd.f32 0.0, %v7816
    %v7818 = vpop.f32.mrf.mxu0
    %7819 = vdwg.mxu0
    %v7820 = vsel %vm40, %v7502, 0.0
    %v7821 = vsel %vm40, %v7507, 0.0
    %v7822 = vadd.f32 %v7820, %v7821
    %v7823 = vsel %vm40, %v7512, 0.0
    %v7824 = vadd.f32 %v7822, %v7823
    %v7825 = vsel %vm40, %v7517, 0.0
    %v7826 = vadd.f32 %v7824, %v7825
    %v7827 = vsel %vm40, %v7522, 0.0
    %v7828 = vadd.f32 %v7826, %v7827
    %v7829 = vsel %vm40, %v7527, 0.0
    %v7830 = vadd.f32 %v7828, %v7829
    %v7831 = vsel %vm40, %v7532, 0.0
    %v7832 = vadd.f32 %v7830, %v7831
    %v7833 = vsel %vm40, %v7537, 0.0
    %v7834 = vadd.f32 %v7832, %v7833
    %v7835 = vsel %vm40, %v7542, 0.0
    %v7836 = vadd.f32 %v7834, %v7835
    %v7837 = vsel %vm40, %v7547, 0.0
    %v7838 = vadd.f32 %v7836, %v7837
    %v7839 = vsel %vm40, %v7552, 0.0
    %v7840 = vadd.f32 %v7838, %v7839
    %v7841 = vsel %vm40, %v7557, 0.0
    %v7842 = vadd.f32 %v7840, %v7841
    %v7843 = vsel %vm40, %v7562, 0.0
    %v7844 = vadd.f32 %v7842, %v7843
    %v7845 = vsel %vm40, %v7567, 0.0
    %v7846 = vadd.f32 %v7844, %v7845
    %v7847 = vsel %vm40, %v7572, 0.0
    %v7848 = vadd.f32 %v7846, %v7847
    %v7849 = vsel %vm40, %v7577, 0.0
    %v7850 = vadd.f32 %v7848, %v7849
    %v7851 = vsel %vm40, %v7582, 0.0
    %v7852 = vadd.f32 %v7850, %v7851
    %v7853 = vsel %vm40, %v7587, 0.0
    %v7854 = vadd.f32 %v7852, %v7853
    %v7855 = vsel %vm40, %v7592, 0.0
    %v7856 = vadd.f32 %v7854, %v7855
    %v7857 = vsel %vm40, %v7597, 0.0
    %v7858 = vadd.f32 %v7856, %v7857
    %v7859 = vsel %vm40, %v7602, 0.0
    %v7860 = vadd.f32 %v7858, %v7859
    %v7861 = vsel %vm40, %v7607, 0.0
    %v7862 = vadd.f32 %v7860, %v7861
    %v7863 = vsel %vm40, %v7612, 0.0
    %v7864 = vadd.f32 %v7862, %v7863
    %v7865 = vsel %vm40, %v7617, 0.0
    %v7866 = vadd.f32 %v7864, %v7865
    %v7867 = vsel %vm40, %v7622, 0.0
    %v7868 = vadd.f32 %v7866, %v7867
    %v7869 = vsel %vm40, %v7627, 0.0
    %v7870 = vadd.f32 %v7868, %v7869
    %v7871 = vsel %vm40, %v7632, 0.0
    %v7872 = vadd.f32 %v7870, %v7871
    %v7873 = vsel %vm40, %v7637, 0.0
    %v7874 = vadd.f32 %v7872, %v7873
    %v7875 = vsel %vm40, %v7642, 0.0
    %v7876 = vadd.f32 %v7874, %v7875
    %v7877 = vsel %vm40, %v7647, 0.0
    %v7878 = vadd.f32 %v7876, %v7877
    %v7879 = vsel %vm40, %v7652, 0.0
    %v7880 = vadd.f32 %v7878, %v7879
    %v7881 = vsel %vm40, %v7657, 0.0
    %v7882 = vadd.f32 %v7880, %v7881
    %v7883 = vsel %vm40, %v7662, 0.0
    %v7884 = vadd.f32 %v7882, %v7883
    %v7885 = vsel %vm40, %v7667, 0.0
    %v7886 = vadd.f32 %v7884, %v7885
    %v7887 = vsel %vm40, %v7672, 0.0
    %v7888 = vadd.f32 %v7886, %v7887
    %v7889 = vsel %vm40, %v7677, 0.0
    %v7890 = vadd.f32 %v7888, %v7889
    %v7891 = vsel %vm40, %v7682, 0.0
    %v7892 = vadd.f32 %v7890, %v7891
    %v7893 = vsel %vm40, %v7687, 0.0
    %v7894 = vadd.f32 %v7892, %v7893
    %v7895 = vsel %vm40, %v7692, 0.0
    %v7896 = vadd.f32 %v7894, %v7895
    %v7897 = vsel %vm40, %v7697, 0.0
    %v7898 = vadd.f32 %v7896, %v7897
    %v7899 = vsel %vm40, %v7702, 0.0
    %v7900 = vadd.f32 %v7898, %v7899
    %v7901 = vsel %vm40, %v7707, 0.0
    %v7902 = vadd.f32 %v7900, %v7901
    %v7903 = vsel %vm40, %v7712, 0.0
    %v7904 = vadd.f32 %v7902, %v7903
    %v7905 = vsel %vm40, %v7717, 0.0
    %v7906 = vadd.f32 %v7904, %v7905
    %v7907 = vsel %vm40, %v7722, 0.0
    %v7908 = vadd.f32 %v7906, %v7907
    %v7909 = vsel %vm40, %v7727, 0.0
    %v7910 = vadd.f32 %v7908, %v7909
    %v7911 = vsel %vm40, %v7732, 0.0
    %v7912 = vadd.f32 %v7910, %v7911
    %v7913 = vsel %vm40, %v7737, 0.0
    %v7914 = vadd.f32 %v7912, %v7913
    %v7915 = vsel %vm40, %v7742, 0.0
    %v7916 = vadd.f32 %v7914, %v7915
    %v7917 = vsel %vm40, %v7747, 0.0
    %v7918 = vadd.f32 %v7916, %v7917
    %v7919 = vsel %vm40, %v7752, 0.0
    %v7920 = vadd.f32 %v7918, %v7919
    %v7921 = vsel %vm40, %v7757, 0.0
    %v7922 = vadd.f32 %v7920, %v7921
    %v7923 = vsel %vm40, %v7762, 0.0
    %v7924 = vadd.f32 %v7922, %v7923
    %v7925 = vsel %vm40, %v7767, 0.0
    %v7926 = vadd.f32 %v7924, %v7925
    %v7927 = vsel %vm40, %v7772, 0.0
    %v7928 = vadd.f32 %v7926, %v7927
    %v7929 = vsel %vm40, %v7777, 0.0
    %v7930 = vadd.f32 %v7928, %v7929
    %v7931 = vsel %vm40, %v7782, 0.0
    %v7932 = vadd.f32 %v7930, %v7931
    %v7933 = vsel %vm40, %v7787, 0.0
    %v7934 = vadd.f32 %v7932, %v7933
    %v7935 = vsel %vm40, %v7792, 0.0
    %v7936 = vadd.f32 %v7934, %v7935
    %v7937 = vsel %vm40, %v7797, 0.0
    %v7938 = vadd.f32 %v7936, %v7937
    %v7939 = vsel %vm40, %v7802, 0.0
    %v7940 = vadd.f32 %v7938, %v7939
    %v7941 = vsel %vm40, %v7807, 0.0
    %v7942 = vadd.f32 %v7940, %v7941
    %v7943 = vsel %vm40, %v7812, 0.0
    %v7944 = vadd.f32 %v7942, %v7943
    %v7945 = vsel %vm40, %v7817, 0.0
    %v7946 = vadd.f32 %v7944, %v7945
    %v7947 = vrot.slane %v7946, 4
    %v7948 = vadd.f32 %v7946, %v7947
    %v7949 = vrot.slane %v7948, 2
    %v7950 = vadd.f32 %v7948, %v7949
    %v7951 = vrot.slane %v7950, 1
    %v7952 = vadd.f32 %v7950, %v7951
    %v7953 = vmul.f32 %v7502, %v7502
    %v7954 = vmul.f32 %v7507, %v7507
    %v7955 = vmul.f32 %v7512, %v7512
    %v7956 = vmul.f32 %v7517, %v7517
    %v7957 = vmul.f32 %v7522, %v7522
    %v7958 = vmul.f32 %v7527, %v7527
    %v7959 = vmul.f32 %v7532, %v7532
    %v7960 = vmul.f32 %v7537, %v7537
    %v7961 = vmul.f32 %v7542, %v7542
    %v7962 = vmul.f32 %v7547, %v7547
    %v7963 = vmul.f32 %v7552, %v7552
    %v7964 = vmul.f32 %v7557, %v7557
    %v7965 = vmul.f32 %v7562, %v7562
    %v7966 = vmul.f32 %v7567, %v7567
    %v7967 = vmul.f32 %v7572, %v7572
    %v7968 = vmul.f32 %v7577, %v7577
    %v7969 = vmul.f32 %v7582, %v7582
    %v7970 = vmul.f32 %v7587, %v7587
    %v7971 = vmul.f32 %v7592, %v7592
    %v7972 = vmul.f32 %v7597, %v7597
    %v7973 = vmul.f32 %v7602, %v7602
    %v7974 = vmul.f32 %v7607, %v7607
    %v7975 = vmul.f32 %v7612, %v7612
    %v7976 = vmul.f32 %v7617, %v7617
    %v7977 = vmul.f32 %v7622, %v7622
    %v7978 = vmul.f32 %v7627, %v7627
    %v7979 = vmul.f32 %v7632, %v7632
    %v7980 = vmul.f32 %v7637, %v7637
    %v7981 = vmul.f32 %v7642, %v7642
    %v7982 = vmul.f32 %v7647, %v7647
    %v7983 = vmul.f32 %v7652, %v7652
    %v7984 = vmul.f32 %v7657, %v7657
    %v7985 = vmul.f32 %v7662, %v7662
    %v7986 = vmul.f32 %v7667, %v7667
    %v7987 = vmul.f32 %v7672, %v7672
    %v7988 = vmul.f32 %v7677, %v7677
    %v7989 = vmul.f32 %v7682, %v7682
    %v7990 = vmul.f32 %v7687, %v7687
    %v7991 = vmul.f32 %v7692, %v7692
    %v7992 = vmul.f32 %v7697, %v7697
    %v7993 = vmul.f32 %v7702, %v7702
    %v7994 = vmul.f32 %v7707, %v7707
    %v7995 = vmul.f32 %v7712, %v7712
    %v7996 = vmul.f32 %v7717, %v7717
    %v7997 = vmul.f32 %v7722, %v7722
    %v7998 = vmul.f32 %v7727, %v7727
    %v7999 = vmul.f32 %v7732, %v7732
    %v8000 = vmul.f32 %v7737, %v7737
    %v8001 = vmul.f32 %v7742, %v7742
    %v8002 = vmul.f32 %v7747, %v7747
    %v8003 = vmul.f32 %v7752, %v7752
    %v8004 = vmul.f32 %v7757, %v7757
    %v8005 = vmul.f32 %v7762, %v7762
    %v8006 = vmul.f32 %v7767, %v7767
    %v8007 = vmul.f32 %v7772, %v7772
    %v8008 = vmul.f32 %v7777, %v7777
    %v8009 = vmul.f32 %v7782, %v7782
    %v8010 = vmul.f32 %v7787, %v7787
    %v8011 = vmul.f32 %v7792, %v7792
    %v8012 = vmul.f32 %v7797, %v7797
    %v8013 = vmul.f32 %v7802, %v7802
    %v8014 = vmul.f32 %v7807, %v7807
    %v8015 = vmul.f32 %v7812, %v7812
    %v8016 = vmul.f32 %v7817, %v7817
    %v8017 = vsel %vm40, %v7953, 0.0
    %v8018 = vsel %vm40, %v7954, 0.0
    %v8019 = vadd.f32 %v8017, %v8018
    %v8020 = vsel %vm40, %v7955, 0.0
    %v8021 = vadd.f32 %v8019, %v8020
    %v8022 = vsel %vm40, %v7956, 0.0
    %v8023 = vadd.f32 %v8021, %v8022
    %v8024 = vsel %vm40, %v7957, 0.0
    %v8025 = vadd.f32 %v8023, %v8024
    %v8026 = vsel %vm40, %v7958, 0.0
    %v8027 = vadd.f32 %v8025, %v8026
    %v8028 = vsel %vm40, %v7959, 0.0
    %v8029 = vadd.f32 %v8027, %v8028
    %v8030 = vsel %vm40, %v7960, 0.0
    %v8031 = vadd.f32 %v8029, %v8030
    %v8032 = vsel %vm40, %v7961, 0.0
    %v8033 = vadd.f32 %v8031, %v8032
    %v8034 = vsel %vm40, %v7962, 0.0
    %v8035 = vadd.f32 %v8033, %v8034
    %v8036 = vsel %vm40, %v7963, 0.0
    %v8037 = vadd.f32 %v8035, %v8036
    %v8038 = vsel %vm40, %v7964, 0.0
    %v8039 = vadd.f32 %v8037, %v8038
    %v8040 = vsel %vm40, %v7965, 0.0
    %v8041 = vadd.f32 %v8039, %v8040
    %v8042 = vsel %vm40, %v7966, 0.0
    %v8043 = vadd.f32 %v8041, %v8042
    %v8044 = vsel %vm40, %v7967, 0.0
    %v8045 = vadd.f32 %v8043, %v8044
    %v8046 = vsel %vm40, %v7968, 0.0
    %v8047 = vadd.f32 %v8045, %v8046
    %v8048 = vsel %vm40, %v7969, 0.0
    %v8049 = vadd.f32 %v8047, %v8048
    %v8050 = vsel %vm40, %v7970, 0.0
    %v8051 = vadd.f32 %v8049, %v8050
    %v8052 = vsel %vm40, %v7971, 0.0
    %v8053 = vadd.f32 %v8051, %v8052
    %v8054 = vsel %vm40, %v7972, 0.0
    %v8055 = vadd.f32 %v8053, %v8054
    %v8056 = vsel %vm40, %v7973, 0.0
    %v8057 = vadd.f32 %v8055, %v8056
    %v8058 = vsel %vm40, %v7974, 0.0
    %v8059 = vadd.f32 %v8057, %v8058
    %v8060 = vsel %vm40, %v7975, 0.0
    %v8061 = vadd.f32 %v8059, %v8060
    %v8062 = vsel %vm40, %v7976, 0.0
    %v8063 = vadd.f32 %v8061, %v8062
    %v8064 = vsel %vm40, %v7977, 0.0
    %v8065 = vadd.f32 %v8063, %v8064
    %v8066 = vsel %vm40, %v7978, 0.0
    %v8067 = vadd.f32 %v8065, %v8066
    %v8068 = vsel %vm40, %v7979, 0.0
    %v8069 = vadd.f32 %v8067, %v8068
    %v8070 = vsel %vm40, %v7980, 0.0
    %v8071 = vadd.f32 %v8069, %v8070
    %v8072 = vsel %vm40, %v7981, 0.0
    %v8073 = vadd.f32 %v8071, %v8072
    %v8074 = vsel %vm40, %v7982, 0.0
    %v8075 = vadd.f32 %v8073, %v8074
    %v8076 = vsel %vm40, %v7983, 0.0
    %v8077 = vadd.f32 %v8075, %v8076
    %v8078 = vsel %vm40, %v7984, 0.0
    %v8079 = vadd.f32 %v8077, %v8078
    %v8080 = vsel %vm40, %v7985, 0.0
    %v8081 = vadd.f32 %v8079, %v8080
    %v8082 = vsel %vm40, %v7986, 0.0
    %v8083 = vadd.f32 %v8081, %v8082
    %v8084 = vsel %vm40, %v7987, 0.0
    %v8085 = vadd.f32 %v8083, %v8084
    %v8086 = vsel %vm40, %v7988, 0.0
    %v8087 = vadd.f32 %v8085, %v8086
    %v8088 = vsel %vm40, %v7989, 0.0
    %v8089 = vadd.f32 %v8087, %v8088
    %v8090 = vsel %vm40, %v7990, 0.0
    %v8091 = vadd.f32 %v8089, %v8090
    %v8092 = vsel %vm40, %v7991, 0.0
    %v8093 = vadd.f32 %v8091, %v8092
    %v8094 = vsel %vm40, %v7992, 0.0
    %v8095 = vadd.f32 %v8093, %v8094
    %v8096 = vsel %vm40, %v7993, 0.0
    %v8097 = vadd.f32 %v8095, %v8096
    %v8098 = vsel %vm40, %v7994, 0.0
    %v8099 = vadd.f32 %v8097, %v8098
    %v8100 = vsel %vm40, %v7995, 0.0
    %v8101 = vadd.f32 %v8099, %v8100
    %v8102 = vsel %vm40, %v7996, 0.0
    %v8103 = vadd.f32 %v8101, %v8102
    %v8104 = vsel %vm40, %v7997, 0.0
    %v8105 = vadd.f32 %v8103, %v8104
    %v8106 = vsel %vm40, %v7998, 0.0
    %v8107 = vadd.f32 %v8105, %v8106
    %v8108 = vsel %vm40, %v7999, 0.0
    %v8109 = vadd.f32 %v8107, %v8108
    %v8110 = vsel %vm40, %v8000, 0.0
    %v8111 = vadd.f32 %v8109, %v8110
    %v8112 = vsel %vm40, %v8001, 0.0
    %v8113 = vadd.f32 %v8111, %v8112
    %v8114 = vsel %vm40, %v8002, 0.0
    %v8115 = vadd.f32 %v8113, %v8114
    %v8116 = vsel %vm40, %v8003, 0.0
    %v8117 = vadd.f32 %v8115, %v8116
    %v8118 = vsel %vm40, %v8004, 0.0
    %v8119 = vadd.f32 %v8117, %v8118
    %v8120 = vsel %vm40, %v8005, 0.0
    %v8121 = vadd.f32 %v8119, %v8120
    %v8122 = vsel %vm40, %v8006, 0.0
    %v8123 = vadd.f32 %v8121, %v8122
    %v8124 = vsel %vm40, %v8007, 0.0
    %v8125 = vadd.f32 %v8123, %v8124
    %v8126 = vsel %vm40, %v8008, 0.0
    %v8127 = vadd.f32 %v8125, %v8126
    %v8128 = vsel %vm40, %v8009, 0.0
    %v8129 = vadd.f32 %v8127, %v8128
    %v8130 = vsel %vm40, %v8010, 0.0
    %v8131 = vadd.f32 %v8129, %v8130
    %v8132 = vsel %vm40, %v8011, 0.0
    %v8133 = vadd.f32 %v8131, %v8132
    %v8134 = vsel %vm40, %v8012, 0.0
    %v8135 = vadd.f32 %v8133, %v8134
    %v8136 = vsel %vm40, %v8013, 0.0
    %v8137 = vadd.f32 %v8135, %v8136
    %v8138 = vsel %vm40, %v8014, 0.0
    %v8139 = vadd.f32 %v8137, %v8138
    %v8140 = vsel %vm40, %v8015, 0.0
    %v8141 = vadd.f32 %v8139, %v8140
    %v8142 = vsel %vm40, %v8016, 0.0
    %v8143 = vadd.f32 %v8141, %v8142
    %v8144 = vrot.slane %v8143, 4
    %v8145 = vadd.f32 %v8143, %v8144
    %v8146 = vrot.slane %v8145, 2
    %v8147 = vadd.f32 %v8145, %v8146
    %v8148 = vrot.slane %v8147, 1
    %v8149 = vadd.f32 %v8147, %v8148
    %v8150 = vmul.f32 %v7952, 0.001953125
    %v8151 = vmul.f32 %v8149, 0.001953125
    %v8152 = vmul.f32 %v8150, %v8150
    %v8153 = vsub.f32 %v8151, %v8152
    %v8154 = vsub.f32 %v7502, %v8150
    %v8155 = vsub.f32 %v7507, %v8150
    %v8156 = vsub.f32 %v7512, %v8150
    %v8157 = vsub.f32 %v7517, %v8150
    %v8158 = vsub.f32 %v7522, %v8150
    %v8159 = vsub.f32 %v7527, %v8150
    %v8160 = vsub.f32 %v7532, %v8150
    %v8161 = vsub.f32 %v7537, %v8150
    %v8162 = vsub.f32 %v7542, %v8150
    %v8163 = vsub.f32 %v7547, %v8150
    %v8164 = vsub.f32 %v7552, %v8150
    %v8165 = vsub.f32 %v7557, %v8150
    %v8166 = vsub.f32 %v7562, %v8150
    %v8167 = vsub.f32 %v7567, %v8150
    %v8168 = vsub.f32 %v7572, %v8150
    %v8169 = vsub.f32 %v7577, %v8150
    %v8170 = vsub.f32 %v7582, %v8150
    %v8171 = vsub.f32 %v7587, %v8150
    %v8172 = vsub.f32 %v7592, %v8150
    %v8173 = vsub.f32 %v7597, %v8150
    %v8174 = vsub.f32 %v7602, %v8150
    %v8175 = vsub.f32 %v7607, %v8150
    %v8176 = vsub.f32 %v7612, %v8150
    %v8177 = vsub.f32 %v7617, %v8150
    %v8178 = vsub.f32 %v7622, %v8150
    %v8179 = vsub.f32 %v7627, %v8150
    %v8180 = vsub.f32 %v7632, %v8150
    %v8181 = vsub.f32 %v7637, %v8150
    %v8182 = vsub.f32 %v7642, %v8150
    %v8183 = vsub.f32 %v7647, %v8150
    %v8184 = vsub.f32 %v7652, %v8150
    %v8185 = vsub.f32 %v7657, %v8150
    %v8186 = vsub.f32 %v7662, %v8150
    %v8187 = vsub.f32 %v7667, %v8150
    %v8188 = vsub.f32 %v7672, %v8150
    %v8189 = vsub.f32 %v7677, %v8150
    %v8190 = vsub.f32 %v7682, %v8150
    %v8191 = vsub.f32 %v7687, %v8150
    %v8192 = vsub.f32 %v7692, %v8150
    %v8193 = vsub.f32 %v7697, %v8150
    %v8194 = vsub.f32 %v7702, %v8150
    %v8195 = vsub.f32 %v7707, %v8150
    %v8196 = vsub.f32 %v7712, %v8150
    %v8197 = vsub.f32 %v7717, %v8150
    %v8198 = vsub.f32 %v7722, %v8150
    %v8199 = vsub.f32 %v7727, %v8150
    %v8200 = vsub.f32 %v7732, %v8150
    %v8201 = vsub.f32 %v7737, %v8150
    %v8202 = vsub.f32 %v7742, %v8150
    %v8203 = vsub.f32 %v7747, %v8150
    %v8204 = vsub.f32 %v7752, %v8150
    %v8205 = vsub.f32 %v7757, %v8150
    %v8206 = vsub.f32 %v7762, %v8150
    %v8207 = vsub.f32 %v7767, %v8150
    %v8208 = vsub.f32 %v7772, %v8150
    %v8209 = vsub.f32 %v7777, %v8150
    %v8210 = vsub.f32 %v7782, %v8150
    %v8211 = vsub.f32 %v7787, %v8150
    %v8212 = vsub.f32 %v7792, %v8150
    %v8213 = vsub.f32 %v7797, %v8150
    %v8214 = vsub.f32 %v7802, %v8150
    %v8215 = vsub.f32 %v7807, %v8150
    %v8216 = vsub.f32 %v7812, %v8150
    %v8217 = vsub.f32 %v7817, %v8150
    %v8218 = vadd.f32 %v8153, 1e-05
    %v8219 = vrsqrt.pop %v8218
    %v8220 = vmul.f32 %v8154, %v8219
    %v8221 = vmul.f32 %v8155, %v8219
    %v8222 = vmul.f32 %v8156, %v8219
    %v8223 = vmul.f32 %v8157, %v8219
    %v8224 = vmul.f32 %v8158, %v8219
    %v8225 = vmul.f32 %v8159, %v8219
    %v8226 = vmul.f32 %v8160, %v8219
    %v8227 = vmul.f32 %v8161, %v8219
    %v8228 = vmul.f32 %v8162, %v8219
    %v8229 = vmul.f32 %v8163, %v8219
    %v8230 = vmul.f32 %v8164, %v8219
    %v8231 = vmul.f32 %v8165, %v8219
    %v8232 = vmul.f32 %v8166, %v8219
    %v8233 = vmul.f32 %v8167, %v8219
    %v8234 = vmul.f32 %v8168, %v8219
    %v8235 = vmul.f32 %v8169, %v8219
    %v8236 = vmul.f32 %v8170, %v8219
    %v8237 = vmul.f32 %v8171, %v8219
    %v8238 = vmul.f32 %v8172, %v8219
    %v8239 = vmul.f32 %v8173, %v8219
    %v8240 = vmul.f32 %v8174, %v8219
    %v8241 = vmul.f32 %v8175, %v8219
    %v8242 = vmul.f32 %v8176, %v8219
    %v8243 = vmul.f32 %v8177, %v8219
    %v8244 = vmul.f32 %v8178, %v8219
    %v8245 = vmul.f32 %v8179, %v8219
    %v8246 = vmul.f32 %v8180, %v8219
    %v8247 = vmul.f32 %v8181, %v8219
    %v8248 = vmul.f32 %v8182, %v8219
    %v8249 = vmul.f32 %v8183, %v8219
    %v8250 = vmul.f32 %v8184, %v8219
    %v8251 = vmul.f32 %v8185, %v8219
    %v8252 = vmul.f32 %v8186, %v8219
    %v8253 = vmul.f32 %v8187, %v8219
    %v8254 = vmul.f32 %v8188, %v8219
    %v8255 = vmul.f32 %v8189, %v8219
    %v8256 = vmul.f32 %v8190, %v8219
    %v8257 = vmul.f32 %v8191, %v8219
    %v8258 = vmul.f32 %v8192, %v8219
    %v8259 = vmul.f32 %v8193, %v8219
    %v8260 = vmul.f32 %v8194, %v8219
    %v8261 = vmul.f32 %v8195, %v8219
    %v8262 = vmul.f32 %v8196, %v8219
    %v8263 = vmul.f32 %v8197, %v8219
    %v8264 = vmul.f32 %v8198, %v8219
    %v8265 = vmul.f32 %v8199, %v8219
    %v8266 = vmul.f32 %v8200, %v8219
    %v8267 = vmul.f32 %v8201, %v8219
    %v8268 = vmul.f32 %v8202, %v8219
    %v8269 = vmul.f32 %v8203, %v8219
    %v8270 = vmul.f32 %v8204, %v8219
    %v8271 = vmul.f32 %v8205, %v8219
    %v8272 = vmul.f32 %v8206, %v8219
    %v8273 = vmul.f32 %v8207, %v8219
    %v8274 = vmul.f32 %v8208, %v8219
    %v8275 = vmul.f32 %v8209, %v8219
    %v8276 = vmul.f32 %v8210, %v8219
    %v8277 = vmul.f32 %v8211, %v8219
    %v8278 = vmul.f32 %v8212, %v8219
    %v8279 = vmul.f32 %v8213, %v8219
    %v8280 = vmul.f32 %v8214, %v8219
    %v8281 = vmul.f32 %v8215, %v8219
    %v8282 = vmul.f32 %v8216, %v8219
    %v8283 = vmul.f32 %v8217, %v8219
    %v8284 = vld [vmem:[%s5] sm:$0x1]
    %v8286 = vlaneseq
    %v8287 = vshrl.u32 %v8286, 7
    %v8288 = vsub.s32 0, %v8287
    %v8289 = vrot.slane %v8284, %v8288
    %v8291 = vmul.f32 %v8220, %v8289
    %v8292 = vmul.f32 %v8221, %v8289
    %v8293 = vmul.f32 %v8222, %v8289
    %v8294 = vmul.f32 %v8223, %v8289
    %v8295 = vmul.f32 %v8224, %v8289
    %v8296 = vmul.f32 %v8225, %v8289
    %v8297 = vmul.f32 %v8226, %v8289
    %v8298 = vmul.f32 %v8227, %v8289
    %v8299 = vmul.f32 %v8228, %v8289
    %v8300 = vmul.f32 %v8229, %v8289
    %v8301 = vmul.f32 %v8230, %v8289
    %v8302 = vmul.f32 %v8231, %v8289
    %v8303 = vmul.f32 %v8232, %v8289
    %v8304 = vmul.f32 %v8233, %v8289
    %v8305 = vmul.f32 %v8234, %v8289
    %v8306 = vmul.f32 %v8235, %v8289
    %v8307 = vmul.f32 %v8236, %v8289
    %v8308 = vmul.f32 %v8237, %v8289
    %v8309 = vmul.f32 %v8238, %v8289
    %v8310 = vmul.f32 %v8239, %v8289
    %v8311 = vmul.f32 %v8240, %v8289
    %v8312 = vmul.f32 %v8241, %v8289
    %v8313 = vmul.f32 %v8242, %v8289
    %v8314 = vmul.f32 %v8243, %v8289
    %v8315 = vmul.f32 %v8244, %v8289
    %v8316 = vmul.f32 %v8245, %v8289
    %v8317 = vmul.f32 %v8246, %v8289
    %v8318 = vmul.f32 %v8247, %v8289
    %v8319 = vmul.f32 %v8248, %v8289
    %v8320 = vmul.f32 %v8249, %v8289
    %v8321 = vmul.f32 %v8250, %v8289
    %v8322 = vmul.f32 %v8251, %v8289
    %v8323 = vmul.f32 %v8252, %v8289
    %v8324 = vmul.f32 %v8253, %v8289
    %v8325 = vmul.f32 %v8254, %v8289
    %v8326 = vmul.f32 %v8255, %v8289
    %v8327 = vmul.f32 %v8256, %v8289
    %v8328 = vmul.f32 %v8257, %v8289
    %v8329 = vmul.f32 %v8258, %v8289
    %v8330 = vmul.f32 %v8259, %v8289
    %v8331 = vmul.f32 %v8260, %v8289
    %v8332 = vmul.f32 %v8261, %v8289
    %v8333 = vmul.f32 %v8262, %v8289
    %v8334 = vmul.f32 %v8263, %v8289
    %v8335 = vmul.f32 %v8264, %v8289
    %v8336 = vmul.f32 %v8265, %v8289
    %v8337 = vmul.f32 %v8266, %v8289
    %v8338 = vmul.f32 %v8267, %v8289
    %v8339 = vmul.f32 %v8268, %v8289
    %v8340 = vmul.f32 %v8269, %v8289
    %v8341 = vmul.f32 %v8270, %v8289
    %v8342 = vmul.f32 %v8271, %v8289
    %v8343 = vmul.f32 %v8272, %v8289
    %v8344 = vmul.f32 %v8273, %v8289
    %v8345 = vmul.f32 %v8274, %v8289
    %v8346 = vmul.f32 %v8275, %v8289
    %v8347 = vmul.f32 %v8276, %v8289
    %v8348 = vmul.f32 %v8277, %v8289
    %v8349 = vmul.f32 %v8278, %v8289
    %v8350 = vmul.f32 %v8279, %v8289
    %v8351 = vmul.f32 %v8280, %v8289
    %v8352 = vmul.f32 %v8281, %v8289
    %v8353 = vmul.f32 %v8282, %v8289
    %v8354 = vmul.f32 %v8283, %v8289
    %v8355 = vld [vmem:[%s6] sm:$0x1]
    %v8357 = vlaneseq
    %v8358 = vshrl.u32 %v8357, 7
    %v8359 = vsub.s32 0, %v8358
    %v8360 = vrot.slane %v8355, %v8359
    %v8362 = vadd.f32 %v8291, %v8360
    %v8363 = vadd.f32 %v8292, %v8360
    %v8364 = vadd.f32 %v8293, %v8360
    %v8365 = vadd.f32 %v8294, %v8360
    %v8366 = vadd.f32 %v8295, %v8360
    %v8367 = vadd.f32 %v8296, %v8360
    %v8368 = vadd.f32 %v8297, %v8360
    %v8369 = vadd.f32 %v8298, %v8360
    %v8370 = vadd.f32 %v8299, %v8360
    %v8371 = vadd.f32 %v8300, %v8360
    %v8372 = vadd.f32 %v8301, %v8360
    %v8373 = vadd.f32 %v8302, %v8360
    %v8374 = vadd.f32 %v8303, %v8360
    %v8375 = vadd.f32 %v8304, %v8360
    %v8376 = vadd.f32 %v8305, %v8360
    %v8377 = vadd.f32 %v8306, %v8360
    %v8378 = vadd.f32 %v8307, %v8360
    %v8379 = vadd.f32 %v8308, %v8360
    %v8380 = vadd.f32 %v8309, %v8360
    %v8381 = vadd.f32 %v8310, %v8360
    %v8382 = vadd.f32 %v8311, %v8360
    %v8383 = vadd.f32 %v8312, %v8360
    %v8384 = vadd.f32 %v8313, %v8360
    %v8385 = vadd.f32 %v8314, %v8360
    %v8386 = vadd.f32 %v8315, %v8360
    %v8387 = vadd.f32 %v8316, %v8360
    %v8388 = vadd.f32 %v8317, %v8360
    %v8389 = vadd.f32 %v8318, %v8360
    %v8390 = vadd.f32 %v8319, %v8360
    %v8391 = vadd.f32 %v8320, %v8360
    %v8392 = vadd.f32 %v8321, %v8360
    %v8393 = vadd.f32 %v8322, %v8360
    %v8394 = vadd.f32 %v8323, %v8360
    %v8395 = vadd.f32 %v8324, %v8360
    %v8396 = vadd.f32 %v8325, %v8360
    %v8397 = vadd.f32 %v8326, %v8360
    %v8398 = vadd.f32 %v8327, %v8360
    %v8399 = vadd.f32 %v8328, %v8360
    %v8400 = vadd.f32 %v8329, %v8360
    %v8401 = vadd.f32 %v8330, %v8360
    %v8402 = vadd.f32 %v8331, %v8360
    %v8403 = vadd.f32 %v8332, %v8360
    %v8404 = vadd.f32 %v8333, %v8360
    %v8405 = vadd.f32 %v8334, %v8360
    %v8406 = vadd.f32 %v8335, %v8360
    %v8407 = vadd.f32 %v8336, %v8360
    %v8408 = vadd.f32 %v8337, %v8360
    %v8409 = vadd.f32 %v8338, %v8360
    %v8410 = vadd.f32 %v8339, %v8360
    %v8411 = vadd.f32 %v8340, %v8360
    %v8412 = vadd.f32 %v8341, %v8360
    %v8413 = vadd.f32 %v8342, %v8360
    %v8414 = vadd.f32 %v8343, %v8360
    %v8415 = vadd.f32 %v8344, %v8360
    %v8416 = vadd.f32 %v8345, %v8360
    %v8417 = vadd.f32 %v8346, %v8360
    %v8418 = vadd.f32 %v8347, %v8360
    %v8419 = vadd.f32 %v8348, %v8360
    %v8420 = vadd.f32 %v8349, %v8360
    %v8421 = vadd.f32 %v8350, %v8360
    %v8422 = vadd.f32 %v8351, %v8360
    %v8423 = vadd.f32 %v8352, %v8360
    %v8424 = vadd.f32 %v8353, %v8360
    %v8425 = vadd.f32 %v8354, %v8360
    %v8426 = vadd.f32 %v8362, %v128
    %v8427 = vadd.f32 %v8363, %v129
    %v8428 = vadd.f32 %v8364, %v130
    %v8429 = vadd.f32 %v8365, %v131
    %v8430 = vadd.f32 %v8366, %v132
    %v8431 = vadd.f32 %v8367, %v133
    %v8432 = vadd.f32 %v8368, %v134
    %v8433 = vadd.f32 %v8369, %v135
    %v8434 = vadd.f32 %v8370, %v136
    %v8435 = vadd.f32 %v8371, %v137
    %v8436 = vadd.f32 %v8372, %v138
    %v8437 = vadd.f32 %v8373, %v139
    %v8438 = vadd.f32 %v8374, %v140
    %v8439 = vadd.f32 %v8375, %v141
    %v8440 = vadd.f32 %v8376, %v142
    %v8441 = vadd.f32 %v8377, %v143
    %v8442 = vadd.f32 %v8378, %v144
    %v8443 = vadd.f32 %v8379, %v145
    %v8444 = vadd.f32 %v8380, %v146
    %v8445 = vadd.f32 %v8381, %v147
    %v8446 = vadd.f32 %v8382, %v148
    %v8447 = vadd.f32 %v8383, %v149
    %v8448 = vadd.f32 %v8384, %v150
    %v8449 = vadd.f32 %v8385, %v151
    %v8450 = vadd.f32 %v8386, %v152
    %v8451 = vadd.f32 %v8387, %v153
    %v8452 = vadd.f32 %v8388, %v154
    %v8453 = vadd.f32 %v8389, %v155
    %v8454 = vadd.f32 %v8390, %v156
    %v8455 = vadd.f32 %v8391, %v157
    %v8456 = vadd.f32 %v8392, %v158
    %v8457 = vadd.f32 %v8393, %v159
    %v8458 = vadd.f32 %v8394, %v160
    %v8459 = vadd.f32 %v8395, %v161
    %v8460 = vadd.f32 %v8396, %v162
    %v8461 = vadd.f32 %v8397, %v163
    %v8462 = vadd.f32 %v8398, %v164
    %v8463 = vadd.f32 %v8399, %v165
    %v8464 = vadd.f32 %v8400, %v166
    %v8465 = vadd.f32 %v8401, %v167
    %v8466 = vadd.f32 %v8402, %v168
    %v8467 = vadd.f32 %v8403, %v169
    %v8468 = vadd.f32 %v8404, %v170
    %v8469 = vadd.f32 %v8405, %v171
    %v8470 = vadd.f32 %v8406, %v172
    %v8471 = vadd.f32 %v8407, %v173
    %v8472 = vadd.f32 %v8408, %v174
    %v8473 = vadd.f32 %v8409, %v175
    %v8474 = vadd.f32 %v8410, %v176
    %v8475 = vadd.f32 %v8411, %v177
    %v8476 = vadd.f32 %v8412, %v178
    %v8477 = vadd.f32 %v8413, %v179
    %v8478 = vadd.f32 %v8414, %v180
    %v8479 = vadd.f32 %v8415, %v181
    %v8480 = vadd.f32 %v8416, %v182
    %v8481 = vadd.f32 %v8417, %v183
    %v8482 = vadd.f32 %v8418, %v184
    %v8483 = vadd.f32 %v8419, %v185
    %v8484 = vadd.f32 %v8420, %v186
    %v8485 = vadd.f32 %v8421, %v187
    %v8486 = vadd.f32 %v8422, %v188
    %v8487 = vadd.f32 %v8423, %v189
    %v8488 = vadd.f32 %v8424, %v190
    %v8489 = vadd.f32 %v8425, %v191
    %8490 = vst.msk [vmem:[%s7] sm:$0xff] %vm40, %v8426
    %8491 = vst.msk [vmem:[%s7 + $0x8] sm:$0xff] %vm40, %v8427
    %8492 = vst.msk [vmem:[%s7 + $0x10] sm:$0xff] %vm40, %v8428
    %8493 = vst.msk [vmem:[%s7 + $0x18] sm:$0xff] %vm40, %v8429
    %8494 = vst.msk [vmem:[%s7 + $0x20] sm:$0xff] %vm40, %v8430
    %8495 = vst.msk [vmem:[%s7 + $0x28] sm:$0xff] %vm40, %v8431
    %8496 = vst.msk [vmem:[%s7 + $0x30] sm:$0xff] %vm40, %v8432
    %8497 = vst.msk [vmem:[%s7 + $0x38] sm:$0xff] %vm40, %v8433
    %8498 = vst.msk [vmem:[%s7 + $0x40] sm:$0xff] %vm40, %v8434
    %8499 = vst.msk [vmem:[%s7 + $0x48] sm:$0xff] %vm40, %v8435
    %8500 = vst.msk [vmem:[%s7 + $0x50] sm:$0xff] %vm40, %v8436
    %8501 = vst.msk [vmem:[%s7 + $0x58] sm:$0xff] %vm40, %v8437
    %8502 = vst.msk [vmem:[%s7 + $0x60] sm:$0xff] %vm40, %v8438
    %8503 = vst.msk [vmem:[%s7 + $0x68] sm:$0xff] %vm40, %v8439
    %8504 = vst.msk [vmem:[%s7 + $0x70] sm:$0xff] %vm40, %v8440
    %8505 = vst.msk [vmem:[%s7 + $0x78] sm:$0xff] %vm40, %v8441
    %8506 = vst.msk [vmem:[%s7 + $0x80] sm:$0xff] %vm40, %v8442
    %8507 = vst.msk [vmem:[%s7 + $0x88] sm:$0xff] %vm40, %v8443
    %8508 = vst.msk [vmem:[%s7 + $0x90] sm:$0xff] %vm40, %v8444
    %8509 = vst.msk [vmem:[%s7 + $0x98] sm:$0xff] %vm40, %v8445
    %8510 = vst.msk [vmem:[%s7 + $0xa0] sm:$0xff] %vm40, %v8446
    %8511 = vst.msk [vmem:[%s7 + $0xa8] sm:$0xff] %vm40, %v8447
    %8512 = vst.msk [vmem:[%s7 + $0xb0] sm:$0xff] %vm40, %v8448
    %8513 = vst.msk [vmem:[%s7 + $0xb8] sm:$0xff] %vm40, %v8449
    %8514 = vst.msk [vmem:[%s7 + $0xc0] sm:$0xff] %vm40, %v8450
    %8515 = vst.msk [vmem:[%s7 + $0xc8] sm:$0xff] %vm40, %v8451
    %8516 = vst.msk [vmem:[%s7 + $0xd0] sm:$0xff] %vm40, %v8452
    %8517 = vst.msk [vmem:[%s7 + $0xd8] sm:$0xff] %vm40, %v8453
    %8518 = vst.msk [vmem:[%s7 + $0xe0] sm:$0xff] %vm40, %v8454
    %8519 = vst.msk [vmem:[%s7 + $0xe8] sm:$0xff] %vm40, %v8455
    %8520 = vst.msk [vmem:[%s7 + $0xf0] sm:$0xff] %vm40, %v8456
    %8521 = vst.msk [vmem:[%s7 + $0xf8] sm:$0xff] %vm40, %v8457
    %8522 = vst.msk [vmem:[%s7 + $0x100] sm:$0xff] %vm40, %v8458
    %8523 = vst.msk [vmem:[%s7 + $0x108] sm:$0xff] %vm40, %v8459
    %8524 = vst.msk [vmem:[%s7 + $0x110] sm:$0xff] %vm40, %v8460
    %8525 = vst.msk [vmem:[%s7 + $0x118] sm:$0xff] %vm40, %v8461
    %8526 = vst.msk [vmem:[%s7 + $0x120] sm:$0xff] %vm40, %v8462
    %8527 = vst.msk [vmem:[%s7 + $0x128] sm:$0xff] %vm40, %v8463
    %8528 = vst.msk [vmem:[%s7 + $0x130] sm:$0xff] %vm40, %v8464
    %8529 = vst.msk [vmem:[%s7 + $0x138] sm:$0xff] %vm40, %v8465
    %8530 = vst.msk [vmem:[%s7 + $0x140] sm:$0xff] %vm40, %v8466
    %8531 = vst.msk [vmem:[%s7 + $0x148] sm:$0xff] %vm40, %v8467
    %8532 = vst.msk [vmem:[%s7 + $0x150] sm:$0xff] %vm40, %v8468
    %8533 = vst.msk [vmem:[%s7 + $0x158] sm:$0xff] %vm40, %v8469
    %8534 = vst.msk [vmem:[%s7 + $0x160] sm:$0xff] %vm40, %v8470
    %8535 = vst.msk [vmem:[%s7 + $0x168] sm:$0xff] %vm40, %v8471
    %8536 = vst.msk [vmem:[%s7 + $0x170] sm:$0xff] %vm40, %v8472
    %8537 = vst.msk [vmem:[%s7 + $0x178] sm:$0xff] %vm40, %v8473
    %8538 = vst.msk [vmem:[%s7 + $0x180] sm:$0xff] %vm40, %v8474
    %8539 = vst.msk [vmem:[%s7 + $0x188] sm:$0xff] %vm40, %v8475
    %8540 = vst.msk [vmem:[%s7 + $0x190] sm:$0xff] %vm40, %v8476
    %8541 = vst.msk [vmem:[%s7 + $0x198] sm:$0xff] %vm40, %v8477
    %8542 = vst.msk [vmem:[%s7 + $0x1a0] sm:$0xff] %vm40, %v8478
    %8543 = vst.msk [vmem:[%s7 + $0x1a8] sm:$0xff] %vm40, %v8479
    %8544 = vst.msk [vmem:[%s7 + $0x1b0] sm:$0xff] %vm40, %v8480
    %8545 = vst.msk [vmem:[%s7 + $0x1b8] sm:$0xff] %vm40, %v8481
    %8546 = vst.msk [vmem:[%s7 + $0x1c0] sm:$0xff] %vm40, %v8482
    %8547 = vst.msk [vmem:[%s7 + $0x1c8] sm:$0xff] %vm40, %v8483
    %8548 = vst.msk [vmem:[%s7 + $0x1d0] sm:$0xff] %vm40, %v8484
    %8549 = vst.msk [vmem:[%s7 + $0x1d8] sm:$0xff] %vm40, %v8485
    %8550 = vst.msk [vmem:[%s7 + $0x1e0] sm:$0xff] %vm40, %v8486
    %8551 = vst.msk [vmem:[%s7 + $0x1e8] sm:$0xff] %vm40, %v8487
    %8552 = vst.msk [vmem:[%s7 + $0x1f0] sm:$0xff] %vm40, %v8488
    %8553 = vst.msk [vmem:[%s7 + $0x1f8] sm:$0xff] %vm40, %v8489
    // Predicated region
    $region34: #{tpu_custom_call.1} parent=1 // pred_check
      _
    $region35: #{tpu_custom_call.1} parent=1 // pred_check_branch
      %8555 = sbr.rel (0) target = $region37
    $region36: #{tpu_custom_call.1} parent=1 // pred_region
      _
    $region37: #{tpu_custom_call.1} parent=1 // pred_fallthru
      _
    // Predicated region
    $region38: #{tpu_custom_call.1} parent=1 // pred_check
      _
    $region39: #{tpu_custom_call.1} parent=1 // pred_check_branch
      %8557 = sbr.rel (0) target = $region41
    $region40: #{tpu_custom_call.1} parent=1 // pred_region
      _
    $region41: #{tpu_custom_call.1} parent=1 // pred_fallthru
      _
    %8558 = vsyncpa [#allocation4], 1

</llo_original>
